<compile_context>
chip_gen: v7x
topology: tpu7x:2x2x1
jax: 0.10.0
libtpu: 0.0.40
codegen_flags: <defaults>
</compile_context>

<pallas_src>
import jax
import jax.numpy as jnp
from jax.experimental import pallas as pl
from jax.experimental.pallas import tpu as pltpu

EPS = 1e-5  # PyTorch InstanceNorm2d default


def _round_up(x, m):
    return ((x + m - 1) // m) * m


# ----------------------------- fused conv kernel -----------------------------

def _make_conv_kernel(n_taps, cin, KW, Wp, Ho, Wo, L, L_pad, cout_eff, groups,
                      mode, relu, has_res):
    """Fused conv (single packed matmul) + bias + IN/ReLU/residual or tanh.

    For one batch element (wrapped-flat layout, p = oh*Wp + ow):
        acc[co, p] = sum_{t, ci} w[co, t*cin+ci] * x_flat[ci, p + off_t]
    Columns with (p % Wp) >= Wo or p >= L are wrap/pad garbage: masked out of
    the InstanceNorm statistics here, dropped on the host afterwards.
    """
    C = cout_eff // groups
    inv_cnt = 1.0 / float(groups * Ho * Wo)

    def kernel(*refs):
        if has_res:
            x_ref, w_ref, b_ref, r_ref, o_ref, col_ref = refs
        else:
            x_ref, w_ref, b_ref, o_ref, col_ref = refs

        # --- stage im2col once into VMEM scratch: the lane shift per tap
        #     happens exactly once, destinations are lane/sublane aligned.
        for t in range(n_taps):
            kh, kw = t // KW, t % KW
            off = kh * Wp + kw
            col_ref[t * cin:(t + 1) * cin, :] = x_ref[:, off:off + L_pad]

        # --- single MXU push: (Cout_eff, K) x (K, L_pad), K = n_taps*cin
        acc = jnp.dot(w_ref[...], col_ref[...],
                      preferred_element_type=jnp.float32)
        acc = acc + b_ref[...]                      # (Cout_eff, L_pad) + (Cout_eff, 1)

        if mode == "in":
            # validity mask built in-kernel (2 VPU ops, no HBM input)
            p = jax.lax.broadcasted_iota(jnp.int32, (1, L_pad), 1)
            maskf = jnp.logical_and(p % Wp < Wo, p < L).astype(jnp.float32)

            # one-pass statistics: E[x], E[x^2] over valid columns (+ groups)
            msum = None
            sqsum = None
            for g in range(groups):
                a_g = acc[g * C:(g + 1) * C]
                am = a_g * maskf
                s1 = jnp.sum(am, axis=-1, keepdims=True)
                s2 = jnp.sum(a_g * am, axis=-1, keepdims=True)
                msum = s1 if msum is None else msum + s1
                sqsum = s2 if sqsum is None else sqsum + s2
            mean = msum * inv_cnt                                     # (C, 1)
            var = jnp.maximum(sqsum * inv_cnt - mean * mean, 0.0)
            inv = jax.lax.rsqrt(var + EPS)                            # (C, 1)

            res = r_ref[...].astype(jnp.float32) if has_res else None
            for g in range(groups):
                y = (acc[g * C:(g + 1) * C] - mean) * inv
                if has_res:
                    y = y + res[g * C:(g + 1) * C]
                if relu:
                    y = jnp.maximum(y, 0.0)
                # direct sliced store (no concat relayout for groups > 1)
                o_ref[g * C:(g + 1) * C, :] = y.astype(o_ref.dtype)
        else:  # "tanh"
            o_ref[...] = jnp.tanh(acc).astype(o_ref.dtype)

    return kernel


# ----------------------------- host-side glue -----------------------------

def _embed_flat(x, Wp, L_pad):
    """(N, C, H, W) -> (N, C, L_pad) in the kernel's wrapped-flat layout."""
    n, c, h, w = x.shape
    y = jnp.pad(x, ((0, 0), (0, 0), (0, 0), (0, Wp - w)))
    y = y.reshape(n, c, h * Wp)
    if h * Wp < L_pad:
        y = jnp.pad(y, ((0, 0), (0, 0), (0, L_pad - h * Wp)))
    else:
        y = y[:, :, :L_pad]
    return y


def _unwrap(out_flat, Ho, Wo, Wp):
    """(N, C, L_pad) wrapped-flat -> (N, C, Ho, Wo) NCHW (drop wrap/pad cols)."""
    n, c, lp = out_flat.shape
    need = Ho * Wp
    if lp < need:
        out_flat = jnp.pad(out_flat, ((0, 0), (0, 0), (0, need - lp)))
    return out_flat[:, :, :need].reshape(n, c, Ho, Wp)[:, :, :, :Wo]


def _conv_pallas(xp, w_eq, bias, Ho, Wo, mode, relu, groups, out_dtype,
                 residual=None):
    """xp: (N, Cin, Hp, Wp) padded input; w_eq: (Cout_eff, Cin, KH, KW)
    equivalent stride-1 conv weight.  Returns (N, Cout_eff, L_pad) flat."""
    n, cin, hp, wp = xp.shape
    cout_eff, cin_w, KH, KW = w_eq.shape
    assert cin_w == cin

    # pad channels to a multiple of 8 -> sublane-aligned im2col staging stores
    cpad = (-cin) % 8
    if cpad:
        xp = jnp.pad(xp, ((0, 0), (0, cpad), (0, 0), (0, 0)))
        w_eq = jnp.pad(w_eq, ((0, 0), (0, cpad), (0, 0), (0, 0)))
        cin += cpad

    n_taps = KH * KW
    L = (Ho - 1) * wp + Wo
    L_pad = _round_up(L, 128)
    max_off = (KH - 1) * wp + (KW - 1)
    assert hp * wp == max_off + L        # geometry of the wrapped-flat layout
    xcols = hp * wp + (L_pad - L)        # == max_off + L_pad (all reads in-bounds)

    # pack taps into the contraction dim: row index = t*cin + ci
    w_packed = jnp.transpose(w_eq, (0, 2, 3, 1)).reshape(cout_eff, n_taps * cin)

    x_flat = xp.reshape(n, cin, hp * wp)
    x_flat = jnp.pad(x_flat, ((0, 0), (0, 0), (0, L_pad - L))).astype(jnp.bfloat16)
    w_bf = w_packed.astype(jnp.bfloat16)
    b2 = bias.reshape(cout_eff, 1).astype(jnp.float32)

    inputs = [x_flat, w_bf, b2]
    in_specs = [
        pl.BlockSpec((None, cin, xcols), lambda i: (i, 0, 0)),
        pl.BlockSpec((cout_eff, n_taps * cin), lambda i: (0, 0)),
        pl.BlockSpec((cout_eff, 1), lambda i: (0, 0)),
    ]
    has_res = residual is not None
    if has_res:
        inputs.append(_embed_flat(residual, wp, L_pad).astype(jnp.bfloat16))
        in_specs.append(pl.BlockSpec((None, cout_eff, L_pad), lambda i: (i, 0, 0)))

    kernel = _make_conv_kernel(n_taps, cin, KW, wp, Ho, Wo, L, L_pad,
                               cout_eff, groups, mode, relu, has_res)
    out = pl.pallas_call(
        kernel,
        out_shape=jax.ShapeDtypeStruct((n, cout_eff, L_pad), out_dtype),
        grid_spec=pltpu.PrefetchScalarGridSpec(
            num_scalar_prefetch=0,
            grid=(n,),
            in_specs=in_specs,
            out_specs=pl.BlockSpec((None, cout_eff, L_pad), lambda i: (i, 0, 0)),
            scratch_shapes=[pltpu.VMEM((n_taps * cin, L_pad), jnp.bfloat16)]),
        compiler_params=pltpu.CompilerParams(dimension_semantics=("parallel",)),
    )(*inputs)
    return out


# ----------------------------- layer wrappers -----------------------------

def _conv_std(x, w, b, ksize, pad, mode="in", relu=True, residual=None,
              out_dtype=jnp.bfloat16):
    """Stride-1 reflect-padded conv fused with bias + IN/ReLU/residual or tanh."""
    n, cin, h, wd = x.shape
    xp = jnp.pad(x, ((0, 0), (0, 0), (pad, pad), (pad, pad)), mode="reflect")
    hp, wp = h + 2 * pad, wd + 2 * pad
    ho, wo = hp - ksize + 1, wp - ksize + 1
    out = _conv_pallas(xp, w, b, ho, wo, mode, relu, 1, out_dtype, residual)
    return _unwrap(out, ho, wo, wp)


def _conv_down(x, w, b):
    """3x3 stride-2 reflect-pad-1 conv + IN + ReLU via space-to-depth rewrite
    (becomes a stride-1 2x2 conv: no strided in-kernel access, no wasted taps)."""
    n, cin, h, wd = x.shape
    cout = w.shape[0]
    xp = jnp.pad(x, ((0, 0), (0, 0), (1, 1), (1, 1)), mode="reflect")
    comps = [xp[:, :, ph::2, pw::2] for ph in (0, 1) for pw in (0, 1)]
    xs2d = jnp.concatenate(comps, axis=1)               # (N, 4*Cin, H/2+1, W/2+1)
    wq = (wd + 2) // 2
    w2 = jnp.zeros((cout, 4 * cin, 2, 2), w.dtype)
    for ph in (0, 1):
        for pw in (0, 1):
            q = ph * 2 + pw
            for dh in (0, 1):
                for dw in (0, 1):
                    kh, kw = 2 * dh + ph, 2 * dw + pw
                    if kh <= 2 and kw <= 2:
                        w2 = w2.at[:, q * cin:(q + 1) * cin, dh, dw].set(w[:, :, kh, kw])
    ho, wo = h // 2, wd // 2
    out = _conv_pallas(xs2d, w2, b, ho, wo, "in", True, 1, jnp.bfloat16, None)
    return _unwrap(out, ho, wo, wq)


def _conv_up(x, wT, b):
    """ConvTranspose2d(k=3, s=2, p=1, op=1) + IN + ReLU via sub-pixel rewrite:
    one stride-1 2x2 conv producing 4 parity planes (grouped IN in-kernel),
    then depth-to-space.  wT: (Cin, Cout, 3, 3) PyTorch layout."""
    n, cin, h, wd = x.shape
    cout = wT.shape[1]
    xz = jnp.pad(x, ((0, 0), (0, 0), (0, 1), (0, 1)))   # zero-pad bottom/right
    w4 = jnp.zeros((4 * cout, cin, 2, 2), wT.dtype)
    for a in (0, 1):
        for c in (0, 1):
            q = a * 2 + c
            for dh in (0, 1):
                for dw in (0, 1):
                    kh, kw = a + 1 - 2 * dh, c + 1 - 2 * dw
                    if 0 <= kh <= 2 and 0 <= kw <= 2:
                        w4 = w4.at[q * cout:(q + 1) * cout, :, dh, dw].set(
                            wT[:, :, kh, kw].T)
    b4 = jnp.tile(b, 4)
    out = _conv_pallas(xz, w4, b4, h, wd, "in", True, 4, jnp.bfloat16, None)
    y4 = _unwrap(out, h, wd, wd + 1)                    # (N, 4*Cout, H, W)
    y = y4.reshape(n, 2, 2, cout, h, wd).transpose(0, 3, 4, 1, 5, 2)
    return y.reshape(n, cout, 2 * h, 2 * wd)            # depth-to-space


# ----------------------------- model -----------------------------

def init_params(key, input_nc=3, scale=8, resnet_layers=2):
    def conv_p(k, cout, cin, ks):
        k1, k2 = jax.random.split(k)
        w = jax.random.normal(k1, (cout, cin, ks, ks), jnp.float32) * 0.05
        b = jax.random.normal(k2, (cout,), jnp.float32) * 0.05
        return w, b

    def convT_p(k, cin, cout, ks):
        k1, k2 = jax.random.split(k)
        w = jax.random.normal(k1, (cin, cout, ks, ks), jnp.float32) * 0.05
        b = jax.random.normal(k2, (cout,), jnp.float32) * 0.05
        return w, b

    keys = jax.random.split(key, 6 + 2 * resnet_layers)
    p = {
        "conv1": conv_p(keys[0], scale, input_nc, 7),
        "down1": conv_p(keys[1], scale * 2, scale, 3),
        "down2": conv_p(keys[2], scale * 4, scale * 2, 3),
        "up1": convT_p(keys[3], scale * 4, scale * 2, 3),
        "up2": convT_p(keys[4], scale * 2, scale, 3),
        "last": conv_p(keys[5], 3, scale, 7),
        "res": [],
    }
    for i in range(resnet_layers):
        c1 = conv_p(keys[6 + 2 * i], scale * 4, scale * 4, 3)
        c2 = conv_p(keys[7 + 2 * i], scale * 4, scale * 4, 3)
        p["res"].append((c1, c2))
    return p


def cyclegan_generator_forward(params, x):
    w, b = params["conv1"]
    x = _conv_std(x, w, b, ksize=7, pad=3)                 # conv + IN + ReLU (fused)
    w, b = params["down1"]
    x = _conv_down(x, w, b)                                # stride-2 conv + IN + ReLU
    w, b = params["down2"]
    x = _conv_down(x, w, b)
    for (w1, b1), (w2, b2) in params["res"]:               # ResBlocks
        h = _conv_std(x, w1, b1, ksize=3, pad=1)           # conv1 + IN + ReLU
        x = _conv_std(h, w2, b2, ksize=3, pad=1, relu=False,
                      residual=x)                          # conv2 + IN + skip (fused)
    w, b = params["up1"]
    x = _conv_up(x, w, b)                                  # convT + IN + ReLU
    w, b = params["up2"]
    x = _conv_up(x, w, b)
    w, b = params["last"]
    x = _conv_std(x, w, b, ksize=7, pad=3, mode="tanh", relu=False,
                  out_dtype=jnp.float32)
    return x


if __name__ == "__main__":
    key = jax.random.PRNGKey(0)
    k_param, k_x = jax.random.split(key)
    # small config: input_nc=3, scale=8, resnet_layers=2, batch=2, 16x16 images
    params = init_params(k_param, input_nc=3, scale=8, resnet_layers=2)
    x = jax.random.normal(k_x, (2, 3, 16, 16), jnp.float32)

    fwd = jax.jit(cyclegan_generator_forward)
    out = jax.block_until_ready(fwd(params, x))
    assert out.shape == (2, 3, 16, 16)
    assert out.dtype == jnp.float32
    assert bool(jnp.all(jnp.isfinite(out)))
    assert bool(jnp.all(jnp.abs(out) <= 1.0 + 1e-6))  # tanh range
    print("KERNEL_OK")
</pallas_src>

<mosaic_0001>
module attributes {stable_mosaic.version = 11 : i64} {
  func.func @kernel(%arg0: i32, %arg1: memref<1x8x522xbf16, #tpu.memory_space<vmem>>, %arg2: memref<8x392xbf16, #tpu.memory_space<vmem>>, %arg3: memref<8x1xf32, #tpu.memory_space<vmem>>, %arg4: memref<1x8x384xbf16, #tpu.memory_space<vmem>>, %arg5: memref<392x384xbf16, #tpu.memory_space<vmem>>) attributes {dimension_semantics = [#tpu.dimension_semantics<parallel>], iteration_bounds = array<i64: 2>, scalar_prefetch = 0 : i64, scratch_operands = 1 : i64, tpu.core_type = #tpu.core_type<tc>, window_params = [{transform_indices = @transform_0, window_bounds = array<i64: 1, 8, 522>}, {pipeline_mode = #tpu.pipeline_mode<synchronous>, transform_indices = @transform_1, window_bounds = array<i64: 8, 392>}, {pipeline_mode = #tpu.pipeline_mode<synchronous>, transform_indices = @transform_2, window_bounds = array<i64: 8, 1>}, {transform_indices = @transform_3, window_bounds = array<i64: 1, 8, 384>}]} {
    %c0 = arith.constant 0 : index
    %c0_0 = arith.constant 0 : index
    %c0_1 = arith.constant 0 : index
    %0 = vector.load %arg1[%c0, %c0_0, %c0_1] : memref<1x8x522xbf16, #tpu.memory_space<vmem>>, vector<1x8x384xbf16>
    %1 = vector.shape_cast %0 : vector<1x8x384xbf16> to vector<8x384xbf16>
    %c0_2 = arith.constant 0 : index
    %c0_3 = arith.constant 0 : index
    %2 = vector.load %arg5[%c0_2, %c0_3] : memref<392x384xbf16, #tpu.memory_space<vmem>>, vector<8x384xbf16>
    tpu.vector_store %arg5[%c0_2, %c0_3], %1 {strides = array<i32>} : memref<392x384xbf16, #tpu.memory_space<vmem>>, vector<8x384xbf16>,
    %c0_4 = arith.constant 0 : index
    %c0_5 = arith.constant 0 : index
    %c1 = arith.constant 1 : index
    %3 = vector.load %arg1[%c0_4, %c0_5, %c1] : memref<1x8x522xbf16, #tpu.memory_space<vmem>>, vector<1x8x384xbf16>
    %4 = vector.shape_cast %3 : vector<1x8x384xbf16> to vector<8x384xbf16>
    %c8 = arith.constant 8 : index
    %c0_6 = arith.constant 0 : index
    %5 = vector.load %arg5[%c8, %c0_6] : memref<392x384xbf16, #tpu.memory_space<vmem>>, vector<8x384xbf16>
    tpu.vector_store %arg5[%c8, %c0_6], %4 {strides = array<i32>} : memref<392x384xbf16, #tpu.memory_space<vmem>>, vector<8x384xbf16>,
    %c0_7 = arith.constant 0 : index
    %c0_8 = arith.constant 0 : index
    %c2 = arith.constant 2 : index
    %6 = vector.load %arg1[%c0_7, %c0_8, %c2] : memref<1x8x522xbf16, #tpu.memory_space<vmem>>, vector<1x8x384xbf16>
    %7 = vector.shape_cast %6 : vector<1x8x384xbf16> to vector<8x384xbf16>
    %c16 = arith.constant 16 : index
    %c0_9 = arith.constant 0 : index
    %8 = vector.load %arg5[%c16, %c0_9] : memref<392x384xbf16, #tpu.memory_space<vmem>>, vector<8x384xbf16>
    tpu.vector_store %arg5[%c16, %c0_9], %7 {strides = array<i32>} : memref<392x384xbf16, #tpu.memory_space<vmem>>, vector<8x384xbf16>,
    %c0_10 = arith.constant 0 : index
    %c0_11 = arith.constant 0 : index
    %c3 = arith.constant 3 : index
    %9 = vector.load %arg1[%c0_10, %c0_11, %c3] : memref<1x8x522xbf16, #tpu.memory_space<vmem>>, vector<1x8x384xbf16>
    %10 = vector.shape_cast %9 : vector<1x8x384xbf16> to vector<8x384xbf16>
    %c24 = arith.constant 24 : index
    %c0_12 = arith.constant 0 : index
    %11 = vector.load %arg5[%c24, %c0_12] : memref<392x384xbf16, #tpu.memory_space<vmem>>, vector<8x384xbf16>
    tpu.vector_store %arg5[%c24, %c0_12], %10 {strides = array<i32>} : memref<392x384xbf16, #tpu.memory_space<vmem>>, vector<8x384xbf16>,
    %c0_13 = arith.constant 0 : index
    %c0_14 = arith.constant 0 : index
    %c4 = arith.constant 4 : index
    %12 = vector.load %arg1[%c0_13, %c0_14, %c4] : memref<1x8x522xbf16, #tpu.memory_space<vmem>>, vector<1x8x384xbf16>
    %13 = vector.shape_cast %12 : vector<1x8x384xbf16> to vector<8x384xbf16>
    %c32 = arith.constant 32 : index
    %c0_15 = arith.constant 0 : index
    %14 = vector.load %arg5[%c32, %c0_15] : memref<392x384xbf16, #tpu.memory_space<vmem>>, vector<8x384xbf16>
    tpu.vector_store %arg5[%c32, %c0_15], %13 {strides = array<i32>} : memref<392x384xbf16, #tpu.memory_space<vmem>>, vector<8x384xbf16>,
    %c0_16 = arith.constant 0 : index
    %c0_17 = arith.constant 0 : index
    %c5 = arith.constant 5 : index
    %15 = vector.load %arg1[%c0_16, %c0_17, %c5] : memref<1x8x522xbf16, #tpu.memory_space<vmem>>, vector<1x8x384xbf16>
    %16 = vector.shape_cast %15 : vector<1x8x384xbf16> to vector<8x384xbf16>
    %c40 = arith.constant 40 : index
    %c0_18 = arith.constant 0 : index
    %17 = vector.load %arg5[%c40, %c0_18] : memref<392x384xbf16, #tpu.memory_space<vmem>>, vector<8x384xbf16>
    tpu.vector_store %arg5[%c40, %c0_18], %16 {strides = array<i32>} : memref<392x384xbf16, #tpu.memory_space<vmem>>, vector<8x384xbf16>,
    %c0_19 = arith.constant 0 : index
    %c0_20 = arith.constant 0 : index
    %c6 = arith.constant 6 : index
    %18 = vector.load %arg1[%c0_19, %c0_20, %c6] : memref<1x8x522xbf16, #tpu.memory_space<vmem>>, vector<1x8x384xbf16>
    %19 = vector.shape_cast %18 : vector<1x8x384xbf16> to vector<8x384xbf16>
    %c48 = arith.constant 48 : index
    %c0_21 = arith.constant 0 : index
    %20 = vector.load %arg5[%c48, %c0_21] : memref<392x384xbf16, #tpu.memory_space<vmem>>, vector<8x384xbf16>
    tpu.vector_store %arg5[%c48, %c0_21], %19 {strides = array<i32>} : memref<392x384xbf16, #tpu.memory_space<vmem>>, vector<8x384xbf16>,
    %c0_22 = arith.constant 0 : index
    %c0_23 = arith.constant 0 : index
    %c22 = arith.constant 22 : index
    %21 = vector.load %arg1[%c0_22, %c0_23, %c22] : memref<1x8x522xbf16, #tpu.memory_space<vmem>>, vector<1x8x384xbf16>
    %22 = vector.shape_cast %21 : vector<1x8x384xbf16> to vector<8x384xbf16>
    %c56 = arith.constant 56 : index
    %c0_24 = arith.constant 0 : index
    %23 = vector.load %arg5[%c56, %c0_24] : memref<392x384xbf16, #tpu.memory_space<vmem>>, vector<8x384xbf16>
    tpu.vector_store %arg5[%c56, %c0_24], %22 {strides = array<i32>} : memref<392x384xbf16, #tpu.memory_space<vmem>>, vector<8x384xbf16>,
    %c0_25 = arith.constant 0 : index
    %c0_26 = arith.constant 0 : index
    %c23 = arith.constant 23 : index
    %24 = vector.load %arg1[%c0_25, %c0_26, %c23] : memref<1x8x522xbf16, #tpu.memory_space<vmem>>, vector<1x8x384xbf16>
    %25 = vector.shape_cast %24 : vector<1x8x384xbf16> to vector<8x384xbf16>
    %c64 = arith.constant 64 : index
    %c0_27 = arith.constant 0 : index
    %26 = vector.load %arg5[%c64, %c0_27] : memref<392x384xbf16, #tpu.memory_space<vmem>>, vector<8x384xbf16>
    tpu.vector_store %arg5[%c64, %c0_27], %25 {strides = array<i32>} : memref<392x384xbf16, #tpu.memory_space<vmem>>, vector<8x384xbf16>,
    %c0_28 = arith.constant 0 : index
    %c0_29 = arith.constant 0 : index
    %c24_30 = arith.constant 24 : index
    %27 = vector.load %arg1[%c0_28, %c0_29, %c24_30] : memref<1x8x522xbf16, #tpu.memory_space<vmem>>, vector<1x8x384xbf16>
    %28 = vector.shape_cast %27 : vector<1x8x384xbf16> to vector<8x384xbf16>
    %c72 = arith.constant 72 : index
    %c0_31 = arith.constant 0 : index
    %29 = vector.load %arg5[%c72, %c0_31] : memref<392x384xbf16, #tpu.memory_space<vmem>>, vector<8x384xbf16>
    tpu.vector_store %arg5[%c72, %c0_31], %28 {strides = array<i32>} : memref<392x384xbf16, #tpu.memory_space<vmem>>, vector<8x384xbf16>,
    %c0_32 = arith.constant 0 : index
    %c0_33 = arith.constant 0 : index
    %c25 = arith.constant 25 : index
    %30 = vector.load %arg1[%c0_32, %c0_33, %c25] : memref<1x8x522xbf16, #tpu.memory_space<vmem>>, vector<1x8x384xbf16>
    %31 = vector.shape_cast %30 : vector<1x8x384xbf16> to vector<8x384xbf16>
    %c80 = arith.constant 80 : index
    %c0_34 = arith.constant 0 : index
    %32 = vector.load %arg5[%c80, %c0_34] : memref<392x384xbf16, #tpu.memory_space<vmem>>, vector<8x384xbf16>
    tpu.vector_store %arg5[%c80, %c0_34], %31 {strides = array<i32>} : memref<392x384xbf16, #tpu.memory_space<vmem>>, vector<8x384xbf16>,
    %c0_35 = arith.constant 0 : index
    %c0_36 = arith.constant 0 : index
    %c26 = arith.constant 26 : index
    %33 = vector.load %arg1[%c0_35, %c0_36, %c26] : memref<1x8x522xbf16, #tpu.memory_space<vmem>>, vector<1x8x384xbf16>
    %34 = vector.shape_cast %33 : vector<1x8x384xbf16> to vector<8x384xbf16>
    %c88 = arith.constant 88 : index
    %c0_37 = arith.constant 0 : index
    %35 = vector.load %arg5[%c88, %c0_37] : memref<392x384xbf16, #tpu.memory_space<vmem>>, vector<8x384xbf16>
    tpu.vector_store %arg5[%c88, %c0_37], %34 {strides = array<i32>} : memref<392x384xbf16, #tpu.memory_space<vmem>>, vector<8x384xbf16>,
    %c0_38 = arith.constant 0 : index
    %c0_39 = arith.constant 0 : index
    %c27 = arith.constant 27 : index
    %36 = vector.load %arg1[%c0_38, %c0_39, %c27] : memref<1x8x522xbf16, #tpu.memory_space<vmem>>, vector<1x8x384xbf16>
    %37 = vector.shape_cast %36 : vector<1x8x384xbf16> to vector<8x384xbf16>
    %c96 = arith.constant 96 : index
    %c0_40 = arith.constant 0 : index
    %38 = vector.load %arg5[%c96, %c0_40] : memref<392x384xbf16, #tpu.memory_space<vmem>>, vector<8x384xbf16>
    tpu.vector_store %arg5[%c96, %c0_40], %37 {strides = array<i32>} : memref<392x384xbf16, #tpu.memory_space<vmem>>, vector<8x384xbf16>,
    %c0_41 = arith.constant 0 : index
    %c0_42 = arith.constant 0 : index
    %c28 = arith.constant 28 : index
    %39 = vector.load %arg1[%c0_41, %c0_42, %c28] : memref<1x8x522xbf16, #tpu.memory_space<vmem>>, vector<1x8x384xbf16>
    %40 = vector.shape_cast %39 : vector<1x8x384xbf16> to vector<8x384xbf16>
    %c104 = arith.constant 104 : index
    %c0_43 = arith.constant 0 : index
    %41 = vector.load %arg5[%c104, %c0_43] : memref<392x384xbf16, #tpu.memory_space<vmem>>, vector<8x384xbf16>
    tpu.vector_store %arg5[%c104, %c0_43], %40 {strides = array<i32>} : memref<392x384xbf16, #tpu.memory_space<vmem>>, vector<8x384xbf16>,
    %c0_44 = arith.constant 0 : index
    %c0_45 = arith.constant 0 : index
    %c44 = arith.constant 44 : index
    %42 = vector.load %arg1[%c0_44, %c0_45, %c44] : memref<1x8x522xbf16, #tpu.memory_space<vmem>>, vector<1x8x384xbf16>
    %43 = vector.shape_cast %42 : vector<1x8x384xbf16> to vector<8x384xbf16>
    %c112 = arith.constant 112 : index
    %c0_46 = arith.constant 0 : index
    %44 = vector.load %arg5[%c112, %c0_46] : memref<392x384xbf16, #tpu.memory_space<vmem>>, vector<8x384xbf16>
    tpu.vector_store %arg5[%c112, %c0_46], %43 {strides = array<i32>} : memref<392x384xbf16, #tpu.memory_space<vmem>>, vector<8x384xbf16>,
    %c0_47 = arith.constant 0 : index
    %c0_48 = arith.constant 0 : index
    %c45 = arith.constant 45 : index
    %45 = vector.load %arg1[%c0_47, %c0_48, %c45] : memref<1x8x522xbf16, #tpu.memory_space<vmem>>, vector<1x8x384xbf16>
    %46 = vector.shape_cast %45 : vector<1x8x384xbf16> to vector<8x384xbf16>
    %c120 = arith.constant 120 : index
    %c0_49 = arith.constant 0 : index
    %47 = vector.load %arg5[%c120, %c0_49] : memref<392x384xbf16, #tpu.memory_space<vmem>>, vector<8x384xbf16>
    tpu.vector_store %arg5[%c120, %c0_49], %46 {strides = array<i32>} : memref<392x384xbf16, #tpu.memory_space<vmem>>, vector<8x384xbf16>,
    %c0_50 = arith.constant 0 : index
    %c0_51 = arith.constant 0 : index
    %c46 = arith.constant 46 : index
    %48 = vector.load %arg1[%c0_50, %c0_51, %c46] : memref<1x8x522xbf16, #tpu.memory_space<vmem>>, vector<1x8x384xbf16>
    %49 = vector.shape_cast %48 : vector<1x8x384xbf16> to vector<8x384xbf16>
    %c128 = arith.constant 128 : index
    %c0_52 = arith.constant 0 : index
    %50 = vector.load %arg5[%c128, %c0_52] : memref<392x384xbf16, #tpu.memory_space<vmem>>, vector<8x384xbf16>
    tpu.vector_store %arg5[%c128, %c0_52], %49 {strides = array<i32>} : memref<392x384xbf16, #tpu.memory_space<vmem>>, vector<8x384xbf16>,
    %c0_53 = arith.constant 0 : index
    %c0_54 = arith.constant 0 : index
    %c47 = arith.constant 47 : index
    %51 = vector.load %arg1[%c0_53, %c0_54, %c47] : memref<1x8x522xbf16, #tpu.memory_space<vmem>>, vector<1x8x384xbf16>
    %52 = vector.shape_cast %51 : vector<1x8x384xbf16> to vector<8x384xbf16>
    %c136 = arith.constant 136 : index
    %c0_55 = arith.constant 0 : index
    %53 = vector.load %arg5[%c136, %c0_55] : memref<392x384xbf16, #tpu.memory_space<vmem>>, vector<8x384xbf16>
    tpu.vector_store %arg5[%c136, %c0_55], %52 {strides = array<i32>} : memref<392x384xbf16, #tpu.memory_space<vmem>>, vector<8x384xbf16>,
    %c0_56 = arith.constant 0 : index
    %c0_57 = arith.constant 0 : index
    %c48_58 = arith.constant 48 : index
    %54 = vector.load %arg1[%c0_56, %c0_57, %c48_58] : memref<1x8x522xbf16, #tpu.memory_space<vmem>>, vector<1x8x384xbf16>
    %55 = vector.shape_cast %54 : vector<1x8x384xbf16> to vector<8x384xbf16>
    %c144 = arith.constant 144 : index
    %c0_59 = arith.constant 0 : index
    %56 = vector.load %arg5[%c144, %c0_59] : memref<392x384xbf16, #tpu.memory_space<vmem>>, vector<8x384xbf16>
    tpu.vector_store %arg5[%c144, %c0_59], %55 {strides = array<i32>} : memref<392x384xbf16, #tpu.memory_space<vmem>>, vector<8x384xbf16>,
    %c0_60 = arith.constant 0 : index
    %c0_61 = arith.constant 0 : index
    %c49 = arith.constant 49 : index
    %57 = vector.load %arg1[%c0_60, %c0_61, %c49] : memref<1x8x522xbf16, #tpu.memory_space<vmem>>, vector<1x8x384xbf16>
    %58 = vector.shape_cast %57 : vector<1x8x384xbf16> to vector<8x384xbf16>
    %c152 = arith.constant 152 : index
    %c0_62 = arith.constant 0 : index
    %59 = vector.load %arg5[%c152, %c0_62] : memref<392x384xbf16, #tpu.memory_space<vmem>>, vector<8x384xbf16>
    tpu.vector_store %arg5[%c152, %c0_62], %58 {strides = array<i32>} : memref<392x384xbf16, #tpu.memory_space<vmem>>, vector<8x384xbf16>,
    %c0_63 = arith.constant 0 : index
    %c0_64 = arith.constant 0 : index
    %c50 = arith.constant 50 : index
    %60 = vector.load %arg1[%c0_63, %c0_64, %c50] : memref<1x8x522xbf16, #tpu.memory_space<vmem>>, vector<1x8x384xbf16>
    %61 = vector.shape_cast %60 : vector<1x8x384xbf16> to vector<8x384xbf16>
    %c160 = arith.constant 160 : index
    %c0_65 = arith.constant 0 : index
    %62 = vector.load %arg5[%c160, %c0_65] : memref<392x384xbf16, #tpu.memory_space<vmem>>, vector<8x384xbf16>
    tpu.vector_store %arg5[%c160, %c0_65], %61 {strides = array<i32>} : memref<392x384xbf16, #tpu.memory_space<vmem>>, vector<8x384xbf16>,
    %c0_66 = arith.constant 0 : index
    %c0_67 = arith.constant 0 : index
    %c66 = arith.constant 66 : index
    %63 = vector.load %arg1[%c0_66, %c0_67, %c66] : memref<1x8x522xbf16, #tpu.memory_space<vmem>>, vector<1x8x384xbf16>
    %64 = vector.shape_cast %63 : vector<1x8x384xbf16> to vector<8x384xbf16>
    %c168 = arith.constant 168 : index
    %c0_68 = arith.constant 0 : index
    %65 = vector.load %arg5[%c168, %c0_68] : memref<392x384xbf16, #tpu.memory_space<vmem>>, vector<8x384xbf16>
    tpu.vector_store %arg5[%c168, %c0_68], %64 {strides = array<i32>} : memref<392x384xbf16, #tpu.memory_space<vmem>>, vector<8x384xbf16>,
    %c0_69 = arith.constant 0 : index
    %c0_70 = arith.constant 0 : index
    %c67 = arith.constant 67 : index
    %66 = vector.load %arg1[%c0_69, %c0_70, %c67] : memref<1x8x522xbf16, #tpu.memory_space<vmem>>, vector<1x8x384xbf16>
    %67 = vector.shape_cast %66 : vector<1x8x384xbf16> to vector<8x384xbf16>
    %c176 = arith.constant 176 : index
    %c0_71 = arith.constant 0 : index
    %68 = vector.load %arg5[%c176, %c0_71] : memref<392x384xbf16, #tpu.memory_space<vmem>>, vector<8x384xbf16>
    tpu.vector_store %arg5[%c176, %c0_71], %67 {strides = array<i32>} : memref<392x384xbf16, #tpu.memory_space<vmem>>, vector<8x384xbf16>,
    %c0_72 = arith.constant 0 : index
    %c0_73 = arith.constant 0 : index
    %c68 = arith.constant 68 : index
    %69 = vector.load %arg1[%c0_72, %c0_73, %c68] : memref<1x8x522xbf16, #tpu.memory_space<vmem>>, vector<1x8x384xbf16>
    %70 = vector.shape_cast %69 : vector<1x8x384xbf16> to vector<8x384xbf16>
    %c184 = arith.constant 184 : index
    %c0_74 = arith.constant 0 : index
    %71 = vector.load %arg5[%c184, %c0_74] : memref<392x384xbf16, #tpu.memory_space<vmem>>, vector<8x384xbf16>
    tpu.vector_store %arg5[%c184, %c0_74], %70 {strides = array<i32>} : memref<392x384xbf16, #tpu.memory_space<vmem>>, vector<8x384xbf16>,
    %c0_75 = arith.constant 0 : index
    %c0_76 = arith.constant 0 : index
    %c69 = arith.constant 69 : index
    %72 = vector.load %arg1[%c0_75, %c0_76, %c69] : memref<1x8x522xbf16, #tpu.memory_space<vmem>>, vector<1x8x384xbf16>
    %73 = vector.shape_cast %72 : vector<1x8x384xbf16> to vector<8x384xbf16>
    %c192 = arith.constant 192 : index
    %c0_77 = arith.constant 0 : index
    %74 = vector.load %arg5[%c192, %c0_77] : memref<392x384xbf16, #tpu.memory_space<vmem>>, vector<8x384xbf16>
    tpu.vector_store %arg5[%c192, %c0_77], %73 {strides = array<i32>} : memref<392x384xbf16, #tpu.memory_space<vmem>>, vector<8x384xbf16>,
    %c0_78 = arith.constant 0 : index
    %c0_79 = arith.constant 0 : index
    %c70 = arith.constant 70 : index
    %75 = vector.load %arg1[%c0_78, %c0_79, %c70] : memref<1x8x522xbf16, #tpu.memory_space<vmem>>, vector<1x8x384xbf16>
    %76 = vector.shape_cast %75 : vector<1x8x384xbf16> to vector<8x384xbf16>
    %c200 = arith.constant 200 : index
    %c0_80 = arith.constant 0 : index
    %77 = vector.load %arg5[%c200, %c0_80] : memref<392x384xbf16, #tpu.memory_space<vmem>>, vector<8x384xbf16>
    tpu.vector_store %arg5[%c200, %c0_80], %76 {strides = array<i32>} : memref<392x384xbf16, #tpu.memory_space<vmem>>, vector<8x384xbf16>,
    %c0_81 = arith.constant 0 : index
    %c0_82 = arith.constant 0 : index
    %c71 = arith.constant 71 : index
    %78 = vector.load %arg1[%c0_81, %c0_82, %c71] : memref<1x8x522xbf16, #tpu.memory_space<vmem>>, vector<1x8x384xbf16>
    %79 = vector.shape_cast %78 : vector<1x8x384xbf16> to vector<8x384xbf16>
    %c208 = arith.constant 208 : index
    %c0_83 = arith.constant 0 : index
    %80 = vector.load %arg5[%c208, %c0_83] : memref<392x384xbf16, #tpu.memory_space<vmem>>, vector<8x384xbf16>
    tpu.vector_store %arg5[%c208, %c0_83], %79 {strides = array<i32>} : memref<392x384xbf16, #tpu.memory_space<vmem>>, vector<8x384xbf16>,
    %c0_84 = arith.constant 0 : index
    %c0_85 = arith.constant 0 : index
    %c72_86 = arith.constant 72 : index
    %81 = vector.load %arg1[%c0_84, %c0_85, %c72_86] : memref<1x8x522xbf16, #tpu.memory_space<vmem>>, vector<1x8x384xbf16>
    %82 = vector.shape_cast %81 : vector<1x8x384xbf16> to vector<8x384xbf16>
    %c216 = arith.constant 216 : index
    %c0_87 = arith.constant 0 : index
    %83 = vector.load %arg5[%c216, %c0_87] : memref<392x384xbf16, #tpu.memory_space<vmem>>, vector<8x384xbf16>
    tpu.vector_store %arg5[%c216, %c0_87], %82 {strides = array<i32>} : memref<392x384xbf16, #tpu.memory_space<vmem>>, vector<8x384xbf16>,
    %c0_88 = arith.constant 0 : index
    %c0_89 = arith.constant 0 : index
    %c88_90 = arith.constant 88 : index
    %84 = vector.load %arg1[%c0_88, %c0_89, %c88_90] : memref<1x8x522xbf16, #tpu.memory_space<vmem>>, vector<1x8x384xbf16>
    %85 = vector.shape_cast %84 : vector<1x8x384xbf16> to vector<8x384xbf16>
    %c224 = arith.constant 224 : index
    %c0_91 = arith.constant 0 : index
    %86 = vector.load %arg5[%c224, %c0_91] : memref<392x384xbf16, #tpu.memory_space<vmem>>, vector<8x384xbf16>
    tpu.vector_store %arg5[%c224, %c0_91], %85 {strides = array<i32>} : memref<392x384xbf16, #tpu.memory_space<vmem>>, vector<8x384xbf16>,
    %c0_92 = arith.constant 0 : index
    %c0_93 = arith.constant 0 : index
    %c89 = arith.constant 89 : index
    %87 = vector.load %arg1[%c0_92, %c0_93, %c89] : memref<1x8x522xbf16, #tpu.memory_space<vmem>>, vector<1x8x384xbf16>
    %88 = vector.shape_cast %87 : vector<1x8x384xbf16> to vector<8x384xbf16>
    %c232 = arith.constant 232 : index
    %c0_94 = arith.constant 0 : index
    %89 = vector.load %arg5[%c232, %c0_94] : memref<392x384xbf16, #tpu.memory_space<vmem>>, vector<8x384xbf16>
    tpu.vector_store %arg5[%c232, %c0_94], %88 {strides = array<i32>} : memref<392x384xbf16, #tpu.memory_space<vmem>>, vector<8x384xbf16>,
    %c0_95 = arith.constant 0 : index
    %c0_96 = arith.constant 0 : index
    %c90 = arith.constant 90 : index
    %90 = vector.load %arg1[%c0_95, %c0_96, %c90] : memref<1x8x522xbf16, #tpu.memory_space<vmem>>, vector<1x8x384xbf16>
    %91 = vector.shape_cast %90 : vector<1x8x384xbf16> to vector<8x384xbf16>
    %c240 = arith.constant 240 : index
    %c0_97 = arith.constant 0 : index
    %92 = vector.load %arg5[%c240, %c0_97] : memref<392x384xbf16, #tpu.memory_space<vmem>>, vector<8x384xbf16>
    tpu.vector_store %arg5[%c240, %c0_97], %91 {strides = array<i32>} : memref<392x384xbf16, #tpu.memory_space<vmem>>, vector<8x384xbf16>,
    %c0_98 = arith.constant 0 : index
    %c0_99 = arith.constant 0 : index
    %c91 = arith.constant 91 : index
    %93 = vector.load %arg1[%c0_98, %c0_99, %c91] : memref<1x8x522xbf16, #tpu.memory_space<vmem>>, vector<1x8x384xbf16>
    %94 = vector.shape_cast %93 : vector<1x8x384xbf16> to vector<8x384xbf16>
    %c248 = arith.constant 248 : index
    %c0_100 = arith.constant 0 : index
    %95 = vector.load %arg5[%c248, %c0_100] : memref<392x384xbf16, #tpu.memory_space<vmem>>, vector<8x384xbf16>
    tpu.vector_store %arg5[%c248, %c0_100], %94 {strides = array<i32>} : memref<392x384xbf16, #tpu.memory_space<vmem>>, vector<8x384xbf16>,
    %c0_101 = arith.constant 0 : index
    %c0_102 = arith.constant 0 : index
    %c92 = arith.constant 92 : index
    %96 = vector.load %arg1[%c0_101, %c0_102, %c92] : memref<1x8x522xbf16, #tpu.memory_space<vmem>>, vector<1x8x384xbf16>
    %97 = vector.shape_cast %96 : vector<1x8x384xbf16> to vector<8x384xbf16>
    %c256 = arith.constant 256 : index
    %c0_103 = arith.constant 0 : index
    %98 = vector.load %arg5[%c256, %c0_103] : memref<392x384xbf16, #tpu.memory_space<vmem>>, vector<8x384xbf16>
    tpu.vector_store %arg5[%c256, %c0_103], %97 {strides = array<i32>} : memref<392x384xbf16, #tpu.memory_space<vmem>>, vector<8x384xbf16>,
    %c0_104 = arith.constant 0 : index
    %c0_105 = arith.constant 0 : index
    %c93 = arith.constant 93 : index
    %99 = vector.load %arg1[%c0_104, %c0_105, %c93] : memref<1x8x522xbf16, #tpu.memory_space<vmem>>, vector<1x8x384xbf16>
    %100 = vector.shape_cast %99 : vector<1x8x384xbf16> to vector<8x384xbf16>
    %c264 = arith.constant 264 : index
    %c0_106 = arith.constant 0 : index
    %101 = vector.load %arg5[%c264, %c0_106] : memref<392x384xbf16, #tpu.memory_space<vmem>>, vector<8x384xbf16>
    tpu.vector_store %arg5[%c264, %c0_106], %100 {strides = array<i32>} : memref<392x384xbf16, #tpu.memory_space<vmem>>, vector<8x384xbf16>,
    %c0_107 = arith.constant 0 : index
    %c0_108 = arith.constant 0 : index
    %c94 = arith.constant 94 : index
    %102 = vector.load %arg1[%c0_107, %c0_108, %c94] : memref<1x8x522xbf16, #tpu.memory_space<vmem>>, vector<1x8x384xbf16>
    %103 = vector.shape_cast %102 : vector<1x8x384xbf16> to vector<8x384xbf16>
    %c272 = arith.constant 272 : index
    %c0_109 = arith.constant 0 : index
    %104 = vector.load %arg5[%c272, %c0_109] : memref<392x384xbf16, #tpu.memory_space<vmem>>, vector<8x384xbf16>
    tpu.vector_store %arg5[%c272, %c0_109], %103 {strides = array<i32>} : memref<392x384xbf16, #tpu.memory_space<vmem>>, vector<8x384xbf16>,
    %c0_110 = arith.constant 0 : index
    %c0_111 = arith.constant 0 : index
    %c110 = arith.constant 110 : index
    %105 = vector.load %arg1[%c0_110, %c0_111, %c110] : memref<1x8x522xbf16, #tpu.memory_space<vmem>>, vector<1x8x384xbf16>
    %106 = vector.shape_cast %105 : vector<1x8x384xbf16> to vector<8x384xbf16>
    %c280 = arith.constant 280 : index
    %c0_112 = arith.constant 0 : index
    %107 = vector.load %arg5[%c280, %c0_112] : memref<392x384xbf16, #tpu.memory_space<vmem>>, vector<8x384xbf16>
    tpu.vector_store %arg5[%c280, %c0_112], %106 {strides = array<i32>} : memref<392x384xbf16, #tpu.memory_space<vmem>>, vector<8x384xbf16>,
    %c0_113 = arith.constant 0 : index
    %c0_114 = arith.constant 0 : index
    %c111 = arith.constant 111 : index
    %108 = vector.load %arg1[%c0_113, %c0_114, %c111] : memref<1x8x522xbf16, #tpu.memory_space<vmem>>, vector<1x8x384xbf16>
    %109 = vector.shape_cast %108 : vector<1x8x384xbf16> to vector<8x384xbf16>
    %c288 = arith.constant 288 : index
    %c0_115 = arith.constant 0 : index
    %110 = vector.load %arg5[%c288, %c0_115] : memref<392x384xbf16, #tpu.memory_space<vmem>>, vector<8x384xbf16>
    tpu.vector_store %arg5[%c288, %c0_115], %109 {strides = array<i32>} : memref<392x384xbf16, #tpu.memory_space<vmem>>, vector<8x384xbf16>,
    %c0_116 = arith.constant 0 : index
    %c0_117 = arith.constant 0 : index
    %c112_118 = arith.constant 112 : index
    %111 = vector.load %arg1[%c0_116, %c0_117, %c112_118] : memref<1x8x522xbf16, #tpu.memory_space<vmem>>, vector<1x8x384xbf16>
    %112 = vector.shape_cast %111 : vector<1x8x384xbf16> to vector<8x384xbf16>
    %c296 = arith.constant 296 : index
    %c0_119 = arith.constant 0 : index
    %113 = vector.load %arg5[%c296, %c0_119] : memref<392x384xbf16, #tpu.memory_space<vmem>>, vector<8x384xbf16>
    tpu.vector_store %arg5[%c296, %c0_119], %112 {strides = array<i32>} : memref<392x384xbf16, #tpu.memory_space<vmem>>, vector<8x384xbf16>,
    %c0_120 = arith.constant 0 : index
    %c0_121 = arith.constant 0 : index
    %c113 = arith.constant 113 : index
    %114 = vector.load %arg1[%c0_120, %c0_121, %c113] : memref<1x8x522xbf16, #tpu.memory_space<vmem>>, vector<1x8x384xbf16>
    %115 = vector.shape_cast %114 : vector<1x8x384xbf16> to vector<8x384xbf16>
    %c304 = arith.constant 304 : index
    %c0_122 = arith.constant 0 : index
    %116 = vector.load %arg5[%c304, %c0_122] : memref<392x384xbf16, #tpu.memory_space<vmem>>, vector<8x384xbf16>
    tpu.vector_store %arg5[%c304, %c0_122], %115 {strides = array<i32>} : memref<392x384xbf16, #tpu.memory_space<vmem>>, vector<8x384xbf16>,
    %c0_123 = arith.constant 0 : index
    %c0_124 = arith.constant 0 : index
    %c114 = arith.constant 114 : index
    %117 = vector.load %arg1[%c0_123, %c0_124, %c114] : memref<1x8x522xbf16, #tpu.memory_space<vmem>>, vector<1x8x384xbf16>
    %118 = vector.shape_cast %117 : vector<1x8x384xbf16> to vector<8x384xbf16>
    %c312 = arith.constant 312 : index
    %c0_125 = arith.constant 0 : index
    %119 = vector.load %arg5[%c312, %c0_125] : memref<392x384xbf16, #tpu.memory_space<vmem>>, vector<8x384xbf16>
    tpu.vector_store %arg5[%c312, %c0_125], %118 {strides = array<i32>} : memref<392x384xbf16, #tpu.memory_space<vmem>>, vector<8x384xbf16>,
    %c0_126 = arith.constant 0 : index
    %c0_127 = arith.constant 0 : index
    %c115 = arith.constant 115 : index
    %120 = vector.load %arg1[%c0_126, %c0_127, %c115] : memref<1x8x522xbf16, #tpu.memory_space<vmem>>, vector<1x8x384xbf16>
    %121 = vector.shape_cast %120 : vector<1x8x384xbf16> to vector<8x384xbf16>
    %c320 = arith.constant 320 : index
    %c0_128 = arith.constant 0 : index
    %122 = vector.load %arg5[%c320, %c0_128] : memref<392x384xbf16, #tpu.memory_space<vmem>>, vector<8x384xbf16>
    tpu.vector_store %arg5[%c320, %c0_128], %121 {strides = array<i32>} : memref<392x384xbf16, #tpu.memory_space<vmem>>, vector<8x384xbf16>,
    %c0_129 = arith.constant 0 : index
    %c0_130 = arith.constant 0 : index
    %c116 = arith.constant 116 : index
    %123 = vector.load %arg1[%c0_129, %c0_130, %c116] : memref<1x8x522xbf16, #tpu.memory_space<vmem>>, vector<1x8x384xbf16>
    %124 = vector.shape_cast %123 : vector<1x8x384xbf16> to vector<8x384xbf16>
    %c328 = arith.constant 328 : index
    %c0_131 = arith.constant 0 : index
    %125 = vector.load %arg5[%c328, %c0_131] : memref<392x384xbf16, #tpu.memory_space<vmem>>, vector<8x384xbf16>
    tpu.vector_store %arg5[%c328, %c0_131], %124 {strides = array<i32>} : memref<392x384xbf16, #tpu.memory_space<vmem>>, vector<8x384xbf16>,
    %c0_132 = arith.constant 0 : index
    %c0_133 = arith.constant 0 : index
    %c132 = arith.constant 132 : index
    %126 = vector.load %arg1[%c0_132, %c0_133, %c132] : memref<1x8x522xbf16, #tpu.memory_space<vmem>>, vector<1x8x384xbf16>
    %127 = vector.shape_cast %126 : vector<1x8x384xbf16> to vector<8x384xbf16>
    %c336 = arith.constant 336 : index
    %c0_134 = arith.constant 0 : index
    %128 = vector.load %arg5[%c336, %c0_134] : memref<392x384xbf16, #tpu.memory_space<vmem>>, vector<8x384xbf16>
    tpu.vector_store %arg5[%c336, %c0_134], %127 {strides = array<i32>} : memref<392x384xbf16, #tpu.memory_space<vmem>>, vector<8x384xbf16>,
    %c0_135 = arith.constant 0 : index
    %c0_136 = arith.constant 0 : index
    %c133 = arith.constant 133 : index
    %129 = vector.load %arg1[%c0_135, %c0_136, %c133] : memref<1x8x522xbf16, #tpu.memory_space<vmem>>, vector<1x8x384xbf16>
    %130 = vector.shape_cast %129 : vector<1x8x384xbf16> to vector<8x384xbf16>
    %c344 = arith.constant 344 : index
    %c0_137 = arith.constant 0 : index
    %131 = vector.load %arg5[%c344, %c0_137] : memref<392x384xbf16, #tpu.memory_space<vmem>>, vector<8x384xbf16>
    tpu.vector_store %arg5[%c344, %c0_137], %130 {strides = array<i32>} : memref<392x384xbf16, #tpu.memory_space<vmem>>, vector<8x384xbf16>,
    %c0_138 = arith.constant 0 : index
    %c0_139 = arith.constant 0 : index
    %c134 = arith.constant 134 : index
    %132 = vector.load %arg1[%c0_138, %c0_139, %c134] : memref<1x8x522xbf16, #tpu.memory_space<vmem>>, vector<1x8x384xbf16>
    %133 = vector.shape_cast %132 : vector<1x8x384xbf16> to vector<8x384xbf16>
    %c352 = arith.constant 352 : index
    %c0_140 = arith.constant 0 : index
    %134 = vector.load %arg5[%c352, %c0_140] : memref<392x384xbf16, #tpu.memory_space<vmem>>, vector<8x384xbf16>
    tpu.vector_store %arg5[%c352, %c0_140], %133 {strides = array<i32>} : memref<392x384xbf16, #tpu.memory_space<vmem>>, vector<8x384xbf16>,
    %c0_141 = arith.constant 0 : index
    %c0_142 = arith.constant 0 : index
    %c135 = arith.constant 135 : index
    %135 = vector.load %arg1[%c0_141, %c0_142, %c135] : memref<1x8x522xbf16, #tpu.memory_space<vmem>>, vector<1x8x384xbf16>
    %136 = vector.shape_cast %135 : vector<1x8x384xbf16> to vector<8x384xbf16>
    %c360 = arith.constant 360 : index
    %c0_143 = arith.constant 0 : index
    %137 = vector.load %arg5[%c360, %c0_143] : memref<392x384xbf16, #tpu.memory_space<vmem>>, vector<8x384xbf16>
    tpu.vector_store %arg5[%c360, %c0_143], %136 {strides = array<i32>} : memref<392x384xbf16, #tpu.memory_space<vmem>>, vector<8x384xbf16>,
    %c0_144 = arith.constant 0 : index
    %c0_145 = arith.constant 0 : index
    %c136_146 = arith.constant 136 : index
    %138 = vector.load %arg1[%c0_144, %c0_145, %c136_146] : memref<1x8x522xbf16, #tpu.memory_space<vmem>>, vector<1x8x384xbf16>
    %139 = vector.shape_cast %138 : vector<1x8x384xbf16> to vector<8x384xbf16>
    %c368 = arith.constant 368 : index
    %c0_147 = arith.constant 0 : index
    %140 = vector.load %arg5[%c368, %c0_147] : memref<392x384xbf16, #tpu.memory_space<vmem>>, vector<8x384xbf16>
    tpu.vector_store %arg5[%c368, %c0_147], %139 {strides = array<i32>} : memref<392x384xbf16, #tpu.memory_space<vmem>>, vector<8x384xbf16>,
    %c0_148 = arith.constant 0 : index
    %c0_149 = arith.constant 0 : index
    %c137 = arith.constant 137 : index
    %141 = vector.load %arg1[%c0_148, %c0_149, %c137] : memref<1x8x522xbf16, #tpu.memory_space<vmem>>, vector<1x8x384xbf16>
    %142 = vector.shape_cast %141 : vector<1x8x384xbf16> to vector<8x384xbf16>
    %c376 = arith.constant 376 : index
    %c0_150 = arith.constant 0 : index
    %143 = vector.load %arg5[%c376, %c0_150] : memref<392x384xbf16, #tpu.memory_space<vmem>>, vector<8x384xbf16>
    tpu.vector_store %arg5[%c376, %c0_150], %142 {strides = array<i32>} : memref<392x384xbf16, #tpu.memory_space<vmem>>, vector<8x384xbf16>,
    %c0_151 = arith.constant 0 : index
    %c0_152 = arith.constant 0 : index
    %c138 = arith.constant 138 : index
    %144 = vector.load %arg1[%c0_151, %c0_152, %c138] : memref<1x8x522xbf16, #tpu.memory_space<vmem>>, vector<1x8x384xbf16>
    %145 = vector.shape_cast %144 : vector<1x8x384xbf16> to vector<8x384xbf16>
    %c384 = arith.constant 384 : index
    %c0_153 = arith.constant 0 : index
    %146 = vector.load %arg5[%c384, %c0_153] : memref<392x384xbf16, #tpu.memory_space<vmem>>, vector<8x384xbf16>
    tpu.vector_store %arg5[%c384, %c0_153], %145 {strides = array<i32>} : memref<392x384xbf16, #tpu.memory_space<vmem>>, vector<8x384xbf16>,
    %c0_154 = arith.constant 0 : index
    %c0_155 = arith.constant 0 : index
    %147 = vector.load %arg2[%c0_154, %c0_155] : memref<8x392xbf16, #tpu.memory_space<vmem>>, vector<8x392xbf16>
    %c0_156 = arith.constant 0 : index
    %c0_157 = arith.constant 0 : index
    %148 = vector.load %arg5[%c0_156, %c0_157] : memref<392x384xbf16, #tpu.memory_space<vmem>>, vector<392x384xbf16>
    %cst = arith.constant dense<0.000000e+00> : vector<8x384xf32>
    %149 = tpu.matmul %147, %148, %cst {dimension_numbers = #tpu.dot_dimension_numbers<[1], [0], [0], [1], [0, 0, 1, 1], [], []>} : vector<8x392xbf16>, vector<392x384xbf16>, vector<8x384xf32> -> vector<8x384xf32>
    %c0_158 = arith.constant 0 : index
    %c0_159 = arith.constant 0 : index
    %150 = vector.load %arg3[%c0_158, %c0_159] : memref<8x1xf32, #tpu.memory_space<vmem>>, vector<8x1xf32>
    %151 = vector.broadcast %150 : vector<8x1xf32> to vector<8x384xf32>
    %152 = arith.addf %149, %151 : vector<8x384xf32>
    %153 = tpu.iota {dimensions = array<i32: 1>} : vector<1x384xi32>
    %c22_i32 = arith.constant 22 : i32
    %c0_i32 = arith.constant 0 : i32
    %154 = arith.cmpi eq, %c22_i32, %c0_i32 : i32
    %c1_i32 = arith.constant 1 : i32
    %155 = arith.select %154, %c1_i32, %c22_i32 : i32
    %156 = vector.broadcast %155 : i32 to vector<1x384xi32>
    %157 = arith.remsi %153, %156 : vector<1x384xi32>
    %c0_i32_160 = arith.constant 0 : i32
    %158 = vector.broadcast %c0_i32_160 : i32 to vector<1x384xi32>
    %159 = arith.cmpi ne, %157, %158 : vector<1x384xi32>
    %c0_i32_161 = arith.constant 0 : i32
    %160 = vector.broadcast %c0_i32_161 : i32 to vector<1x384xi32>
    %161 = arith.cmpi slt, %157, %160 : vector<1x384xi32>
    %c0_i32_162 = arith.constant 0 : i32
    %162 = arith.cmpi slt, %155, %c0_i32_162 : i32
    %163 = vector.broadcast %162 : i1 to vector<1x384xi1>
    %164 = vector.broadcast %163 : vector<1x384xi1> to vector<1x384xi1>
    %165 = arith.xori %161, %164 : vector<1x384xi1>
    %166 = arith.andi %165, %159 : vector<1x384xi1>
    %167 = vector.broadcast %155 : i32 to vector<1x384xi32>
    %168 = arith.addi %157, %167 : vector<1x384xi32>
    %169 = arith.select %166, %168, %157 : vector<1x384xi1>, vector<1x384xi32>
    %c16_i32 = arith.constant 16 : i32
    %170 = vector.broadcast %c16_i32 : i32 to vector<1x384xi32>
    %171 = arith.cmpi slt, %169, %170 : vector<1x384xi32>
    %c346_i32 = arith.constant 346 : i32
    %172 = vector.broadcast %c346_i32 : i32 to vector<1x384xi32>
    %173 = arith.cmpi slt, %153, %172 : vector<1x384xi32>
    %174 = arith.andi %171, %173 : vector<1x384xi1>
    %175 = arith.extui %174 : vector<1x384xi1> to vector<1x384xi32>
    %176 = arith.sitofp %175 : vector<1x384xi32> to vector<1x384xf32>
    %177 = vector.broadcast %176 : vector<1x384xf32> to vector<8x384xf32>
    %178 = arith.mulf %152, %177 : vector<8x384xf32>
    %cst_163 = arith.constant dense<0.000000e+00> : vector<8xf32>
    %179 = vector.multi_reduction <add>, %178, %cst_163 [1] : vector<8x384xf32> to vector<8xf32>
    %180 = vector.shape_cast %179 : vector<8xf32> to vector<8x1xf32>
    %181 = arith.mulf %152, %178 : vector<8x384xf32>
    %cst_164 = arith.constant dense<0.000000e+00> : vector<8xf32>
    %182 = vector.multi_reduction <add>, %181, %cst_164 [1] : vector<8x384xf32> to vector<8xf32>
    %183 = vector.shape_cast %182 : vector<8xf32> to vector<8x1xf32>
    %cst_165 = arith.constant 3.906250e-03 : f32
    %184 = vector.broadcast %cst_165 : f32 to vector<8x1xf32>
    %185 = arith.mulf %180, %184 : vector<8x1xf32>
    %cst_166 = arith.constant 3.906250e-03 : f32
    %186 = vector.broadcast %cst_166 : f32 to vector<8x1xf32>
    %187 = arith.mulf %183, %186 : vector<8x1xf32>
    %188 = arith.mulf %185, %185 : vector<8x1xf32>
    %189 = arith.subf %187, %188 : vector<8x1xf32>
    %cst_167 = arith.constant 0.000000e+00 : f32
    %190 = vector.broadcast %cst_167 : f32 to vector<8x1xf32>
    %191 = arith.maximumf %189, %190 : vector<8x1xf32>
    %cst_168 = arith.constant 9.99999974E-6 : f32
    %192 = vector.broadcast %cst_168 : f32 to vector<8x1xf32>
    %193 = arith.addf %191, %192 : vector<8x1xf32>
    %194 = math.rsqrt %193 : vector<8x1xf32>
    %195 = vector.broadcast %185 : vector<8x1xf32> to vector<8x384xf32>
    %196 = arith.subf %152, %195 : vector<8x384xf32>
    %197 = vector.broadcast %194 : vector<8x1xf32> to vector<8x384xf32>
    %198 = arith.mulf %196, %197 : vector<8x384xf32>
    %cst_169 = arith.constant 0.000000e+00 : f32
    %199 = vector.broadcast %cst_169 : f32 to vector<8x384xf32>
    %200 = arith.maximumf %198, %199 : vector<8x384xf32>
    %201 = arith.truncf %200 : vector<8x384xf32> to vector<8x384xbf16>
    %c0_170 = arith.constant 0 : index
    %c0_171 = arith.constant 0 : index
    %c0_172 = arith.constant 0 : index
    %202 = vector.load %arg4[%c0_170, %c0_171, %c0_172] : memref<1x8x384xbf16, #tpu.memory_space<vmem>>, vector<1x8x384xbf16>
    %203 = vector.shape_cast %202 : vector<1x8x384xbf16> to vector<8x384xbf16>
    %204 = vector.shape_cast %201 : vector<8x384xbf16> to vector<1x8x384xbf16>
    tpu.vector_store %arg4[%c0_170, %c0_171, %c0_172], %204 {strides = array<i32>} : memref<1x8x384xbf16, #tpu.memory_space<vmem>>, vector<1x8x384xbf16>,
    return
  }
  func.func @transform_0(%arg0: i32) -> (i32, i32, i32) {
    %c0_i32 = arith.constant 0 : i32
    %c0_i32_0 = arith.constant 0 : i32
    %c0_i32_1 = arith.constant 0 : i32
    return %arg0, %c0_i32, %c0_i32_0 : i32, i32, i32
  }
  func.func @transform_1(%arg0: i32) -> (i32, i32) {
    %c0_i32 = arith.constant 0 : i32
    %c0_i32_0 = arith.constant 0 : i32
    %c0_i32_1 = arith.constant 0 : i32
    return %c0_i32, %c0_i32_0 : i32, i32
  }
  func.func @transform_2(%arg0: i32) -> (i32, i32) {
    %c0_i32 = arith.constant 0 : i32
    %c0_i32_0 = arith.constant 0 : i32
    %c0_i32_1 = arith.constant 0 : i32
    return %c0_i32, %c0_i32_0 : i32, i32
  }
  func.func @transform_3(%arg0: i32) -> (i32, i32, i32) {
    %c0_i32 = arith.constant 0 : i32
    %c0_i32_0 = arith.constant 0 : i32
    %c0_i32_1 = arith.constant 0 : i32
    return %arg0, %c0_i32, %c0_i32_0 : i32, i32, i32
  }
}

module attributes {stable_mosaic.version = 11 : i64} {
  func.func @kernel(%arg0: i32, %arg1: memref<1x32x138xbf16, #tpu.memory_space<vmem>>, %arg2: memref<16x128xbf16, #tpu.memory_space<vmem>>, %arg3: memref<16x1xf32, #tpu.memory_space<vmem>>, %arg4: memref<1x16x128xbf16, #tpu.memory_space<vmem>>, %arg5: memref<128x128xbf16, #tpu.memory_space<vmem>>) attributes {dimension_semantics = [#tpu.dimension_semantics<parallel>], iteration_bounds = array<i64: 2>, scalar_prefetch = 0 : i64, scratch_operands = 1 : i64, tpu.core_type = #tpu.core_type<tc>, window_params = [{transform_indices = @transform_0, window_bounds = array<i64: 1, 32, 138>}, {pipeline_mode = #tpu.pipeline_mode<synchronous>, transform_indices = @transform_1, window_bounds = array<i64: 16, 128>}, {pipeline_mode = #tpu.pipeline_mode<synchronous>, transform_indices = @transform_2, window_bounds = array<i64: 16, 1>}, {transform_indices = @transform_3, window_bounds = array<i64: 1, 16, 128>}]} {
    %c0 = arith.constant 0 : index
    %c0_0 = arith.constant 0 : index
    %c0_1 = arith.constant 0 : index
    %0 = vector.load %arg1[%c0, %c0_0, %c0_1] : memref<1x32x138xbf16, #tpu.memory_space<vmem>>, vector<1x32x128xbf16>
    %1 = vector.shape_cast %0 : vector<1x32x128xbf16> to vector<32x128xbf16>
    %c0_2 = arith.constant 0 : index
    %c0_3 = arith.constant 0 : index
    %2 = vector.load %arg5[%c0_2, %c0_3] : memref<128x128xbf16, #tpu.memory_space<vmem>>, vector<32x128xbf16>
    tpu.vector_store %arg5[%c0_2, %c0_3], %1 {strides = array<i32>} : memref<128x128xbf16, #tpu.memory_space<vmem>>, vector<32x128xbf16>,
    %c0_4 = arith.constant 0 : index
    %c0_5 = arith.constant 0 : index
    %c1 = arith.constant 1 : index
    %3 = vector.load %arg1[%c0_4, %c0_5, %c1] : memref<1x32x138xbf16, #tpu.memory_space<vmem>>, vector<1x32x128xbf16>
    %4 = vector.shape_cast %3 : vector<1x32x128xbf16> to vector<32x128xbf16>
    %c32 = arith.constant 32 : index
    %c0_6 = arith.constant 0 : index
    %5 = vector.load %arg5[%c32, %c0_6] : memref<128x128xbf16, #tpu.memory_space<vmem>>, vector<32x128xbf16>
    tpu.vector_store %arg5[%c32, %c0_6], %4 {strides = array<i32>} : memref<128x128xbf16, #tpu.memory_space<vmem>>, vector<32x128xbf16>,
    %c0_7 = arith.constant 0 : index
    %c0_8 = arith.constant 0 : index
    %c9 = arith.constant 9 : index
    %6 = vector.load %arg1[%c0_7, %c0_8, %c9] : memref<1x32x138xbf16, #tpu.memory_space<vmem>>, vector<1x32x128xbf16>
    %7 = vector.shape_cast %6 : vector<1x32x128xbf16> to vector<32x128xbf16>
    %c64 = arith.constant 64 : index
    %c0_9 = arith.constant 0 : index
    %8 = vector.load %arg5[%c64, %c0_9] : memref<128x128xbf16, #tpu.memory_space<vmem>>, vector<32x128xbf16>
    tpu.vector_store %arg5[%c64, %c0_9], %7 {strides = array<i32>} : memref<128x128xbf16, #tpu.memory_space<vmem>>, vector<32x128xbf16>,
    %c0_10 = arith.constant 0 : index
    %c0_11 = arith.constant 0 : index
    %c10 = arith.constant 10 : index
    %9 = vector.load %arg1[%c0_10, %c0_11, %c10] : memref<1x32x138xbf16, #tpu.memory_space<vmem>>, vector<1x32x128xbf16>
    %10 = vector.shape_cast %9 : vector<1x32x128xbf16> to vector<32x128xbf16>
    %c96 = arith.constant 96 : index
    %c0_12 = arith.constant 0 : index
    %11 = vector.load %arg5[%c96, %c0_12] : memref<128x128xbf16, #tpu.memory_space<vmem>>, vector<32x128xbf16>
    tpu.vector_store %arg5[%c96, %c0_12], %10 {strides = array<i32>} : memref<128x128xbf16, #tpu.memory_space<vmem>>, vector<32x128xbf16>,
    %c0_13 = arith.constant 0 : index
    %c0_14 = arith.constant 0 : index
    %12 = vector.load %arg2[%c0_13, %c0_14] : memref<16x128xbf16, #tpu.memory_space<vmem>>, vector<16x128xbf16>
    %c0_15 = arith.constant 0 : index
    %c0_16 = arith.constant 0 : index
    %13 = vector.load %arg5[%c0_15, %c0_16] : memref<128x128xbf16, #tpu.memory_space<vmem>>, vector<128x128xbf16>
    %cst = arith.constant dense<0.000000e+00> : vector<16x128xf32>
    %14 = tpu.matmul %12, %13, %cst {dimension_numbers = #tpu.dot_dimension_numbers<[1], [0], [0], [1], [0, 0, 1, 1], [], []>} : vector<16x128xbf16>, vector<128x128xbf16>, vector<16x128xf32> -> vector<16x128xf32>
    %c0_17 = arith.constant 0 : index
    %c0_18 = arith.constant 0 : index
    %15 = vector.load %arg3[%c0_17, %c0_18] : memref<16x1xf32, #tpu.memory_space<vmem>>, vector<16x1xf32>
    %16 = vector.broadcast %15 : vector<16x1xf32> to vector<16x128xf32>
    %17 = arith.addf %14, %16 : vector<16x128xf32>
    %18 = tpu.iota {dimensions = array<i32: 1>} : vector<1x128xi32>
    %c9_i32 = arith.constant 9 : i32
    %c0_i32 = arith.constant 0 : i32
    %19 = arith.cmpi eq, %c9_i32, %c0_i32 : i32
    %c1_i32 = arith.constant 1 : i32
    %20 = arith.select %19, %c1_i32, %c9_i32 : i32
    %21 = vector.broadcast %20 : i32 to vector<1x128xi32>
    %22 = arith.remsi %18, %21 : vector<1x128xi32>
    %c0_i32_19 = arith.constant 0 : i32
    %23 = vector.broadcast %c0_i32_19 : i32 to vector<1x128xi32>
    %24 = arith.cmpi ne, %22, %23 : vector<1x128xi32>
    %c0_i32_20 = arith.constant 0 : i32
    %25 = vector.broadcast %c0_i32_20 : i32 to vector<1x128xi32>
    %26 = arith.cmpi slt, %22, %25 : vector<1x128xi32>
    %c0_i32_21 = arith.constant 0 : i32
    %27 = arith.cmpi slt, %20, %c0_i32_21 : i32
    %28 = vector.broadcast %27 : i1 to vector<1x128xi1>
    %29 = vector.broadcast %28 : vector<1x128xi1> to vector<1x128xi1>
    %30 = arith.xori %26, %29 : vector<1x128xi1>
    %31 = arith.andi %30, %24 : vector<1x128xi1>
    %32 = vector.broadcast %20 : i32 to vector<1x128xi32>
    %33 = arith.addi %22, %32 : vector<1x128xi32>
    %34 = arith.select %31, %33, %22 : vector<1x128xi1>, vector<1x128xi32>
    %c8_i32 = arith.constant 8 : i32
    %35 = vector.broadcast %c8_i32 : i32 to vector<1x128xi32>
    %36 = arith.cmpi slt, %34, %35 : vector<1x128xi32>
    %c71_i32 = arith.constant 71 : i32
    %37 = vector.broadcast %c71_i32 : i32 to vector<1x128xi32>
    %38 = arith.cmpi slt, %18, %37 : vector<1x128xi32>
    %39 = arith.andi %36, %38 : vector<1x128xi1>
    %40 = arith.extui %39 : vector<1x128xi1> to vector<1x128xi32>
    %41 = arith.sitofp %40 : vector<1x128xi32> to vector<1x128xf32>
    %42 = vector.broadcast %41 : vector<1x128xf32> to vector<16x128xf32>
    %43 = arith.mulf %17, %42 : vector<16x128xf32>
    %cst_22 = arith.constant dense<0.000000e+00> : vector<16xf32>
    %44 = vector.multi_reduction <add>, %43, %cst_22 [1] : vector<16x128xf32> to vector<16xf32>
    %45 = vector.shape_cast %44 : vector<16xf32> to vector<16x1xf32>
    %46 = arith.mulf %17, %43 : vector<16x128xf32>
    %cst_23 = arith.constant dense<0.000000e+00> : vector<16xf32>
    %47 = vector.multi_reduction <add>, %46, %cst_23 [1] : vector<16x128xf32> to vector<16xf32>
    %48 = vector.shape_cast %47 : vector<16xf32> to vector<16x1xf32>
    %cst_24 = arith.constant 1.562500e-02 : f32
    %49 = vector.broadcast %cst_24 : f32 to vector<16x1xf32>
    %50 = arith.mulf %45, %49 : vector<16x1xf32>
    %cst_25 = arith.constant 1.562500e-02 : f32
    %51 = vector.broadcast %cst_25 : f32 to vector<16x1xf32>
    %52 = arith.mulf %48, %51 : vector<16x1xf32>
    %53 = arith.mulf %50, %50 : vector<16x1xf32>
    %54 = arith.subf %52, %53 : vector<16x1xf32>
    %cst_26 = arith.constant 0.000000e+00 : f32
    %55 = vector.broadcast %cst_26 : f32 to vector<16x1xf32>
    %56 = arith.maximumf %54, %55 : vector<16x1xf32>
    %cst_27 = arith.constant 9.99999974E-6 : f32
    %57 = vector.broadcast %cst_27 : f32 to vector<16x1xf32>
    %58 = arith.addf %56, %57 : vector<16x1xf32>
    %59 = math.rsqrt %58 : vector<16x1xf32>
    %60 = vector.broadcast %50 : vector<16x1xf32> to vector<16x128xf32>
    %61 = arith.subf %17, %60 : vector<16x128xf32>
    %62 = vector.broadcast %59 : vector<16x1xf32> to vector<16x128xf32>
    %63 = arith.mulf %61, %62 : vector<16x128xf32>
    %cst_28 = arith.constant 0.000000e+00 : f32
    %64 = vector.broadcast %cst_28 : f32 to vector<16x128xf32>
    %65 = arith.maximumf %63, %64 : vector<16x128xf32>
    %66 = arith.truncf %65 : vector<16x128xf32> to vector<16x128xbf16>
    %c0_29 = arith.constant 0 : index
    %c0_30 = arith.constant 0 : index
    %c0_31 = arith.constant 0 : index
    %67 = vector.load %arg4[%c0_29, %c0_30, %c0_31] : memref<1x16x128xbf16, #tpu.memory_space<vmem>>, vector<1x16x128xbf16>
    %68 = vector.shape_cast %67 : vector<1x16x128xbf16> to vector<16x128xbf16>
    %69 = vector.shape_cast %66 : vector<16x128xbf16> to vector<1x16x128xbf16>
    tpu.vector_store %arg4[%c0_29, %c0_30, %c0_31], %69 {strides = array<i32>} : memref<1x16x128xbf16, #tpu.memory_space<vmem>>, vector<1x16x128xbf16>,
    return
  }
  func.func @transform_0(%arg0: i32) -> (i32, i32, i32) {
    %c0_i32 = arith.constant 0 : i32
    %c0_i32_0 = arith.constant 0 : i32
    %c0_i32_1 = arith.constant 0 : i32
    return %arg0, %c0_i32, %c0_i32_0 : i32, i32, i32
  }
  func.func @transform_1(%arg0: i32) -> (i32, i32) {
    %c0_i32 = arith.constant 0 : i32
    %c0_i32_0 = arith.constant 0 : i32
    %c0_i32_1 = arith.constant 0 : i32
    return %c0_i32, %c0_i32_0 : i32, i32
  }
  func.func @transform_2(%arg0: i32) -> (i32, i32) {
    %c0_i32 = arith.constant 0 : i32
    %c0_i32_0 = arith.constant 0 : i32
    %c0_i32_1 = arith.constant 0 : i32
    return %c0_i32, %c0_i32_0 : i32, i32
  }
  func.func @transform_3(%arg0: i32) -> (i32, i32, i32) {
    %c0_i32 = arith.constant 0 : i32
    %c0_i32_0 = arith.constant 0 : i32
    %c0_i32_1 = arith.constant 0 : i32
    return %arg0, %c0_i32, %c0_i32_0 : i32, i32, i32
  }
}

module attributes {stable_mosaic.version = 11 : i64} {
  func.func @kernel(%arg0: i32, %arg1: memref<1x64x134xbf16, #tpu.memory_space<vmem>>, %arg2: memref<32x256xbf16, #tpu.memory_space<vmem>>, %arg3: memref<32x1xf32, #tpu.memory_space<vmem>>, %arg4: memref<1x32x128xbf16, #tpu.memory_space<vmem>>, %arg5: memref<256x128xbf16, #tpu.memory_space<vmem>>) attributes {dimension_semantics = [#tpu.dimension_semantics<parallel>], iteration_bounds = array<i64: 2>, scalar_prefetch = 0 : i64, scratch_operands = 1 : i64, tpu.core_type = #tpu.core_type<tc>, window_params = [{transform_indices = @transform_0, window_bounds = array<i64: 1, 64, 134>}, {pipeline_mode = #tpu.pipeline_mode<synchronous>, transform_indices = @transform_1, window_bounds = array<i64: 32, 256>}, {pipeline_mode = #tpu.pipeline_mode<synchronous>, transform_indices = @transform_2, window_bounds = array<i64: 32, 1>}, {transform_indices = @transform_3, window_bounds = array<i64: 1, 32, 128>}]} {
    %c0 = arith.constant 0 : index
    %c0_0 = arith.constant 0 : index
    %c0_1 = arith.constant 0 : index
    %0 = vector.load %arg1[%c0, %c0_0, %c0_1] : memref<1x64x134xbf16, #tpu.memory_space<vmem>>, vector<1x64x128xbf16>
    %1 = vector.shape_cast %0 : vector<1x64x128xbf16> to vector<64x128xbf16>
    %c0_2 = arith.constant 0 : index
    %c0_3 = arith.constant 0 : index
    %2 = vector.load %arg5[%c0_2, %c0_3] : memref<256x128xbf16, #tpu.memory_space<vmem>>, vector<64x128xbf16>
    tpu.vector_store %arg5[%c0_2, %c0_3], %1 {strides = array<i32>} : memref<256x128xbf16, #tpu.memory_space<vmem>>, vector<64x128xbf16>,
    %c0_4 = arith.constant 0 : index
    %c0_5 = arith.constant 0 : index
    %c1 = arith.constant 1 : index
    %3 = vector.load %arg1[%c0_4, %c0_5, %c1] : memref<1x64x134xbf16, #tpu.memory_space<vmem>>, vector<1x64x128xbf16>
    %4 = vector.shape_cast %3 : vector<1x64x128xbf16> to vector<64x128xbf16>
    %c64 = arith.constant 64 : index
    %c0_6 = arith.constant 0 : index
    %5 = vector.load %arg5[%c64, %c0_6] : memref<256x128xbf16, #tpu.memory_space<vmem>>, vector<64x128xbf16>
    tpu.vector_store %arg5[%c64, %c0_6], %4 {strides = array<i32>} : memref<256x128xbf16, #tpu.memory_space<vmem>>, vector<64x128xbf16>,
    %c0_7 = arith.constant 0 : index
    %c0_8 = arith.constant 0 : index
    %c5 = arith.constant 5 : index
    %6 = vector.load %arg1[%c0_7, %c0_8, %c5] : memref<1x64x134xbf16, #tpu.memory_space<vmem>>, vector<1x64x128xbf16>
    %7 = vector.shape_cast %6 : vector<1x64x128xbf16> to vector<64x128xbf16>
    %c128 = arith.constant 128 : index
    %c0_9 = arith.constant 0 : index
    %8 = vector.load %arg5[%c128, %c0_9] : memref<256x128xbf16, #tpu.memory_space<vmem>>, vector<64x128xbf16>
    tpu.vector_store %arg5[%c128, %c0_9], %7 {strides = array<i32>} : memref<256x128xbf16, #tpu.memory_space<vmem>>, vector<64x128xbf16>,
    %c0_10 = arith.constant 0 : index
    %c0_11 = arith.constant 0 : index
    %c6 = arith.constant 6 : index
    %9 = vector.load %arg1[%c0_10, %c0_11, %c6] : memref<1x64x134xbf16, #tpu.memory_space<vmem>>, vector<1x64x128xbf16>
    %10 = vector.shape_cast %9 : vector<1x64x128xbf16> to vector<64x128xbf16>
    %c192 = arith.constant 192 : index
    %c0_12 = arith.constant 0 : index
    %11 = vector.load %arg5[%c192, %c0_12] : memref<256x128xbf16, #tpu.memory_space<vmem>>, vector<64x128xbf16>
    tpu.vector_store %arg5[%c192, %c0_12], %10 {strides = array<i32>} : memref<256x128xbf16, #tpu.memory_space<vmem>>, vector<64x128xbf16>,
    %c0_13 = arith.constant 0 : index
    %c0_14 = arith.constant 0 : index
    %12 = vector.load %arg2[%c0_13, %c0_14] : memref<32x256xbf16, #tpu.memory_space<vmem>>, vector<32x256xbf16>
    %c0_15 = arith.constant 0 : index
    %c0_16 = arith.constant 0 : index
    %13 = vector.load %arg5[%c0_15, %c0_16] : memref<256x128xbf16, #tpu.memory_space<vmem>>, vector<256x128xbf16>
    %cst = arith.constant dense<0.000000e+00> : vector<32x128xf32>
    %14 = tpu.matmul %12, %13, %cst {dimension_numbers = #tpu.dot_dimension_numbers<[1], [0], [0], [1], [0, 0, 1, 1], [], []>} : vector<32x256xbf16>, vector<256x128xbf16>, vector<32x128xf32> -> vector<32x128xf32>
    %c0_17 = arith.constant 0 : index
    %c0_18 = arith.constant 0 : index
    %15 = vector.load %arg3[%c0_17, %c0_18] : memref<32x1xf32, #tpu.memory_space<vmem>>, vector<32x1xf32>
    %16 = vector.broadcast %15 : vector<32x1xf32> to vector<32x128xf32>
    %17 = arith.addf %14, %16 : vector<32x128xf32>
    %18 = tpu.iota {dimensions = array<i32: 1>} : vector<1x128xi32>
    %c5_i32 = arith.constant 5 : i32
    %c0_i32 = arith.constant 0 : i32
    %19 = arith.cmpi eq, %c5_i32, %c0_i32 : i32
    %c1_i32 = arith.constant 1 : i32
    %20 = arith.select %19, %c1_i32, %c5_i32 : i32
    %21 = vector.broadcast %20 : i32 to vector<1x128xi32>
    %22 = arith.remsi %18, %21 : vector<1x128xi32>
    %c0_i32_19 = arith.constant 0 : i32
    %23 = vector.broadcast %c0_i32_19 : i32 to vector<1x128xi32>
    %24 = arith.cmpi ne, %22, %23 : vector<1x128xi32>
    %c0_i32_20 = arith.constant 0 : i32
    %25 = vector.broadcast %c0_i32_20 : i32 to vector<1x128xi32>
    %26 = arith.cmpi slt, %22, %25 : vector<1x128xi32>
    %c0_i32_21 = arith.constant 0 : i32
    %27 = arith.cmpi slt, %20, %c0_i32_21 : i32
    %28 = vector.broadcast %27 : i1 to vector<1x128xi1>
    %29 = vector.broadcast %28 : vector<1x128xi1> to vector<1x128xi1>
    %30 = arith.xori %26, %29 : vector<1x128xi1>
    %31 = arith.andi %30, %24 : vector<1x128xi1>
    %32 = vector.broadcast %20 : i32 to vector<1x128xi32>
    %33 = arith.addi %22, %32 : vector<1x128xi32>
    %34 = arith.select %31, %33, %22 : vector<1x128xi1>, vector<1x128xi32>
    %c4_i32 = arith.constant 4 : i32
    %35 = vector.broadcast %c4_i32 : i32 to vector<1x128xi32>
    %36 = arith.cmpi slt, %34, %35 : vector<1x128xi32>
    %c19_i32 = arith.constant 19 : i32
    %37 = vector.broadcast %c19_i32 : i32 to vector<1x128xi32>
    %38 = arith.cmpi slt, %18, %37 : vector<1x128xi32>
    %39 = arith.andi %36, %38 : vector<1x128xi1>
    %40 = arith.extui %39 : vector<1x128xi1> to vector<1x128xi32>
    %41 = arith.sitofp %40 : vector<1x128xi32> to vector<1x128xf32>
    %42 = vector.broadcast %41 : vector<1x128xf32> to vector<32x128xf32>
    %43 = arith.mulf %17, %42 : vector<32x128xf32>
    %cst_22 = arith.constant dense<0.000000e+00> : vector<32xf32>
    %44 = vector.multi_reduction <add>, %43, %cst_22 [1] : vector<32x128xf32> to vector<32xf32>
    %45 = vector.shape_cast %44 : vector<32xf32> to vector<32x1xf32>
    %46 = arith.mulf %17, %43 : vector<32x128xf32>
    %cst_23 = arith.constant dense<0.000000e+00> : vector<32xf32>
    %47 = vector.multi_reduction <add>, %46, %cst_23 [1] : vector<32x128xf32> to vector<32xf32>
    %48 = vector.shape_cast %47 : vector<32xf32> to vector<32x1xf32>
    %cst_24 = arith.constant 6.250000e-02 : f32
    %49 = vector.broadcast %cst_24 : f32 to vector<32x1xf32>
    %50 = arith.mulf %45, %49 : vector<32x1xf32>
    %cst_25 = arith.constant 6.250000e-02 : f32
    %51 = vector.broadcast %cst_25 : f32 to vector<32x1xf32>
    %52 = arith.mulf %48, %51 : vector<32x1xf32>
    %53 = arith.mulf %50, %50 : vector<32x1xf32>
    %54 = arith.subf %52, %53 : vector<32x1xf32>
    %cst_26 = arith.constant 0.000000e+00 : f32
    %55 = vector.broadcast %cst_26 : f32 to vector<32x1xf32>
    %56 = arith.maximumf %54, %55 : vector<32x1xf32>
    %cst_27 = arith.constant 9.99999974E-6 : f32
    %57 = vector.broadcast %cst_27 : f32 to vector<32x1xf32>
    %58 = arith.addf %56, %57 : vector<32x1xf32>
    %59 = math.rsqrt %58 : vector<32x1xf32>
    %60 = vector.broadcast %50 : vector<32x1xf32> to vector<32x128xf32>
    %61 = arith.subf %17, %60 : vector<32x128xf32>
    %62 = vector.broadcast %59 : vector<32x1xf32> to vector<32x128xf32>
    %63 = arith.mulf %61, %62 : vector<32x128xf32>
    %cst_28 = arith.constant 0.000000e+00 : f32
    %64 = vector.broadcast %cst_28 : f32 to vector<32x128xf32>
    %65 = arith.maximumf %63, %64 : vector<32x128xf32>
    %66 = arith.truncf %65 : vector<32x128xf32> to vector<32x128xbf16>
    %c0_29 = arith.constant 0 : index
    %c0_30 = arith.constant 0 : index
    %c0_31 = arith.constant 0 : index
    %67 = vector.load %arg4[%c0_29, %c0_30, %c0_31] : memref<1x32x128xbf16, #tpu.memory_space<vmem>>, vector<1x32x128xbf16>
    %68 = vector.shape_cast %67 : vector<1x32x128xbf16> to vector<32x128xbf16>
    %69 = vector.shape_cast %66 : vector<32x128xbf16> to vector<1x32x128xbf16>
    tpu.vector_store %arg4[%c0_29, %c0_30, %c0_31], %69 {strides = array<i32>} : memref<1x32x128xbf16, #tpu.memory_space<vmem>>, vector<1x32x128xbf16>,
    return
  }
  func.func @transform_0(%arg0: i32) -> (i32, i32, i32) {
    %c0_i32 = arith.constant 0 : i32
    %c0_i32_0 = arith.constant 0 : i32
    %c0_i32_1 = arith.constant 0 : i32
    return %arg0, %c0_i32, %c0_i32_0 : i32, i32, i32
  }
  func.func @transform_1(%arg0: i32) -> (i32, i32) {
    %c0_i32 = arith.constant 0 : i32
    %c0_i32_0 = arith.constant 0 : i32
    %c0_i32_1 = arith.constant 0 : i32
    return %c0_i32, %c0_i32_0 : i32, i32
  }
  func.func @transform_2(%arg0: i32) -> (i32, i32) {
    %c0_i32 = arith.constant 0 : i32
    %c0_i32_0 = arith.constant 0 : i32
    %c0_i32_1 = arith.constant 0 : i32
    return %c0_i32, %c0_i32_0 : i32, i32
  }
  func.func @transform_3(%arg0: i32) -> (i32, i32, i32) {
    %c0_i32 = arith.constant 0 : i32
    %c0_i32_0 = arith.constant 0 : i32
    %c0_i32_1 = arith.constant 0 : i32
    return %arg0, %c0_i32, %c0_i32_0 : i32, i32, i32
  }
}

module attributes {stable_mosaic.version = 11 : i64} {
  func.func @kernel(%arg0: i32, %arg1: memref<1x32x142xbf16, #tpu.memory_space<vmem>>, %arg2: memref<32x288xbf16, #tpu.memory_space<vmem>>, %arg3: memref<32x1xf32, #tpu.memory_space<vmem>>, %arg4: memref<1x32x128xbf16, #tpu.memory_space<vmem>>, %arg5: memref<288x128xbf16, #tpu.memory_space<vmem>>) attributes {dimension_semantics = [#tpu.dimension_semantics<parallel>], iteration_bounds = array<i64: 2>, scalar_prefetch = 0 : i64, scratch_operands = 1 : i64, tpu.core_type = #tpu.core_type<tc>, window_params = [{transform_indices = @transform_0, window_bounds = array<i64: 1, 32, 142>}, {pipeline_mode = #tpu.pipeline_mode<synchronous>, transform_indices = @transform_1, window_bounds = array<i64: 32, 288>}, {pipeline_mode = #tpu.pipeline_mode<synchronous>, transform_indices = @transform_2, window_bounds = array<i64: 32, 1>}, {transform_indices = @transform_3, window_bounds = array<i64: 1, 32, 128>}]} {
    %c0 = arith.constant 0 : index
    %c0_0 = arith.constant 0 : index
    %c0_1 = arith.constant 0 : index
    %0 = vector.load %arg1[%c0, %c0_0, %c0_1] : memref<1x32x142xbf16, #tpu.memory_space<vmem>>, vector<1x32x128xbf16>
    %1 = vector.shape_cast %0 : vector<1x32x128xbf16> to vector<32x128xbf16>
    %c0_2 = arith.constant 0 : index
    %c0_3 = arith.constant 0 : index
    %2 = vector.load %arg5[%c0_2, %c0_3] : memref<288x128xbf16, #tpu.memory_space<vmem>>, vector<32x128xbf16>
    tpu.vector_store %arg5[%c0_2, %c0_3], %1 {strides = array<i32>} : memref<288x128xbf16, #tpu.memory_space<vmem>>, vector<32x128xbf16>,
    %c0_4 = arith.constant 0 : index
    %c0_5 = arith.constant 0 : index
    %c1 = arith.constant 1 : index
    %3 = vector.load %arg1[%c0_4, %c0_5, %c1] : memref<1x32x142xbf16, #tpu.memory_space<vmem>>, vector<1x32x128xbf16>
    %4 = vector.shape_cast %3 : vector<1x32x128xbf16> to vector<32x128xbf16>
    %c32 = arith.constant 32 : index
    %c0_6 = arith.constant 0 : index
    %5 = vector.load %arg5[%c32, %c0_6] : memref<288x128xbf16, #tpu.memory_space<vmem>>, vector<32x128xbf16>
    tpu.vector_store %arg5[%c32, %c0_6], %4 {strides = array<i32>} : memref<288x128xbf16, #tpu.memory_space<vmem>>, vector<32x128xbf16>,
    %c0_7 = arith.constant 0 : index
    %c0_8 = arith.constant 0 : index
    %c2 = arith.constant 2 : index
    %6 = vector.load %arg1[%c0_7, %c0_8, %c2] : memref<1x32x142xbf16, #tpu.memory_space<vmem>>, vector<1x32x128xbf16>
    %7 = vector.shape_cast %6 : vector<1x32x128xbf16> to vector<32x128xbf16>
    %c64 = arith.constant 64 : index
    %c0_9 = arith.constant 0 : index
    %8 = vector.load %arg5[%c64, %c0_9] : memref<288x128xbf16, #tpu.memory_space<vmem>>, vector<32x128xbf16>
    tpu.vector_store %arg5[%c64, %c0_9], %7 {strides = array<i32>} : memref<288x128xbf16, #tpu.memory_space<vmem>>, vector<32x128xbf16>,
    %c0_10 = arith.constant 0 : index
    %c0_11 = arith.constant 0 : index
    %c6 = arith.constant 6 : index
    %9 = vector.load %arg1[%c0_10, %c0_11, %c6] : memref<1x32x142xbf16, #tpu.memory_space<vmem>>, vector<1x32x128xbf16>
    %10 = vector.shape_cast %9 : vector<1x32x128xbf16> to vector<32x128xbf16>
    %c96 = arith.constant 96 : index
    %c0_12 = arith.constant 0 : index
    %11 = vector.load %arg5[%c96, %c0_12] : memref<288x128xbf16, #tpu.memory_space<vmem>>, vector<32x128xbf16>
    tpu.vector_store %arg5[%c96, %c0_12], %10 {strides = array<i32>} : memref<288x128xbf16, #tpu.memory_space<vmem>>, vector<32x128xbf16>,
    %c0_13 = arith.constant 0 : index
    %c0_14 = arith.constant 0 : index
    %c7 = arith.constant 7 : index
    %12 = vector.load %arg1[%c0_13, %c0_14, %c7] : memref<1x32x142xbf16, #tpu.memory_space<vmem>>, vector<1x32x128xbf16>
    %13 = vector.shape_cast %12 : vector<1x32x128xbf16> to vector<32x128xbf16>
    %c128 = arith.constant 128 : index
    %c0_15 = arith.constant 0 : index
    %14 = vector.load %arg5[%c128, %c0_15] : memref<288x128xbf16, #tpu.memory_space<vmem>>, vector<32x128xbf16>
    tpu.vector_store %arg5[%c128, %c0_15], %13 {strides = array<i32>} : memref<288x128xbf16, #tpu.memory_space<vmem>>, vector<32x128xbf16>,
    %c0_16 = arith.constant 0 : index
    %c0_17 = arith.constant 0 : index
    %c8 = arith.constant 8 : index
    %15 = vector.load %arg1[%c0_16, %c0_17, %c8] : memref<1x32x142xbf16, #tpu.memory_space<vmem>>, vector<1x32x128xbf16>
    %16 = vector.shape_cast %15 : vector<1x32x128xbf16> to vector<32x128xbf16>
    %c160 = arith.constant 160 : index
    %c0_18 = arith.constant 0 : index
    %17 = vector.load %arg5[%c160, %c0_18] : memref<288x128xbf16, #tpu.memory_space<vmem>>, vector<32x128xbf16>
    tpu.vector_store %arg5[%c160, %c0_18], %16 {strides = array<i32>} : memref<288x128xbf16, #tpu.memory_space<vmem>>, vector<32x128xbf16>,
    %c0_19 = arith.constant 0 : index
    %c0_20 = arith.constant 0 : index
    %c12 = arith.constant 12 : index
    %18 = vector.load %arg1[%c0_19, %c0_20, %c12] : memref<1x32x142xbf16, #tpu.memory_space<vmem>>, vector<1x32x128xbf16>
    %19 = vector.shape_cast %18 : vector<1x32x128xbf16> to vector<32x128xbf16>
    %c192 = arith.constant 192 : index
    %c0_21 = arith.constant 0 : index
    %20 = vector.load %arg5[%c192, %c0_21] : memref<288x128xbf16, #tpu.memory_space<vmem>>, vector<32x128xbf16>
    tpu.vector_store %arg5[%c192, %c0_21], %19 {strides = array<i32>} : memref<288x128xbf16, #tpu.memory_space<vmem>>, vector<32x128xbf16>,
    %c0_22 = arith.constant 0 : index
    %c0_23 = arith.constant 0 : index
    %c13 = arith.constant 13 : index
    %21 = vector.load %arg1[%c0_22, %c0_23, %c13] : memref<1x32x142xbf16, #tpu.memory_space<vmem>>, vector<1x32x128xbf16>
    %22 = vector.shape_cast %21 : vector<1x32x128xbf16> to vector<32x128xbf16>
    %c224 = arith.constant 224 : index
    %c0_24 = arith.constant 0 : index
    %23 = vector.load %arg5[%c224, %c0_24] : memref<288x128xbf16, #tpu.memory_space<vmem>>, vector<32x128xbf16>
    tpu.vector_store %arg5[%c224, %c0_24], %22 {strides = array<i32>} : memref<288x128xbf16, #tpu.memory_space<vmem>>, vector<32x128xbf16>,
    %c0_25 = arith.constant 0 : index
    %c0_26 = arith.constant 0 : index
    %c14 = arith.constant 14 : index
    %24 = vector.load %arg1[%c0_25, %c0_26, %c14] : memref<1x32x142xbf16, #tpu.memory_space<vmem>>, vector<1x32x128xbf16>
    %25 = vector.shape_cast %24 : vector<1x32x128xbf16> to vector<32x128xbf16>
    %c256 = arith.constant 256 : index
    %c0_27 = arith.constant 0 : index
    %26 = vector.load %arg5[%c256, %c0_27] : memref<288x128xbf16, #tpu.memory_space<vmem>>, vector<32x128xbf16>
    tpu.vector_store %arg5[%c256, %c0_27], %25 {strides = array<i32>} : memref<288x128xbf16, #tpu.memory_space<vmem>>, vector<32x128xbf16>,
    %c0_28 = arith.constant 0 : index
    %c0_29 = arith.constant 0 : index
    %27 = vector.load %arg2[%c0_28, %c0_29] : memref<32x288xbf16, #tpu.memory_space<vmem>>, vector<32x288xbf16>
    %c0_30 = arith.constant 0 : index
    %c0_31 = arith.constant 0 : index
    %28 = vector.load %arg5[%c0_30, %c0_31] : memref<288x128xbf16, #tpu.memory_space<vmem>>, vector<288x128xbf16>
    %cst = arith.constant dense<0.000000e+00> : vector<32x128xf32>
    %29 = tpu.matmul %27, %28, %cst {dimension_numbers = #tpu.dot_dimension_numbers<[1], [0], [0], [1], [0, 0, 1, 1], [], []>} : vector<32x288xbf16>, vector<288x128xbf16>, vector<32x128xf32> -> vector<32x128xf32>
    %c0_32 = arith.constant 0 : index
    %c0_33 = arith.constant 0 : index
    %30 = vector.load %arg3[%c0_32, %c0_33] : memref<32x1xf32, #tpu.memory_space<vmem>>, vector<32x1xf32>
    %31 = vector.broadcast %30 : vector<32x1xf32> to vector<32x128xf32>
    %32 = arith.addf %29, %31 : vector<32x128xf32>
    %33 = tpu.iota {dimensions = array<i32: 1>} : vector<1x128xi32>
    %c6_i32 = arith.constant 6 : i32
    %c0_i32 = arith.constant 0 : i32
    %34 = arith.cmpi eq, %c6_i32, %c0_i32 : i32
    %c1_i32 = arith.constant 1 : i32
    %35 = arith.select %34, %c1_i32, %c6_i32 : i32
    %36 = vector.broadcast %35 : i32 to vector<1x128xi32>
    %37 = arith.remsi %33, %36 : vector<1x128xi32>
    %c0_i32_34 = arith.constant 0 : i32
    %38 = vector.broadcast %c0_i32_34 : i32 to vector<1x128xi32>
    %39 = arith.cmpi ne, %37, %38 : vector<1x128xi32>
    %c0_i32_35 = arith.constant 0 : i32
    %40 = vector.broadcast %c0_i32_35 : i32 to vector<1x128xi32>
    %41 = arith.cmpi slt, %37, %40 : vector<1x128xi32>
    %c0_i32_36 = arith.constant 0 : i32
    %42 = arith.cmpi slt, %35, %c0_i32_36 : i32
    %43 = vector.broadcast %42 : i1 to vector<1x128xi1>
    %44 = vector.broadcast %43 : vector<1x128xi1> to vector<1x128xi1>
    %45 = arith.xori %41, %44 : vector<1x128xi1>
    %46 = arith.andi %45, %39 : vector<1x128xi1>
    %47 = vector.broadcast %35 : i32 to vector<1x128xi32>
    %48 = arith.addi %37, %47 : vector<1x128xi32>
    %49 = arith.select %46, %48, %37 : vector<1x128xi1>, vector<1x128xi32>
    %c4_i32 = arith.constant 4 : i32
    %50 = vector.broadcast %c4_i32 : i32 to vector<1x128xi32>
    %51 = arith.cmpi slt, %49, %50 : vector<1x128xi32>
    %c22_i32 = arith.constant 22 : i32
    %52 = vector.broadcast %c22_i32 : i32 to vector<1x128xi32>
    %53 = arith.cmpi slt, %33, %52 : vector<1x128xi32>
    %54 = arith.andi %51, %53 : vector<1x128xi1>
    %55 = arith.extui %54 : vector<1x128xi1> to vector<1x128xi32>
    %56 = arith.sitofp %55 : vector<1x128xi32> to vector<1x128xf32>
    %57 = vector.broadcast %56 : vector<1x128xf32> to vector<32x128xf32>
    %58 = arith.mulf %32, %57 : vector<32x128xf32>
    %cst_37 = arith.constant dense<0.000000e+00> : vector<32xf32>
    %59 = vector.multi_reduction <add>, %58, %cst_37 [1] : vector<32x128xf32> to vector<32xf32>
    %60 = vector.shape_cast %59 : vector<32xf32> to vector<32x1xf32>
    %61 = arith.mulf %32, %58 : vector<32x128xf32>
    %cst_38 = arith.constant dense<0.000000e+00> : vector<32xf32>
    %62 = vector.multi_reduction <add>, %61, %cst_38 [1] : vector<32x128xf32> to vector<32xf32>
    %63 = vector.shape_cast %62 : vector<32xf32> to vector<32x1xf32>
    %cst_39 = arith.constant 6.250000e-02 : f32
    %64 = vector.broadcast %cst_39 : f32 to vector<32x1xf32>
    %65 = arith.mulf %60, %64 : vector<32x1xf32>
    %cst_40 = arith.constant 6.250000e-02 : f32
    %66 = vector.broadcast %cst_40 : f32 to vector<32x1xf32>
    %67 = arith.mulf %63, %66 : vector<32x1xf32>
    %68 = arith.mulf %65, %65 : vector<32x1xf32>
    %69 = arith.subf %67, %68 : vector<32x1xf32>
    %cst_41 = arith.constant 0.000000e+00 : f32
    %70 = vector.broadcast %cst_41 : f32 to vector<32x1xf32>
    %71 = arith.maximumf %69, %70 : vector<32x1xf32>
    %cst_42 = arith.constant 9.99999974E-6 : f32
    %72 = vector.broadcast %cst_42 : f32 to vector<32x1xf32>
    %73 = arith.addf %71, %72 : vector<32x1xf32>
    %74 = math.rsqrt %73 : vector<32x1xf32>
    %75 = vector.broadcast %65 : vector<32x1xf32> to vector<32x128xf32>
    %76 = arith.subf %32, %75 : vector<32x128xf32>
    %77 = vector.broadcast %74 : vector<32x1xf32> to vector<32x128xf32>
    %78 = arith.mulf %76, %77 : vector<32x128xf32>
    %cst_43 = arith.constant 0.000000e+00 : f32
    %79 = vector.broadcast %cst_43 : f32 to vector<32x128xf32>
    %80 = arith.maximumf %78, %79 : vector<32x128xf32>
    %81 = arith.truncf %80 : vector<32x128xf32> to vector<32x128xbf16>
    %c0_44 = arith.constant 0 : index
    %c0_45 = arith.constant 0 : index
    %c0_46 = arith.constant 0 : index
    %82 = vector.load %arg4[%c0_44, %c0_45, %c0_46] : memref<1x32x128xbf16, #tpu.memory_space<vmem>>, vector<1x32x128xbf16>
    %83 = vector.shape_cast %82 : vector<1x32x128xbf16> to vector<32x128xbf16>
    %84 = vector.shape_cast %81 : vector<32x128xbf16> to vector<1x32x128xbf16>
    tpu.vector_store %arg4[%c0_44, %c0_45, %c0_46], %84 {strides = array<i32>} : memref<1x32x128xbf16, #tpu.memory_space<vmem>>, vector<1x32x128xbf16>,
    return
  }
  func.func @transform_0(%arg0: i32) -> (i32, i32, i32) {
    %c0_i32 = arith.constant 0 : i32
    %c0_i32_0 = arith.constant 0 : i32
    %c0_i32_1 = arith.constant 0 : i32
    return %arg0, %c0_i32, %c0_i32_0 : i32, i32, i32
  }
  func.func @transform_1(%arg0: i32) -> (i32, i32) {
    %c0_i32 = arith.constant 0 : i32
    %c0_i32_0 = arith.constant 0 : i32
    %c0_i32_1 = arith.constant 0 : i32
    return %c0_i32, %c0_i32_0 : i32, i32
  }
  func.func @transform_2(%arg0: i32) -> (i32, i32) {
    %c0_i32 = arith.constant 0 : i32
    %c0_i32_0 = arith.constant 0 : i32
    %c0_i32_1 = arith.constant 0 : i32
    return %c0_i32, %c0_i32_0 : i32, i32
  }
  func.func @transform_3(%arg0: i32) -> (i32, i32, i32) {
    %c0_i32 = arith.constant 0 : i32
    %c0_i32_0 = arith.constant 0 : i32
    %c0_i32_1 = arith.constant 0 : i32
    return %arg0, %c0_i32, %c0_i32_0 : i32, i32, i32
  }
}

module attributes {stable_mosaic.version = 11 : i64} {
  func.func @kernel(%arg0: i32, %arg1: memref<1x32x142xbf16, #tpu.memory_space<vmem>>, %arg2: memref<32x288xbf16, #tpu.memory_space<vmem>>, %arg3: memref<32x1xf32, #tpu.memory_space<vmem>>, %arg4: memref<1x32x128xbf16, #tpu.memory_space<vmem>>, %arg5: memref<1x32x128xbf16, #tpu.memory_space<vmem>>, %arg6: memref<288x128xbf16, #tpu.memory_space<vmem>>) attributes {dimension_semantics = [#tpu.dimension_semantics<parallel>], iteration_bounds = array<i64: 2>, scalar_prefetch = 0 : i64, scratch_operands = 1 : i64, tpu.core_type = #tpu.core_type<tc>, window_params = [{transform_indices = @transform_0, window_bounds = array<i64: 1, 32, 142>}, {pipeline_mode = #tpu.pipeline_mode<synchronous>, transform_indices = @transform_1, window_bounds = array<i64: 32, 288>}, {pipeline_mode = #tpu.pipeline_mode<synchronous>, transform_indices = @transform_2, window_bounds = array<i64: 32, 1>}, {transform_indices = @transform_3, window_bounds = array<i64: 1, 32, 128>}, {transform_indices = @transform_4, window_bounds = array<i64: 1, 32, 128>}]} {
    %c0 = arith.constant 0 : index
    %c0_0 = arith.constant 0 : index
    %c0_1 = arith.constant 0 : index
    %0 = vector.load %arg1[%c0, %c0_0, %c0_1] : memref<1x32x142xbf16, #tpu.memory_space<vmem>>, vector<1x32x128xbf16>
    %1 = vector.shape_cast %0 : vector<1x32x128xbf16> to vector<32x128xbf16>
    %c0_2 = arith.constant 0 : index
    %c0_3 = arith.constant 0 : index
    %2 = vector.load %arg6[%c0_2, %c0_3] : memref<288x128xbf16, #tpu.memory_space<vmem>>, vector<32x128xbf16>
    tpu.vector_store %arg6[%c0_2, %c0_3], %1 {strides = array<i32>} : memref<288x128xbf16, #tpu.memory_space<vmem>>, vector<32x128xbf16>,
    %c0_4 = arith.constant 0 : index
    %c0_5 = arith.constant 0 : index
    %c1 = arith.constant 1 : index
    %3 = vector.load %arg1[%c0_4, %c0_5, %c1] : memref<1x32x142xbf16, #tpu.memory_space<vmem>>, vector<1x32x128xbf16>
    %4 = vector.shape_cast %3 : vector<1x32x128xbf16> to vector<32x128xbf16>
    %c32 = arith.constant 32 : index
    %c0_6 = arith.constant 0 : index
    %5 = vector.load %arg6[%c32, %c0_6] : memref<288x128xbf16, #tpu.memory_space<vmem>>, vector<32x128xbf16>
    tpu.vector_store %arg6[%c32, %c0_6], %4 {strides = array<i32>} : memref<288x128xbf16, #tpu.memory_space<vmem>>, vector<32x128xbf16>,
    %c0_7 = arith.constant 0 : index
    %c0_8 = arith.constant 0 : index
    %c2 = arith.constant 2 : index
    %6 = vector.load %arg1[%c0_7, %c0_8, %c2] : memref<1x32x142xbf16, #tpu.memory_space<vmem>>, vector<1x32x128xbf16>
    %7 = vector.shape_cast %6 : vector<1x32x128xbf16> to vector<32x128xbf16>
    %c64 = arith.constant 64 : index
    %c0_9 = arith.constant 0 : index
    %8 = vector.load %arg6[%c64, %c0_9] : memref<288x128xbf16, #tpu.memory_space<vmem>>, vector<32x128xbf16>
    tpu.vector_store %arg6[%c64, %c0_9], %7 {strides = array<i32>} : memref<288x128xbf16, #tpu.memory_space<vmem>>, vector<32x128xbf16>,
    %c0_10 = arith.constant 0 : index
    %c0_11 = arith.constant 0 : index
    %c6 = arith.constant 6 : index
    %9 = vector.load %arg1[%c0_10, %c0_11, %c6] : memref<1x32x142xbf16, #tpu.memory_space<vmem>>, vector<1x32x128xbf16>
    %10 = vector.shape_cast %9 : vector<1x32x128xbf16> to vector<32x128xbf16>
    %c96 = arith.constant 96 : index
    %c0_12 = arith.constant 0 : index
    %11 = vector.load %arg6[%c96, %c0_12] : memref<288x128xbf16, #tpu.memory_space<vmem>>, vector<32x128xbf16>
    tpu.vector_store %arg6[%c96, %c0_12], %10 {strides = array<i32>} : memref<288x128xbf16, #tpu.memory_space<vmem>>, vector<32x128xbf16>,
    %c0_13 = arith.constant 0 : index
    %c0_14 = arith.constant 0 : index
    %c7 = arith.constant 7 : index
    %12 = vector.load %arg1[%c0_13, %c0_14, %c7] : memref<1x32x142xbf16, #tpu.memory_space<vmem>>, vector<1x32x128xbf16>
    %13 = vector.shape_cast %12 : vector<1x32x128xbf16> to vector<32x128xbf16>
    %c128 = arith.constant 128 : index
    %c0_15 = arith.constant 0 : index
    %14 = vector.load %arg6[%c128, %c0_15] : memref<288x128xbf16, #tpu.memory_space<vmem>>, vector<32x128xbf16>
    tpu.vector_store %arg6[%c128, %c0_15], %13 {strides = array<i32>} : memref<288x128xbf16, #tpu.memory_space<vmem>>, vector<32x128xbf16>,
    %c0_16 = arith.constant 0 : index
    %c0_17 = arith.constant 0 : index
    %c8 = arith.constant 8 : index
    %15 = vector.load %arg1[%c0_16, %c0_17, %c8] : memref<1x32x142xbf16, #tpu.memory_space<vmem>>, vector<1x32x128xbf16>
    %16 = vector.shape_cast %15 : vector<1x32x128xbf16> to vector<32x128xbf16>
    %c160 = arith.constant 160 : index
    %c0_18 = arith.constant 0 : index
    %17 = vector.load %arg6[%c160, %c0_18] : memref<288x128xbf16, #tpu.memory_space<vmem>>, vector<32x128xbf16>
    tpu.vector_store %arg6[%c160, %c0_18], %16 {strides = array<i32>} : memref<288x128xbf16, #tpu.memory_space<vmem>>, vector<32x128xbf16>,
    %c0_19 = arith.constant 0 : index
    %c0_20 = arith.constant 0 : index
    %c12 = arith.constant 12 : index
    %18 = vector.load %arg1[%c0_19, %c0_20, %c12] : memref<1x32x142xbf16, #tpu.memory_space<vmem>>, vector<1x32x128xbf16>
    %19 = vector.shape_cast %18 : vector<1x32x128xbf16> to vector<32x128xbf16>
    %c192 = arith.constant 192 : index
    %c0_21 = arith.constant 0 : index
    %20 = vector.load %arg6[%c192, %c0_21] : memref<288x128xbf16, #tpu.memory_space<vmem>>, vector<32x128xbf16>
    tpu.vector_store %arg6[%c192, %c0_21], %19 {strides = array<i32>} : memref<288x128xbf16, #tpu.memory_space<vmem>>, vector<32x128xbf16>,
    %c0_22 = arith.constant 0 : index
    %c0_23 = arith.constant 0 : index
    %c13 = arith.constant 13 : index
    %21 = vector.load %arg1[%c0_22, %c0_23, %c13] : memref<1x32x142xbf16, #tpu.memory_space<vmem>>, vector<1x32x128xbf16>
    %22 = vector.shape_cast %21 : vector<1x32x128xbf16> to vector<32x128xbf16>
    %c224 = arith.constant 224 : index
    %c0_24 = arith.constant 0 : index
    %23 = vector.load %arg6[%c224, %c0_24] : memref<288x128xbf16, #tpu.memory_space<vmem>>, vector<32x128xbf16>
    tpu.vector_store %arg6[%c224, %c0_24], %22 {strides = array<i32>} : memref<288x128xbf16, #tpu.memory_space<vmem>>, vector<32x128xbf16>,
    %c0_25 = arith.constant 0 : index
    %c0_26 = arith.constant 0 : index
    %c14 = arith.constant 14 : index
    %24 = vector.load %arg1[%c0_25, %c0_26, %c14] : memref<1x32x142xbf16, #tpu.memory_space<vmem>>, vector<1x32x128xbf16>
    %25 = vector.shape_cast %24 : vector<1x32x128xbf16> to vector<32x128xbf16>
    %c256 = arith.constant 256 : index
    %c0_27 = arith.constant 0 : index
    %26 = vector.load %arg6[%c256, %c0_27] : memref<288x128xbf16, #tpu.memory_space<vmem>>, vector<32x128xbf16>
    tpu.vector_store %arg6[%c256, %c0_27], %25 {strides = array<i32>} : memref<288x128xbf16, #tpu.memory_space<vmem>>, vector<32x128xbf16>,
    %c0_28 = arith.constant 0 : index
    %c0_29 = arith.constant 0 : index
    %27 = vector.load %arg2[%c0_28, %c0_29] : memref<32x288xbf16, #tpu.memory_space<vmem>>, vector<32x288xbf16>
    %c0_30 = arith.constant 0 : index
    %c0_31 = arith.constant 0 : index
    %28 = vector.load %arg6[%c0_30, %c0_31] : memref<288x128xbf16, #tpu.memory_space<vmem>>, vector<288x128xbf16>
    %cst = arith.constant dense<0.000000e+00> : vector<32x128xf32>
    %29 = tpu.matmul %27, %28, %cst {dimension_numbers = #tpu.dot_dimension_numbers<[1], [0], [0], [1], [0, 0, 1, 1], [], []>} : vector<32x288xbf16>, vector<288x128xbf16>, vector<32x128xf32> -> vector<32x128xf32>
    %c0_32 = arith.constant 0 : index
    %c0_33 = arith.constant 0 : index
    %30 = vector.load %arg3[%c0_32, %c0_33] : memref<32x1xf32, #tpu.memory_space<vmem>>, vector<32x1xf32>
    %31 = vector.broadcast %30 : vector<32x1xf32> to vector<32x128xf32>
    %32 = arith.addf %29, %31 : vector<32x128xf32>
    %33 = tpu.iota {dimensions = array<i32: 1>} : vector<1x128xi32>
    %c6_i32 = arith.constant 6 : i32
    %c0_i32 = arith.constant 0 : i32
    %34 = arith.cmpi eq, %c6_i32, %c0_i32 : i32
    %c1_i32 = arith.constant 1 : i32
    %35 = arith.select %34, %c1_i32, %c6_i32 : i32
    %36 = vector.broadcast %35 : i32 to vector<1x128xi32>
    %37 = arith.remsi %33, %36 : vector<1x128xi32>
    %c0_i32_34 = arith.constant 0 : i32
    %38 = vector.broadcast %c0_i32_34 : i32 to vector<1x128xi32>
    %39 = arith.cmpi ne, %37, %38 : vector<1x128xi32>
    %c0_i32_35 = arith.constant 0 : i32
    %40 = vector.broadcast %c0_i32_35 : i32 to vector<1x128xi32>
    %41 = arith.cmpi slt, %37, %40 : vector<1x128xi32>
    %c0_i32_36 = arith.constant 0 : i32
    %42 = arith.cmpi slt, %35, %c0_i32_36 : i32
    %43 = vector.broadcast %42 : i1 to vector<1x128xi1>
    %44 = vector.broadcast %43 : vector<1x128xi1> to vector<1x128xi1>
    %45 = arith.xori %41, %44 : vector<1x128xi1>
    %46 = arith.andi %45, %39 : vector<1x128xi1>
    %47 = vector.broadcast %35 : i32 to vector<1x128xi32>
    %48 = arith.addi %37, %47 : vector<1x128xi32>
    %49 = arith.select %46, %48, %37 : vector<1x128xi1>, vector<1x128xi32>
    %c4_i32 = arith.constant 4 : i32
    %50 = vector.broadcast %c4_i32 : i32 to vector<1x128xi32>
    %51 = arith.cmpi slt, %49, %50 : vector<1x128xi32>
    %c22_i32 = arith.constant 22 : i32
    %52 = vector.broadcast %c22_i32 : i32 to vector<1x128xi32>
    %53 = arith.cmpi slt, %33, %52 : vector<1x128xi32>
    %54 = arith.andi %51, %53 : vector<1x128xi1>
    %55 = arith.extui %54 : vector<1x128xi1> to vector<1x128xi32>
    %56 = arith.sitofp %55 : vector<1x128xi32> to vector<1x128xf32>
    %57 = vector.broadcast %56 : vector<1x128xf32> to vector<32x128xf32>
    %58 = arith.mulf %32, %57 : vector<32x128xf32>
    %cst_37 = arith.constant dense<0.000000e+00> : vector<32xf32>
    %59 = vector.multi_reduction <add>, %58, %cst_37 [1] : vector<32x128xf32> to vector<32xf32>
    %60 = vector.shape_cast %59 : vector<32xf32> to vector<32x1xf32>
    %61 = arith.mulf %32, %58 : vector<32x128xf32>
    %cst_38 = arith.constant dense<0.000000e+00> : vector<32xf32>
    %62 = vector.multi_reduction <add>, %61, %cst_38 [1] : vector<32x128xf32> to vector<32xf32>
    %63 = vector.shape_cast %62 : vector<32xf32> to vector<32x1xf32>
    %cst_39 = arith.constant 6.250000e-02 : f32
    %64 = vector.broadcast %cst_39 : f32 to vector<32x1xf32>
    %65 = arith.mulf %60, %64 : vector<32x1xf32>
    %cst_40 = arith.constant 6.250000e-02 : f32
    %66 = vector.broadcast %cst_40 : f32 to vector<32x1xf32>
    %67 = arith.mulf %63, %66 : vector<32x1xf32>
    %68 = arith.mulf %65, %65 : vector<32x1xf32>
    %69 = arith.subf %67, %68 : vector<32x1xf32>
    %cst_41 = arith.constant 0.000000e+00 : f32
    %70 = vector.broadcast %cst_41 : f32 to vector<32x1xf32>
    %71 = arith.maximumf %69, %70 : vector<32x1xf32>
    %cst_42 = arith.constant 9.99999974E-6 : f32
    %72 = vector.broadcast %cst_42 : f32 to vector<32x1xf32>
    %73 = arith.addf %71, %72 : vector<32x1xf32>
    %74 = math.rsqrt %73 : vector<32x1xf32>
    %c0_43 = arith.constant 0 : index
    %c0_44 = arith.constant 0 : index
    %c0_45 = arith.constant 0 : index
    %75 = vector.load %arg4[%c0_43, %c0_44, %c0_45] : memref<1x32x128xbf16, #tpu.memory_space<vmem>>, vector<1x32x128xbf16>
    %76 = vector.shape_cast %75 : vector<1x32x128xbf16> to vector<32x128xbf16>
    %77 = arith.extf %76 : vector<32x128xbf16> to vector<32x128xf32>
    %78 = vector.broadcast %65 : vector<32x1xf32> to vector<32x128xf32>
    %79 = arith.subf %32, %78 : vector<32x128xf32>
    %80 = vector.broadcast %74 : vector<32x1xf32> to vector<32x128xf32>
    %81 = arith.mulf %79, %80 : vector<32x128xf32>
    %82 = arith.addf %81, %77 : vector<32x128xf32>
    %83 = arith.truncf %82 : vector<32x128xf32> to vector<32x128xbf16>
    %c0_46 = arith.constant 0 : index
    %c0_47 = arith.constant 0 : index
    %c0_48 = arith.constant 0 : index
    %84 = vector.load %arg5[%c0_46, %c0_47, %c0_48] : memref<1x32x128xbf16, #tpu.memory_space<vmem>>, vector<1x32x128xbf16>
    %85 = vector.shape_cast %84 : vector<1x32x128xbf16> to vector<32x128xbf16>
    %86 = vector.shape_cast %83 : vector<32x128xbf16> to vector<1x32x128xbf16>
    tpu.vector_store %arg5[%c0_46, %c0_47, %c0_48], %86 {strides = array<i32>} : memref<1x32x128xbf16, #tpu.memory_space<vmem>>, vector<1x32x128xbf16>,
    return
  }
  func.func @transform_0(%arg0: i32) -> (i32, i32, i32) {
    %c0_i32 = arith.constant 0 : i32
    %c0_i32_0 = arith.constant 0 : i32
    %c0_i32_1 = arith.constant 0 : i32
    return %arg0, %c0_i32, %c0_i32_0 : i32, i32, i32
  }
  func.func @transform_1(%arg0: i32) -> (i32, i32) {
    %c0_i32 = arith.constant 0 : i32
    %c0_i32_0 = arith.constant 0 : i32
    %c0_i32_1 = arith.constant 0 : i32
    return %c0_i32, %c0_i32_0 : i32, i32
  }
  func.func @transform_2(%arg0: i32) -> (i32, i32) {
    %c0_i32 = arith.constant 0 : i32
    %c0_i32_0 = arith.constant 0 : i32
    %c0_i32_1 = arith.constant 0 : i32
    return %c0_i32, %c0_i32_0 : i32, i32
  }
  func.func @transform_3(%arg0: i32) -> (i32, i32, i32) {
    %c0_i32 = arith.constant 0 : i32
    %c0_i32_0 = arith.constant 0 : i32
    %c0_i32_1 = arith.constant 0 : i32
    return %arg0, %c0_i32, %c0_i32_0 : i32, i32, i32
  }
  func.func @transform_4(%arg0: i32) -> (i32, i32, i32) {
    %c0_i32 = arith.constant 0 : i32
    %c0_i32_0 = arith.constant 0 : i32
    %c0_i32_1 = arith.constant 0 : i32
    return %arg0, %c0_i32, %c0_i32_0 : i32, i32, i32
  }
}

module attributes {stable_mosaic.version = 11 : i64} {
  func.func @kernel(%arg0: i32, %arg1: memref<1x32x134xbf16, #tpu.memory_space<vmem>>, %arg2: memref<64x128xbf16, #tpu.memory_space<vmem>>, %arg3: memref<64x1xf32, #tpu.memory_space<vmem>>, %arg4: memref<1x64x128xbf16, #tpu.memory_space<vmem>>, %arg5: memref<128x128xbf16, #tpu.memory_space<vmem>>) attributes {dimension_semantics = [#tpu.dimension_semantics<parallel>], iteration_bounds = array<i64: 2>, scalar_prefetch = 0 : i64, scratch_operands = 1 : i64, tpu.core_type = #tpu.core_type<tc>, window_params = [{transform_indices = @transform_0, window_bounds = array<i64: 1, 32, 134>}, {pipeline_mode = #tpu.pipeline_mode<synchronous>, transform_indices = @transform_1, window_bounds = array<i64: 64, 128>}, {pipeline_mode = #tpu.pipeline_mode<synchronous>, transform_indices = @transform_2, window_bounds = array<i64: 64, 1>}, {transform_indices = @transform_3, window_bounds = array<i64: 1, 64, 128>}]} {
    %c0 = arith.constant 0 : index
    %c0_0 = arith.constant 0 : index
    %c0_1 = arith.constant 0 : index
    %0 = vector.load %arg1[%c0, %c0_0, %c0_1] : memref<1x32x134xbf16, #tpu.memory_space<vmem>>, vector<1x32x128xbf16>
    %1 = vector.shape_cast %0 : vector<1x32x128xbf16> to vector<32x128xbf16>
    %c0_2 = arith.constant 0 : index
    %c0_3 = arith.constant 0 : index
    %2 = vector.load %arg5[%c0_2, %c0_3] : memref<128x128xbf16, #tpu.memory_space<vmem>>, vector<32x128xbf16>
    tpu.vector_store %arg5[%c0_2, %c0_3], %1 {strides = array<i32>} : memref<128x128xbf16, #tpu.memory_space<vmem>>, vector<32x128xbf16>,
    %c0_4 = arith.constant 0 : index
    %c0_5 = arith.constant 0 : index
    %c1 = arith.constant 1 : index
    %3 = vector.load %arg1[%c0_4, %c0_5, %c1] : memref<1x32x134xbf16, #tpu.memory_space<vmem>>, vector<1x32x128xbf16>
    %4 = vector.shape_cast %3 : vector<1x32x128xbf16> to vector<32x128xbf16>
    %c32 = arith.constant 32 : index
    %c0_6 = arith.constant 0 : index
    %5 = vector.load %arg5[%c32, %c0_6] : memref<128x128xbf16, #tpu.memory_space<vmem>>, vector<32x128xbf16>
    tpu.vector_store %arg5[%c32, %c0_6], %4 {strides = array<i32>} : memref<128x128xbf16, #tpu.memory_space<vmem>>, vector<32x128xbf16>,
    %c0_7 = arith.constant 0 : index
    %c0_8 = arith.constant 0 : index
    %c5 = arith.constant 5 : index
    %6 = vector.load %arg1[%c0_7, %c0_8, %c5] : memref<1x32x134xbf16, #tpu.memory_space<vmem>>, vector<1x32x128xbf16>
    %7 = vector.shape_cast %6 : vector<1x32x128xbf16> to vector<32x128xbf16>
    %c64 = arith.constant 64 : index
    %c0_9 = arith.constant 0 : index
    %8 = vector.load %arg5[%c64, %c0_9] : memref<128x128xbf16, #tpu.memory_space<vmem>>, vector<32x128xbf16>
    tpu.vector_store %arg5[%c64, %c0_9], %7 {strides = array<i32>} : memref<128x128xbf16, #tpu.memory_space<vmem>>, vector<32x128xbf16>,
    %c0_10 = arith.constant 0 : index
    %c0_11 = arith.constant 0 : index
    %c6 = arith.constant 6 : index
    %9 = vector.load %arg1[%c0_10, %c0_11, %c6] : memref<1x32x134xbf16, #tpu.memory_space<vmem>>, vector<1x32x128xbf16>
    %10 = vector.shape_cast %9 : vector<1x32x128xbf16> to vector<32x128xbf16>
    %c96 = arith.constant 96 : index
    %c0_12 = arith.constant 0 : index
    %11 = vector.load %arg5[%c96, %c0_12] : memref<128x128xbf16, #tpu.memory_space<vmem>>, vector<32x128xbf16>
    tpu.vector_store %arg5[%c96, %c0_12], %10 {strides = array<i32>} : memref<128x128xbf16, #tpu.memory_space<vmem>>, vector<32x128xbf16>,
    %c0_13 = arith.constant 0 : index
    %c0_14 = arith.constant 0 : index
    %12 = vector.load %arg2[%c0_13, %c0_14] : memref<64x128xbf16, #tpu.memory_space<vmem>>, vector<64x128xbf16>
    %c0_15 = arith.constant 0 : index
    %c0_16 = arith.constant 0 : index
    %13 = vector.load %arg5[%c0_15, %c0_16] : memref<128x128xbf16, #tpu.memory_space<vmem>>, vector<128x128xbf16>
    %cst = arith.constant dense<0.000000e+00> : vector<64x128xf32>
    %14 = tpu.matmul %12, %13, %cst {dimension_numbers = #tpu.dot_dimension_numbers<[1], [0], [0], [1], [0, 0, 1, 1], [], []>} : vector<64x128xbf16>, vector<128x128xbf16>, vector<64x128xf32> -> vector<64x128xf32>
    %c0_17 = arith.constant 0 : index
    %c0_18 = arith.constant 0 : index
    %15 = vector.load %arg3[%c0_17, %c0_18] : memref<64x1xf32, #tpu.memory_space<vmem>>, vector<64x1xf32>
    %16 = vector.broadcast %15 : vector<64x1xf32> to vector<64x128xf32>
    %17 = arith.addf %14, %16 : vector<64x128xf32>
    %18 = tpu.iota {dimensions = array<i32: 1>} : vector<1x128xi32>
    %c5_i32 = arith.constant 5 : i32
    %c0_i32 = arith.constant 0 : i32
    %19 = arith.cmpi eq, %c5_i32, %c0_i32 : i32
    %c1_i32 = arith.constant 1 : i32
    %20 = arith.select %19, %c1_i32, %c5_i32 : i32
    %21 = vector.broadcast %20 : i32 to vector<1x128xi32>
    %22 = arith.remsi %18, %21 : vector<1x128xi32>
    %c0_i32_19 = arith.constant 0 : i32
    %23 = vector.broadcast %c0_i32_19 : i32 to vector<1x128xi32>
    %24 = arith.cmpi ne, %22, %23 : vector<1x128xi32>
    %c0_i32_20 = arith.constant 0 : i32
    %25 = vector.broadcast %c0_i32_20 : i32 to vector<1x128xi32>
    %26 = arith.cmpi slt, %22, %25 : vector<1x128xi32>
    %c0_i32_21 = arith.constant 0 : i32
    %27 = arith.cmpi slt, %20, %c0_i32_21 : i32
    %28 = vector.broadcast %27 : i1 to vector<1x128xi1>
    %29 = vector.broadcast %28 : vector<1x128xi1> to vector<1x128xi1>
    %30 = arith.xori %26, %29 : vector<1x128xi1>
    %31 = arith.andi %30, %24 : vector<1x128xi1>
    %32 = vector.broadcast %20 : i32 to vector<1x128xi32>
    %33 = arith.addi %22, %32 : vector<1x128xi32>
    %34 = arith.select %31, %33, %22 : vector<1x128xi1>, vector<1x128xi32>
    %c4_i32 = arith.constant 4 : i32
    %35 = vector.broadcast %c4_i32 : i32 to vector<1x128xi32>
    %36 = arith.cmpi slt, %34, %35 : vector<1x128xi32>
    %c19_i32 = arith.constant 19 : i32
    %37 = vector.broadcast %c19_i32 : i32 to vector<1x128xi32>
    %38 = arith.cmpi slt, %18, %37 : vector<1x128xi32>
    %39 = arith.andi %36, %38 : vector<1x128xi1>
    %40 = arith.extui %39 : vector<1x128xi1> to vector<1x128xi32>
    %41 = arith.sitofp %40 : vector<1x128xi32> to vector<1x128xf32>
    %42 = vector.extract_strided_slice %17 {offsets = [0, 0], sizes = [16, 128], strides = [1, 1]} : vector<64x128xf32> to vector<16x128xf32>
    %43 = vector.broadcast %41 : vector<1x128xf32> to vector<16x128xf32>
    %44 = arith.mulf %42, %43 : vector<16x128xf32>
    %cst_22 = arith.constant dense<0.000000e+00> : vector<16xf32>
    %45 = vector.multi_reduction <add>, %44, %cst_22 [1] : vector<16x128xf32> to vector<16xf32>
    %46 = vector.shape_cast %45 : vector<16xf32> to vector<16x1xf32>
    %47 = arith.mulf %42, %44 : vector<16x128xf32>
    %cst_23 = arith.constant dense<0.000000e+00> : vector<16xf32>
    %48 = vector.multi_reduction <add>, %47, %cst_23 [1] : vector<16x128xf32> to vector<16xf32>
    %49 = vector.shape_cast %48 : vector<16xf32> to vector<16x1xf32>
    %50 = vector.extract_strided_slice %17 {offsets = [16, 0], sizes = [16, 128], strides = [1, 1]} : vector<64x128xf32> to vector<16x128xf32>
    %51 = vector.broadcast %41 : vector<1x128xf32> to vector<16x128xf32>
    %52 = arith.mulf %50, %51 : vector<16x128xf32>
    %cst_24 = arith.constant dense<0.000000e+00> : vector<16xf32>
    %53 = vector.multi_reduction <add>, %52, %cst_24 [1] : vector<16x128xf32> to vector<16xf32>
    %54 = vector.shape_cast %53 : vector<16xf32> to vector<16x1xf32>
    %55 = arith.mulf %50, %52 : vector<16x128xf32>
    %cst_25 = arith.constant dense<0.000000e+00> : vector<16xf32>
    %56 = vector.multi_reduction <add>, %55, %cst_25 [1] : vector<16x128xf32> to vector<16xf32>
    %57 = vector.shape_cast %56 : vector<16xf32> to vector<16x1xf32>
    %58 = arith.addf %46, %54 : vector<16x1xf32>
    %59 = arith.addf %49, %57 : vector<16x1xf32>
    %60 = vector.extract_strided_slice %17 {offsets = [32, 0], sizes = [16, 128], strides = [1, 1]} : vector<64x128xf32> to vector<16x128xf32>
    %61 = vector.broadcast %41 : vector<1x128xf32> to vector<16x128xf32>
    %62 = arith.mulf %60, %61 : vector<16x128xf32>
    %cst_26 = arith.constant dense<0.000000e+00> : vector<16xf32>
    %63 = vector.multi_reduction <add>, %62, %cst_26 [1] : vector<16x128xf32> to vector<16xf32>
    %64 = vector.shape_cast %63 : vector<16xf32> to vector<16x1xf32>
    %65 = arith.mulf %60, %62 : vector<16x128xf32>
    %cst_27 = arith.constant dense<0.000000e+00> : vector<16xf32>
    %66 = vector.multi_reduction <add>, %65, %cst_27 [1] : vector<16x128xf32> to vector<16xf32>
    %67 = vector.shape_cast %66 : vector<16xf32> to vector<16x1xf32>
    %68 = arith.addf %58, %64 : vector<16x1xf32>
    %69 = arith.addf %59, %67 : vector<16x1xf32>
    %70 = vector.extract_strided_slice %17 {offsets = [48, 0], sizes = [16, 128], strides = [1, 1]} : vector<64x128xf32> to vector<16x128xf32>
    %71 = vector.broadcast %41 : vector<1x128xf32> to vector<16x128xf32>
    %72 = arith.mulf %70, %71 : vector<16x128xf32>
    %cst_28 = arith.constant dense<0.000000e+00> : vector<16xf32>
    %73 = vector.multi_reduction <add>, %72, %cst_28 [1] : vector<16x128xf32> to vector<16xf32>
    %74 = vector.shape_cast %73 : vector<16xf32> to vector<16x1xf32>
    %75 = arith.mulf %70, %72 : vector<16x128xf32>
    %cst_29 = arith.constant dense<0.000000e+00> : vector<16xf32>
    %76 = vector.multi_reduction <add>, %75, %cst_29 [1] : vector<16x128xf32> to vector<16xf32>
    %77 = vector.shape_cast %76 : vector<16xf32> to vector<16x1xf32>
    %78 = arith.addf %68, %74 : vector<16x1xf32>
    %79 = arith.addf %69, %77 : vector<16x1xf32>
    %cst_30 = arith.constant 1.562500e-02 : f32
    %80 = vector.broadcast %cst_30 : f32 to vector<16x1xf32>
    %81 = arith.mulf %78, %80 : vector<16x1xf32>
    %cst_31 = arith.constant 1.562500e-02 : f32
    %82 = vector.broadcast %cst_31 : f32 to vector<16x1xf32>
    %83 = arith.mulf %79, %82 : vector<16x1xf32>
    %84 = arith.mulf %81, %81 : vector<16x1xf32>
    %85 = arith.subf %83, %84 : vector<16x1xf32>
    %cst_32 = arith.constant 0.000000e+00 : f32
    %86 = vector.broadcast %cst_32 : f32 to vector<16x1xf32>
    %87 = arith.maximumf %85, %86 : vector<16x1xf32>
    %cst_33 = arith.constant 9.99999974E-6 : f32
    %88 = vector.broadcast %cst_33 : f32 to vector<16x1xf32>
    %89 = arith.addf %87, %88 : vector<16x1xf32>
    %90 = math.rsqrt %89 : vector<16x1xf32>
    %91 = vector.extract_strided_slice %17 {offsets = [0, 0], sizes = [16, 128], strides = [1, 1]} : vector<64x128xf32> to vector<16x128xf32>
    %92 = vector.broadcast %81 : vector<16x1xf32> to vector<16x128xf32>
    %93 = arith.subf %91, %92 : vector<16x128xf32>
    %94 = vector.broadcast %90 : vector<16x1xf32> to vector<16x128xf32>
    %95 = arith.mulf %93, %94 : vector<16x128xf32>
    %cst_34 = arith.constant 0.000000e+00 : f32
    %96 = vector.broadcast %cst_34 : f32 to vector<16x128xf32>
    %97 = arith.maximumf %95, %96 : vector<16x128xf32>
    %98 = arith.truncf %97 : vector<16x128xf32> to vector<16x128xbf16>
    %c0_35 = arith.constant 0 : index
    %c0_36 = arith.constant 0 : index
    %c0_37 = arith.constant 0 : index
    %99 = vector.load %arg4[%c0_35, %c0_36, %c0_37] : memref<1x64x128xbf16, #tpu.memory_space<vmem>>, vector<1x16x128xbf16>
    %100 = vector.shape_cast %99 : vector<1x16x128xbf16> to vector<16x128xbf16>
    %101 = vector.shape_cast %98 : vector<16x128xbf16> to vector<1x16x128xbf16>
    tpu.vector_store %arg4[%c0_35, %c0_36, %c0_37], %101 {strides = array<i32>} : memref<1x64x128xbf16, #tpu.memory_space<vmem>>, vector<1x16x128xbf16>,
    %102 = vector.extract_strided_slice %17 {offsets = [16, 0], sizes = [16, 128], strides = [1, 1]} : vector<64x128xf32> to vector<16x128xf32>
    %103 = vector.broadcast %81 : vector<16x1xf32> to vector<16x128xf32>
    %104 = arith.subf %102, %103 : vector<16x128xf32>
    %105 = vector.broadcast %90 : vector<16x1xf32> to vector<16x128xf32>
    %106 = arith.mulf %104, %105 : vector<16x128xf32>
    %cst_38 = arith.constant 0.000000e+00 : f32
    %107 = vector.broadcast %cst_38 : f32 to vector<16x128xf32>
    %108 = arith.maximumf %106, %107 : vector<16x128xf32>
    %109 = arith.truncf %108 : vector<16x128xf32> to vector<16x128xbf16>
    %c0_39 = arith.constant 0 : index
    %c16 = arith.constant 16 : index
    %c0_40 = arith.constant 0 : index
    %110 = vector.load %arg4[%c0_39, %c16, %c0_40] : memref<1x64x128xbf16, #tpu.memory_space<vmem>>, vector<1x16x128xbf16>
    %111 = vector.shape_cast %110 : vector<1x16x128xbf16> to vector<16x128xbf16>
    %112 = vector.shape_cast %109 : vector<16x128xbf16> to vector<1x16x128xbf16>
    tpu.vector_store %arg4[%c0_39, %c16, %c0_40], %112 {strides = array<i32>} : memref<1x64x128xbf16, #tpu.memory_space<vmem>>, vector<1x16x128xbf16>,
    %113 = vector.extract_strided_slice %17 {offsets = [32, 0], sizes = [16, 128], strides = [1, 1]} : vector<64x128xf32> to vector<16x128xf32>
    %114 = vector.broadcast %81 : vector<16x1xf32> to vector<16x128xf32>
    %115 = arith.subf %113, %114 : vector<16x128xf32>
    %116 = vector.broadcast %90 : vector<16x1xf32> to vector<16x128xf32>
    %117 = arith.mulf %115, %116 : vector<16x128xf32>
    %cst_41 = arith.constant 0.000000e+00 : f32
    %118 = vector.broadcast %cst_41 : f32 to vector<16x128xf32>
    %119 = arith.maximumf %117, %118 : vector<16x128xf32>
    %120 = arith.truncf %119 : vector<16x128xf32> to vector<16x128xbf16>
    %c0_42 = arith.constant 0 : index
    %c32_43 = arith.constant 32 : index
    %c0_44 = arith.constant 0 : index
    %121 = vector.load %arg4[%c0_42, %c32_43, %c0_44] : memref<1x64x128xbf16, #tpu.memory_space<vmem>>, vector<1x16x128xbf16>
    %122 = vector.shape_cast %121 : vector<1x16x128xbf16> to vector<16x128xbf16>
    %123 = vector.shape_cast %120 : vector<16x128xbf16> to vector<1x16x128xbf16>
    tpu.vector_store %arg4[%c0_42, %c32_43, %c0_44], %123 {strides = array<i32>} : memref<1x64x128xbf16, #tpu.memory_space<vmem>>, vector<1x16x128xbf16>,
    %124 = vector.extract_strided_slice %17 {offsets = [48, 0], sizes = [16, 128], strides = [1, 1]} : vector<64x128xf32> to vector<16x128xf32>
    %125 = vector.broadcast %81 : vector<16x1xf32> to vector<16x128xf32>
    %126 = arith.subf %124, %125 : vector<16x128xf32>
    %127 = vector.broadcast %90 : vector<16x1xf32> to vector<16x128xf32>
    %128 = arith.mulf %126, %127 : vector<16x128xf32>
    %cst_45 = arith.constant 0.000000e+00 : f32
    %129 = vector.broadcast %cst_45 : f32 to vector<16x128xf32>
    %130 = arith.maximumf %128, %129 : vector<16x128xf32>
    %131 = arith.truncf %130 : vector<16x128xf32> to vector<16x128xbf16>
    %c0_46 = arith.constant 0 : index
    %c48 = arith.constant 48 : index
    %c0_47 = arith.constant 0 : index
    %132 = vector.load %arg4[%c0_46, %c48, %c0_47] : memref<1x64x128xbf16, #tpu.memory_space<vmem>>, vector<1x16x128xbf16>
    %133 = vector.shape_cast %132 : vector<1x16x128xbf16> to vector<16x128xbf16>
    %134 = vector.shape_cast %131 : vector<16x128xbf16> to vector<1x16x128xbf16>
    tpu.vector_store %arg4[%c0_46, %c48, %c0_47], %134 {strides = array<i32>} : memref<1x64x128xbf16, #tpu.memory_space<vmem>>, vector<1x16x128xbf16>,
    return
  }
  func.func @transform_0(%arg0: i32) -> (i32, i32, i32) {
    %c0_i32 = arith.constant 0 : i32
    %c0_i32_0 = arith.constant 0 : i32
    %c0_i32_1 = arith.constant 0 : i32
    return %arg0, %c0_i32, %c0_i32_0 : i32, i32, i32
  }
  func.func @transform_1(%arg0: i32) -> (i32, i32) {
    %c0_i32 = arith.constant 0 : i32
    %c0_i32_0 = arith.constant 0 : i32
    %c0_i32_1 = arith.constant 0 : i32
    return %c0_i32, %c0_i32_0 : i32, i32
  }
  func.func @transform_2(%arg0: i32) -> (i32, i32) {
    %c0_i32 = arith.constant 0 : i32
    %c0_i32_0 = arith.constant 0 : i32
    %c0_i32_1 = arith.constant 0 : i32
    return %c0_i32, %c0_i32_0 : i32, i32
  }
  func.func @transform_3(%arg0: i32) -> (i32, i32, i32) {
    %c0_i32 = arith.constant 0 : i32
    %c0_i32_0 = arith.constant 0 : i32
    %c0_i32_1 = arith.constant 0 : i32
    return %arg0, %c0_i32, %c0_i32_0 : i32, i32, i32
  }
}

module attributes {stable_mosaic.version = 11 : i64} {
  func.func @kernel(%arg0: i32, %arg1: memref<1x16x138xbf16, #tpu.memory_space<vmem>>, %arg2: memref<32x64xbf16, #tpu.memory_space<vmem>>, %arg3: memref<32x1xf32, #tpu.memory_space<vmem>>, %arg4: memref<1x32x128xbf16, #tpu.memory_space<vmem>>, %arg5: memref<64x128xbf16, #tpu.memory_space<vmem>>) attributes {dimension_semantics = [#tpu.dimension_semantics<parallel>], iteration_bounds = array<i64: 2>, scalar_prefetch = 0 : i64, scratch_operands = 1 : i64, tpu.core_type = #tpu.core_type<tc>, window_params = [{transform_indices = @transform_0, window_bounds = array<i64: 1, 16, 138>}, {pipeline_mode = #tpu.pipeline_mode<synchronous>, transform_indices = @transform_1, window_bounds = array<i64: 32, 64>}, {pipeline_mode = #tpu.pipeline_mode<synchronous>, transform_indices = @transform_2, window_bounds = array<i64: 32, 1>}, {transform_indices = @transform_3, window_bounds = array<i64: 1, 32, 128>}]} {
    %c0 = arith.constant 0 : index
    %c0_0 = arith.constant 0 : index
    %c0_1 = arith.constant 0 : index
    %0 = vector.load %arg1[%c0, %c0_0, %c0_1] : memref<1x16x138xbf16, #tpu.memory_space<vmem>>, vector<1x16x128xbf16>
    %1 = vector.shape_cast %0 : vector<1x16x128xbf16> to vector<16x128xbf16>
    %c0_2 = arith.constant 0 : index
    %c0_3 = arith.constant 0 : index
    %2 = vector.load %arg5[%c0_2, %c0_3] : memref<64x128xbf16, #tpu.memory_space<vmem>>, vector<16x128xbf16>
    tpu.vector_store %arg5[%c0_2, %c0_3], %1 {strides = array<i32>} : memref<64x128xbf16, #tpu.memory_space<vmem>>, vector<16x128xbf16>,
    %c0_4 = arith.constant 0 : index
    %c0_5 = arith.constant 0 : index
    %c1 = arith.constant 1 : index
    %3 = vector.load %arg1[%c0_4, %c0_5, %c1] : memref<1x16x138xbf16, #tpu.memory_space<vmem>>, vector<1x16x128xbf16>
    %4 = vector.shape_cast %3 : vector<1x16x128xbf16> to vector<16x128xbf16>
    %c16 = arith.constant 16 : index
    %c0_6 = arith.constant 0 : index
    %5 = vector.load %arg5[%c16, %c0_6] : memref<64x128xbf16, #tpu.memory_space<vmem>>, vector<16x128xbf16>
    tpu.vector_store %arg5[%c16, %c0_6], %4 {strides = array<i32>} : memref<64x128xbf16, #tpu.memory_space<vmem>>, vector<16x128xbf16>,
    %c0_7 = arith.constant 0 : index
    %c0_8 = arith.constant 0 : index
    %c9 = arith.constant 9 : index
    %6 = vector.load %arg1[%c0_7, %c0_8, %c9] : memref<1x16x138xbf16, #tpu.memory_space<vmem>>, vector<1x16x128xbf16>
    %7 = vector.shape_cast %6 : vector<1x16x128xbf16> to vector<16x128xbf16>
    %c32 = arith.constant 32 : index
    %c0_9 = arith.constant 0 : index
    %8 = vector.load %arg5[%c32, %c0_9] : memref<64x128xbf16, #tpu.memory_space<vmem>>, vector<16x128xbf16>
    tpu.vector_store %arg5[%c32, %c0_9], %7 {strides = array<i32>} : memref<64x128xbf16, #tpu.memory_space<vmem>>, vector<16x128xbf16>,
    %c0_10 = arith.constant 0 : index
    %c0_11 = arith.constant 0 : index
    %c10 = arith.constant 10 : index
    %9 = vector.load %arg1[%c0_10, %c0_11, %c10] : memref<1x16x138xbf16, #tpu.memory_space<vmem>>, vector<1x16x128xbf16>
    %10 = vector.shape_cast %9 : vector<1x16x128xbf16> to vector<16x128xbf16>
    %c48 = arith.constant 48 : index
    %c0_12 = arith.constant 0 : index
    %11 = vector.load %arg5[%c48, %c0_12] : memref<64x128xbf16, #tpu.memory_space<vmem>>, vector<16x128xbf16>
    tpu.vector_store %arg5[%c48, %c0_12], %10 {strides = array<i32>} : memref<64x128xbf16, #tpu.memory_space<vmem>>, vector<16x128xbf16>,
    %c0_13 = arith.constant 0 : index
    %c0_14 = arith.constant 0 : index
    %12 = vector.load %arg2[%c0_13, %c0_14] : memref<32x64xbf16, #tpu.memory_space<vmem>>, vector<32x64xbf16>
    %c0_15 = arith.constant 0 : index
    %c0_16 = arith.constant 0 : index
    %13 = vector.load %arg5[%c0_15, %c0_16] : memref<64x128xbf16, #tpu.memory_space<vmem>>, vector<64x128xbf16>
    %cst = arith.constant dense<0.000000e+00> : vector<32x128xf32>
    %14 = tpu.matmul %12, %13, %cst {dimension_numbers = #tpu.dot_dimension_numbers<[1], [0], [0], [1], [0, 0, 1, 1], [], []>} : vector<32x64xbf16>, vector<64x128xbf16>, vector<32x128xf32> -> vector<32x128xf32>
    %c0_17 = arith.constant 0 : index
    %c0_18 = arith.constant 0 : index
    %15 = vector.load %arg3[%c0_17, %c0_18] : memref<32x1xf32, #tpu.memory_space<vmem>>, vector<32x1xf32>
    %16 = vector.broadcast %15 : vector<32x1xf32> to vector<32x128xf32>
    %17 = arith.addf %14, %16 : vector<32x128xf32>
    %18 = tpu.iota {dimensions = array<i32: 1>} : vector<1x128xi32>
    %c9_i32 = arith.constant 9 : i32
    %c0_i32 = arith.constant 0 : i32
    %19 = arith.cmpi eq, %c9_i32, %c0_i32 : i32
    %c1_i32 = arith.constant 1 : i32
    %20 = arith.select %19, %c1_i32, %c9_i32 : i32
    %21 = vector.broadcast %20 : i32 to vector<1x128xi32>
    %22 = arith.remsi %18, %21 : vector<1x128xi32>
    %c0_i32_19 = arith.constant 0 : i32
    %23 = vector.broadcast %c0_i32_19 : i32 to vector<1x128xi32>
    %24 = arith.cmpi ne, %22, %23 : vector<1x128xi32>
    %c0_i32_20 = arith.constant 0 : i32
    %25 = vector.broadcast %c0_i32_20 : i32 to vector<1x128xi32>
    %26 = arith.cmpi slt, %22, %25 : vector<1x128xi32>
    %c0_i32_21 = arith.constant 0 : i32
    %27 = arith.cmpi slt, %20, %c0_i32_21 : i32
    %28 = vector.broadcast %27 : i1 to vector<1x128xi1>
    %29 = vector.broadcast %28 : vector<1x128xi1> to vector<1x128xi1>
    %30 = arith.xori %26, %29 : vector<1x128xi1>
    %31 = arith.andi %30, %24 : vector<1x128xi1>
    %32 = vector.broadcast %20 : i32 to vector<1x128xi32>
    %33 = arith.addi %22, %32 : vector<1x128xi32>
    %34 = arith.select %31, %33, %22 : vector<1x128xi1>, vector<1x128xi32>
    %c8_i32 = arith.constant 8 : i32
    %35 = vector.broadcast %c8_i32 : i32 to vector<1x128xi32>
    %36 = arith.cmpi slt, %34, %35 : vector<1x128xi32>
    %c71_i32 = arith.constant 71 : i32
    %37 = vector.broadcast %c71_i32 : i32 to vector<1x128xi32>
    %38 = arith.cmpi slt, %18, %37 : vector<1x128xi32>
    %39 = arith.andi %36, %38 : vector<1x128xi1>
    %40 = arith.extui %39 : vector<1x128xi1> to vector<1x128xi32>
    %41 = arith.sitofp %40 : vector<1x128xi32> to vector<1x128xf32>
    %42 = vector.extract_strided_slice %17 {offsets = [0, 0], sizes = [8, 128], strides = [1, 1]} : vector<32x128xf32> to vector<8x128xf32>
    %43 = vector.broadcast %41 : vector<1x128xf32> to vector<8x128xf32>
    %44 = arith.mulf %42, %43 : vector<8x128xf32>
    %cst_22 = arith.constant dense<0.000000e+00> : vector<8xf32>
    %45 = vector.multi_reduction <add>, %44, %cst_22 [1] : vector<8x128xf32> to vector<8xf32>
    %46 = vector.shape_cast %45 : vector<8xf32> to vector<8x1xf32>
    %47 = arith.mulf %42, %44 : vector<8x128xf32>
    %cst_23 = arith.constant dense<0.000000e+00> : vector<8xf32>
    %48 = vector.multi_reduction <add>, %47, %cst_23 [1] : vector<8x128xf32> to vector<8xf32>
    %49 = vector.shape_cast %48 : vector<8xf32> to vector<8x1xf32>
    %50 = vector.extract_strided_slice %17 {offsets = [8, 0], sizes = [8, 128], strides = [1, 1]} : vector<32x128xf32> to vector<8x128xf32>
    %51 = vector.broadcast %41 : vector<1x128xf32> to vector<8x128xf32>
    %52 = arith.mulf %50, %51 : vector<8x128xf32>
    %cst_24 = arith.constant dense<0.000000e+00> : vector<8xf32>
    %53 = vector.multi_reduction <add>, %52, %cst_24 [1] : vector<8x128xf32> to vector<8xf32>
    %54 = vector.shape_cast %53 : vector<8xf32> to vector<8x1xf32>
    %55 = arith.mulf %50, %52 : vector<8x128xf32>
    %cst_25 = arith.constant dense<0.000000e+00> : vector<8xf32>
    %56 = vector.multi_reduction <add>, %55, %cst_25 [1] : vector<8x128xf32> to vector<8xf32>
    %57 = vector.shape_cast %56 : vector<8xf32> to vector<8x1xf32>
    %58 = arith.addf %46, %54 : vector<8x1xf32>
    %59 = arith.addf %49, %57 : vector<8x1xf32>
    %60 = vector.extract_strided_slice %17 {offsets = [16, 0], sizes = [8, 128], strides = [1, 1]} : vector<32x128xf32> to vector<8x128xf32>
    %61 = vector.broadcast %41 : vector<1x128xf32> to vector<8x128xf32>
    %62 = arith.mulf %60, %61 : vector<8x128xf32>
    %cst_26 = arith.constant dense<0.000000e+00> : vector<8xf32>
    %63 = vector.multi_reduction <add>, %62, %cst_26 [1] : vector<8x128xf32> to vector<8xf32>
    %64 = vector.shape_cast %63 : vector<8xf32> to vector<8x1xf32>
    %65 = arith.mulf %60, %62 : vector<8x128xf32>
    %cst_27 = arith.constant dense<0.000000e+00> : vector<8xf32>
    %66 = vector.multi_reduction <add>, %65, %cst_27 [1] : vector<8x128xf32> to vector<8xf32>
    %67 = vector.shape_cast %66 : vector<8xf32> to vector<8x1xf32>
    %68 = arith.addf %58, %64 : vector<8x1xf32>
    %69 = arith.addf %59, %67 : vector<8x1xf32>
    %70 = vector.extract_strided_slice %17 {offsets = [24, 0], sizes = [8, 128], strides = [1, 1]} : vector<32x128xf32> to vector<8x128xf32>
    %71 = vector.broadcast %41 : vector<1x128xf32> to vector<8x128xf32>
    %72 = arith.mulf %70, %71 : vector<8x128xf32>
    %cst_28 = arith.constant dense<0.000000e+00> : vector<8xf32>
    %73 = vector.multi_reduction <add>, %72, %cst_28 [1] : vector<8x128xf32> to vector<8xf32>
    %74 = vector.shape_cast %73 : vector<8xf32> to vector<8x1xf32>
    %75 = arith.mulf %70, %72 : vector<8x128xf32>
    %cst_29 = arith.constant dense<0.000000e+00> : vector<8xf32>
    %76 = vector.multi_reduction <add>, %75, %cst_29 [1] : vector<8x128xf32> to vector<8xf32>
    %77 = vector.shape_cast %76 : vector<8xf32> to vector<8x1xf32>
    %78 = arith.addf %68, %74 : vector<8x1xf32>
    %79 = arith.addf %69, %77 : vector<8x1xf32>
    %cst_30 = arith.constant 3.906250e-03 : f32
    %80 = vector.broadcast %cst_30 : f32 to vector<8x1xf32>
    %81 = arith.mulf %78, %80 : vector<8x1xf32>
    %cst_31 = arith.constant 3.906250e-03 : f32
    %82 = vector.broadcast %cst_31 : f32 to vector<8x1xf32>
    %83 = arith.mulf %79, %82 : vector<8x1xf32>
    %84 = arith.mulf %81, %81 : vector<8x1xf32>
    %85 = arith.subf %83, %84 : vector<8x1xf32>
    %cst_32 = arith.constant 0.000000e+00 : f32
    %86 = vector.broadcast %cst_32 : f32 to vector<8x1xf32>
    %87 = arith.maximumf %85, %86 : vector<8x1xf32>
    %cst_33 = arith.constant 9.99999974E-6 : f32
    %88 = vector.broadcast %cst_33 : f32 to vector<8x1xf32>
    %89 = arith.addf %87, %88 : vector<8x1xf32>
    %90 = math.rsqrt %89 : vector<8x1xf32>
    %91 = vector.extract_strided_slice %17 {offsets = [0, 0], sizes = [8, 128], strides = [1, 1]} : vector<32x128xf32> to vector<8x128xf32>
    %92 = vector.broadcast %81 : vector<8x1xf32> to vector<8x128xf32>
    %93 = arith.subf %91, %92 : vector<8x128xf32>
    %94 = vector.broadcast %90 : vector<8x1xf32> to vector<8x128xf32>
    %95 = arith.mulf %93, %94 : vector<8x128xf32>
    %cst_34 = arith.constant 0.000000e+00 : f32
    %96 = vector.broadcast %cst_34 : f32 to vector<8x128xf32>
    %97 = arith.maximumf %95, %96 : vector<8x128xf32>
    %98 = arith.truncf %97 : vector<8x128xf32> to vector<8x128xbf16>
    %c0_35 = arith.constant 0 : index
    %c0_36 = arith.constant 0 : index
    %c0_37 = arith.constant 0 : index
    %99 = vector.load %arg4[%c0_35, %c0_36, %c0_37] : memref<1x32x128xbf16, #tpu.memory_space<vmem>>, vector<1x8x128xbf16>
    %100 = vector.shape_cast %99 : vector<1x8x128xbf16> to vector<8x128xbf16>
    %101 = vector.shape_cast %98 : vector<8x128xbf16> to vector<1x8x128xbf16>
    tpu.vector_store %arg4[%c0_35, %c0_36, %c0_37], %101 {strides = array<i32>} : memref<1x32x128xbf16, #tpu.memory_space<vmem>>, vector<1x8x128xbf16>,
    %102 = vector.extract_strided_slice %17 {offsets = [8, 0], sizes = [8, 128], strides = [1, 1]} : vector<32x128xf32> to vector<8x128xf32>
    %103 = vector.broadcast %81 : vector<8x1xf32> to vector<8x128xf32>
    %104 = arith.subf %102, %103 : vector<8x128xf32>
    %105 = vector.broadcast %90 : vector<8x1xf32> to vector<8x128xf32>
    %106 = arith.mulf %104, %105 : vector<8x128xf32>
    %cst_38 = arith.constant 0.000000e+00 : f32
    %107 = vector.broadcast %cst_38 : f32 to vector<8x128xf32>
    %108 = arith.maximumf %106, %107 : vector<8x128xf32>
    %109 = arith.truncf %108 : vector<8x128xf32> to vector<8x128xbf16>
    %c0_39 = arith.constant 0 : index
    %c8 = arith.constant 8 : index
    %c0_40 = arith.constant 0 : index
    %110 = vector.load %arg4[%c0_39, %c8, %c0_40] : memref<1x32x128xbf16, #tpu.memory_space<vmem>>, vector<1x8x128xbf16>
    %111 = vector.shape_cast %110 : vector<1x8x128xbf16> to vector<8x128xbf16>
    %112 = vector.shape_cast %109 : vector<8x128xbf16> to vector<1x8x128xbf16>
    tpu.vector_store %arg4[%c0_39, %c8, %c0_40], %112 {strides = array<i32>} : memref<1x32x128xbf16, #tpu.memory_space<vmem>>, vector<1x8x128xbf16>,
    %113 = vector.extract_strided_slice %17 {offsets = [16, 0], sizes = [8, 128], strides = [1, 1]} : vector<32x128xf32> to vector<8x128xf32>
    %114 = vector.broadcast %81 : vector<8x1xf32> to vector<8x128xf32>
    %115 = arith.subf %113, %114 : vector<8x128xf32>
    %116 = vector.broadcast %90 : vector<8x1xf32> to vector<8x128xf32>
    %117 = arith.mulf %115, %116 : vector<8x128xf32>
    %cst_41 = arith.constant 0.000000e+00 : f32
    %118 = vector.broadcast %cst_41 : f32 to vector<8x128xf32>
    %119 = arith.maximumf %117, %118 : vector<8x128xf32>
    %120 = arith.truncf %119 : vector<8x128xf32> to vector<8x128xbf16>
    %c0_42 = arith.constant 0 : index
    %c16_43 = arith.constant 16 : index
    %c0_44 = arith.constant 0 : index
    %121 = vector.load %arg4[%c0_42, %c16_43, %c0_44] : memref<1x32x128xbf16, #tpu.memory_space<vmem>>, vector<1x8x128xbf16>
    %122 = vector.shape_cast %121 : vector<1x8x128xbf16> to vector<8x128xbf16>
    %123 = vector.shape_cast %120 : vector<8x128xbf16> to vector<1x8x128xbf16>
    tpu.vector_store %arg4[%c0_42, %c16_43, %c0_44], %123 {strides = array<i32>} : memref<1x32x128xbf16, #tpu.memory_space<vmem>>, vector<1x8x128xbf16>,
    %124 = vector.extract_strided_slice %17 {offsets = [24, 0], sizes = [8, 128], strides = [1, 1]} : vector<32x128xf32> to vector<8x128xf32>
    %125 = vector.broadcast %81 : vector<8x1xf32> to vector<8x128xf32>
    %126 = arith.subf %124, %125 : vector<8x128xf32>
    %127 = vector.broadcast %90 : vector<8x1xf32> to vector<8x128xf32>
    %128 = arith.mulf %126, %127 : vector<8x128xf32>
    %cst_45 = arith.constant 0.000000e+00 : f32
    %129 = vector.broadcast %cst_45 : f32 to vector<8x128xf32>
    %130 = arith.maximumf %128, %129 : vector<8x128xf32>
    %131 = arith.truncf %130 : vector<8x128xf32> to vector<8x128xbf16>
    %c0_46 = arith.constant 0 : index
    %c24 = arith.constant 24 : index
    %c0_47 = arith.constant 0 : index
    %132 = vector.load %arg4[%c0_46, %c24, %c0_47] : memref<1x32x128xbf16, #tpu.memory_space<vmem>>, vector<1x8x128xbf16>
    %133 = vector.shape_cast %132 : vector<1x8x128xbf16> to vector<8x128xbf16>
    %134 = vector.shape_cast %131 : vector<8x128xbf16> to vector<1x8x128xbf16>
    tpu.vector_store %arg4[%c0_46, %c24, %c0_47], %134 {strides = array<i32>} : memref<1x32x128xbf16, #tpu.memory_space<vmem>>, vector<1x8x128xbf16>,
    return
  }
  func.func @transform_0(%arg0: i32) -> (i32, i32, i32) {
    %c0_i32 = arith.constant 0 : i32
    %c0_i32_0 = arith.constant 0 : i32
    %c0_i32_1 = arith.constant 0 : i32
    return %arg0, %c0_i32, %c0_i32_0 : i32, i32, i32
  }
  func.func @transform_1(%arg0: i32) -> (i32, i32) {
    %c0_i32 = arith.constant 0 : i32
    %c0_i32_0 = arith.constant 0 : i32
    %c0_i32_1 = arith.constant 0 : i32
    return %c0_i32, %c0_i32_0 : i32, i32
  }
  func.func @transform_2(%arg0: i32) -> (i32, i32) {
    %c0_i32 = arith.constant 0 : i32
    %c0_i32_0 = arith.constant 0 : i32
    %c0_i32_1 = arith.constant 0 : i32
    return %c0_i32, %c0_i32_0 : i32, i32
  }
  func.func @transform_3(%arg0: i32) -> (i32, i32, i32) {
    %c0_i32 = arith.constant 0 : i32
    %c0_i32_0 = arith.constant 0 : i32
    %c0_i32_1 = arith.constant 0 : i32
    return %arg0, %c0_i32, %c0_i32_0 : i32, i32, i32
  }
}

module attributes {stable_mosaic.version = 11 : i64} {
  func.func @kernel(%arg0: i32, %arg1: memref<1x8x522xbf16, #tpu.memory_space<vmem>>, %arg2: memref<3x392xbf16, #tpu.memory_space<vmem>>, %arg3: memref<3x1xf32, #tpu.memory_space<vmem>>, %arg4: memref<1x3x384xf32, #tpu.memory_space<vmem>>, %arg5: memref<392x384xbf16, #tpu.memory_space<vmem>>) attributes {dimension_semantics = [#tpu.dimension_semantics<parallel>], iteration_bounds = array<i64: 2>, scalar_prefetch = 0 : i64, scratch_operands = 1 : i64, tpu.core_type = #tpu.core_type<tc>, window_params = [{transform_indices = @transform_0, window_bounds = array<i64: 1, 8, 522>}, {pipeline_mode = #tpu.pipeline_mode<synchronous>, transform_indices = @transform_1, window_bounds = array<i64: 3, 392>}, {pipeline_mode = #tpu.pipeline_mode<synchronous>, transform_indices = @transform_2, window_bounds = array<i64: 3, 1>}, {transform_indices = @transform_3, window_bounds = array<i64: 1, 3, 384>}]} {
    %c0 = arith.constant 0 : index
    %c0_0 = arith.constant 0 : index
    %c0_1 = arith.constant 0 : index
    %0 = vector.load %arg1[%c0, %c0_0, %c0_1] : memref<1x8x522xbf16, #tpu.memory_space<vmem>>, vector<1x8x384xbf16>
    %1 = vector.shape_cast %0 : vector<1x8x384xbf16> to vector<8x384xbf16>
    %c0_2 = arith.constant 0 : index
    %c0_3 = arith.constant 0 : index
    %2 = vector.load %arg5[%c0_2, %c0_3] : memref<392x384xbf16, #tpu.memory_space<vmem>>, vector<8x384xbf16>
    tpu.vector_store %arg5[%c0_2, %c0_3], %1 {strides = array<i32>} : memref<392x384xbf16, #tpu.memory_space<vmem>>, vector<8x384xbf16>,
    %c0_4 = arith.constant 0 : index
    %c0_5 = arith.constant 0 : index
    %c1 = arith.constant 1 : index
    %3 = vector.load %arg1[%c0_4, %c0_5, %c1] : memref<1x8x522xbf16, #tpu.memory_space<vmem>>, vector<1x8x384xbf16>
    %4 = vector.shape_cast %3 : vector<1x8x384xbf16> to vector<8x384xbf16>
    %c8 = arith.constant 8 : index
    %c0_6 = arith.constant 0 : index
    %5 = vector.load %arg5[%c8, %c0_6] : memref<392x384xbf16, #tpu.memory_space<vmem>>, vector<8x384xbf16>
    tpu.vector_store %arg5[%c8, %c0_6], %4 {strides = array<i32>} : memref<392x384xbf16, #tpu.memory_space<vmem>>, vector<8x384xbf16>,
    %c0_7 = arith.constant 0 : index
    %c0_8 = arith.constant 0 : index
    %c2 = arith.constant 2 : index
    %6 = vector.load %arg1[%c0_7, %c0_8, %c2] : memref<1x8x522xbf16, #tpu.memory_space<vmem>>, vector<1x8x384xbf16>
    %7 = vector.shape_cast %6 : vector<1x8x384xbf16> to vector<8x384xbf16>
    %c16 = arith.constant 16 : index
    %c0_9 = arith.constant 0 : index
    %8 = vector.load %arg5[%c16, %c0_9] : memref<392x384xbf16, #tpu.memory_space<vmem>>, vector<8x384xbf16>
    tpu.vector_store %arg5[%c16, %c0_9], %7 {strides = array<i32>} : memref<392x384xbf16, #tpu.memory_space<vmem>>, vector<8x384xbf16>,
    %c0_10 = arith.constant 0 : index
    %c0_11 = arith.constant 0 : index
    %c3 = arith.constant 3 : index
    %9 = vector.load %arg1[%c0_10, %c0_11, %c3] : memref<1x8x522xbf16, #tpu.memory_space<vmem>>, vector<1x8x384xbf16>
    %10 = vector.shape_cast %9 : vector<1x8x384xbf16> to vector<8x384xbf16>
    %c24 = arith.constant 24 : index
    %c0_12 = arith.constant 0 : index
    %11 = vector.load %arg5[%c24, %c0_12] : memref<392x384xbf16, #tpu.memory_space<vmem>>, vector<8x384xbf16>
    tpu.vector_store %arg5[%c24, %c0_12], %10 {strides = array<i32>} : memref<392x384xbf16, #tpu.memory_space<vmem>>, vector<8x384xbf16>,
    %c0_13 = arith.constant 0 : index
    %c0_14 = arith.constant 0 : index
    %c4 = arith.constant 4 : index
    %12 = vector.load %arg1[%c0_13, %c0_14, %c4] : memref<1x8x522xbf16, #tpu.memory_space<vmem>>, vector<1x8x384xbf16>
    %13 = vector.shape_cast %12 : vector<1x8x384xbf16> to vector<8x384xbf16>
    %c32 = arith.constant 32 : index
    %c0_15 = arith.constant 0 : index
    %14 = vector.load %arg5[%c32, %c0_15] : memref<392x384xbf16, #tpu.memory_space<vmem>>, vector<8x384xbf16>
    tpu.vector_store %arg5[%c32, %c0_15], %13 {strides = array<i32>} : memref<392x384xbf16, #tpu.memory_space<vmem>>, vector<8x384xbf16>,
    %c0_16 = arith.constant 0 : index
    %c0_17 = arith.constant 0 : index
    %c5 = arith.constant 5 : index
    %15 = vector.load %arg1[%c0_16, %c0_17, %c5] : memref<1x8x522xbf16, #tpu.memory_space<vmem>>, vector<1x8x384xbf16>
    %16 = vector.shape_cast %15 : vector<1x8x384xbf16> to vector<8x384xbf16>
    %c40 = arith.constant 40 : index
    %c0_18 = arith.constant 0 : index
    %17 = vector.load %arg5[%c40, %c0_18] : memref<392x384xbf16, #tpu.memory_space<vmem>>, vector<8x384xbf16>
    tpu.vector_store %arg5[%c40, %c0_18], %16 {strides = array<i32>} : memref<392x384xbf16, #tpu.memory_space<vmem>>, vector<8x384xbf16>,
    %c0_19 = arith.constant 0 : index
    %c0_20 = arith.constant 0 : index
    %c6 = arith.constant 6 : index
    %18 = vector.load %arg1[%c0_19, %c0_20, %c6] : memref<1x8x522xbf16, #tpu.memory_space<vmem>>, vector<1x8x384xbf16>
    %19 = vector.shape_cast %18 : vector<1x8x384xbf16> to vector<8x384xbf16>
    %c48 = arith.constant 48 : index
    %c0_21 = arith.constant 0 : index
    %20 = vector.load %arg5[%c48, %c0_21] : memref<392x384xbf16, #tpu.memory_space<vmem>>, vector<8x384xbf16>
    tpu.vector_store %arg5[%c48, %c0_21], %19 {strides = array<i32>} : memref<392x384xbf16, #tpu.memory_space<vmem>>, vector<8x384xbf16>,
    %c0_22 = arith.constant 0 : index
    %c0_23 = arith.constant 0 : index
    %c22 = arith.constant 22 : index
    %21 = vector.load %arg1[%c0_22, %c0_23, %c22] : memref<1x8x522xbf16, #tpu.memory_space<vmem>>, vector<1x8x384xbf16>
    %22 = vector.shape_cast %21 : vector<1x8x384xbf16> to vector<8x384xbf16>
    %c56 = arith.constant 56 : index
    %c0_24 = arith.constant 0 : index
    %23 = vector.load %arg5[%c56, %c0_24] : memref<392x384xbf16, #tpu.memory_space<vmem>>, vector<8x384xbf16>
    tpu.vector_store %arg5[%c56, %c0_24], %22 {strides = array<i32>} : memref<392x384xbf16, #tpu.memory_space<vmem>>, vector<8x384xbf16>,
    %c0_25 = arith.constant 0 : index
    %c0_26 = arith.constant 0 : index
    %c23 = arith.constant 23 : index
    %24 = vector.load %arg1[%c0_25, %c0_26, %c23] : memref<1x8x522xbf16, #tpu.memory_space<vmem>>, vector<1x8x384xbf16>
    %25 = vector.shape_cast %24 : vector<1x8x384xbf16> to vector<8x384xbf16>
    %c64 = arith.constant 64 : index
    %c0_27 = arith.constant 0 : index
    %26 = vector.load %arg5[%c64, %c0_27] : memref<392x384xbf16, #tpu.memory_space<vmem>>, vector<8x384xbf16>
    tpu.vector_store %arg5[%c64, %c0_27], %25 {strides = array<i32>} : memref<392x384xbf16, #tpu.memory_space<vmem>>, vector<8x384xbf16>,
    %c0_28 = arith.constant 0 : index
    %c0_29 = arith.constant 0 : index
    %c24_30 = arith.constant 24 : index
    %27 = vector.load %arg1[%c0_28, %c0_29, %c24_30] : memref<1x8x522xbf16, #tpu.memory_space<vmem>>, vector<1x8x384xbf16>
    %28 = vector.shape_cast %27 : vector<1x8x384xbf16> to vector<8x384xbf16>
    %c72 = arith.constant 72 : index
    %c0_31 = arith.constant 0 : index
    %29 = vector.load %arg5[%c72, %c0_31] : memref<392x384xbf16, #tpu.memory_space<vmem>>, vector<8x384xbf16>
    tpu.vector_store %arg5[%c72, %c0_31], %28 {strides = array<i32>} : memref<392x384xbf16, #tpu.memory_space<vmem>>, vector<8x384xbf16>,
    %c0_32 = arith.constant 0 : index
    %c0_33 = arith.constant 0 : index
    %c25 = arith.constant 25 : index
    %30 = vector.load %arg1[%c0_32, %c0_33, %c25] : memref<1x8x522xbf16, #tpu.memory_space<vmem>>, vector<1x8x384xbf16>
    %31 = vector.shape_cast %30 : vector<1x8x384xbf16> to vector<8x384xbf16>
    %c80 = arith.constant 80 : index
    %c0_34 = arith.constant 0 : index
    %32 = vector.load %arg5[%c80, %c0_34] : memref<392x384xbf16, #tpu.memory_space<vmem>>, vector<8x384xbf16>
    tpu.vector_store %arg5[%c80, %c0_34], %31 {strides = array<i32>} : memref<392x384xbf16, #tpu.memory_space<vmem>>, vector<8x384xbf16>,
    %c0_35 = arith.constant 0 : index
    %c0_36 = arith.constant 0 : index
    %c26 = arith.constant 26 : index
    %33 = vector.load %arg1[%c0_35, %c0_36, %c26] : memref<1x8x522xbf16, #tpu.memory_space<vmem>>, vector<1x8x384xbf16>
    %34 = vector.shape_cast %33 : vector<1x8x384xbf16> to vector<8x384xbf16>
    %c88 = arith.constant 88 : index
    %c0_37 = arith.constant 0 : index
    %35 = vector.load %arg5[%c88, %c0_37] : memref<392x384xbf16, #tpu.memory_space<vmem>>, vector<8x384xbf16>
    tpu.vector_store %arg5[%c88, %c0_37], %34 {strides = array<i32>} : memref<392x384xbf16, #tpu.memory_space<vmem>>, vector<8x384xbf16>,
    %c0_38 = arith.constant 0 : index
    %c0_39 = arith.constant 0 : index
    %c27 = arith.constant 27 : index
    %36 = vector.load %arg1[%c0_38, %c0_39, %c27] : memref<1x8x522xbf16, #tpu.memory_space<vmem>>, vector<1x8x384xbf16>
    %37 = vector.shape_cast %36 : vector<1x8x384xbf16> to vector<8x384xbf16>
    %c96 = arith.constant 96 : index
    %c0_40 = arith.constant 0 : index
    %38 = vector.load %arg5[%c96, %c0_40] : memref<392x384xbf16, #tpu.memory_space<vmem>>, vector<8x384xbf16>
    tpu.vector_store %arg5[%c96, %c0_40], %37 {strides = array<i32>} : memref<392x384xbf16, #tpu.memory_space<vmem>>, vector<8x384xbf16>,
    %c0_41 = arith.constant 0 : index
    %c0_42 = arith.constant 0 : index
    %c28 = arith.constant 28 : index
    %39 = vector.load %arg1[%c0_41, %c0_42, %c28] : memref<1x8x522xbf16, #tpu.memory_space<vmem>>, vector<1x8x384xbf16>
    %40 = vector.shape_cast %39 : vector<1x8x384xbf16> to vector<8x384xbf16>
    %c104 = arith.constant 104 : index
    %c0_43 = arith.constant 0 : index
    %41 = vector.load %arg5[%c104, %c0_43] : memref<392x384xbf16, #tpu.memory_space<vmem>>, vector<8x384xbf16>
    tpu.vector_store %arg5[%c104, %c0_43], %40 {strides = array<i32>} : memref<392x384xbf16, #tpu.memory_space<vmem>>, vector<8x384xbf16>,
    %c0_44 = arith.constant 0 : index
    %c0_45 = arith.constant 0 : index
    %c44 = arith.constant 44 : index
    %42 = vector.load %arg1[%c0_44, %c0_45, %c44] : memref<1x8x522xbf16, #tpu.memory_space<vmem>>, vector<1x8x384xbf16>
    %43 = vector.shape_cast %42 : vector<1x8x384xbf16> to vector<8x384xbf16>
    %c112 = arith.constant 112 : index
    %c0_46 = arith.constant 0 : index
    %44 = vector.load %arg5[%c112, %c0_46] : memref<392x384xbf16, #tpu.memory_space<vmem>>, vector<8x384xbf16>
    tpu.vector_store %arg5[%c112, %c0_46], %43 {strides = array<i32>} : memref<392x384xbf16, #tpu.memory_space<vmem>>, vector<8x384xbf16>,
    %c0_47 = arith.constant 0 : index
    %c0_48 = arith.constant 0 : index
    %c45 = arith.constant 45 : index
    %45 = vector.load %arg1[%c0_47, %c0_48, %c45] : memref<1x8x522xbf16, #tpu.memory_space<vmem>>, vector<1x8x384xbf16>
    %46 = vector.shape_cast %45 : vector<1x8x384xbf16> to vector<8x384xbf16>
    %c120 = arith.constant 120 : index
    %c0_49 = arith.constant 0 : index
    %47 = vector.load %arg5[%c120, %c0_49] : memref<392x384xbf16, #tpu.memory_space<vmem>>, vector<8x384xbf16>
    tpu.vector_store %arg5[%c120, %c0_49], %46 {strides = array<i32>} : memref<392x384xbf16, #tpu.memory_space<vmem>>, vector<8x384xbf16>,
    %c0_50 = arith.constant 0 : index
    %c0_51 = arith.constant 0 : index
    %c46 = arith.constant 46 : index
    %48 = vector.load %arg1[%c0_50, %c0_51, %c46] : memref<1x8x522xbf16, #tpu.memory_space<vmem>>, vector<1x8x384xbf16>
    %49 = vector.shape_cast %48 : vector<1x8x384xbf16> to vector<8x384xbf16>
    %c128 = arith.constant 128 : index
    %c0_52 = arith.constant 0 : index
    %50 = vector.load %arg5[%c128, %c0_52] : memref<392x384xbf16, #tpu.memory_space<vmem>>, vector<8x384xbf16>
    tpu.vector_store %arg5[%c128, %c0_52], %49 {strides = array<i32>} : memref<392x384xbf16, #tpu.memory_space<vmem>>, vector<8x384xbf16>,
    %c0_53 = arith.constant 0 : index
    %c0_54 = arith.constant 0 : index
    %c47 = arith.constant 47 : index
    %51 = vector.load %arg1[%c0_53, %c0_54, %c47] : memref<1x8x522xbf16, #tpu.memory_space<vmem>>, vector<1x8x384xbf16>
    %52 = vector.shape_cast %51 : vector<1x8x384xbf16> to vector<8x384xbf16>
    %c136 = arith.constant 136 : index
    %c0_55 = arith.constant 0 : index
    %53 = vector.load %arg5[%c136, %c0_55] : memref<392x384xbf16, #tpu.memory_space<vmem>>, vector<8x384xbf16>
    tpu.vector_store %arg5[%c136, %c0_55], %52 {strides = array<i32>} : memref<392x384xbf16, #tpu.memory_space<vmem>>, vector<8x384xbf16>,
    %c0_56 = arith.constant 0 : index
    %c0_57 = arith.constant 0 : index
    %c48_58 = arith.constant 48 : index
    %54 = vector.load %arg1[%c0_56, %c0_57, %c48_58] : memref<1x8x522xbf16, #tpu.memory_space<vmem>>, vector<1x8x384xbf16>
    %55 = vector.shape_cast %54 : vector<1x8x384xbf16> to vector<8x384xbf16>
    %c144 = arith.constant 144 : index
    %c0_59 = arith.constant 0 : index
    %56 = vector.load %arg5[%c144, %c0_59] : memref<392x384xbf16, #tpu.memory_space<vmem>>, vector<8x384xbf16>
    tpu.vector_store %arg5[%c144, %c0_59], %55 {strides = array<i32>} : memref<392x384xbf16, #tpu.memory_space<vmem>>, vector<8x384xbf16>,
    %c0_60 = arith.constant 0 : index
    %c0_61 = arith.constant 0 : index
    %c49 = arith.constant 49 : index
    %57 = vector.load %arg1[%c0_60, %c0_61, %c49] : memref<1x8x522xbf16, #tpu.memory_space<vmem>>, vector<1x8x384xbf16>
    %58 = vector.shape_cast %57 : vector<1x8x384xbf16> to vector<8x384xbf16>
    %c152 = arith.constant 152 : index
    %c0_62 = arith.constant 0 : index
    %59 = vector.load %arg5[%c152, %c0_62] : memref<392x384xbf16, #tpu.memory_space<vmem>>, vector<8x384xbf16>
    tpu.vector_store %arg5[%c152, %c0_62], %58 {strides = array<i32>} : memref<392x384xbf16, #tpu.memory_space<vmem>>, vector<8x384xbf16>,
    %c0_63 = arith.constant 0 : index
    %c0_64 = arith.constant 0 : index
    %c50 = arith.constant 50 : index
    %60 = vector.load %arg1[%c0_63, %c0_64, %c50] : memref<1x8x522xbf16, #tpu.memory_space<vmem>>, vector<1x8x384xbf16>
    %61 = vector.shape_cast %60 : vector<1x8x384xbf16> to vector<8x384xbf16>
    %c160 = arith.constant 160 : index
    %c0_65 = arith.constant 0 : index
    %62 = vector.load %arg5[%c160, %c0_65] : memref<392x384xbf16, #tpu.memory_space<vmem>>, vector<8x384xbf16>
    tpu.vector_store %arg5[%c160, %c0_65], %61 {strides = array<i32>} : memref<392x384xbf16, #tpu.memory_space<vmem>>, vector<8x384xbf16>,
    %c0_66 = arith.constant 0 : index
    %c0_67 = arith.constant 0 : index
    %c66 = arith.constant 66 : index
    %63 = vector.load %arg1[%c0_66, %c0_67, %c66] : memref<1x8x522xbf16, #tpu.memory_space<vmem>>, vector<1x8x384xbf16>
    %64 = vector.shape_cast %63 : vector<1x8x384xbf16> to vector<8x384xbf16>
    %c168 = arith.constant 168 : index
    %c0_68 = arith.constant 0 : index
    %65 = vector.load %arg5[%c168, %c0_68] : memref<392x384xbf16, #tpu.memory_space<vmem>>, vector<8x384xbf16>
    tpu.vector_store %arg5[%c168, %c0_68], %64 {strides = array<i32>} : memref<392x384xbf16, #tpu.memory_space<vmem>>, vector<8x384xbf16>,
    %c0_69 = arith.constant 0 : index
    %c0_70 = arith.constant 0 : index
    %c67 = arith.constant 67 : index
    %66 = vector.load %arg1[%c0_69, %c0_70, %c67] : memref<1x8x522xbf16, #tpu.memory_space<vmem>>, vector<1x8x384xbf16>
    %67 = vector.shape_cast %66 : vector<1x8x384xbf16> to vector<8x384xbf16>
    %c176 = arith.constant 176 : index
    %c0_71 = arith.constant 0 : index
    %68 = vector.load %arg5[%c176, %c0_71] : memref<392x384xbf16, #tpu.memory_space<vmem>>, vector<8x384xbf16>
    tpu.vector_store %arg5[%c176, %c0_71], %67 {strides = array<i32>} : memref<392x384xbf16, #tpu.memory_space<vmem>>, vector<8x384xbf16>,
    %c0_72 = arith.constant 0 : index
    %c0_73 = arith.constant 0 : index
    %c68 = arith.constant 68 : index
    %69 = vector.load %arg1[%c0_72, %c0_73, %c68] : memref<1x8x522xbf16, #tpu.memory_space<vmem>>, vector<1x8x384xbf16>
    %70 = vector.shape_cast %69 : vector<1x8x384xbf16> to vector<8x384xbf16>
    %c184 = arith.constant 184 : index
    %c0_74 = arith.constant 0 : index
    %71 = vector.load %arg5[%c184, %c0_74] : memref<392x384xbf16, #tpu.memory_space<vmem>>, vector<8x384xbf16>
    tpu.vector_store %arg5[%c184, %c0_74], %70 {strides = array<i32>} : memref<392x384xbf16, #tpu.memory_space<vmem>>, vector<8x384xbf16>,
    %c0_75 = arith.constant 0 : index
    %c0_76 = arith.constant 0 : index
    %c69 = arith.constant 69 : index
    %72 = vector.load %arg1[%c0_75, %c0_76, %c69] : memref<1x8x522xbf16, #tpu.memory_space<vmem>>, vector<1x8x384xbf16>
    %73 = vector.shape_cast %72 : vector<1x8x384xbf16> to vector<8x384xbf16>
    %c192 = arith.constant 192 : index
    %c0_77 = arith.constant 0 : index
    %74 = vector.load %arg5[%c192, %c0_77] : memref<392x384xbf16, #tpu.memory_space<vmem>>, vector<8x384xbf16>
    tpu.vector_store %arg5[%c192, %c0_77], %73 {strides = array<i32>} : memref<392x384xbf16, #tpu.memory_space<vmem>>, vector<8x384xbf16>,
    %c0_78 = arith.constant 0 : index
    %c0_79 = arith.constant 0 : index
    %c70 = arith.constant 70 : index
    %75 = vector.load %arg1[%c0_78, %c0_79, %c70] : memref<1x8x522xbf16, #tpu.memory_space<vmem>>, vector<1x8x384xbf16>
    %76 = vector.shape_cast %75 : vector<1x8x384xbf16> to vector<8x384xbf16>
    %c200 = arith.constant 200 : index
    %c0_80 = arith.constant 0 : index
    %77 = vector.load %arg5[%c200, %c0_80] : memref<392x384xbf16, #tpu.memory_space<vmem>>, vector<8x384xbf16>
    tpu.vector_store %arg5[%c200, %c0_80], %76 {strides = array<i32>} : memref<392x384xbf16, #tpu.memory_space<vmem>>, vector<8x384xbf16>,
    %c0_81 = arith.constant 0 : index
    %c0_82 = arith.constant 0 : index
    %c71 = arith.constant 71 : index
    %78 = vector.load %arg1[%c0_81, %c0_82, %c71] : memref<1x8x522xbf16, #tpu.memory_space<vmem>>, vector<1x8x384xbf16>
    %79 = vector.shape_cast %78 : vector<1x8x384xbf16> to vector<8x384xbf16>
    %c208 = arith.constant 208 : index
    %c0_83 = arith.constant 0 : index
    %80 = vector.load %arg5[%c208, %c0_83] : memref<392x384xbf16, #tpu.memory_space<vmem>>, vector<8x384xbf16>
    tpu.vector_store %arg5[%c208, %c0_83], %79 {strides = array<i32>} : memref<392x384xbf16, #tpu.memory_space<vmem>>, vector<8x384xbf16>,
    %c0_84 = arith.constant 0 : index
    %c0_85 = arith.constant 0 : index
    %c72_86 = arith.constant 72 : index
    %81 = vector.load %arg1[%c0_84, %c0_85, %c72_86] : memref<1x8x522xbf16, #tpu.memory_space<vmem>>, vector<1x8x384xbf16>
    %82 = vector.shape_cast %81 : vector<1x8x384xbf16> to vector<8x384xbf16>
    %c216 = arith.constant 216 : index
    %c0_87 = arith.constant 0 : index
    %83 = vector.load %arg5[%c216, %c0_87] : memref<392x384xbf16, #tpu.memory_space<vmem>>, vector<8x384xbf16>
    tpu.vector_store %arg5[%c216, %c0_87], %82 {strides = array<i32>} : memref<392x384xbf16, #tpu.memory_space<vmem>>, vector<8x384xbf16>,
    %c0_88 = arith.constant 0 : index
    %c0_89 = arith.constant 0 : index
    %c88_90 = arith.constant 88 : index
    %84 = vector.load %arg1[%c0_88, %c0_89, %c88_90] : memref<1x8x522xbf16, #tpu.memory_space<vmem>>, vector<1x8x384xbf16>
    %85 = vector.shape_cast %84 : vector<1x8x384xbf16> to vector<8x384xbf16>
    %c224 = arith.constant 224 : index
    %c0_91 = arith.constant 0 : index
    %86 = vector.load %arg5[%c224, %c0_91] : memref<392x384xbf16, #tpu.memory_space<vmem>>, vector<8x384xbf16>
    tpu.vector_store %arg5[%c224, %c0_91], %85 {strides = array<i32>} : memref<392x384xbf16, #tpu.memory_space<vmem>>, vector<8x384xbf16>,
    %c0_92 = arith.constant 0 : index
    %c0_93 = arith.constant 0 : index
    %c89 = arith.constant 89 : index
    %87 = vector.load %arg1[%c0_92, %c0_93, %c89] : memref<1x8x522xbf16, #tpu.memory_space<vmem>>, vector<1x8x384xbf16>
    %88 = vector.shape_cast %87 : vector<1x8x384xbf16> to vector<8x384xbf16>
    %c232 = arith.constant 232 : index
    %c0_94 = arith.constant 0 : index
    %89 = vector.load %arg5[%c232, %c0_94] : memref<392x384xbf16, #tpu.memory_space<vmem>>, vector<8x384xbf16>
    tpu.vector_store %arg5[%c232, %c0_94], %88 {strides = array<i32>} : memref<392x384xbf16, #tpu.memory_space<vmem>>, vector<8x384xbf16>,
    %c0_95 = arith.constant 0 : index
    %c0_96 = arith.constant 0 : index
    %c90 = arith.constant 90 : index
    %90 = vector.load %arg1[%c0_95, %c0_96, %c90] : memref<1x8x522xbf16, #tpu.memory_space<vmem>>, vector<1x8x384xbf16>
    %91 = vector.shape_cast %90 : vector<1x8x384xbf16> to vector<8x384xbf16>
    %c240 = arith.constant 240 : index
    %c0_97 = arith.constant 0 : index
    %92 = vector.load %arg5[%c240, %c0_97] : memref<392x384xbf16, #tpu.memory_space<vmem>>, vector<8x384xbf16>
    tpu.vector_store %arg5[%c240, %c0_97], %91 {strides = array<i32>} : memref<392x384xbf16, #tpu.memory_space<vmem>>, vector<8x384xbf16>,
    %c0_98 = arith.constant 0 : index
    %c0_99 = arith.constant 0 : index
    %c91 = arith.constant 91 : index
    %93 = vector.load %arg1[%c0_98, %c0_99, %c91] : memref<1x8x522xbf16, #tpu.memory_space<vmem>>, vector<1x8x384xbf16>
    %94 = vector.shape_cast %93 : vector<1x8x384xbf16> to vector<8x384xbf16>
    %c248 = arith.constant 248 : index
    %c0_100 = arith.constant 0 : index
    %95 = vector.load %arg5[%c248, %c0_100] : memref<392x384xbf16, #tpu.memory_space<vmem>>, vector<8x384xbf16>
    tpu.vector_store %arg5[%c248, %c0_100], %94 {strides = array<i32>} : memref<392x384xbf16, #tpu.memory_space<vmem>>, vector<8x384xbf16>,
    %c0_101 = arith.constant 0 : index
    %c0_102 = arith.constant 0 : index
    %c92 = arith.constant 92 : index
    %96 = vector.load %arg1[%c0_101, %c0_102, %c92] : memref<1x8x522xbf16, #tpu.memory_space<vmem>>, vector<1x8x384xbf16>
    %97 = vector.shape_cast %96 : vector<1x8x384xbf16> to vector<8x384xbf16>
    %c256 = arith.constant 256 : index
    %c0_103 = arith.constant 0 : index
    %98 = vector.load %arg5[%c256, %c0_103] : memref<392x384xbf16, #tpu.memory_space<vmem>>, vector<8x384xbf16>
    tpu.vector_store %arg5[%c256, %c0_103], %97 {strides = array<i32>} : memref<392x384xbf16, #tpu.memory_space<vmem>>, vector<8x384xbf16>,
    %c0_104 = arith.constant 0 : index
    %c0_105 = arith.constant 0 : index
    %c93 = arith.constant 93 : index
    %99 = vector.load %arg1[%c0_104, %c0_105, %c93] : memref<1x8x522xbf16, #tpu.memory_space<vmem>>, vector<1x8x384xbf16>
    %100 = vector.shape_cast %99 : vector<1x8x384xbf16> to vector<8x384xbf16>
    %c264 = arith.constant 264 : index
    %c0_106 = arith.constant 0 : index
    %101 = vector.load %arg5[%c264, %c0_106] : memref<392x384xbf16, #tpu.memory_space<vmem>>, vector<8x384xbf16>
    tpu.vector_store %arg5[%c264, %c0_106], %100 {strides = array<i32>} : memref<392x384xbf16, #tpu.memory_space<vmem>>, vector<8x384xbf16>,
    %c0_107 = arith.constant 0 : index
    %c0_108 = arith.constant 0 : index
    %c94 = arith.constant 94 : index
    %102 = vector.load %arg1[%c0_107, %c0_108, %c94] : memref<1x8x522xbf16, #tpu.memory_space<vmem>>, vector<1x8x384xbf16>
    %103 = vector.shape_cast %102 : vector<1x8x384xbf16> to vector<8x384xbf16>
    %c272 = arith.constant 272 : index
    %c0_109 = arith.constant 0 : index
    %104 = vector.load %arg5[%c272, %c0_109] : memref<392x384xbf16, #tpu.memory_space<vmem>>, vector<8x384xbf16>
    tpu.vector_store %arg5[%c272, %c0_109], %103 {strides = array<i32>} : memref<392x384xbf16, #tpu.memory_space<vmem>>, vector<8x384xbf16>,
    %c0_110 = arith.constant 0 : index
    %c0_111 = arith.constant 0 : index
    %c110 = arith.constant 110 : index
    %105 = vector.load %arg1[%c0_110, %c0_111, %c110] : memref<1x8x522xbf16, #tpu.memory_space<vmem>>, vector<1x8x384xbf16>
    %106 = vector.shape_cast %105 : vector<1x8x384xbf16> to vector<8x384xbf16>
    %c280 = arith.constant 280 : index
    %c0_112 = arith.constant 0 : index
    %107 = vector.load %arg5[%c280, %c0_112] : memref<392x384xbf16, #tpu.memory_space<vmem>>, vector<8x384xbf16>
    tpu.vector_store %arg5[%c280, %c0_112], %106 {strides = array<i32>} : memref<392x384xbf16, #tpu.memory_space<vmem>>, vector<8x384xbf16>,
    %c0_113 = arith.constant 0 : index
    %c0_114 = arith.constant 0 : index
    %c111 = arith.constant 111 : index
    %108 = vector.load %arg1[%c0_113, %c0_114, %c111] : memref<1x8x522xbf16, #tpu.memory_space<vmem>>, vector<1x8x384xbf16>
    %109 = vector.shape_cast %108 : vector<1x8x384xbf16> to vector<8x384xbf16>
    %c288 = arith.constant 288 : index
    %c0_115 = arith.constant 0 : index
    %110 = vector.load %arg5[%c288, %c0_115] : memref<392x384xbf16, #tpu.memory_space<vmem>>, vector<8x384xbf16>
    tpu.vector_store %arg5[%c288, %c0_115], %109 {strides = array<i32>} : memref<392x384xbf16, #tpu.memory_space<vmem>>, vector<8x384xbf16>,
    %c0_116 = arith.constant 0 : index
    %c0_117 = arith.constant 0 : index
    %c112_118 = arith.constant 112 : index
    %111 = vector.load %arg1[%c0_116, %c0_117, %c112_118] : memref<1x8x522xbf16, #tpu.memory_space<vmem>>, vector<1x8x384xbf16>
    %112 = vector.shape_cast %111 : vector<1x8x384xbf16> to vector<8x384xbf16>
    %c296 = arith.constant 296 : index
    %c0_119 = arith.constant 0 : index
    %113 = vector.load %arg5[%c296, %c0_119] : memref<392x384xbf16, #tpu.memory_space<vmem>>, vector<8x384xbf16>
    tpu.vector_store %arg5[%c296, %c0_119], %112 {strides = array<i32>} : memref<392x384xbf16, #tpu.memory_space<vmem>>, vector<8x384xbf16>,
    %c0_120 = arith.constant 0 : index
    %c0_121 = arith.constant 0 : index
    %c113 = arith.constant 113 : index
    %114 = vector.load %arg1[%c0_120, %c0_121, %c113] : memref<1x8x522xbf16, #tpu.memory_space<vmem>>, vector<1x8x384xbf16>
    %115 = vector.shape_cast %114 : vector<1x8x384xbf16> to vector<8x384xbf16>
    %c304 = arith.constant 304 : index
    %c0_122 = arith.constant 0 : index
    %116 = vector.load %arg5[%c304, %c0_122] : memref<392x384xbf16, #tpu.memory_space<vmem>>, vector<8x384xbf16>
    tpu.vector_store %arg5[%c304, %c0_122], %115 {strides = array<i32>} : memref<392x384xbf16, #tpu.memory_space<vmem>>, vector<8x384xbf16>,
    %c0_123 = arith.constant 0 : index
    %c0_124 = arith.constant 0 : index
    %c114 = arith.constant 114 : index
    %117 = vector.load %arg1[%c0_123, %c0_124, %c114] : memref<1x8x522xbf16, #tpu.memory_space<vmem>>, vector<1x8x384xbf16>
    %118 = vector.shape_cast %117 : vector<1x8x384xbf16> to vector<8x384xbf16>
    %c312 = arith.constant 312 : index
    %c0_125 = arith.constant 0 : index
    %119 = vector.load %arg5[%c312, %c0_125] : memref<392x384xbf16, #tpu.memory_space<vmem>>, vector<8x384xbf16>
    tpu.vector_store %arg5[%c312, %c0_125], %118 {strides = array<i32>} : memref<392x384xbf16, #tpu.memory_space<vmem>>, vector<8x384xbf16>,
    %c0_126 = arith.constant 0 : index
    %c0_127 = arith.constant 0 : index
    %c115 = arith.constant 115 : index
    %120 = vector.load %arg1[%c0_126, %c0_127, %c115] : memref<1x8x522xbf16, #tpu.memory_space<vmem>>, vector<1x8x384xbf16>
    %121 = vector.shape_cast %120 : vector<1x8x384xbf16> to vector<8x384xbf16>
    %c320 = arith.constant 320 : index
    %c0_128 = arith.constant 0 : index
    %122 = vector.load %arg5[%c320, %c0_128] : memref<392x384xbf16, #tpu.memory_space<vmem>>, vector<8x384xbf16>
    tpu.vector_store %arg5[%c320, %c0_128], %121 {strides = array<i32>} : memref<392x384xbf16, #tpu.memory_space<vmem>>, vector<8x384xbf16>,
    %c0_129 = arith.constant 0 : index
    %c0_130 = arith.constant 0 : index
    %c116 = arith.constant 116 : index
    %123 = vector.load %arg1[%c0_129, %c0_130, %c116] : memref<1x8x522xbf16, #tpu.memory_space<vmem>>, vector<1x8x384xbf16>
    %124 = vector.shape_cast %123 : vector<1x8x384xbf16> to vector<8x384xbf16>
    %c328 = arith.constant 328 : index
    %c0_131 = arith.constant 0 : index
    %125 = vector.load %arg5[%c328, %c0_131] : memref<392x384xbf16, #tpu.memory_space<vmem>>, vector<8x384xbf16>
    tpu.vector_store %arg5[%c328, %c0_131], %124 {strides = array<i32>} : memref<392x384xbf16, #tpu.memory_space<vmem>>, vector<8x384xbf16>,
    %c0_132 = arith.constant 0 : index
    %c0_133 = arith.constant 0 : index
    %c132 = arith.constant 132 : index
    %126 = vector.load %arg1[%c0_132, %c0_133, %c132] : memref<1x8x522xbf16, #tpu.memory_space<vmem>>, vector<1x8x384xbf16>
    %127 = vector.shape_cast %126 : vector<1x8x384xbf16> to vector<8x384xbf16>
    %c336 = arith.constant 336 : index
    %c0_134 = arith.constant 0 : index
    %128 = vector.load %arg5[%c336, %c0_134] : memref<392x384xbf16, #tpu.memory_space<vmem>>, vector<8x384xbf16>
    tpu.vector_store %arg5[%c336, %c0_134], %127 {strides = array<i32>} : memref<392x384xbf16, #tpu.memory_space<vmem>>, vector<8x384xbf16>,
    %c0_135 = arith.constant 0 : index
    %c0_136 = arith.constant 0 : index
    %c133 = arith.constant 133 : index
    %129 = vector.load %arg1[%c0_135, %c0_136, %c133] : memref<1x8x522xbf16, #tpu.memory_space<vmem>>, vector<1x8x384xbf16>
    %130 = vector.shape_cast %129 : vector<1x8x384xbf16> to vector<8x384xbf16>
    %c344 = arith.constant 344 : index
    %c0_137 = arith.constant 0 : index
    %131 = vector.load %arg5[%c344, %c0_137] : memref<392x384xbf16, #tpu.memory_space<vmem>>, vector<8x384xbf16>
    tpu.vector_store %arg5[%c344, %c0_137], %130 {strides = array<i32>} : memref<392x384xbf16, #tpu.memory_space<vmem>>, vector<8x384xbf16>,
    %c0_138 = arith.constant 0 : index
    %c0_139 = arith.constant 0 : index
    %c134 = arith.constant 134 : index
    %132 = vector.load %arg1[%c0_138, %c0_139, %c134] : memref<1x8x522xbf16, #tpu.memory_space<vmem>>, vector<1x8x384xbf16>
    %133 = vector.shape_cast %132 : vector<1x8x384xbf16> to vector<8x384xbf16>
    %c352 = arith.constant 352 : index
    %c0_140 = arith.constant 0 : index
    %134 = vector.load %arg5[%c352, %c0_140] : memref<392x384xbf16, #tpu.memory_space<vmem>>, vector<8x384xbf16>
    tpu.vector_store %arg5[%c352, %c0_140], %133 {strides = array<i32>} : memref<392x384xbf16, #tpu.memory_space<vmem>>, vector<8x384xbf16>,
    %c0_141 = arith.constant 0 : index
    %c0_142 = arith.constant 0 : index
    %c135 = arith.constant 135 : index
    %135 = vector.load %arg1[%c0_141, %c0_142, %c135] : memref<1x8x522xbf16, #tpu.memory_space<vmem>>, vector<1x8x384xbf16>
    %136 = vector.shape_cast %135 : vector<1x8x384xbf16> to vector<8x384xbf16>
    %c360 = arith.constant 360 : index
    %c0_143 = arith.constant 0 : index
    %137 = vector.load %arg5[%c360, %c0_143] : memref<392x384xbf16, #tpu.memory_space<vmem>>, vector<8x384xbf16>
    tpu.vector_store %arg5[%c360, %c0_143], %136 {strides = array<i32>} : memref<392x384xbf16, #tpu.memory_space<vmem>>, vector<8x384xbf16>,
    %c0_144 = arith.constant 0 : index
    %c0_145 = arith.constant 0 : index
    %c136_146 = arith.constant 136 : index
    %138 = vector.load %arg1[%c0_144, %c0_145, %c136_146] : memref<1x8x522xbf16, #tpu.memory_space<vmem>>, vector<1x8x384xbf16>
    %139 = vector.shape_cast %138 : vector<1x8x384xbf16> to vector<8x384xbf16>
    %c368 = arith.constant 368 : index
    %c0_147 = arith.constant 0 : index
    %140 = vector.load %arg5[%c368, %c0_147] : memref<392x384xbf16, #tpu.memory_space<vmem>>, vector<8x384xbf16>
    tpu.vector_store %arg5[%c368, %c0_147], %139 {strides = array<i32>} : memref<392x384xbf16, #tpu.memory_space<vmem>>, vector<8x384xbf16>,
    %c0_148 = arith.constant 0 : index
    %c0_149 = arith.constant 0 : index
    %c137 = arith.constant 137 : index
    %141 = vector.load %arg1[%c0_148, %c0_149, %c137] : memref<1x8x522xbf16, #tpu.memory_space<vmem>>, vector<1x8x384xbf16>
    %142 = vector.shape_cast %141 : vector<1x8x384xbf16> to vector<8x384xbf16>
    %c376 = arith.constant 376 : index
    %c0_150 = arith.constant 0 : index
    %143 = vector.load %arg5[%c376, %c0_150] : memref<392x384xbf16, #tpu.memory_space<vmem>>, vector<8x384xbf16>
    tpu.vector_store %arg5[%c376, %c0_150], %142 {strides = array<i32>} : memref<392x384xbf16, #tpu.memory_space<vmem>>, vector<8x384xbf16>,
    %c0_151 = arith.constant 0 : index
    %c0_152 = arith.constant 0 : index
    %c138 = arith.constant 138 : index
    %144 = vector.load %arg1[%c0_151, %c0_152, %c138] : memref<1x8x522xbf16, #tpu.memory_space<vmem>>, vector<1x8x384xbf16>
    %145 = vector.shape_cast %144 : vector<1x8x384xbf16> to vector<8x384xbf16>
    %c384 = arith.constant 384 : index
    %c0_153 = arith.constant 0 : index
    %146 = vector.load %arg5[%c384, %c0_153] : memref<392x384xbf16, #tpu.memory_space<vmem>>, vector<8x384xbf16>
    tpu.vector_store %arg5[%c384, %c0_153], %145 {strides = array<i32>} : memref<392x384xbf16, #tpu.memory_space<vmem>>, vector<8x384xbf16>,
    %c0_154 = arith.constant 0 : index
    %c0_155 = arith.constant 0 : index
    %147 = vector.load %arg2[%c0_154, %c0_155] : memref<3x392xbf16, #tpu.memory_space<vmem>>, vector<3x392xbf16>
    %c0_156 = arith.constant 0 : index
    %c0_157 = arith.constant 0 : index
    %148 = vector.load %arg5[%c0_156, %c0_157] : memref<392x384xbf16, #tpu.memory_space<vmem>>, vector<392x384xbf16>
    %cst = arith.constant dense<0.000000e+00> : vector<3x384xf32>
    %149 = tpu.matmul %147, %148, %cst {dimension_numbers = #tpu.dot_dimension_numbers<[1], [0], [0], [1], [0, 0, 1, 1], [], []>} : vector<3x392xbf16>, vector<392x384xbf16>, vector<3x384xf32> -> vector<3x384xf32>
    %c0_158 = arith.constant 0 : index
    %c0_159 = arith.constant 0 : index
    %150 = vector.load %arg3[%c0_158, %c0_159] : memref<3x1xf32, #tpu.memory_space<vmem>>, vector<3x1xf32>
    %151 = vector.broadcast %150 : vector<3x1xf32> to vector<3x384xf32>
    %152 = arith.addf %149, %151 : vector<3x384xf32>
    %153 = math.tanh %152 : vector<3x384xf32>
    %c0_160 = arith.constant 0 : index
    %c0_161 = arith.constant 0 : index
    %c0_162 = arith.constant 0 : index
    %154 = vector.load %arg4[%c0_160, %c0_161, %c0_162] : memref<1x3x384xf32, #tpu.memory_space<vmem>>, vector<1x3x384xf32>
    %155 = vector.shape_cast %154 : vector<1x3x384xf32> to vector<3x384xf32>
    %156 = vector.shape_cast %153 : vector<3x384xf32> to vector<1x3x384xf32>
    tpu.vector_store %arg4[%c0_160, %c0_161, %c0_162], %156 {strides = array<i32>} : memref<1x3x384xf32, #tpu.memory_space<vmem>>, vector<1x3x384xf32>,
    return
  }
  func.func @transform_0(%arg0: i32) -> (i32, i32, i32) {
    %c0_i32 = arith.constant 0 : i32
    %c0_i32_0 = arith.constant 0 : i32
    %c0_i32_1 = arith.constant 0 : i32
    return %arg0, %c0_i32, %c0_i32_0 : i32, i32, i32
  }
  func.func @transform_1(%arg0: i32) -> (i32, i32) {
    %c0_i32 = arith.constant 0 : i32
    %c0_i32_0 = arith.constant 0 : i32
    %c0_i32_1 = arith.constant 0 : i32
    return %c0_i32, %c0_i32_0 : i32, i32
  }
  func.func @transform_2(%arg0: i32) -> (i32, i32) {
    %c0_i32 = arith.constant 0 : i32
    %c0_i32_0 = arith.constant 0 : i32
    %c0_i32_1 = arith.constant 0 : i32
    return %c0_i32, %c0_i32_0 : i32, i32
  }
  func.func @transform_3(%arg0: i32) -> (i32, i32, i32) {
    %c0_i32 = arith.constant 0 : i32
    %c0_i32_0 = arith.constant 0 : i32
    %c0_i32_1 = arith.constant 0 : i32
    return %arg0, %c0_i32, %c0_i32_0 : i32, i32, i32
  }
}

</mosaic_0001>

<llo_original>
// kernel: cyclegan_generator_forward.10
$region0: #{cyclegan_generator_forward.10}
  #allocation0 [shape = 'u32[]', space=smem, size = 0x4, offset = 0x4, fixed_abs, tag = 'smem constant byte address 0x4 - core index']
  #allocation1 [shape = 'u32[144,128]{1,0:T(1,128)}', space=vmem, size = 0x12000, scoped, tag = 'internal scratch']
  #allocation2 [shape = 'bf16[392,384]{1,0:T(8,128)(2,1)}', space=vmem, size = 0x49800, scoped, tag = 'scratch operand']
  %s0 = inlined_call_operand.vmem [shape: bf16[2,8,522], index: 0, kind: input, shape index: {}]
  %s1 = inlined_call_operand.vmem [shape: bf16[8,392], index: 1, kind: input, shape index: {}]
  %s2 = inlined_call_operand.vmem [shape: f32[8,1], index: 2, kind: input, shape index: {}]
  %s3 = inlined_call_operand.vmem [shape: bf16[2,8,384], index: 3, kind: output, shape index: {}]
  %s4 = sld [smem:[#allocation0]]
  $region45: #{cyclegan_generator_forward.10} parent=0
    _
  %s6 = ssub.s32 1, %s4
  %s7 = scalar_select 0, %s6, %s4
  loop: start=0, step=1, limit=4
  $region2: #{cyclegan_generator_forward.10} parent=0 // loop_pre_header
    _
  $region3: #{cyclegan_generator_forward.10} parent=0 // loop_header
    %s9 = sphi 0, %s13
    %p10 = scmp.ge.s32.totalorder %s9, 4
    %s19 = sphi 0, %s21
    %s22 = sphi 0, %s19
    %s23 = sphi 0, %s22
    %s39 = sphi 0, %s23
    %s43 = sphi 0, %s43
    %s45 = sphi 0, %s43
    %s46 = sphi 0, %s45
    %s60 = sphi 0, %s46
    %s64 = sphi 0, %s64
    %s66 = sphi 0, %s64
    %s67 = sphi 0, %s66
    %s81 = sphi 0, %s67
    %s87 = sphi 0, %s89
    %s90 = sphi 0, %s87
    %s91 = sphi 0, %s90
    %s107 = sphi 0, %s91
  $region4: #{cyclegan_generator_forward.10} parent=0 // loop_header_branch
    %12 = sbr.rel (%p10) target = $region8
  $region5: #{cyclegan_generator_forward.10} parent=0 // loop_body
    %s14 = ssub.s32 %s9, 1
    %s15 = ssub.s32 %s9, 2
    %s16 = sadd.s32 %s9, 1
    %s17 = ssub.s32 %s9, %s16
    %p18 = scmp.eq.s32.totalorder %s17, 0
    %s20 = sadd.s32 %s19, 1
    %s21 = scalar_select %p18, %s19, %s20
    %p24 = pneg %p18
    %p25 = scmp.eq.s32.totalorder %s9, 1
    %p26 = por %p24, %p25
    %p27 = scmp.ne.s32.totalorder %s19, %s22
    %p28 = scmp.eq.s32.totalorder %s9, 0
    %p29 = por %p27, %p28
    %p30 = scmp.ne.s32.totalorder %s19, %s22
    %p31 = scmp.eq.s32.totalorder %s14, 1
    %p32 = por %p30, %p31
    %p33 = scmp.ne.s32.totalorder %s22, %s23
    %p34 = scmp.eq.s32.totalorder %s14, 0
    %p35 = por %p33, %p34
    %p36 = scmp.ne.s32.totalorder %s22, %s23
    %p37 = scmp.eq.s32.totalorder %s15, 1
    %p38 = por %p36, %p37
    %p40 = scmp.ne.s32.totalorder %s23, %s39
    %p41 = scmp.eq.s32.totalorder %s15, 0
    %p42 = por %p40, %p41
    %s44 = sadd.s32 %s43, 1
    %p47 = scmp.eq.s32.totalorder %s9, 1
    %p48 = scmp.ne.s32.totalorder %s43, %s45
    %p49 = scmp.eq.s32.totalorder %s9, 0
    %p50 = por %p48, %p49
    %p51 = scmp.ne.s32.totalorder %s43, %s45
    %p52 = scmp.eq.s32.totalorder %s14, 1
    %p53 = por %p51, %p52
    %p54 = scmp.ne.s32.totalorder %s45, %s46
    %p55 = scmp.eq.s32.totalorder %s14, 0
    %p56 = por %p54, %p55
    %p57 = scmp.ne.s32.totalorder %s45, %s46
    %p58 = scmp.eq.s32.totalorder %s15, 1
    %p59 = por %p57, %p58
    %p61 = scmp.ne.s32.totalorder %s46, %s60
    %p62 = scmp.eq.s32.totalorder %s15, 0
    %p63 = por %p61, %p62
    %s65 = sadd.s32 %s64, 1
    %p68 = scmp.eq.s32.totalorder %s9, 1
    %p69 = scmp.ne.s32.totalorder %s64, %s66
    %p70 = scmp.eq.s32.totalorder %s9, 0
    %p71 = por %p69, %p70
    %p72 = scmp.ne.s32.totalorder %s64, %s66
    %p73 = scmp.eq.s32.totalorder %s14, 1
    %p74 = por %p72, %p73
    %p75 = scmp.ne.s32.totalorder %s66, %s67
    %p76 = scmp.eq.s32.totalorder %s14, 0
    %p77 = por %p75, %p76
    %p78 = scmp.ne.s32.totalorder %s66, %s67
    %p79 = scmp.eq.s32.totalorder %s15, 1
    %p80 = por %p78, %p79
    %p82 = scmp.ne.s32.totalorder %s67, %s81
    %p83 = scmp.eq.s32.totalorder %s15, 0
    %p84 = por %p82, %p83
    %s85 = ssub.s32 %s9, %s16
    %p86 = scmp.eq.s32.totalorder %s85, 0
    %s88 = sadd.s32 %s87, 1
    %s89 = scalar_select %p86, %s87, %s88
    %p92 = pneg %p86
    %p93 = scmp.eq.s32.totalorder %s9, 1
    %p94 = por %p92, %p93
    %p95 = scmp.ne.s32.totalorder %s87, %s90
    %p96 = scmp.eq.s32.totalorder %s9, 0
    %p97 = por %p95, %p96
    %p98 = scmp.ne.s32.totalorder %s87, %s90
    %p99 = scmp.eq.s32.totalorder %s14, 1
    %p100 = por %p98, %p99
    %p101 = scmp.ne.s32.totalorder %s90, %s91
    %p102 = scmp.eq.s32.totalorder %s14, 0
    %p103 = por %p101, %p102
    %p104 = scmp.ne.s32.totalorder %s90, %s91
    %p105 = scmp.eq.s32.totalorder %s15, 1
    %p106 = por %p104, %p105
    %p108 = scmp.ne.s32.totalorder %s91, %s107
    %p109 = scmp.eq.s32.totalorder %s15, 0
    %p110 = por %p108, %p109
    %p111 = scmp.le.s32.totalorder 1, %s9
    %p112 = scmp.lt.s32.totalorder %s9, 3
    %p113 = pnand %p111, %p112
    %p114 = pneg %p113
    // Predicated region
    $region9: #{cyclegan_generator_forward.10} parent=5 // pred_check
      _
    $region10: #{cyclegan_generator_forward.10} parent=5 // pred_check_branch
      %116 = sbr.rel (%p113) target = $region12
    $region11: #{cyclegan_generator_forward.10} parent=5 // pred_region
      %s117 = ssub.s32 %s9, 1
      // Predicated region
      $region13: #{cyclegan_generator_forward.10} parent=11 // pred_check
        %p118 = pneg %p56
      $region14: #{cyclegan_generator_forward.10} parent=11 // pred_check_branch
        %120 = sbr.rel (%p118) target = $region16
      $region15: #{cyclegan_generator_forward.10} parent=11 // pred_region
        _
      $region16: #{cyclegan_generator_forward.10} parent=11 // pred_fallthru
        _
      // Predicated region
      $region17: #{cyclegan_generator_forward.10} parent=11 // pred_check
        %p121 = pneg %p77
      $region18: #{cyclegan_generator_forward.10} parent=11 // pred_check_branch
        %123 = sbr.rel (%p121) target = $region20
      $region19: #{cyclegan_generator_forward.10} parent=11 // pred_region
        _
      $region20: #{cyclegan_generator_forward.10} parent=11 // pred_fallthru
        _
    $region12: #{cyclegan_generator_forward.10} parent=5 // pred_fallthru
      _
    %p124 = scmp.lt.s32.totalorder %s9, 2
    // Predicated region
    $region21: #{cyclegan_generator_forward.10} parent=5 // pred_check
      %p125 = pneg %p124
    $region22: #{cyclegan_generator_forward.10} parent=5 // pred_check_branch
      %127 = sbr.rel (%p125) target = $region24
    $region23: #{cyclegan_generator_forward.10} parent=5 // pred_region
      // Predicated region
      $region25: #{cyclegan_generator_forward.10} parent=23 // pred_check
        %p128 = pneg %p29
      $region26: #{cyclegan_generator_forward.10} parent=23 // pred_check_branch
        %130 = sbr.rel (%p128) target = $region28
      $region27: #{cyclegan_generator_forward.10} parent=23 // pred_region
        %p131 = scmp.lt.s32.totalorder %s9, 1
        %s132 = scalar_select %p131, %s9, 1
        %s133 = smul.addr %s132, 5
        %s134 = smul.addr %s133, 4
        %s135 = scalar_lea.vmem %s0, %s134
      $region28: #{cyclegan_generator_forward.10} parent=23 // pred_fallthru
        _
    $region24: #{cyclegan_generator_forward.10} parent=5 // pred_fallthru
      _
    %p136 = scmp.le.s32.totalorder 1, %s9
    %p137 = scmp.lt.s32.totalorder %s9, 3
    %p138 = pnand %p136, %p137
    %p139 = pneg %p138
    // Predicated region
    $region29: #{cyclegan_generator_forward.10} parent=5 // pred_check
      _
    $region30: #{cyclegan_generator_forward.10} parent=5 // pred_check_branch
      %141 = sbr.rel (%p138) target = $region32
    $region31: #{cyclegan_generator_forward.10} parent=5 // pred_region
      %s142 = ssub.s32 %s9, 1
      %p143 = scmp.lt.s32.totalorder %s14, 1
      %s144 = scalar_select %p143, %s14, 1
      %s145 = smul.addr %s144, 5
      %s146 = smul.addr %s145, 4
      %s147 = scalar_lea.vmem %s0, %s146
      %p148 = pneg %p35
      %p149 = pneg %p32
      %p150 = pneg %p56
      %p151 = pneg %p53
      %p152 = pneg %p77
      %p153 = pneg %p74
      %p154 = pneg %p103
      %p155 = pneg %p100
      %p156 = scmp.lt.s32.totalorder %s14, 1
      %s157 = scalar_select %p156, %s14, 1
      %s158 = smul.addr %s157, 3
      %s159 = smul.addr %s158, 4
      %s160 = scalar_lea.vmem %s3, %s159
      %p161 = scmp.lt.s32.totalorder %s14, 1
      %s162 = scalar_select %p161, %s14, 1
      %s163 = smul.addr %s162, 5
      %s164 = smul.addr %s163, 4
      %s165 = scalar_lea.vmem %s0, %s164
      %p166 = scmp.lt.s32.totalorder %s14, 1
      %s167 = scalar_select %p166, %s14, 1
      %s168 = smul.addr %s167, 3
      %s169 = smul.addr %s168, 4
      %s170 = scalar_lea.vmem %s3, %s169
      %v172 = vld [vmem:[%s165] sm:$0xff]
      %v173 = vld [vmem:[%s165 + $0x8] sm:$0xf]
      %174 = vst [vmem:[#allocation2] sm:$0xff] %v172
      %175 = vst [vmem:[#allocation2 + $0x8] sm:$0xf] %v173
      %v176 = vld [vmem:[%s165] sm:$0xff]
      %v177 = vld [vmem:[%s165 + $0x8] sm:$0xff]
      %180 = vrot.lane.b32.xlu0 %v176, 127
      %v181 = vpop.permute.xlu0 %180
      %182 = vrot.lane.b32.xlu0 %v177, 127
      %v183 = vpop.permute.xlu0 %182
      %v184 = vrot.slane %v181, 4
      %v185 = vrot.slane %v183, 4
      %vm186 = vcmask 1043456
      %v187 = vsel %vm186, %v184, %v185
      %vm188 = vcmask 1039360
      %v189 = vsel %vm188, %v181, %v187
      %v190 = vsel %vm188, %v183, %v185
      %193 = vst [vmem:[#allocation2 + $0xc] sm:$0xff] %v189
      %194 = vst [vmem:[#allocation2 + $0x14] sm:$0xf] %v190
      %v195 = vld [vmem:[%s165] sm:$0xff]
      %v196 = vld [vmem:[%s165 + $0x8] sm:$0xff]
      %199 = vrot.lane.b32.xlu0 %v195, 126
      %v200 = vpop.permute.xlu0 %199
      %201 = vrot.lane.b32.xlu0 %v196, 126
      %v202 = vpop.permute.xlu0 %201
      %v203 = vrot.slane %v200, 4
      %v204 = vrot.slane %v202, 4
      %v205 = vsel %vm186, %v203, %v204
      %vm206 = vcmask 1031168
      %v207 = vsel %vm206, %v200, %v205
      %v208 = vsel %vm206, %v202, %v204
      %211 = vst [vmem:[#allocation2 + $0x18] sm:$0xff] %v207
      %212 = vst [vmem:[#allocation2 + $0x20] sm:$0xf] %v208
      %v213 = vld [vmem:[%s165] sm:$0xff]
      %v214 = vld [vmem:[%s165 + $0x8] sm:$0xff]
      %217 = vrot.lane.b32.xlu0 %v213, 125
      %v218 = vpop.permute.xlu0 %217
      %219 = vrot.lane.b32.xlu0 %v214, 125
      %v220 = vpop.permute.xlu0 %219
      %v221 = vrot.slane %v218, 4
      %v222 = vrot.slane %v220, 4
      %v223 = vsel %vm186, %v221, %v222
      %vm224 = vcmask 1022976
      %v225 = vsel %vm224, %v218, %v223
      %v226 = vsel %vm224, %v220, %v222
      %229 = vst [vmem:[#allocation2 + $0x24] sm:$0xff] %v225
      %230 = vst [vmem:[#allocation2 + $0x2c] sm:$0xf] %v226
      %v231 = vld [vmem:[%s165] sm:$0xff]
      %v232 = vld [vmem:[%s165 + $0x8] sm:$0xff]
      %235 = vrot.lane.b32.xlu0 %v231, 124
      %v236 = vpop.permute.xlu0 %235
      %237 = vrot.lane.b32.xlu0 %v232, 124
      %v238 = vpop.permute.xlu0 %237
      %v239 = vrot.slane %v236, 4
      %v240 = vrot.slane %v238, 4
      %v241 = vsel %vm186, %v239, %v240
      %vm242 = vcmask 1014784
      %v243 = vsel %vm242, %v236, %v241
      %v244 = vsel %vm242, %v238, %v240
      %247 = vst [vmem:[#allocation2 + $0x30] sm:$0xff] %v243
      %248 = vst [vmem:[#allocation2 + $0x38] sm:$0xf] %v244
      %v249 = vld [vmem:[%s165] sm:$0xff]
      %v250 = vld [vmem:[%s165 + $0x8] sm:$0xff]
      %253 = vrot.lane.b32.xlu0 %v249, 123
      %v254 = vpop.permute.xlu0 %253
      %255 = vrot.lane.b32.xlu0 %v250, 123
      %v256 = vpop.permute.xlu0 %255
      %v257 = vrot.slane %v254, 4
      %v258 = vrot.slane %v256, 4
      %v259 = vsel %vm186, %v257, %v258
      %vm260 = vcmask 1006592
      %v261 = vsel %vm260, %v254, %v259
      %v262 = vsel %vm260, %v256, %v258
      %265 = vst [vmem:[#allocation2 + $0x3c] sm:$0xff] %v261
      %266 = vst [vmem:[#allocation2 + $0x44] sm:$0xf] %v262
      %v267 = vld [vmem:[%s165] sm:$0xff]
      %v268 = vld [vmem:[%s165 + $0x8] sm:$0xff]
      %271 = vrot.lane.b32.xlu0 %v267, 122
      %v272 = vpop.permute.xlu0 %271
      %273 = vrot.lane.b32.xlu0 %v268, 122
      %v274 = vpop.permute.xlu0 %273
      %v275 = vrot.slane %v272, 4
      %v276 = vrot.slane %v274, 4
      %v277 = vsel %vm186, %v275, %v276
      %vm278 = vcmask 998400
      %v279 = vsel %vm278, %v272, %v277
      %v280 = vsel %vm278, %v274, %v276
      %283 = vst [vmem:[#allocation2 + $0x48] sm:$0xff] %v279
      %284 = vst [vmem:[#allocation2 + $0x50] sm:$0xf] %v280
      %v285 = vld [vmem:[%s165] sm:$0xff]
      %v286 = vld [vmem:[%s165 + $0x8] sm:$0xff]
      %289 = vrot.lane.b32.xlu0 %v285, 106
      %v290 = vpop.permute.xlu0 %289
      %291 = vrot.lane.b32.xlu0 %v286, 106
      %v292 = vpop.permute.xlu0 %291
      %v293 = vrot.slane %v290, 4
      %v294 = vrot.slane %v292, 4
      %v295 = vsel %vm186, %v293, %v294
      %vm296 = vcmask 867328
      %v297 = vsel %vm296, %v290, %v295
      %v298 = vsel %vm296, %v292, %v294
      %301 = vst [vmem:[#allocation2 + $0x54] sm:$0xff] %v297
      %302 = vst [vmem:[#allocation2 + $0x5c] sm:$0xf] %v298
      %v303 = vld [vmem:[%s165] sm:$0xff]
      %v304 = vld [vmem:[%s165 + $0x8] sm:$0xff]
      %307 = vrot.lane.b32.xlu0 %v303, 105
      %v308 = vpop.permute.xlu0 %307
      %309 = vrot.lane.b32.xlu0 %v304, 105
      %v310 = vpop.permute.xlu0 %309
      %v311 = vrot.slane %v308, 4
      %v312 = vrot.slane %v310, 4
      %v313 = vsel %vm186, %v311, %v312
      %vm314 = vcmask 859136
      %v315 = vsel %vm314, %v308, %v313
      %v316 = vsel %vm314, %v310, %v312
      %319 = vst [vmem:[#allocation2 + $0x60] sm:$0xff] %v315
      %320 = vst [vmem:[#allocation2 + $0x68] sm:$0xf] %v316
      %v321 = vld [vmem:[%s165] sm:$0xff]
      %v322 = vld [vmem:[%s165 + $0x8] sm:$0xff]
      %325 = vrot.lane.b32.xlu0 %v321, 104
      %v326 = vpop.permute.xlu0 %325
      %327 = vrot.lane.b32.xlu0 %v322, 104
      %v328 = vpop.permute.xlu0 %327
      %v329 = vrot.slane %v326, 4
      %v330 = vrot.slane %v328, 4
      %v331 = vsel %vm186, %v329, %v330
      %vm332 = vcmask 850944
      %v333 = vsel %vm332, %v326, %v331
      %v334 = vsel %vm332, %v328, %v330
      %337 = vst [vmem:[#allocation2 + $0x6c] sm:$0xff] %v333
      %338 = vst [vmem:[#allocation2 + $0x74] sm:$0xf] %v334
      %v339 = vld [vmem:[%s165] sm:$0xff]
      %v340 = vld [vmem:[%s165 + $0x8] sm:$0xff]
      %343 = vrot.lane.b32.xlu0 %v339, 103
      %v344 = vpop.permute.xlu0 %343
      %345 = vrot.lane.b32.xlu0 %v340, 103
      %v346 = vpop.permute.xlu0 %345
      %v347 = vrot.slane %v344, 4
      %v348 = vrot.slane %v346, 4
      %v349 = vsel %vm186, %v347, %v348
      %vm350 = vcmask 842752
      %v351 = vsel %vm350, %v344, %v349
      %v352 = vsel %vm350, %v346, %v348
      %355 = vst [vmem:[#allocation2 + $0x78] sm:$0xff] %v351
      %356 = vst [vmem:[#allocation2 + $0x80] sm:$0xf] %v352
      %v357 = vld [vmem:[%s165] sm:$0xff]
      %v358 = vld [vmem:[%s165 + $0x8] sm:$0xff]
      %361 = vrot.lane.b32.xlu0 %v357, 102
      %v362 = vpop.permute.xlu0 %361
      %363 = vrot.lane.b32.xlu0 %v358, 102
      %v364 = vpop.permute.xlu0 %363
      %v365 = vrot.slane %v362, 4
      %v366 = vrot.slane %v364, 4
      %v367 = vsel %vm186, %v365, %v366
      %vm368 = vcmask 834560
      %v369 = vsel %vm368, %v362, %v367
      %v370 = vsel %vm368, %v364, %v366
      %373 = vst [vmem:[#allocation2 + $0x84] sm:$0xff] %v369
      %374 = vst [vmem:[#allocation2 + $0x8c] sm:$0xf] %v370
      %v375 = vld [vmem:[%s165] sm:$0xff]
      %v376 = vld [vmem:[%s165 + $0x8] sm:$0xff]
      %379 = vrot.lane.b32.xlu0 %v375, 101
      %v380 = vpop.permute.xlu0 %379
      %381 = vrot.lane.b32.xlu0 %v376, 101
      %v382 = vpop.permute.xlu0 %381
      %v383 = vrot.slane %v380, 4
      %v384 = vrot.slane %v382, 4
      %v385 = vsel %vm186, %v383, %v384
      %vm386 = vcmask 826368
      %v387 = vsel %vm386, %v380, %v385
      %v388 = vsel %vm386, %v382, %v384
      %391 = vst [vmem:[#allocation2 + $0x90] sm:$0xff] %v387
      %392 = vst [vmem:[#allocation2 + $0x98] sm:$0xf] %v388
      %v393 = vld [vmem:[%s165] sm:$0xff]
      %v394 = vld [vmem:[%s165 + $0x8] sm:$0xff]
      %397 = vrot.lane.b32.xlu0 %v393, 100
      %v398 = vpop.permute.xlu0 %397
      %399 = vrot.lane.b32.xlu0 %v394, 100
      %v400 = vpop.permute.xlu0 %399
      %v401 = vrot.slane %v398, 4
      %v402 = vrot.slane %v400, 4
      %v403 = vsel %vm186, %v401, %v402
      %vm404 = vcmask 818176
      %v405 = vsel %vm404, %v398, %v403
      %v406 = vsel %vm404, %v400, %v402
      %409 = vst [vmem:[#allocation2 + $0x9c] sm:$0xff] %v405
      %410 = vst [vmem:[#allocation2 + $0xa4] sm:$0xf] %v406
      %v411 = vld [vmem:[%s165] sm:$0xff]
      %v412 = vld [vmem:[%s165 + $0x8] sm:$0xff]
      %415 = vrot.lane.b32.xlu0 %v411, 84
      %v416 = vpop.permute.xlu0 %415
      %417 = vrot.lane.b32.xlu0 %v412, 84
      %v418 = vpop.permute.xlu0 %417
      %v419 = vrot.slane %v416, 4
      %v420 = vrot.slane %v418, 4
      %v421 = vsel %vm186, %v419, %v420
      %vm422 = vcmask 687104
      %v423 = vsel %vm422, %v416, %v421
      %v424 = vsel %vm422, %v418, %v420
      %427 = vst [vmem:[#allocation2 + $0xa8] sm:$0xff] %v423
      %428 = vst [vmem:[#allocation2 + $0xb0] sm:$0xf] %v424
      %v429 = vld [vmem:[%s165] sm:$0xff]
      %v430 = vld [vmem:[%s165 + $0x8] sm:$0xff]
      %433 = vrot.lane.b32.xlu0 %v429, 83
      %v434 = vpop.permute.xlu0 %433
      %435 = vrot.lane.b32.xlu0 %v430, 83
      %v436 = vpop.permute.xlu0 %435
      %v437 = vrot.slane %v434, 4
      %v438 = vrot.slane %v436, 4
      %v439 = vsel %vm186, %v437, %v438
      %vm440 = vcmask 678912
      %v441 = vsel %vm440, %v434, %v439
      %v442 = vsel %vm440, %v436, %v438
      %445 = vst [vmem:[#allocation2 + $0xb4] sm:$0xff] %v441
      %446 = vst [vmem:[#allocation2 + $0xbc] sm:$0xf] %v442
      %v447 = vld [vmem:[%s165] sm:$0xff]
      %v448 = vld [vmem:[%s165 + $0x8] sm:$0xff]
      %451 = vrot.lane.b32.xlu0 %v447, 82
      %v452 = vpop.permute.xlu0 %451
      %453 = vrot.lane.b32.xlu0 %v448, 82
      %v454 = vpop.permute.xlu0 %453
      %v455 = vrot.slane %v452, 4
      %v456 = vrot.slane %v454, 4
      %v457 = vsel %vm186, %v455, %v456
      %vm458 = vcmask 670720
      %v459 = vsel %vm458, %v452, %v457
      %v460 = vsel %vm458, %v454, %v456
      %463 = vst [vmem:[#allocation2 + $0xc0] sm:$0xff] %v459
      %464 = vst [vmem:[#allocation2 + $0xc8] sm:$0xf] %v460
      %v465 = vld [vmem:[%s165] sm:$0xff]
      %v466 = vld [vmem:[%s165 + $0x8] sm:$0xff]
      %469 = vrot.lane.b32.xlu0 %v465, 81
      %v470 = vpop.permute.xlu0 %469
      %471 = vrot.lane.b32.xlu0 %v466, 81
      %v472 = vpop.permute.xlu0 %471
      %v473 = vrot.slane %v470, 4
      %v474 = vrot.slane %v472, 4
      %v475 = vsel %vm186, %v473, %v474
      %vm476 = vcmask 662528
      %v477 = vsel %vm476, %v470, %v475
      %v478 = vsel %vm476, %v472, %v474
      %481 = vst [vmem:[#allocation2 + $0xcc] sm:$0xff] %v477
      %482 = vst [vmem:[#allocation2 + $0xd4] sm:$0xf] %v478
      %v483 = vld [vmem:[%s165] sm:$0xff]
      %v484 = vld [vmem:[%s165 + $0x8] sm:$0xff]
      %487 = vrot.lane.b32.xlu0 %v483, 80
      %v488 = vpop.permute.xlu0 %487
      %489 = vrot.lane.b32.xlu0 %v484, 80
      %v490 = vpop.permute.xlu0 %489
      %v491 = vrot.slane %v488, 4
      %v492 = vrot.slane %v490, 4
      %v493 = vsel %vm186, %v491, %v492
      %vm494 = vcmask 654336
      %v495 = vsel %vm494, %v488, %v493
      %v496 = vsel %vm494, %v490, %v492
      %499 = vst [vmem:[#allocation2 + $0xd8] sm:$0xff] %v495
      %500 = vst [vmem:[#allocation2 + $0xe0] sm:$0xf] %v496
      %v501 = vld [vmem:[%s165] sm:$0xff]
      %v502 = vld [vmem:[%s165 + $0x8] sm:$0xff]
      %505 = vrot.lane.b32.xlu0 %v501, 79
      %v506 = vpop.permute.xlu0 %505
      %507 = vrot.lane.b32.xlu0 %v502, 79
      %v508 = vpop.permute.xlu0 %507
      %v509 = vrot.slane %v506, 4
      %v510 = vrot.slane %v508, 4
      %v511 = vsel %vm186, %v509, %v510
      %vm512 = vcmask 646144
      %v513 = vsel %vm512, %v506, %v511
      %v514 = vsel %vm512, %v508, %v510
      %517 = vst [vmem:[#allocation2 + $0xe4] sm:$0xff] %v513
      %518 = vst [vmem:[#allocation2 + $0xec] sm:$0xf] %v514
      %v519 = vld [vmem:[%s165] sm:$0xff]
      %v520 = vld [vmem:[%s165 + $0x8] sm:$0xff]
      %523 = vrot.lane.b32.xlu0 %v519, 78
      %v524 = vpop.permute.xlu0 %523
      %525 = vrot.lane.b32.xlu0 %v520, 78
      %v526 = vpop.permute.xlu0 %525
      %v527 = vrot.slane %v524, 4
      %v528 = vrot.slane %v526, 4
      %v529 = vsel %vm186, %v527, %v528
      %vm530 = vcmask 637952
      %v531 = vsel %vm530, %v524, %v529
      %v532 = vsel %vm530, %v526, %v528
      %535 = vst [vmem:[#allocation2 + $0xf0] sm:$0xff] %v531
      %536 = vst [vmem:[#allocation2 + $0xf8] sm:$0xf] %v532
      %v537 = vld [vmem:[%s165] sm:$0xff]
      %v538 = vld [vmem:[%s165 + $0x8] sm:$0xff]
      %541 = vrot.lane.b32.xlu0 %v537, 62
      %v542 = vpop.permute.xlu0 %541
      %543 = vrot.lane.b32.xlu0 %v538, 62
      %v544 = vpop.permute.xlu0 %543
      %v545 = vrot.slane %v542, 4
      %v546 = vrot.slane %v544, 4
      %v547 = vsel %vm186, %v545, %v546
      %vm548 = vcmask 506880
      %v549 = vsel %vm548, %v542, %v547
      %v550 = vsel %vm548, %v544, %v546
      %553 = vst [vmem:[#allocation2 + $0xfc] sm:$0xff] %v549
      %554 = vst [vmem:[#allocation2 + $0x104] sm:$0xf] %v550
      %v555 = vld [vmem:[%s165] sm:$0xff]
      %v556 = vld [vmem:[%s165 + $0x8] sm:$0xff]
      %559 = vrot.lane.b32.xlu0 %v555, 61
      %v560 = vpop.permute.xlu0 %559
      %561 = vrot.lane.b32.xlu0 %v556, 61
      %v562 = vpop.permute.xlu0 %561
      %v563 = vrot.slane %v560, 4
      %v564 = vrot.slane %v562, 4
      %v565 = vsel %vm186, %v563, %v564
      %vm566 = vcmask 498688
      %v567 = vsel %vm566, %v560, %v565
      %v568 = vsel %vm566, %v562, %v564
      %571 = vst [vmem:[#allocation2 + $0x108] sm:$0xff] %v567
      %572 = vst [vmem:[#allocation2 + $0x110] sm:$0xf] %v568
      %v573 = vld [vmem:[%s165] sm:$0xff]
      %v574 = vld [vmem:[%s165 + $0x8] sm:$0xff]
      %577 = vrot.lane.b32.xlu0 %v573, 60
      %v578 = vpop.permute.xlu0 %577
      %579 = vrot.lane.b32.xlu0 %v574, 60
      %v580 = vpop.permute.xlu0 %579
      %v581 = vrot.slane %v578, 4
      %v582 = vrot.slane %v580, 4
      %v583 = vsel %vm186, %v581, %v582
      %vm584 = vcmask 490496
      %v585 = vsel %vm584, %v578, %v583
      %v586 = vsel %vm584, %v580, %v582
      %589 = vst [vmem:[#allocation2 + $0x114] sm:$0xff] %v585
      %590 = vst [vmem:[#allocation2 + $0x11c] sm:$0xf] %v586
      %v591 = vld [vmem:[%s165] sm:$0xff]
      %v592 = vld [vmem:[%s165 + $0x8] sm:$0xff]
      %595 = vrot.lane.b32.xlu0 %v591, 59
      %v596 = vpop.permute.xlu0 %595
      %597 = vrot.lane.b32.xlu0 %v592, 59
      %v598 = vpop.permute.xlu0 %597
      %v599 = vrot.slane %v596, 4
      %v600 = vrot.slane %v598, 4
      %v601 = vsel %vm186, %v599, %v600
      %vm602 = vcmask 482304
      %v603 = vsel %vm602, %v596, %v601
      %v604 = vsel %vm602, %v598, %v600
      %607 = vst [vmem:[#allocation2 + $0x120] sm:$0xff] %v603
      %608 = vst [vmem:[#allocation2 + $0x128] sm:$0xf] %v604
      %v609 = vld [vmem:[%s165] sm:$0xff]
      %v610 = vld [vmem:[%s165 + $0x8] sm:$0xff]
      %613 = vrot.lane.b32.xlu0 %v609, 58
      %v614 = vpop.permute.xlu0 %613
      %615 = vrot.lane.b32.xlu0 %v610, 58
      %v616 = vpop.permute.xlu0 %615
      %v617 = vrot.slane %v614, 4
      %v618 = vrot.slane %v616, 4
      %v619 = vsel %vm186, %v617, %v618
      %vm620 = vcmask 474112
      %v621 = vsel %vm620, %v614, %v619
      %v622 = vsel %vm620, %v616, %v618
      %625 = vst [vmem:[#allocation2 + $0x12c] sm:$0xff] %v621
      %626 = vst [vmem:[#allocation2 + $0x134] sm:$0xf] %v622
      %v627 = vld [vmem:[%s165] sm:$0xff]
      %v628 = vld [vmem:[%s165 + $0x8] sm:$0xff]
      %631 = vrot.lane.b32.xlu0 %v627, 57
      %v632 = vpop.permute.xlu0 %631
      %633 = vrot.lane.b32.xlu0 %v628, 57
      %v634 = vpop.permute.xlu0 %633
      %v635 = vrot.slane %v632, 4
      %v636 = vrot.slane %v634, 4
      %v637 = vsel %vm186, %v635, %v636
      %vm638 = vcmask 465920
      %v639 = vsel %vm638, %v632, %v637
      %v640 = vsel %vm638, %v634, %v636
      %643 = vst [vmem:[#allocation2 + $0x138] sm:$0xff] %v639
      %644 = vst [vmem:[#allocation2 + $0x140] sm:$0xf] %v640
      %v645 = vld [vmem:[%s165] sm:$0xff]
      %v646 = vld [vmem:[%s165 + $0x8] sm:$0xff]
      %649 = vrot.lane.b32.xlu0 %v645, 56
      %v650 = vpop.permute.xlu0 %649
      %651 = vrot.lane.b32.xlu0 %v646, 56
      %v652 = vpop.permute.xlu0 %651
      %v653 = vrot.slane %v650, 4
      %v654 = vrot.slane %v652, 4
      %v655 = vsel %vm186, %v653, %v654
      %vm656 = vcmask 457728
      %v657 = vsel %vm656, %v650, %v655
      %v658 = vsel %vm656, %v652, %v654
      %661 = vst [vmem:[#allocation2 + $0x144] sm:$0xff] %v657
      %662 = vst [vmem:[#allocation2 + $0x14c] sm:$0xf] %v658
      %v663 = vld [vmem:[%s165] sm:$0xff]
      %v664 = vld [vmem:[%s165 + $0x8] sm:$0xff]
      %667 = vrot.lane.b32.xlu0 %v663, 40
      %v668 = vpop.permute.xlu0 %667
      %669 = vrot.lane.b32.xlu0 %v664, 40
      %v670 = vpop.permute.xlu0 %669
      %v671 = vrot.slane %v668, 4
      %v672 = vrot.slane %v670, 4
      %v673 = vsel %vm186, %v671, %v672
      %vm674 = vcmask 326656
      %v675 = vsel %vm674, %v668, %v673
      %v676 = vsel %vm674, %v670, %v672
      %679 = vst [vmem:[#allocation2 + $0x150] sm:$0xff] %v675
      %680 = vst [vmem:[#allocation2 + $0x158] sm:$0xf] %v676
      %v681 = vld [vmem:[%s165] sm:$0xff]
      %v682 = vld [vmem:[%s165 + $0x8] sm:$0xff]
      %685 = vrot.lane.b32.xlu0 %v681, 39
      %v686 = vpop.permute.xlu0 %685
      %687 = vrot.lane.b32.xlu0 %v682, 39
      %v688 = vpop.permute.xlu0 %687
      %v689 = vrot.slane %v686, 4
      %v690 = vrot.slane %v688, 4
      %v691 = vsel %vm186, %v689, %v690
      %vm692 = vcmask 318464
      %v693 = vsel %vm692, %v686, %v691
      %v694 = vsel %vm692, %v688, %v690
      %697 = vst [vmem:[#allocation2 + $0x15c] sm:$0xff] %v693
      %698 = vst [vmem:[#allocation2 + $0x164] sm:$0xf] %v694
      %v699 = vld [vmem:[%s165] sm:$0xff]
      %v700 = vld [vmem:[%s165 + $0x8] sm:$0xff]
      %703 = vrot.lane.b32.xlu0 %v699, 38
      %v704 = vpop.permute.xlu0 %703
      %705 = vrot.lane.b32.xlu0 %v700, 38
      %v706 = vpop.permute.xlu0 %705
      %v707 = vrot.slane %v704, 4
      %v708 = vrot.slane %v706, 4
      %v709 = vsel %vm186, %v707, %v708
      %vm710 = vcmask 310272
      %v711 = vsel %vm710, %v704, %v709
      %v712 = vsel %vm710, %v706, %v708
      %715 = vst [vmem:[#allocation2 + $0x168] sm:$0xff] %v711
      %716 = vst [vmem:[#allocation2 + $0x170] sm:$0xf] %v712
      %v717 = vld [vmem:[%s165] sm:$0xff]
      %v718 = vld [vmem:[%s165 + $0x8] sm:$0xff]
      %721 = vrot.lane.b32.xlu0 %v717, 37
      %v722 = vpop.permute.xlu0 %721
      %723 = vrot.lane.b32.xlu0 %v718, 37
      %v724 = vpop.permute.xlu0 %723
      %v725 = vrot.slane %v722, 4
      %v726 = vrot.slane %v724, 4
      %v727 = vsel %vm186, %v725, %v726
      %vm728 = vcmask 302080
      %v729 = vsel %vm728, %v722, %v727
      %v730 = vsel %vm728, %v724, %v726
      %733 = vst [vmem:[#allocation2 + $0x174] sm:$0xff] %v729
      %734 = vst [vmem:[#allocation2 + $0x17c] sm:$0xf] %v730
      %v735 = vld [vmem:[%s165] sm:$0xff]
      %v736 = vld [vmem:[%s165 + $0x8] sm:$0xff]
      %739 = vrot.lane.b32.xlu0 %v735, 36
      %v740 = vpop.permute.xlu0 %739
      %741 = vrot.lane.b32.xlu0 %v736, 36
      %v742 = vpop.permute.xlu0 %741
      %v743 = vrot.slane %v740, 4
      %v744 = vrot.slane %v742, 4
      %v745 = vsel %vm186, %v743, %v744
      %vm746 = vcmask 293888
      %v747 = vsel %vm746, %v740, %v745
      %v748 = vsel %vm746, %v742, %v744
      %751 = vst [vmem:[#allocation2 + $0x180] sm:$0xff] %v747
      %752 = vst [vmem:[#allocation2 + $0x188] sm:$0xf] %v748
      %v753 = vld [vmem:[%s165] sm:$0xff]
      %v754 = vld [vmem:[%s165 + $0x8] sm:$0xff]
      %757 = vrot.lane.b32.xlu0 %v753, 35
      %v758 = vpop.permute.xlu0 %757
      %759 = vrot.lane.b32.xlu0 %v754, 35
      %v760 = vpop.permute.xlu0 %759
      %v761 = vrot.slane %v758, 4
      %v762 = vrot.slane %v760, 4
      %v763 = vsel %vm186, %v761, %v762
      %vm764 = vcmask 285696
      %v765 = vsel %vm764, %v758, %v763
      %v766 = vsel %vm764, %v760, %v762
      %769 = vst [vmem:[#allocation2 + $0x18c] sm:$0xff] %v765
      %770 = vst [vmem:[#allocation2 + $0x194] sm:$0xf] %v766
      %v771 = vld [vmem:[%s165] sm:$0xff]
      %v772 = vld [vmem:[%s165 + $0x8] sm:$0xff]
      %775 = vrot.lane.b32.xlu0 %v771, 34
      %v776 = vpop.permute.xlu0 %775
      %777 = vrot.lane.b32.xlu0 %v772, 34
      %v778 = vpop.permute.xlu0 %777
      %v779 = vrot.slane %v776, 4
      %v780 = vrot.slane %v778, 4
      %v781 = vsel %vm186, %v779, %v780
      %vm782 = vcmask 277504
      %v783 = vsel %vm782, %v776, %v781
      %v784 = vsel %vm782, %v778, %v780
      %787 = vst [vmem:[#allocation2 + $0x198] sm:$0xff] %v783
      %788 = vst [vmem:[#allocation2 + $0x1a0] sm:$0xf] %v784
      %v789 = vld [vmem:[%s165] sm:$0xff]
      %v790 = vld [vmem:[%s165 + $0x8] sm:$0xff]
      %793 = vrot.lane.b32.xlu0 %v789, 18
      %v794 = vpop.permute.xlu0 %793
      %795 = vrot.lane.b32.xlu0 %v790, 18
      %v796 = vpop.permute.xlu0 %795
      %v797 = vrot.slane %v794, 4
      %v798 = vrot.slane %v796, 4
      %v799 = vsel %vm186, %v797, %v798
      %vm800 = vcmask 146432
      %v801 = vsel %vm800, %v794, %v799
      %v802 = vsel %vm800, %v796, %v798
      %805 = vst [vmem:[#allocation2 + $0x1a4] sm:$0xff] %v801
      %806 = vst [vmem:[#allocation2 + $0x1ac] sm:$0xf] %v802
      %v807 = vld [vmem:[%s165] sm:$0xff]
      %v808 = vld [vmem:[%s165 + $0x8] sm:$0xff]
      %811 = vrot.lane.b32.xlu0 %v807, 17
      %v812 = vpop.permute.xlu0 %811
      %813 = vrot.lane.b32.xlu0 %v808, 17
      %v814 = vpop.permute.xlu0 %813
      %v815 = vrot.slane %v812, 4
      %v816 = vrot.slane %v814, 4
      %v817 = vsel %vm186, %v815, %v816
      %vm818 = vcmask 138240
      %v819 = vsel %vm818, %v812, %v817
      %v820 = vsel %vm818, %v814, %v816
      %823 = vst [vmem:[#allocation2 + $0x1b0] sm:$0xff] %v819
      %824 = vst [vmem:[#allocation2 + $0x1b8] sm:$0xf] %v820
      %v825 = vld [vmem:[%s165] sm:$0xff]
      %v826 = vld [vmem:[%s165 + $0x8] sm:$0xff]
      %829 = vrot.lane.b32.xlu0 %v825, 16
      %v830 = vpop.permute.xlu0 %829
      %831 = vrot.lane.b32.xlu0 %v826, 16
      %v832 = vpop.permute.xlu0 %831
      %v833 = vrot.slane %v830, 4
      %v834 = vrot.slane %v832, 4
      %v835 = vsel %vm186, %v833, %v834
      %vm836 = vcmask 130048
      %v837 = vsel %vm836, %v830, %v835
      %v838 = vsel %vm836, %v832, %v834
      %841 = vst [vmem:[#allocation2 + $0x1bc] sm:$0xff] %v837
      %842 = vst [vmem:[#allocation2 + $0x1c4] sm:$0xf] %v838
      %v843 = vld [vmem:[%s165] sm:$0xff]
      %v844 = vld [vmem:[%s165 + $0x8] sm:$0xff]
      %847 = vrot.lane.b32.xlu0 %v843, 15
      %v848 = vpop.permute.xlu0 %847
      %849 = vrot.lane.b32.xlu0 %v844, 15
      %v850 = vpop.permute.xlu0 %849
      %v851 = vrot.slane %v848, 4
      %v852 = vrot.slane %v850, 4
      %v853 = vsel %vm186, %v851, %v852
      %vm854 = vcmask 121856
      %v855 = vsel %vm854, %v848, %v853
      %v856 = vsel %vm854, %v850, %v852
      %859 = vst [vmem:[#allocation2 + $0x1c8] sm:$0xff] %v855
      %860 = vst [vmem:[#allocation2 + $0x1d0] sm:$0xf] %v856
      %v861 = vld [vmem:[%s165] sm:$0xff]
      %v862 = vld [vmem:[%s165 + $0x8] sm:$0xff]
      %865 = vrot.lane.b32.xlu0 %v861, 14
      %v866 = vpop.permute.xlu0 %865
      %867 = vrot.lane.b32.xlu0 %v862, 14
      %v868 = vpop.permute.xlu0 %867
      %v869 = vrot.slane %v866, 4
      %v870 = vrot.slane %v868, 4
      %v871 = vsel %vm186, %v869, %v870
      %vm872 = vcmask 113664
      %v873 = vsel %vm872, %v866, %v871
      %v874 = vsel %vm872, %v868, %v870
      %877 = vst [vmem:[#allocation2 + $0x1d4] sm:$0xff] %v873
      %878 = vst [vmem:[#allocation2 + $0x1dc] sm:$0xf] %v874
      %v879 = vld [vmem:[%s165] sm:$0xff]
      %v880 = vld [vmem:[%s165 + $0x8] sm:$0xff]
      %883 = vrot.lane.b32.xlu0 %v879, 13
      %v884 = vpop.permute.xlu0 %883
      %885 = vrot.lane.b32.xlu0 %v880, 13
      %v886 = vpop.permute.xlu0 %885
      %v887 = vrot.slane %v884, 4
      %v888 = vrot.slane %v886, 4
      %v889 = vsel %vm186, %v887, %v888
      %vm890 = vcmask 105472
      %v891 = vsel %vm890, %v884, %v889
      %v892 = vsel %vm890, %v886, %v888
      %895 = vst [vmem:[#allocation2 + $0x1e0] sm:$0xff] %v891
      %896 = vst [vmem:[#allocation2 + $0x1e8] sm:$0xf] %v892
      %v897 = vld [vmem:[%s165] sm:$0xff]
      %v898 = vld [vmem:[%s165 + $0x8] sm:$0xff]
      %901 = vrot.lane.b32.xlu0 %v897, 12
      %v902 = vpop.permute.xlu0 %901
      %903 = vrot.lane.b32.xlu0 %v898, 12
      %v904 = vpop.permute.xlu0 %903
      %v905 = vrot.slane %v902, 4
      %v906 = vrot.slane %v904, 4
      %v907 = vsel %vm186, %v905, %v906
      %vm908 = vcmask 97280
      %v909 = vsel %vm908, %v902, %v907
      %v910 = vsel %vm908, %v904, %v906
      %913 = vst [vmem:[#allocation2 + $0x1ec] sm:$0xff] %v909
      %914 = vst [vmem:[#allocation2 + $0x1f4] sm:$0xf] %v910
      %v915 = vld [vmem:[%s165 + $0x4] sm:$0xff]
      %v916 = vld [vmem:[%s165 + $0xc] sm:$0xff]
      %919 = vrot.lane.b32.xlu0 %v915, 124
      %v920 = vpop.permute.xlu0 %919
      %921 = vrot.lane.b32.xlu0 %v916, 124
      %v922 = vpop.permute.xlu0 %921
      %v923 = vrot.slane %v920, 4
      %v924 = vrot.slane %v922, 4
      %v925 = vsel %vm186, %v923, %v924
      %v926 = vsel %vm242, %v920, %v925
      %v927 = vsel %vm242, %v922, %v924
      %930 = vst [vmem:[#allocation2 + $0x1f8] sm:$0xff] %v926
      %931 = vst [vmem:[#allocation2 + $0x200] sm:$0xf] %v927
      %v932 = vld [vmem:[%s165 + $0x4] sm:$0xff]
      %v933 = vld [vmem:[%s165 + $0xc] sm:$0xff]
      %936 = vrot.lane.b32.xlu0 %v932, 123
      %v937 = vpop.permute.xlu0 %936
      %938 = vrot.lane.b32.xlu0 %v933, 123
      %v939 = vpop.permute.xlu0 %938
      %v940 = vrot.slane %v937, 4
      %v941 = vrot.slane %v939, 4
      %v942 = vsel %vm186, %v940, %v941
      %v943 = vsel %vm260, %v937, %v942
      %v944 = vsel %vm260, %v939, %v941
      %947 = vst [vmem:[#allocation2 + $0x204] sm:$0xff] %v943
      %948 = vst [vmem:[#allocation2 + $0x20c] sm:$0xf] %v944
      %v949 = vld [vmem:[%s165 + $0x4] sm:$0xff]
      %v950 = vld [vmem:[%s165 + $0xc] sm:$0xff]
      %953 = vrot.lane.b32.xlu0 %v949, 122
      %v954 = vpop.permute.xlu0 %953
      %955 = vrot.lane.b32.xlu0 %v950, 122
      %v956 = vpop.permute.xlu0 %955
      %v957 = vrot.slane %v954, 4
      %v958 = vrot.slane %v956, 4
      %v959 = vsel %vm186, %v957, %v958
      %v960 = vsel %vm278, %v954, %v959
      %v961 = vsel %vm278, %v956, %v958
      %964 = vst [vmem:[#allocation2 + $0x210] sm:$0xff] %v960
      %965 = vst [vmem:[#allocation2 + $0x218] sm:$0xf] %v961
      %v966 = vld [vmem:[%s165 + $0x4] sm:$0xff]
      %v967 = vld [vmem:[%s165 + $0xc] sm:$0xff]
      %970 = vrot.lane.b32.xlu0 %v966, 121
      %v971 = vpop.permute.xlu0 %970
      %972 = vrot.lane.b32.xlu0 %v967, 121
      %v973 = vpop.permute.xlu0 %972
      %v974 = vrot.slane %v971, 4
      %v975 = vrot.slane %v973, 4
      %v976 = vsel %vm186, %v974, %v975
      %vm977 = vcmask 990208
      %v978 = vsel %vm977, %v971, %v976
      %v979 = vsel %vm977, %v973, %v975
      %982 = vst [vmem:[#allocation2 + $0x21c] sm:$0xff] %v978
      %983 = vst [vmem:[#allocation2 + $0x224] sm:$0xf] %v979
      %v984 = vld [vmem:[%s165 + $0x4] sm:$0xff]
      %v985 = vld [vmem:[%s165 + $0xc] sm:$0xff]
      %988 = vrot.lane.b32.xlu0 %v984, 120
      %v989 = vpop.permute.xlu0 %988
      %990 = vrot.lane.b32.xlu0 %v985, 120
      %v991 = vpop.permute.xlu0 %990
      %v992 = vrot.slane %v989, 4
      %v993 = vrot.slane %v991, 4
      %v994 = vsel %vm186, %v992, %v993
      %vm995 = vcmask 982016
      %v996 = vsel %vm995, %v989, %v994
      %v997 = vsel %vm995, %v991, %v993
      %1000 = vst [vmem:[#allocation2 + $0x228] sm:$0xff] %v996
      %1001 = vst [vmem:[#allocation2 + $0x230] sm:$0xf] %v997
      %v1002 = vld [vmem:[%s165 + $0x4] sm:$0xff]
      %v1003 = vld [vmem:[%s165 + $0xc] sm:$0xff]
      %1006 = vrot.lane.b32.xlu0 %v1002, 119
      %v1007 = vpop.permute.xlu0 %1006
      %1008 = vrot.lane.b32.xlu0 %v1003, 119
      %v1009 = vpop.permute.xlu0 %1008
      %v1010 = vrot.slane %v1007, 4
      %v1011 = vrot.slane %v1009, 4
      %v1012 = vsel %vm186, %v1010, %v1011
      %vm1013 = vcmask 973824
      %v1014 = vsel %vm1013, %v1007, %v1012
      %v1015 = vsel %vm1013, %v1009, %v1011
      %1018 = vst [vmem:[#allocation2 + $0x234] sm:$0xff] %v1014
      %1019 = vst [vmem:[#allocation2 + $0x23c] sm:$0xf] %v1015
      %v1020 = vld [vmem:[%s165 + $0x4] sm:$0xff]
      %v1021 = vld [vmem:[%s165 + $0xc] sm:$0xff]
      %1024 = vrot.lane.b32.xlu0 %v1020, 118
      %v1025 = vpop.permute.xlu0 %1024
      %1026 = vrot.lane.b32.xlu0 %v1021, 118
      %v1027 = vpop.permute.xlu0 %1026
      %v1028 = vrot.slane %v1025, 4
      %v1029 = vrot.slane %v1027, 4
      %v1030 = vsel %vm186, %v1028, %v1029
      %vm1031 = vcmask 965632
      %v1032 = vsel %vm1031, %v1025, %v1030
      %v1033 = vsel %vm1031, %v1027, %v1029
      %1036 = vst [vmem:[#allocation2 + $0x240] sm:$0xff] %v1032
      %1037 = vst [vmem:[#allocation2 + $0x248] sm:$0xf] %v1033
      %v1038 = vld [vmem:[%s1] sm:$0xff]
      %v1039 = vld [vmem:[%s1 + $0x8] sm:$0xff]
      %v1040 = vld [vmem:[#allocation2] sm:$0xff]
      %v1041 = vld [vmem:[#allocation2 + $0x8] sm:$0xf]
      %v1042 = vld [vmem:[#allocation2 + $0xc] sm:$0xff]
      %v1043 = vld [vmem:[#allocation2 + $0x14] sm:$0xf]
      %v1044 = vld [vmem:[#allocation2 + $0x18] sm:$0xff]
      %v1045 = vld [vmem:[#allocation2 + $0x20] sm:$0xf]
      %v1046 = vld [vmem:[#allocation2 + $0x24] sm:$0xff]
      %v1047 = vld [vmem:[#allocation2 + $0x2c] sm:$0xf]
      %v1048 = vld [vmem:[#allocation2 + $0x30] sm:$0xff]
      %v1049 = vld [vmem:[#allocation2 + $0x38] sm:$0xf]
      %v1050 = vld [vmem:[#allocation2 + $0x3c] sm:$0xff]
      %v1051 = vld [vmem:[#allocation2 + $0x44] sm:$0xf]
      %v1052 = vld [vmem:[#allocation2 + $0x48] sm:$0xff]
      %v1053 = vld [vmem:[#allocation2 + $0x50] sm:$0xf]
      %v1054 = vld [vmem:[#allocation2 + $0x54] sm:$0xff]
      %v1055 = vld [vmem:[#allocation2 + $0x5c] sm:$0xf]
      %v1056 = vld [vmem:[#allocation2 + $0x60] sm:$0xff]
      %v1057 = vld [vmem:[#allocation2 + $0x68] sm:$0xf]
      %v1058 = vld [vmem:[#allocation2 + $0x6c] sm:$0xff]
      %v1059 = vld [vmem:[#allocation2 + $0x74] sm:$0xf]
      %v1060 = vld [vmem:[#allocation2 + $0x78] sm:$0xff]
      %v1061 = vld [vmem:[#allocation2 + $0x80] sm:$0xf]
      %v1062 = vld [vmem:[#allocation2 + $0x84] sm:$0xff]
      %v1063 = vld [vmem:[#allocation2 + $0x8c] sm:$0xf]
      %v1064 = vld [vmem:[#allocation2 + $0x90] sm:$0xff]
      %v1065 = vld [vmem:[#allocation2 + $0x98] sm:$0xf]
      %v1066 = vld [vmem:[#allocation2 + $0x9c] sm:$0xff]
      %v1067 = vld [vmem:[#allocation2 + $0xa4] sm:$0xf]
      %v1068 = vld [vmem:[#allocation2 + $0xa8] sm:$0xff]
      %v1069 = vld [vmem:[#allocation2 + $0xb0] sm:$0xf]
      %v1070 = vld [vmem:[#allocation2 + $0xb4] sm:$0xff]
      %v1071 = vld [vmem:[#allocation2 + $0xbc] sm:$0xf]
      %v1072 = vld [vmem:[#allocation2 + $0xc0] sm:$0xff]
      %v1073 = vld [vmem:[#allocation2 + $0xc8] sm:$0xf]
      %v1074 = vld [vmem:[#allocation2 + $0xcc] sm:$0xff]
      %v1075 = vld [vmem:[#allocation2 + $0xd4] sm:$0xf]
      %v1076 = vld [vmem:[#allocation2 + $0xd8] sm:$0xff]
      %v1077 = vld [vmem:[#allocation2 + $0xe0] sm:$0xf]
      %v1078 = vld [vmem:[#allocation2 + $0xe4] sm:$0xff]
      %v1079 = vld [vmem:[#allocation2 + $0xec] sm:$0xf]
      %v1080 = vld [vmem:[#allocation2 + $0xf0] sm:$0xff]
      %v1081 = vld [vmem:[#allocation2 + $0xf8] sm:$0xf]
      %v1082 = vld [vmem:[#allocation2 + $0xfc] sm:$0xff]
      %v1083 = vld [vmem:[#allocation2 + $0x104] sm:$0xf]
      %v1084 = vld [vmem:[#allocation2 + $0x108] sm:$0xff]
      %v1085 = vld [vmem:[#allocation2 + $0x110] sm:$0xf]
      %v1086 = vld [vmem:[#allocation2 + $0x114] sm:$0xff]
      %v1087 = vld [vmem:[#allocation2 + $0x11c] sm:$0xf]
      %v1088 = vld [vmem:[#allocation2 + $0x120] sm:$0xff]
      %v1089 = vld [vmem:[#allocation2 + $0x128] sm:$0xf]
      %v1090 = vld [vmem:[#allocation2 + $0x12c] sm:$0xff]
      %v1091 = vld [vmem:[#allocation2 + $0x134] sm:$0xf]
      %v1092 = vld [vmem:[#allocation2 + $0x138] sm:$0xff]
      %v1093 = vld [vmem:[#allocation2 + $0x140] sm:$0xf]
      %v1094 = vld [vmem:[#allocation2 + $0x144] sm:$0xff]
      %v1095 = vld [vmem:[#allocation2 + $0x14c] sm:$0xf]
      %v1096 = vld [vmem:[#allocation2 + $0x150] sm:$0xff]
      %v1097 = vld [vmem:[#allocation2 + $0x158] sm:$0xf]
      %v1098 = vld [vmem:[#allocation2 + $0x15c] sm:$0xff]
      %v1099 = vld [vmem:[#allocation2 + $0x164] sm:$0xf]
      %v1100 = vld [vmem:[#allocation2 + $0x168] sm:$0xff]
      %v1101 = vld [vmem:[#allocation2 + $0x170] sm:$0xf]
      %v1102 = vld [vmem:[#allocation2 + $0x174] sm:$0xff]
      %v1103 = vld [vmem:[#allocation2 + $0x17c] sm:$0xf]
      %v1104 = vld [vmem:[#allocation2 + $0x180] sm:$0xff]
      %v1105 = vld [vmem:[#allocation2 + $0x188] sm:$0xf]
      %v1106 = vld [vmem:[#allocation2 + $0x18c] sm:$0xff]
      %v1107 = vld [vmem:[#allocation2 + $0x194] sm:$0xf]
      %v1108 = vld [vmem:[#allocation2 + $0x198] sm:$0xff]
      %v1109 = vld [vmem:[#allocation2 + $0x1a0] sm:$0xf]
      %v1110 = vld [vmem:[#allocation2 + $0x1a4] sm:$0xff]
      %v1111 = vld [vmem:[#allocation2 + $0x1ac] sm:$0xf]
      %v1112 = vld [vmem:[#allocation2 + $0x1b0] sm:$0xff]
      %v1113 = vld [vmem:[#allocation2 + $0x1b8] sm:$0xf]
      %v1114 = vld [vmem:[#allocation2 + $0x1bc] sm:$0xff]
      %v1115 = vld [vmem:[#allocation2 + $0x1c4] sm:$0xf]
      %v1116 = vld [vmem:[#allocation2 + $0x1c8] sm:$0xff]
      %v1117 = vld [vmem:[#allocation2 + $0x1d0] sm:$0xf]
      %v1118 = vld [vmem:[#allocation2 + $0x1d4] sm:$0xff]
      %v1119 = vld [vmem:[#allocation2 + $0x1dc] sm:$0xf]
      %v1120 = vld [vmem:[#allocation2 + $0x1e0] sm:$0xff]
      %v1121 = vld [vmem:[#allocation2 + $0x1e8] sm:$0xf]
      %v1122 = vld [vmem:[#allocation2 + $0x1ec] sm:$0xff]
      %v1123 = vld [vmem:[#allocation2 + $0x1f4] sm:$0xf]
      %v1124 = vld [vmem:[#allocation2 + $0x1f8] sm:$0xff]
      %v1125 = vld [vmem:[#allocation2 + $0x200] sm:$0xf]
      %v1126 = vld [vmem:[#allocation2 + $0x204] sm:$0xff]
      %v1127 = vld [vmem:[#allocation2 + $0x20c] sm:$0xf]
      %v1128 = vld [vmem:[#allocation2 + $0x210] sm:$0xff]
      %v1129 = vld [vmem:[#allocation2 + $0x218] sm:$0xf]
      %v1130 = vld [vmem:[#allocation2 + $0x21c] sm:$0xff]
      %v1131 = vld [vmem:[#allocation2 + $0x224] sm:$0xf]
      %v1132 = vld [vmem:[#allocation2 + $0x228] sm:$0xff]
      %v1133 = vld [vmem:[#allocation2 + $0x230] sm:$0xf]
      %v1134 = vld [vmem:[#allocation2 + $0x234] sm:$0xff]
      %v1135 = vld [vmem:[#allocation2 + $0x23c] sm:$0xf]
      %v1136 = vld [vmem:[#allocation2 + $0x240] sm:$0xff]
      %v1137 = vld [vmem:[#allocation2 + $0x248] sm:$0xf]
      %v1138 = vld [vmem:[%s2] sm:$0xff]
      %1140 = vset.pattern.permute.xlu0 0
      %1141 = vperm.xlu0 %1140, %v1138
      %v1142 = vpop.permute.xlu0 %1141
      %v1146 = vunpack.c.l.b16 %v1038
      %v1147 = vunpack.c.h.b16 %v1038
      %v1148 = vunpack.c.l.b16 %v1039
      %v1149 = vunpack.c.h.b16 %v1039
      %v1150 = vpack.c.b16 %v1146, %v1146
      %v1151 = vpack.c.b16 %v1147, %v1147
      %v1152 = vpack.c.b16 %v1148, %v1148
      %v1153 = vpack.c.b16 %v1149, %v1149
      %v1255 = vunpack.c.l.b16 %v1040
      %v1256 = vunpack.c.h.b16 %v1040
      %v1257 = vunpack.c.l.b16 %v1041
      %v1258 = vunpack.c.l.b16 %v1042
      %v1259 = vunpack.c.h.b16 %v1042
      %v1260 = vunpack.c.l.b16 %v1043
      %v1261 = vunpack.c.l.b16 %v1044
      %v1262 = vunpack.c.h.b16 %v1044
      %v1263 = vunpack.c.l.b16 %v1045
      %v1264 = vunpack.c.l.b16 %v1046
      %v1265 = vunpack.c.h.b16 %v1046
      %v1266 = vunpack.c.l.b16 %v1047
      %v1267 = vunpack.c.l.b16 %v1048
      %v1268 = vunpack.c.h.b16 %v1048
      %v1269 = vunpack.c.l.b16 %v1049
      %v1270 = vunpack.c.l.b16 %v1050
      %v1271 = vunpack.c.h.b16 %v1050
      %v1272 = vunpack.c.l.b16 %v1051
      %v1273 = vunpack.c.l.b16 %v1052
      %v1274 = vunpack.c.h.b16 %v1052
      %v1275 = vunpack.c.l.b16 %v1053
      %v1276 = vunpack.c.l.b16 %v1054
      %v1277 = vunpack.c.h.b16 %v1054
      %v1278 = vunpack.c.l.b16 %v1055
      %v1279 = vunpack.c.l.b16 %v1056
      %v1280 = vunpack.c.h.b16 %v1056
      %v1281 = vunpack.c.l.b16 %v1057
      %v1282 = vunpack.c.l.b16 %v1058
      %v1283 = vunpack.c.h.b16 %v1058
      %v1284 = vunpack.c.l.b16 %v1059
      %v1285 = vunpack.c.l.b16 %v1060
      %v1286 = vunpack.c.h.b16 %v1060
      %v1287 = vunpack.c.l.b16 %v1061
      %v1288 = vunpack.c.l.b16 %v1062
      %v1289 = vunpack.c.h.b16 %v1062
      %v1290 = vunpack.c.l.b16 %v1063
      %v1291 = vunpack.c.l.b16 %v1064
      %v1292 = vunpack.c.h.b16 %v1064
      %v1293 = vunpack.c.l.b16 %v1065
      %v1294 = vunpack.c.l.b16 %v1066
      %v1295 = vunpack.c.h.b16 %v1066
      %v1296 = vunpack.c.l.b16 %v1067
      %v1297 = vunpack.c.l.b16 %v1068
      %v1298 = vunpack.c.h.b16 %v1068
      %v1299 = vunpack.c.l.b16 %v1069
      %v1300 = vunpack.c.l.b16 %v1070
      %v1301 = vunpack.c.h.b16 %v1070
      %v1302 = vunpack.c.l.b16 %v1071
      %v1303 = vunpack.c.l.b16 %v1072
      %v1304 = vunpack.c.h.b16 %v1072
      %v1305 = vunpack.c.l.b16 %v1073
      %v1306 = vunpack.c.l.b16 %v1074
      %v1307 = vunpack.c.h.b16 %v1074
      %v1308 = vunpack.c.l.b16 %v1075
      %v1309 = vunpack.c.l.b16 %v1076
      %v1310 = vunpack.c.h.b16 %v1076
      %v1311 = vunpack.c.l.b16 %v1077
      %v1312 = vunpack.c.l.b16 %v1078
      %v1313 = vunpack.c.h.b16 %v1078
      %v1314 = vunpack.c.l.b16 %v1079
      %v1315 = vunpack.c.l.b16 %v1080
      %v1316 = vunpack.c.h.b16 %v1080
      %v1317 = vunpack.c.l.b16 %v1081
      %v1318 = vunpack.c.l.b16 %v1082
      %v1319 = vunpack.c.h.b16 %v1082
      %v1320 = vunpack.c.l.b16 %v1083
      %v1321 = vunpack.c.l.b16 %v1084
      %v1322 = vunpack.c.h.b16 %v1084
      %v1323 = vunpack.c.l.b16 %v1085
      %v1324 = vunpack.c.l.b16 %v1086
      %v1325 = vunpack.c.h.b16 %v1086
      %v1326 = vunpack.c.l.b16 %v1087
      %v1327 = vunpack.c.l.b16 %v1088
      %v1328 = vunpack.c.h.b16 %v1088
      %v1329 = vunpack.c.l.b16 %v1089
      %v1330 = vunpack.c.l.b16 %v1090
      %v1331 = vunpack.c.h.b16 %v1090
      %v1332 = vunpack.c.l.b16 %v1091
      %v1333 = vunpack.c.l.b16 %v1092
      %v1334 = vunpack.c.h.b16 %v1092
      %v1335 = vunpack.c.l.b16 %v1093
      %v1336 = vunpack.c.l.b16 %v1094
      %v1337 = vunpack.c.h.b16 %v1094
      %v1338 = vunpack.c.l.b16 %v1095
      %v1339 = vunpack.c.l.b16 %v1096
      %v1340 = vunpack.c.h.b16 %v1096
      %v1341 = vunpack.c.l.b16 %v1097
      %v1342 = vunpack.c.l.b16 %v1098
      %v1343 = vunpack.c.h.b16 %v1098
      %v1344 = vunpack.c.l.b16 %v1099
      %v1345 = vunpack.c.l.b16 %v1100
      %v1346 = vunpack.c.h.b16 %v1100
      %v1347 = vunpack.c.l.b16 %v1101
      %v1348 = vunpack.c.l.b16 %v1102
      %v1349 = vunpack.c.h.b16 %v1102
      %v1350 = vunpack.c.l.b16 %v1103
      %v1351 = vunpack.c.l.b16 %v1104
      %v1352 = vunpack.c.h.b16 %v1104
      %v1353 = vunpack.c.l.b16 %v1105
      %v1354 = vunpack.c.l.b16 %v1106
      %v1355 = vunpack.c.h.b16 %v1106
      %v1356 = vunpack.c.l.b16 %v1107
      %v1357 = vunpack.c.l.b16 %v1108
      %v1358 = vunpack.c.h.b16 %v1108
      %v1359 = vunpack.c.l.b16 %v1109
      %v1360 = vunpack.c.l.b16 %v1110
      %v1361 = vunpack.c.h.b16 %v1110
      %v1362 = vunpack.c.l.b16 %v1111
      %v1363 = vunpack.c.l.b16 %v1112
      %v1364 = vunpack.c.h.b16 %v1112
      %v1365 = vunpack.c.l.b16 %v1113
      %v1366 = vunpack.c.l.b16 %v1114
      %v1367 = vunpack.c.h.b16 %v1114
      %v1368 = vunpack.c.l.b16 %v1115
      %v1369 = vunpack.c.l.b16 %v1116
      %v1370 = vunpack.c.h.b16 %v1116
      %v1371 = vunpack.c.l.b16 %v1117
      %v1372 = vunpack.c.l.b16 %v1118
      %v1373 = vunpack.c.h.b16 %v1118
      %v1374 = vunpack.c.l.b16 %v1119
      %v1375 = vunpack.c.l.b16 %v1120
      %v1376 = vunpack.c.h.b16 %v1120
      %v1377 = vunpack.c.l.b16 %v1121
      %v1378 = vunpack.c.l.b16 %v1122
      %v1379 = vunpack.c.h.b16 %v1122
      %v1380 = vunpack.c.l.b16 %v1123
      %v1381 = vunpack.c.l.b16 %v1124
      %v1382 = vunpack.c.h.b16 %v1124
      %v1383 = vunpack.c.l.b16 %v1125
      %v1384 = vunpack.c.l.b16 %v1126
      %v1385 = vunpack.c.h.b16 %v1126
      %v1386 = vunpack.c.l.b16 %v1127
      %v1387 = vunpack.c.l.b16 %v1128
      %v1388 = vunpack.c.h.b16 %v1128
      %v1389 = vunpack.c.l.b16 %v1129
      %v1390 = vunpack.c.l.b16 %v1130
      %v1391 = vunpack.c.h.b16 %v1130
      %v1392 = vunpack.c.l.b16 %v1131
      %v1393 = vunpack.c.l.b16 %v1132
      %v1394 = vunpack.c.h.b16 %v1132
      %v1395 = vunpack.c.l.b16 %v1133
      %v1396 = vunpack.c.l.b16 %v1134
      %v1397 = vunpack.c.h.b16 %v1134
      %v1398 = vunpack.c.l.b16 %v1135
      %v1399 = vunpack.c.l.b16 %v1136
      %v1400 = vunpack.c.h.b16 %v1136
      %v1401 = vunpack.c.l.b16 %v1137
      %v1402 = vpack.c.b16 %v1258, %v1255
      %v1403 = vpack.c.b16 %v1259, %v1256
      %v1404 = vpack.c.b16 %v1260, %v1257
      %v1405 = vpack.c.b16 %v1264, %v1261
      %v1406 = vpack.c.b16 %v1265, %v1262
      %v1407 = vpack.c.b16 %v1266, %v1263
      %v1408 = vpack.c.b16 %v1270, %v1267
      %v1409 = vpack.c.b16 %v1271, %v1268
      %v1410 = vpack.c.b16 %v1272, %v1269
      %v1411 = vpack.c.b16 %v1276, %v1273
      %v1412 = vpack.c.b16 %v1277, %v1274
      %v1413 = vpack.c.b16 %v1278, %v1275
      %v1414 = vpack.c.b16 %v1282, %v1279
      %v1415 = vpack.c.b16 %v1283, %v1280
      %v1416 = vpack.c.b16 %v1284, %v1281
      %v1417 = vpack.c.b16 %v1288, %v1285
      %v1418 = vpack.c.b16 %v1289, %v1286
      %v1419 = vpack.c.b16 %v1290, %v1287
      %v1420 = vpack.c.b16 %v1294, %v1291
      %v1421 = vpack.c.b16 %v1295, %v1292
      %v1422 = vpack.c.b16 %v1296, %v1293
      %v1423 = vpack.c.b16 %v1300, %v1297
      %v1424 = vpack.c.b16 %v1301, %v1298
      %v1425 = vpack.c.b16 %v1302, %v1299
      %v1426 = vpack.c.b16 %v1306, %v1303
      %v1427 = vpack.c.b16 %v1307, %v1304
      %v1428 = vpack.c.b16 %v1308, %v1305
      %v1429 = vpack.c.b16 %v1312, %v1309
      %v1430 = vpack.c.b16 %v1313, %v1310
      %v1431 = vpack.c.b16 %v1314, %v1311
      %v1432 = vpack.c.b16 %v1318, %v1315
      %v1433 = vpack.c.b16 %v1319, %v1316
      %v1434 = vpack.c.b16 %v1320, %v1317
      %v1435 = vpack.c.b16 %v1324, %v1321
      %v1436 = vpack.c.b16 %v1325, %v1322
      %v1437 = vpack.c.b16 %v1326, %v1323
      %v1438 = vpack.c.b16 %v1330, %v1327
      %v1439 = vpack.c.b16 %v1331, %v1328
      %v1440 = vpack.c.b16 %v1332, %v1329
      %v1441 = vpack.c.b16 %v1336, %v1333
      %v1442 = vpack.c.b16 %v1337, %v1334
      %v1443 = vpack.c.b16 %v1338, %v1335
      %v1444 = vpack.c.b16 %v1342, %v1339
      %v1445 = vpack.c.b16 %v1343, %v1340
      %v1446 = vpack.c.b16 %v1344, %v1341
      %v1447 = vpack.c.b16 %v1348, %v1345
      %v1448 = vpack.c.b16 %v1349, %v1346
      %v1449 = vpack.c.b16 %v1350, %v1347
      %v1450 = vpack.c.b16 %v1354, %v1351
      %v1451 = vpack.c.b16 %v1355, %v1352
      %v1452 = vpack.c.b16 %v1356, %v1353
      %v1453 = vpack.c.b16 %v1360, %v1357
      %v1454 = vpack.c.b16 %v1361, %v1358
      %v1455 = vpack.c.b16 %v1362, %v1359
      %v1456 = vpack.c.b16 %v1366, %v1363
      %v1457 = vpack.c.b16 %v1367, %v1364
      %v1458 = vpack.c.b16 %v1368, %v1365
      %v1459 = vpack.c.b16 %v1372, %v1369
      %v1460 = vpack.c.b16 %v1373, %v1370
      %v1461 = vpack.c.b16 %v1374, %v1371
      %v1462 = vpack.c.b16 %v1378, %v1375
      %v1463 = vpack.c.b16 %v1379, %v1376
      %v1464 = vpack.c.b16 %v1380, %v1377
      %v1465 = vpack.c.b16 %v1384, %v1381
      %v1466 = vpack.c.b16 %v1385, %v1382
      %v1467 = vpack.c.b16 %v1386, %v1383
      %v1468 = vpack.c.b16 %v1390, %v1387
      %v1469 = vpack.c.b16 %v1391, %v1388
      %v1470 = vpack.c.b16 %v1392, %v1389
      %v1471 = vpack.c.b16 %v1396, %v1393
      %v1472 = vpack.c.b16 %v1397, %v1394
      %v1473 = vpack.c.b16 %v1398, %v1395
      %v1474 = vpack.c.b16 %v1399, %v1399
      %v1475 = vpack.c.b16 %v1400, %v1400
      %v1476 = vpack.c.b16 %v1401, %v1401
      %vm1549 = vcmask 64512
      %v1551 = vsel %vm1549, %v1153, 0
      %vm1553 = vcmask 1043456
      %v1555 = vsel %vm1553, %v1474, 0
      %v1558 = vsel %vm1553, %v1475, 0
      %v1561 = vsel %vm1553, %v1476, 0
      %1563 = vmatprep.subr.bf16.mxu0 %v1403
      %1564 = vmatpush1.bf16.msra.mxu0 %v1402
      %1565 = vmatprep.subr.bf16.mxu0 %v1406
      %1566 = vmatpush1.bf16.msra.mxu0 %v1405
      %1567 = vmatprep.subr.bf16.mxu0 %v1409
      %1568 = vmatpush1.bf16.msra.mxu0 %v1408
      %1569 = vmatprep.subr.bf16.mxu0 %v1412
      %1570 = vmatpush1.bf16.msra.mxu0 %v1411
      %1571 = vmatprep.subr.bf16.mxu0 %v1415
      %1572 = vmatpush1.bf16.msra.mxu0 %v1414
      %1573 = vmatprep.subr.bf16.mxu0 %v1418
      %1574 = vmatpush1.bf16.msra.mxu0 %v1417
      %1575 = vmatprep.subr.bf16.mxu0 %v1421
      %1576 = vmatpush1.bf16.msra.mxu0 %v1420
      %1577 = vmatprep.subr.bf16.mxu0 %v1424
      %1578 = vmatpush1.bf16.msra.mxu0 %v1423
      %1579 = vmatprep.subr.bf16.mxu0 %v1427
      %1580 = vmatpush1.bf16.msra.mxu0 %v1426
      %1581 = vmatprep.subr.bf16.mxu0 %v1430
      %1582 = vmatpush1.bf16.msra.mxu0 %v1429
      %1583 = vmatprep.subr.bf16.mxu0 %v1433
      %1584 = vmatpush1.bf16.msra.mxu0 %v1432
      %1585 = vmatprep.subr.bf16.mxu0 %v1436
      %1586 = vmatpush1.bf16.msra.mxu0 %v1435
      %1587 = vmatprep.subr.bf16.mxu0 %v1439
      %1588 = vmatpush1.bf16.msra.mxu0 %v1438
      %1589 = vmatprep.subr.bf16.mxu0 %v1442
      %1590 = vmatpush1.bf16.msra.mxu0 %v1441
      %1591 = vmatprep.subr.bf16.mxu0 %v1445
      %1592 = vmatpush1.bf16.msra.mxu0 %v1444
      %1593 = vmatprep.subr.bf16.mxu0 %v1448
      %1594 = vmatpush1.bf16.msra.mxu0 %v1447
      %1595 = vmatprep.mubr.bf16.mxu0 %v1151
      %1596 = vmatmul.mubr.bf16.gmra.mrb[0].mxu0 %v1150
      %v1597 = vpop.f32.mrb[0].mxu0
      %v1598 = vadd.f32 %v1142, %v1597
      %v1599 = vpop.f32.mrb[0].mxu0
      %v1600 = vadd.f32 %v1142, %v1599
      %v1601 = vpop.f32.mrb[0].mxu0
      %v1602 = vpop.f32.mrb[0].mxu0
      %1603 = vdwg.mxu0
      %1604 = vmatprep.subr.bf16.mxu0 %v1451
      %1605 = vmatpush1.bf16.msra.mxu0 %v1450
      %1606 = vmatprep.subr.bf16.mxu0 %v1454
      %1607 = vmatpush1.bf16.msra.mxu0 %v1453
      %1608 = vmatprep.subr.bf16.mxu0 %v1457
      %1609 = vmatpush1.bf16.msra.mxu0 %v1456
      %1610 = vmatprep.subr.bf16.mxu0 %v1460
      %1611 = vmatpush1.bf16.msra.mxu0 %v1459
      %1612 = vmatprep.subr.bf16.mxu0 %v1463
      %1613 = vmatpush1.bf16.msra.mxu0 %v1462
      %1614 = vmatprep.subr.bf16.mxu0 %v1466
      %1615 = vmatpush1.bf16.msra.mxu0 %v1465
      %1616 = vmatprep.subr.bf16.mxu0 %v1469
      %1617 = vmatpush1.bf16.msra.mxu0 %v1468
      %1618 = vmatprep.subr.bf16.mxu0 %v1472
      %1619 = vmatpush1.bf16.msra.mxu0 %v1471
      %1620 = vmatprep.subr.bf16.mxu0 %v1558
      %1621 = vmatpush1.bf16.msra.mxu0 %v1555
      %1622 = vmatprep.subr.bf16.mxu0 0
      %1623 = vmatpush1.bf16.msra.mxu0 0
      %1624 = vmatprep.subr.bf16.mxu0 0
      %1625 = vmatpush1.bf16.msra.mxu0 0
      %1626 = vmatprep.subr.bf16.mxu0 0
      %1627 = vmatpush1.bf16.msra.mxu0 0
      %1628 = vmatprep.subr.bf16.mxu0 0
      %1629 = vmatpush1.bf16.msra.mxu0 0
      %1630 = vmatprep.subr.bf16.mxu0 0
      %1631 = vmatpush1.bf16.msra.mxu0 0
      %1632 = vmatprep.subr.bf16.mxu0 0
      %1633 = vmatpush1.bf16.msra.mxu0 0
      %1634 = vmatprep.subr.bf16.mxu0 0
      %1635 = vmatpush1.bf16.msra.mxu0 0
      %1636 = vmatprep.mubr.bf16.mxu0 %v1551
      %1637 = vmatmul.mubr.bf16.gmra.mrb[0].mxu0 %v1152
      %v1638 = vpop.f32.mrb[0].mxu0
      %v1639 = vadd.f32 %v1598, %v1638
      %v1640 = vpop.f32.mrb[0].mxu0
      %v1641 = vadd.f32 %v1600, %v1640
      %v1642 = vpop.f32.mrb[0].mxu0
      %v1643 = vpop.f32.mrb[0].mxu0
      %1644 = vdwg.mxu0
      %1645 = vmatprep.subr.bf16.mxu0 0
      %1646 = vmatpush1.bf16.msra.mxu0 %v1404
      %1647 = vmatprep.subr.bf16.mxu0 0
      %1648 = vmatpush1.bf16.msra.mxu0 %v1407
      %1649 = vmatprep.subr.bf16.mxu0 0
      %1650 = vmatpush1.bf16.msra.mxu0 %v1410
      %1651 = vmatprep.subr.bf16.mxu0 0
      %1652 = vmatpush1.bf16.msra.mxu0 %v1413
      %1653 = vmatprep.subr.bf16.mxu0 0
      %1654 = vmatpush1.bf16.msra.mxu0 %v1416
      %1655 = vmatprep.subr.bf16.mxu0 0
      %1656 = vmatpush1.bf16.msra.mxu0 %v1419
      %1657 = vmatprep.subr.bf16.mxu0 0
      %1658 = vmatpush1.bf16.msra.mxu0 %v1422
      %1659 = vmatprep.subr.bf16.mxu0 0
      %1660 = vmatpush1.bf16.msra.mxu0 %v1425
      %1661 = vmatprep.subr.bf16.mxu0 0
      %1662 = vmatpush1.bf16.msra.mxu0 %v1428
      %1663 = vmatprep.subr.bf16.mxu0 0
      %1664 = vmatpush1.bf16.msra.mxu0 %v1431
      %1665 = vmatprep.subr.bf16.mxu0 0
      %1666 = vmatpush1.bf16.msra.mxu0 %v1434
      %1667 = vmatprep.subr.bf16.mxu0 0
      %1668 = vmatpush1.bf16.msra.mxu0 %v1437
      %1669 = vmatprep.subr.bf16.mxu0 0
      %1670 = vmatpush1.bf16.msra.mxu0 %v1440
      %1671 = vmatprep.subr.bf16.mxu0 0
      %1672 = vmatpush1.bf16.msra.mxu0 %v1443
      %1673 = vmatprep.subr.bf16.mxu0 0
      %1674 = vmatpush1.bf16.msra.mxu0 %v1446
      %1675 = vmatprep.subr.bf16.mxu0 0
      %1676 = vmatpush1.bf16.msra.mxu0 %v1449
      %1677 = vmatprep.mubr.bf16.mxu0 %v1151
      %1678 = vmatmul.mubr.bf16.gmra.mrb[0].mxu0 %v1150
      %v1679 = vpop.f32.mrb[0].mxu0
      %v1680 = vadd.f32 %v1142, %v1679
      %v1681 = vpop.f32.mrb[0].mxu0
      %v1682 = vpop.f32.mrb[0].mxu0
      %v1683 = vpop.f32.mrb[0].mxu0
      %1684 = vdwg.mxu0
      %1685 = vmatprep.subr.bf16.mxu0 0
      %1686 = vmatpush1.bf16.msra.mxu0 %v1452
      %1687 = vmatprep.subr.bf16.mxu0 0
      %1688 = vmatpush1.bf16.msra.mxu0 %v1455
      %1689 = vmatprep.subr.bf16.mxu0 0
      %1690 = vmatpush1.bf16.msra.mxu0 %v1458
      %1691 = vmatprep.subr.bf16.mxu0 0
      %1692 = vmatpush1.bf16.msra.mxu0 %v1461
      %1693 = vmatprep.subr.bf16.mxu0 0
      %1694 = vmatpush1.bf16.msra.mxu0 %v1464
      %1695 = vmatprep.subr.bf16.mxu0 0
      %1696 = vmatpush1.bf16.msra.mxu0 %v1467
      %1697 = vmatprep.subr.bf16.mxu0 0
      %1698 = vmatpush1.bf16.msra.mxu0 %v1470
      %1699 = vmatprep.subr.bf16.mxu0 0
      %1700 = vmatpush1.bf16.msra.mxu0 %v1473
      %1701 = vmatprep.subr.bf16.mxu0 0
      %1702 = vmatpush1.bf16.msra.mxu0 %v1561
      %1703 = vmatprep.subr.bf16.mxu0 0
      %1704 = vmatpush1.bf16.msra.mxu0 0
      %1705 = vmatprep.subr.bf16.mxu0 0
      %1706 = vmatpush1.bf16.msra.mxu0 0
      %1707 = vmatprep.subr.bf16.mxu0 0
      %1708 = vmatpush1.bf16.msra.mxu0 0
      %1709 = vmatprep.subr.bf16.mxu0 0
      %1710 = vmatpush1.bf16.msra.mxu0 0
      %1711 = vmatprep.subr.bf16.mxu0 0
      %1712 = vmatpush1.bf16.msra.mxu0 0
      %1713 = vmatprep.subr.bf16.mxu0 0
      %1714 = vmatpush1.bf16.msra.mxu0 0
      %1715 = vmatprep.subr.bf16.mxu0 0
      %1716 = vmatpush1.bf16.msra.mxu0 0
      %1717 = vmatprep.mubr.bf16.mxu0 %v1551
      %1718 = vmatmul.mubr.bf16.gmra.mrb[0].mxu0 %v1152
      %v1719 = vpop.f32.mrb[0].mxu0
      %v1720 = vadd.f32 %v1680, %v1719
      %v1721 = vpop.f32.mrb[0].mxu0
      %v1722 = vpop.f32.mrb[0].mxu0
      %v1723 = vpop.f32.mrb[0].mxu0
      %1724 = vdwg.mxu0
      %v1725 = vlaneseq
      %v1726 = vand.u32 %v1725, 127
      %v1727 = vadd.s32 %v1726, 128
      %v1728 = vadd.s32 %v1726, 256
      %vm1729 = vcmp.lt.s32.totalorder %v1726, 0
      %v1730 = vsub.s32 0, %v1726
      %v1731 = vsel %vm1729, %v1730, %v1726
      %v1732 = vmul.u32.u64.compose %v1731, 3123612579
      %v1733 = vextract.low.u32 %v1732
      %v1734 = vextract.high.u32 %v1732
      %v1735 = vshrl.u32 %v1734, 4
      %v1736 = vmul.u32 %v1735, 22
      %v1737 = vsub.s32 %v1731, %v1736
      %v1738 = vsub.s32 0, %v1737
      %v1739 = vsel %vm1729, %v1738, %v1737
      %vm1740 = vcmp.lt.s32.totalorder %v1727, 0
      %v1741 = vsub.s32 0, %v1727
      %v1742 = vsel %vm1740, %v1741, %v1727
      %v1743 = vmul.u32.u64.compose %v1742, 3123612579
      %v1744 = vextract.low.u32 %v1743
      %v1745 = vextract.high.u32 %v1743
      %v1746 = vshrl.u32 %v1745, 4
      %v1747 = vmul.u32 %v1746, 22
      %v1748 = vsub.s32 %v1742, %v1747
      %v1749 = vsub.s32 0, %v1748
      %v1750 = vsel %vm1740, %v1749, %v1748
      %vm1751 = vcmp.lt.s32.totalorder %v1728, 0
      %v1752 = vsub.s32 0, %v1728
      %v1753 = vsel %vm1751, %v1752, %v1728
      %v1754 = vmul.u32.u64.compose %v1753, 3123612579
      %v1755 = vextract.low.u32 %v1754
      %v1756 = vextract.high.u32 %v1754
      %v1757 = vshrl.u32 %v1756, 4
      %v1758 = vmul.u32 %v1757, 22
      %v1759 = vsub.s32 %v1753, %v1758
      %v1760 = vsub.s32 0, %v1759
      %v1761 = vsel %vm1751, %v1760, %v1759
      %vm1762 = vcmp.ne.s32.totalorder %v1739, 0
      %vm1763 = vcmp.ne.s32.totalorder %v1750, 0
      %vm1764 = vcmp.ne.s32.totalorder %v1761, 0
      %vm1765 = vcmp.lt.s32.totalorder %v1739, 0
      %vm1766 = vcmp.lt.s32.totalorder %v1750, 0
      %vm1767 = vcmp.lt.s32.totalorder %v1761, 0
      %vm1768 = vmand %vm1765, %vm1762
      %vm1769 = vmand %vm1766, %vm1763
      %vm1770 = vmand %vm1767, %vm1764
      %v1771 = vadd.s32 %v1739, 22
      %v1772 = vadd.s32 %v1750, 22
      %v1773 = vadd.s32 %v1761, 22
      %v1774 = vsel %vm1768, %v1771, %v1739
      %v1775 = vsel %vm1769, %v1772, %v1750
      %v1776 = vsel %vm1770, %v1773, %v1761
      %vm1777 = vcmp.lt.s32.totalorder %v1774, 16
      %vm1778 = vcmp.lt.s32.totalorder %v1775, 16
      %vm1779 = vcmp.lt.s32.totalorder %v1776, 16
      %vm1780 = vcmp.lt.s32.totalorder %v1726, 346
      %vm1781 = vcmp.lt.s32.totalorder %v1727, 346
      %vm1782 = vcmp.lt.s32.totalorder %v1728, 346
      %vm1783 = vmand %vm1777, %vm1780
      %vm1784 = vmand %vm1778, %vm1781
      %vm1785 = vmand %vm1779, %vm1782
      %v1786 = vsel %vm1783, 1, 0
      %v1787 = vsel %vm1784, 1, 0
      %v1788 = vsel %vm1785, 1, 0
      %v1789 = vcvt.s32.f32 %v1786
      %v1790 = vcvt.s32.f32 %v1787
      %v1791 = vcvt.s32.f32 %v1788
      %v1792 = vmul.f32 %v1639, %v1789
      %v1793 = vmul.f32 %v1641, %v1790
      %v1794 = vmul.f32 %v1720, %v1791
      %v1795 = vadd.f32 %v1792, %v1793
      %v1796 = vadd.f32 %v1795, %v1794
      %1797 = vadd.xlane.f32.xlu0 %v1796
      %v1798 = vpop.xlane.xlu0 %1797
      %v1799 = vmul.f32 %v1639, %v1792
      %v1800 = vmul.f32 %v1641, %v1793
      %v1801 = vmul.f32 %v1720, %v1794
      %v1802 = vadd.f32 %v1799, %v1800
      %v1803 = vadd.f32 %v1802, %v1801
      %1804 = vadd.xlane.f32.xlu0 %v1803
      %v1805 = vpop.xlane.xlu0 %1804
      %v1806 = vmul.f32 %v1798, 0.00390625
      %v1807 = vmul.f32 %v1805, 0.00390625
      %v1808 = vmul.f32 %v1806, %v1806
      %v1809 = vsub.f32 %v1807, %v1808
      %v1810 = vmax.f32 %v1809, 0.0
      %v1811 = vadd.f32 %v1810, 1e-05
      %v1812 = vrsqrt.pop %v1811
      %v1813 = vsub.f32 %v1639, %v1806
      %v1814 = vsub.f32 %v1641, %v1806
      %v1815 = vsub.f32 %v1720, %v1806
      %v1816 = vmul.f32 %v1813, %v1812
      %v1817 = vmul.f32 %v1814, %v1812
      %v1818 = vmul.f32 %v1815, %v1812
      %v1819 = vmax.f32 %v1816, 0.0
      %v1820 = vmax.f32 %v1817, 0.0
      %v1821 = vmax.f32 %v1818, 0.0
      %v1822 = vpack.c.bf16 %v1819, %v1819
      %v1823 = vpack.c.bf16 %v1820, %v1820
      %v1824 = vpack.c.bf16 %v1821, %v1821
      %v1828 = vunpack.c.l.b16 %v1822
      %v1829 = vunpack.c.l.b16 %v1823
      %v1830 = vunpack.c.l.b16 %v1824
      %v1831 = vpack.c.b16 %v1829, %v1828
      %v1832 = vpack.c.b16 %v1830, %v1830
      %1835 = vst [vmem:[%s170] sm:$0xff] %v1831
      %1836 = vst [vmem:[%s170 + $0x8] sm:$0xf] %v1832
      %p1837 = scmp.lt.s32.totalorder %s14, 1
      %s1838 = scalar_select %p1837, %s14, 1
      %s1839 = smul.addr %s1838, 3
      %s1840 = smul.addr %s1839, 4
      %s1841 = scalar_lea.vmem %s3, %s1840
      // Predicated region
      $region33: #{cyclegan_generator_forward.10} parent=31 // pred_check
        %p1842 = pneg %p100
      $region34: #{cyclegan_generator_forward.10} parent=31 // pred_check_branch
        %1844 = sbr.rel (%p1842) target = $region36
      $region35: #{cyclegan_generator_forward.10} parent=31 // pred_region
        _
      $region36: #{cyclegan_generator_forward.10} parent=31 // pred_fallthru
        _
    $region32: #{cyclegan_generator_forward.10} parent=5 // pred_fallthru
      _
    %p1845 = scmp.le.s32.totalorder 2, %s9
    // Predicated region
    $region37: #{cyclegan_generator_forward.10} parent=5 // pred_check
      %p1846 = pneg %p1845
    $region38: #{cyclegan_generator_forward.10} parent=5 // pred_check_branch
      %1848 = sbr.rel (%p1846) target = $region40
    $region39: #{cyclegan_generator_forward.10} parent=5 // pred_region
      %s1849 = ssub.s32 %s9, 2
      // Predicated region
      $region41: #{cyclegan_generator_forward.10} parent=39 // pred_check
        %p1850 = pneg %p106
      $region42: #{cyclegan_generator_forward.10} parent=39 // pred_check_branch
        %1852 = sbr.rel (%p1850) target = $region44
      $region43: #{cyclegan_generator_forward.10} parent=39 // pred_region
        %p1853 = scmp.lt.s32.totalorder %s15, 1
        %s1854 = scalar_select %p1853, %s15, 1
        %s1855 = smul.addr %s1854, 3
        %s1856 = smul.addr %s1855, 4
        %s1857 = scalar_lea.vmem %s3, %s1856
      $region44: #{cyclegan_generator_forward.10} parent=39 // pred_fallthru
        _
    $region40: #{cyclegan_generator_forward.10} parent=5 // pred_fallthru
      _
  $region6: #{cyclegan_generator_forward.10} parent=0 // loop_footer
    %s13 = sadd.s32 1, %s9
  $region7: #{cyclegan_generator_forward.10} parent=0 // loop_footer_branch
    %8 = sbr.rel target = $region3
  $region8: #{cyclegan_generator_forward.10} parent=0 // loop_exit
    _

// kernel: cyclegan_generator_forward.11
$region0: #{cyclegan_generator_forward.11}
  #allocation0 [shape = 'u32[]', space=smem, size = 0x4, offset = 0x4, fixed_abs, tag = 'smem constant byte address 0x4 - core index']
  #allocation1 [shape = 'u32[144,128]{1,0:T(1,128)}', space=vmem, size = 0x12000, scoped, tag = 'internal scratch']
  #allocation2 [shape = 'bf16[128,128]{1,0:T(16,128)(2,1)}', space=vmem, size = 0x8000, scoped, tag = 'scratch operand']
  %s0 = inlined_call_operand.vmem [shape: bf16[2,32,138], index: 0, kind: input, shape index: {}]
  %s1 = inlined_call_operand.vmem [shape: bf16[16,128], index: 1, kind: input, shape index: {}]
  %s2 = inlined_call_operand.vmem [shape: f32[16,1], index: 2, kind: input, shape index: {}]
  %s3 = inlined_call_operand.vmem [shape: bf16[2,16,128], index: 3, kind: output, shape index: {}]
  %s4 = sld [smem:[#allocation0]]
  $region45: #{cyclegan_generator_forward.11} parent=0
    _
  %s6 = ssub.s32 1, %s4
  %s7 = scalar_select 0, %s6, %s4
  loop: start=0, step=1, limit=4
  $region2: #{cyclegan_generator_forward.11} parent=0 // loop_pre_header
    _
  $region3: #{cyclegan_generator_forward.11} parent=0 // loop_header
    %s9 = sphi 0, %s13
    %p10 = scmp.ge.s32.totalorder %s9, 4
    %s19 = sphi 0, %s21
    %s22 = sphi 0, %s19
    %s23 = sphi 0, %s22
    %s39 = sphi 0, %s23
    %s43 = sphi 0, %s43
    %s45 = sphi 0, %s43
    %s46 = sphi 0, %s45
    %s60 = sphi 0, %s46
    %s64 = sphi 0, %s64
    %s66 = sphi 0, %s64
    %s67 = sphi 0, %s66
    %s81 = sphi 0, %s67
    %s87 = sphi 0, %s89
    %s90 = sphi 0, %s87
    %s91 = sphi 0, %s90
    %s107 = sphi 0, %s91
  $region4: #{cyclegan_generator_forward.11} parent=0 // loop_header_branch
    %12 = sbr.rel (%p10) target = $region8
  $region5: #{cyclegan_generator_forward.11} parent=0 // loop_body
    %s14 = ssub.s32 %s9, 1
    %s15 = ssub.s32 %s9, 2
    %s16 = sadd.s32 %s9, 1
    %s17 = ssub.s32 %s9, %s16
    %p18 = scmp.eq.s32.totalorder %s17, 0
    %s20 = sadd.s32 %s19, 1
    %s21 = scalar_select %p18, %s19, %s20
    %p24 = pneg %p18
    %p25 = scmp.eq.s32.totalorder %s9, 1
    %p26 = por %p24, %p25
    %p27 = scmp.ne.s32.totalorder %s19, %s22
    %p28 = scmp.eq.s32.totalorder %s9, 0
    %p29 = por %p27, %p28
    %p30 = scmp.ne.s32.totalorder %s19, %s22
    %p31 = scmp.eq.s32.totalorder %s14, 1
    %p32 = por %p30, %p31
    %p33 = scmp.ne.s32.totalorder %s22, %s23
    %p34 = scmp.eq.s32.totalorder %s14, 0
    %p35 = por %p33, %p34
    %p36 = scmp.ne.s32.totalorder %s22, %s23
    %p37 = scmp.eq.s32.totalorder %s15, 1
    %p38 = por %p36, %p37
    %p40 = scmp.ne.s32.totalorder %s23, %s39
    %p41 = scmp.eq.s32.totalorder %s15, 0
    %p42 = por %p40, %p41
    %s44 = sadd.s32 %s43, 1
    %p47 = scmp.eq.s32.totalorder %s9, 1
    %p48 = scmp.ne.s32.totalorder %s43, %s45
    %p49 = scmp.eq.s32.totalorder %s9, 0
    %p50 = por %p48, %p49
    %p51 = scmp.ne.s32.totalorder %s43, %s45
    %p52 = scmp.eq.s32.totalorder %s14, 1
    %p53 = por %p51, %p52
    %p54 = scmp.ne.s32.totalorder %s45, %s46
    %p55 = scmp.eq.s32.totalorder %s14, 0
    %p56 = por %p54, %p55
    %p57 = scmp.ne.s32.totalorder %s45, %s46
    %p58 = scmp.eq.s32.totalorder %s15, 1
    %p59 = por %p57, %p58
    %p61 = scmp.ne.s32.totalorder %s46, %s60
    %p62 = scmp.eq.s32.totalorder %s15, 0
    %p63 = por %p61, %p62
    %s65 = sadd.s32 %s64, 1
    %p68 = scmp.eq.s32.totalorder %s9, 1
    %p69 = scmp.ne.s32.totalorder %s64, %s66
    %p70 = scmp.eq.s32.totalorder %s9, 0
    %p71 = por %p69, %p70
    %p72 = scmp.ne.s32.totalorder %s64, %s66
    %p73 = scmp.eq.s32.totalorder %s14, 1
    %p74 = por %p72, %p73
    %p75 = scmp.ne.s32.totalorder %s66, %s67
    %p76 = scmp.eq.s32.totalorder %s14, 0
    %p77 = por %p75, %p76
    %p78 = scmp.ne.s32.totalorder %s66, %s67
    %p79 = scmp.eq.s32.totalorder %s15, 1
    %p80 = por %p78, %p79
    %p82 = scmp.ne.s32.totalorder %s67, %s81
    %p83 = scmp.eq.s32.totalorder %s15, 0
    %p84 = por %p82, %p83
    %s85 = ssub.s32 %s9, %s16
    %p86 = scmp.eq.s32.totalorder %s85, 0
    %s88 = sadd.s32 %s87, 1
    %s89 = scalar_select %p86, %s87, %s88
    %p92 = pneg %p86
    %p93 = scmp.eq.s32.totalorder %s9, 1
    %p94 = por %p92, %p93
    %p95 = scmp.ne.s32.totalorder %s87, %s90
    %p96 = scmp.eq.s32.totalorder %s9, 0
    %p97 = por %p95, %p96
    %p98 = scmp.ne.s32.totalorder %s87, %s90
    %p99 = scmp.eq.s32.totalorder %s14, 1
    %p100 = por %p98, %p99
    %p101 = scmp.ne.s32.totalorder %s90, %s91
    %p102 = scmp.eq.s32.totalorder %s14, 0
    %p103 = por %p101, %p102
    %p104 = scmp.ne.s32.totalorder %s90, %s91
    %p105 = scmp.eq.s32.totalorder %s15, 1
    %p106 = por %p104, %p105
    %p108 = scmp.ne.s32.totalorder %s91, %s107
    %p109 = scmp.eq.s32.totalorder %s15, 0
    %p110 = por %p108, %p109
    %p111 = scmp.le.s32.totalorder 1, %s9
    %p112 = scmp.lt.s32.totalorder %s9, 3
    %p113 = pnand %p111, %p112
    %p114 = pneg %p113
    // Predicated region
    $region9: #{cyclegan_generator_forward.11} parent=5 // pred_check
      _
    $region10: #{cyclegan_generator_forward.11} parent=5 // pred_check_branch
      %116 = sbr.rel (%p113) target = $region12
    $region11: #{cyclegan_generator_forward.11} parent=5 // pred_region
      %s117 = ssub.s32 %s9, 1
      // Predicated region
      $region13: #{cyclegan_generator_forward.11} parent=11 // pred_check
        %p118 = pneg %p56
      $region14: #{cyclegan_generator_forward.11} parent=11 // pred_check_branch
        %120 = sbr.rel (%p118) target = $region16
      $region15: #{cyclegan_generator_forward.11} parent=11 // pred_region
        _
      $region16: #{cyclegan_generator_forward.11} parent=11 // pred_fallthru
        _
      // Predicated region
      $region17: #{cyclegan_generator_forward.11} parent=11 // pred_check
        %p121 = pneg %p77
      $region18: #{cyclegan_generator_forward.11} parent=11 // pred_check_branch
        %123 = sbr.rel (%p121) target = $region20
      $region19: #{cyclegan_generator_forward.11} parent=11 // pred_region
        _
      $region20: #{cyclegan_generator_forward.11} parent=11 // pred_fallthru
        _
    $region12: #{cyclegan_generator_forward.11} parent=5 // pred_fallthru
      _
    %p124 = scmp.lt.s32.totalorder %s9, 2
    // Predicated region
    $region21: #{cyclegan_generator_forward.11} parent=5 // pred_check
      %p125 = pneg %p124
    $region22: #{cyclegan_generator_forward.11} parent=5 // pred_check_branch
      %127 = sbr.rel (%p125) target = $region24
    $region23: #{cyclegan_generator_forward.11} parent=5 // pred_region
      // Predicated region
      $region25: #{cyclegan_generator_forward.11} parent=23 // pred_check
        %p128 = pneg %p29
      $region26: #{cyclegan_generator_forward.11} parent=23 // pred_check_branch
        %130 = sbr.rel (%p128) target = $region28
      $region27: #{cyclegan_generator_forward.11} parent=23 // pred_region
        %p131 = scmp.lt.s32.totalorder %s9, 1
        %s132 = scalar_select %p131, %s9, 1
        %s133 = smul.addr %s132, 8
        %s134 = smul.addr %s133, 4
        %s135 = scalar_lea.vmem %s0, %s134
      $region28: #{cyclegan_generator_forward.11} parent=23 // pred_fallthru
        _
    $region24: #{cyclegan_generator_forward.11} parent=5 // pred_fallthru
      _
    %p136 = scmp.le.s32.totalorder 1, %s9
    %p137 = scmp.lt.s32.totalorder %s9, 3
    %p138 = pnand %p136, %p137
    %p139 = pneg %p138
    // Predicated region
    $region29: #{cyclegan_generator_forward.11} parent=5 // pred_check
      _
    $region30: #{cyclegan_generator_forward.11} parent=5 // pred_check_branch
      %141 = sbr.rel (%p138) target = $region32
    $region31: #{cyclegan_generator_forward.11} parent=5 // pred_region
      %s142 = ssub.s32 %s9, 1
      %p143 = scmp.lt.s32.totalorder %s14, 1
      %s144 = scalar_select %p143, %s14, 1
      %s145 = smul.addr %s144, 8
      %s146 = smul.addr %s145, 4
      %s147 = scalar_lea.vmem %s0, %s146
      %p148 = pneg %p35
      %p149 = pneg %p32
      %p150 = pneg %p56
      %p151 = pneg %p53
      %p152 = pneg %p77
      %p153 = pneg %p74
      %p154 = pneg %p103
      %p155 = pneg %p100
      %p156 = scmp.lt.s32.totalorder %s14, 1
      %s157 = scalar_select %p156, %s14, 1
      %s158 = smul.addr %s157, 2
      %s159 = smul.addr %s158, 4
      %s160 = scalar_lea.vmem %s3, %s159
      %p161 = scmp.lt.s32.totalorder %s14, 1
      %s162 = scalar_select %p161, %s14, 1
      %s163 = smul.addr %s162, 8
      %s164 = smul.addr %s163, 4
      %s165 = scalar_lea.vmem %s0, %s164
      %p166 = scmp.lt.s32.totalorder %s14, 1
      %s167 = scalar_select %p166, %s14, 1
      %s168 = smul.addr %s167, 2
      %s169 = smul.addr %s168, 4
      %s170 = scalar_lea.vmem %s3, %s169
      %v172 = vld [vmem:[%s165] sm:$0xf]
      %v173 = vld [vmem:[%s165 + $0x8] sm:$0xf]
      %v174 = vld [vmem:[%s165 + $0x10] sm:$0xf]
      %v175 = vld [vmem:[%s165 + $0x18] sm:$0xf]
      %v180 = vunpack.c.l.b16 %v172
      %v181 = vunpack.c.l.b16 %v173
      %v182 = vunpack.c.l.b16 %v174
      %v183 = vunpack.c.l.b16 %v175
      %v184 = vpack.c.b16 %v181, %v180
      %v185 = vpack.c.b16 %v183, %v182
      %188 = vst [vmem:[#allocation2] sm:$0xff] %v184
      %189 = vst [vmem:[#allocation2 + $0x8] sm:$0xff] %v185
      %v190 = vld [vmem:[%s165] sm:$0xff]
      %v191 = vld [vmem:[%s165 + $0x8] sm:$0xff]
      %v192 = vld [vmem:[%s165 + $0x10] sm:$0xff]
      %v193 = vld [vmem:[%s165 + $0x18] sm:$0xff]
      %v198 = vunpack.c.l.b16 %v190
      %v199 = vunpack.c.h.b16 %v190
      %v200 = vunpack.c.l.b16 %v191
      %v201 = vunpack.c.h.b16 %v191
      %v202 = vunpack.c.l.b16 %v192
      %v203 = vunpack.c.h.b16 %v192
      %v204 = vunpack.c.l.b16 %v193
      %v205 = vunpack.c.h.b16 %v193
      %v206 = vpack.c.b16 %v200, %v198
      %v207 = vpack.c.b16 %v201, %v199
      %v208 = vpack.c.b16 %v204, %v202
      %v209 = vpack.c.b16 %v205, %v203
      %210 = vrot.lane.b32.xlu0 %v206, 127
      %v211 = vpop.permute.xlu0 %210
      %212 = vrot.lane.b32.xlu0 %v207, 127
      %v213 = vpop.permute.xlu0 %212
      %214 = vrot.lane.b32.xlu0 %v208, 127
      %v215 = vpop.permute.xlu0 %214
      %216 = vrot.lane.b32.xlu0 %v209, 127
      %v217 = vpop.permute.xlu0 %216
      %vm218 = vcmask 1039360
      %v219 = vsel %vm218, %v211, %v213
      %v220 = vsel %vm218, %v215, %v217
      %223 = vst [vmem:[#allocation2 + $0x10] sm:$0xff] %v219
      %224 = vst [vmem:[#allocation2 + $0x18] sm:$0xff] %v220
      %v225 = vld [vmem:[%s165] sm:$0xff]
      %v226 = vld [vmem:[%s165 + $0x8] sm:$0xff]
      %v227 = vld [vmem:[%s165 + $0x10] sm:$0xff]
      %v228 = vld [vmem:[%s165 + $0x18] sm:$0xff]
      %v233 = vunpack.c.l.b16 %v225
      %v234 = vunpack.c.h.b16 %v225
      %v235 = vunpack.c.l.b16 %v226
      %v236 = vunpack.c.h.b16 %v226
      %v237 = vunpack.c.l.b16 %v227
      %v238 = vunpack.c.h.b16 %v227
      %v239 = vunpack.c.l.b16 %v228
      %v240 = vunpack.c.h.b16 %v228
      %v241 = vpack.c.b16 %v235, %v233
      %v242 = vpack.c.b16 %v236, %v234
      %v243 = vpack.c.b16 %v239, %v237
      %v244 = vpack.c.b16 %v240, %v238
      %245 = vrot.lane.b32.xlu0 %v241, 119
      %v246 = vpop.permute.xlu0 %245
      %247 = vrot.lane.b32.xlu0 %v242, 119
      %v248 = vpop.permute.xlu0 %247
      %249 = vrot.lane.b32.xlu0 %v243, 119
      %v250 = vpop.permute.xlu0 %249
      %251 = vrot.lane.b32.xlu0 %v244, 119
      %v252 = vpop.permute.xlu0 %251
      %vm253 = vcmask 973824
      %v254 = vsel %vm253, %v246, %v248
      %v255 = vsel %vm253, %v250, %v252
      %258 = vst [vmem:[#allocation2 + $0x20] sm:$0xff] %v254
      %259 = vst [vmem:[#allocation2 + $0x28] sm:$0xff] %v255
      %v260 = vld [vmem:[%s165] sm:$0xff]
      %v261 = vld [vmem:[%s165 + $0x8] sm:$0xff]
      %v262 = vld [vmem:[%s165 + $0x10] sm:$0xff]
      %v263 = vld [vmem:[%s165 + $0x18] sm:$0xff]
      %v268 = vunpack.c.l.b16 %v260
      %v269 = vunpack.c.h.b16 %v260
      %v270 = vunpack.c.l.b16 %v261
      %v271 = vunpack.c.h.b16 %v261
      %v272 = vunpack.c.l.b16 %v262
      %v273 = vunpack.c.h.b16 %v262
      %v274 = vunpack.c.l.b16 %v263
      %v275 = vunpack.c.h.b16 %v263
      %v276 = vpack.c.b16 %v270, %v268
      %v277 = vpack.c.b16 %v271, %v269
      %v278 = vpack.c.b16 %v274, %v272
      %v279 = vpack.c.b16 %v275, %v273
      %280 = vrot.lane.b32.xlu0 %v276, 118
      %v281 = vpop.permute.xlu0 %280
      %282 = vrot.lane.b32.xlu0 %v277, 118
      %v283 = vpop.permute.xlu0 %282
      %284 = vrot.lane.b32.xlu0 %v278, 118
      %v285 = vpop.permute.xlu0 %284
      %286 = vrot.lane.b32.xlu0 %v279, 118
      %v287 = vpop.permute.xlu0 %286
      %vm288 = vcmask 965632
      %v289 = vsel %vm288, %v281, %v283
      %v290 = vsel %vm288, %v285, %v287
      %293 = vst [vmem:[#allocation2 + $0x30] sm:$0xff] %v289
      %294 = vst [vmem:[#allocation2 + $0x38] sm:$0xff] %v290
      %v295 = vld [vmem:[%s1] sm:$0xf]
      %v296 = vld [vmem:[%s1 + $0x4] sm:$0xf]
      %v297 = vld [vmem:[#allocation2] sm:$0xff]
      %v298 = vld [vmem:[#allocation2 + $0x8] sm:$0xff]
      %v299 = vld [vmem:[#allocation2 + $0x10] sm:$0xff]
      %v300 = vld [vmem:[#allocation2 + $0x18] sm:$0xff]
      %v301 = vld [vmem:[#allocation2 + $0x20] sm:$0xff]
      %v302 = vld [vmem:[#allocation2 + $0x28] sm:$0xff]
      %v303 = vld [vmem:[#allocation2 + $0x30] sm:$0xff]
      %v304 = vld [vmem:[#allocation2 + $0x38] sm:$0xff]
      %v305 = vld [vmem:[%s2] sm:$0xff]
      %v306 = vld [vmem:[%s2 + $0x8] sm:$0xff]
      %308 = vset.pattern.permute.xlu0 0
      %309 = vperm.xlu0 %308, %v305
      %v310 = vpop.permute.xlu0 %309
      %313 = vset.pattern.permute.xlu0 0
      %314 = vperm.xlu0 %313, %v306
      %v315 = vpop.permute.xlu0 %314
      %v319 = vunpack.c.l.b16 %v295
      %v320 = vunpack.c.l.b16 %v296
      %v321 = vpack.c.b16 %v320, %v319
      %323 = vmatprep.subr.bf16.mxu0 0
      %324 = vmatpush1.bf16.msra.mxu0 %v297
      %325 = vmatprep.subr.bf16.mxu0 0
      %326 = vmatpush1.bf16.msra.mxu0 %v298
      %327 = vmatprep.subr.bf16.mxu0 0
      %328 = vmatpush1.bf16.msra.mxu0 %v299
      %329 = vmatprep.subr.bf16.mxu0 0
      %330 = vmatpush1.bf16.msra.mxu0 %v300
      %331 = vmatprep.subr.bf16.mxu0 0
      %332 = vmatpush1.bf16.msra.mxu0 %v301
      %333 = vmatprep.subr.bf16.mxu0 0
      %334 = vmatpush1.bf16.msra.mxu0 %v302
      %335 = vmatprep.subr.bf16.mxu0 0
      %336 = vmatpush1.bf16.msra.mxu0 %v303
      %337 = vmatprep.subr.bf16.mxu0 0
      %338 = vmatpush1.bf16.msra.mxu0 %v304
      %339 = vmatprep.subr.bf16.mxu0 0
      %340 = vmatpush1.bf16.msra.mxu0 0
      %341 = vmatprep.subr.bf16.mxu0 0
      %342 = vmatpush1.bf16.msra.mxu0 0
      %343 = vmatprep.subr.bf16.mxu0 0
      %344 = vmatpush1.bf16.msra.mxu0 0
      %345 = vmatprep.subr.bf16.mxu0 0
      %346 = vmatpush1.bf16.msra.mxu0 0
      %347 = vmatprep.subr.bf16.mxu0 0
      %348 = vmatpush1.bf16.msra.mxu0 0
      %349 = vmatprep.subr.bf16.mxu0 0
      %350 = vmatpush1.bf16.msra.mxu0 0
      %351 = vmatprep.subr.bf16.mxu0 0
      %352 = vmatpush1.bf16.msra.mxu0 0
      %353 = vmatprep.subr.bf16.mxu0 0
      %354 = vmatpush1.bf16.msra.mxu0 0
      %355 = vmatprep.mubr.bf16.mxu0 0
      %356 = vmatmul.mubr.bf16.gmra.mrb[0].mxu0 %v321
      %v357 = vpop.f32.mrb[0].mxu0
      %v358 = vadd.f32 %v310, %v357
      %v359 = vpop.f32.mrb[0].mxu0
      %v360 = vpop.f32.mrb[0].mxu0
      %v361 = vadd.f32 %v315, %v360
      %v362 = vpop.f32.mrb[0].mxu0
      %363 = vdwg.mxu0
      %v364 = vlaneseq
      %v365 = vand.u32 %v364, 127
      %vm366 = vcmp.lt.s32.totalorder %v365, 0
      %v367 = vsub.s32 0, %v365
      %v368 = vsel %vm366, %v367, %v365
      %v369 = vmul.u32.u64.compose %v368, 3817748708
      %v370 = vextract.low.u32 %v369
      %v371 = vextract.high.u32 %v369
      %v372 = vshrl.u32 %v371, 3
      %v373 = vmul.u32 %v372, 9
      %v374 = vsub.s32 %v368, %v373
      %v375 = vsub.s32 0, %v374
      %v376 = vsel %vm366, %v375, %v374
      %vm377 = vcmp.ne.s32.totalorder %v376, 0
      %vm378 = vcmp.lt.s32.totalorder %v376, 0
      %vm379 = vmand %vm378, %vm377
      %v380 = vadd.s32 %v376, 9
      %v381 = vsel %vm379, %v380, %v376
      %vm382 = vcmp.lt.s32.totalorder %v381, 8
      %vm383 = vcmp.lt.s32.totalorder %v365, 71
      %vm384 = vmand %vm382, %vm383
      %v385 = vsel %vm384, 1, 0
      %v386 = vcvt.s32.f32 %v385
      %v387 = vmul.f32 %v358, %v386
      %v388 = vmul.f32 %v361, %v386
      %389 = vadd.xlane.f32.xlu0 %v387
      %v390 = vpop.xlane.xlu0 %389
      %391 = vadd.xlane.f32.xlu0 %v388
      %v392 = vpop.xlane.xlu0 %391
      %v393 = vmul.f32 %v358, %v387
      %v394 = vmul.f32 %v361, %v388
      %395 = vadd.xlane.f32.xlu0 %v393
      %v396 = vpop.xlane.xlu0 %395
      %397 = vadd.xlane.f32.xlu0 %v394
      %v398 = vpop.xlane.xlu0 %397
      %v399 = vmul.f32 %v390, 0.015625
      %v400 = vmul.f32 %v392, 0.015625
      %v401 = vmul.f32 %v396, 0.015625
      %v402 = vmul.f32 %v398, 0.015625
      %v403 = vmul.f32 %v399, %v399
      %v404 = vmul.f32 %v400, %v400
      %v405 = vsub.f32 %v401, %v403
      %v406 = vsub.f32 %v402, %v404
      %v407 = vmax.f32 %v405, 0.0
      %v408 = vmax.f32 %v406, 0.0
      %v409 = vadd.f32 %v407, 1e-05
      %v410 = vadd.f32 %v408, 1e-05
      %v411 = vrsqrt.pop %v409
      %v412 = vrsqrt.pop %v410
      %v413 = vsub.f32 %v358, %v399
      %v414 = vsub.f32 %v361, %v400
      %v415 = vmul.f32 %v413, %v411
      %v416 = vmul.f32 %v414, %v412
      %v417 = vmax.f32 %v415, 0.0
      %v418 = vmax.f32 %v416, 0.0
      %v419 = vpack.c.bf16 %v418, %v417
      %v421 = vunpack.c.l.b16 %v419
      %v422 = vunpack.c.h.b16 %v419
      %v423 = vpack.c.b16 %v421, %v421
      %v424 = vpack.c.b16 %v422, %v422
      %427 = vst [vmem:[%s170] sm:$0xf] %v423
      %428 = vst [vmem:[%s170 + $0x4] sm:$0xf] %v424
      %p429 = scmp.lt.s32.totalorder %s14, 1
      %s430 = scalar_select %p429, %s14, 1
      %s431 = smul.addr %s430, 2
      %s432 = smul.addr %s431, 4
      %s433 = scalar_lea.vmem %s3, %s432
      // Predicated region
      $region33: #{cyclegan_generator_forward.11} parent=31 // pred_check
        %p434 = pneg %p100
      $region34: #{cyclegan_generator_forward.11} parent=31 // pred_check_branch
        %436 = sbr.rel (%p434) target = $region36
      $region35: #{cyclegan_generator_forward.11} parent=31 // pred_region
        _
      $region36: #{cyclegan_generator_forward.11} parent=31 // pred_fallthru
        _
    $region32: #{cyclegan_generator_forward.11} parent=5 // pred_fallthru
      _
    %p437 = scmp.le.s32.totalorder 2, %s9
    // Predicated region
    $region37: #{cyclegan_generator_forward.11} parent=5 // pred_check
      %p438 = pneg %p437
    $region38: #{cyclegan_generator_forward.11} parent=5 // pred_check_branch
      %440 = sbr.rel (%p438) target = $region40
    $region39: #{cyclegan_generator_forward.11} parent=5 // pred_region
      %s441 = ssub.s32 %s9, 2
      // Predicated region
      $region41: #{cyclegan_generator_forward.11} parent=39 // pred_check
        %p442 = pneg %p106
      $region42: #{cyclegan_generator_forward.11} parent=39 // pred_check_branch
        %444 = sbr.rel (%p442) target = $region44
      $region43: #{cyclegan_generator_forward.11} parent=39 // pred_region
        %p445 = scmp.lt.s32.totalorder %s15, 1
        %s446 = scalar_select %p445, %s15, 1
        %s447 = smul.addr %s446, 2
        %s448 = smul.addr %s447, 4
        %s449 = scalar_lea.vmem %s3, %s448
      $region44: #{cyclegan_generator_forward.11} parent=39 // pred_fallthru
        _
    $region40: #{cyclegan_generator_forward.11} parent=5 // pred_fallthru
      _
  $region6: #{cyclegan_generator_forward.11} parent=0 // loop_footer
    %s13 = sadd.s32 1, %s9
  $region7: #{cyclegan_generator_forward.11} parent=0 // loop_footer_branch
    %8 = sbr.rel target = $region3
  $region8: #{cyclegan_generator_forward.11} parent=0 // loop_exit
    _

// kernel: cyclegan_generator_forward.12
$region0: #{cyclegan_generator_forward.12}
  #allocation0 [shape = 'u32[]', space=smem, size = 0x4, offset = 0x4, fixed_abs, tag = 'smem constant byte address 0x4 - core index']
  #allocation1 [shape = 'u32[144,128]{1,0:T(1,128)}', space=vmem, size = 0x12000, scoped, tag = 'internal scratch']
  #allocation2 [shape = 'bf16[256,128]{1,0:T(16,128)(2,1)}', space=vmem, size = 0x10000, scoped, tag = 'scratch operand']
  %s0 = inlined_call_operand.vmem [shape: bf16[2,64,134], index: 0, kind: input, shape index: {}]
  %s1 = inlined_call_operand.vmem [shape: bf16[32,256], index: 1, kind: input, shape index: {}]
  %s2 = inlined_call_operand.vmem [shape: f32[32,1], index: 2, kind: input, shape index: {}]
  %s3 = inlined_call_operand.vmem [shape: bf16[2,32,128], index: 3, kind: output, shape index: {}]
  %s4 = sld [smem:[#allocation0]]
  $region45: #{cyclegan_generator_forward.12} parent=0
    _
  %s6 = ssub.s32 1, %s4
  %s7 = scalar_select 0, %s6, %s4
  loop: start=0, step=1, limit=4
  $region2: #{cyclegan_generator_forward.12} parent=0 // loop_pre_header
    _
  $region3: #{cyclegan_generator_forward.12} parent=0 // loop_header
    %s9 = sphi 0, %s13
    %p10 = scmp.ge.s32.totalorder %s9, 4
    %s19 = sphi 0, %s21
    %s22 = sphi 0, %s19
    %s23 = sphi 0, %s22
    %s39 = sphi 0, %s23
    %s43 = sphi 0, %s43
    %s45 = sphi 0, %s43
    %s46 = sphi 0, %s45
    %s60 = sphi 0, %s46
    %s64 = sphi 0, %s64
    %s66 = sphi 0, %s64
    %s67 = sphi 0, %s66
    %s81 = sphi 0, %s67
    %s87 = sphi 0, %s89
    %s90 = sphi 0, %s87
    %s91 = sphi 0, %s90
    %s107 = sphi 0, %s91
  $region4: #{cyclegan_generator_forward.12} parent=0 // loop_header_branch
    %12 = sbr.rel (%p10) target = $region8
  $region5: #{cyclegan_generator_forward.12} parent=0 // loop_body
    %s14 = ssub.s32 %s9, 1
    %s15 = ssub.s32 %s9, 2
    %s16 = sadd.s32 %s9, 1
    %s17 = ssub.s32 %s9, %s16
    %p18 = scmp.eq.s32.totalorder %s17, 0
    %s20 = sadd.s32 %s19, 1
    %s21 = scalar_select %p18, %s19, %s20
    %p24 = pneg %p18
    %p25 = scmp.eq.s32.totalorder %s9, 1
    %p26 = por %p24, %p25
    %p27 = scmp.ne.s32.totalorder %s19, %s22
    %p28 = scmp.eq.s32.totalorder %s9, 0
    %p29 = por %p27, %p28
    %p30 = scmp.ne.s32.totalorder %s19, %s22
    %p31 = scmp.eq.s32.totalorder %s14, 1
    %p32 = por %p30, %p31
    %p33 = scmp.ne.s32.totalorder %s22, %s23
    %p34 = scmp.eq.s32.totalorder %s14, 0
    %p35 = por %p33, %p34
    %p36 = scmp.ne.s32.totalorder %s22, %s23
    %p37 = scmp.eq.s32.totalorder %s15, 1
    %p38 = por %p36, %p37
    %p40 = scmp.ne.s32.totalorder %s23, %s39
    %p41 = scmp.eq.s32.totalorder %s15, 0
    %p42 = por %p40, %p41
    %s44 = sadd.s32 %s43, 1
    %p47 = scmp.eq.s32.totalorder %s9, 1
    %p48 = scmp.ne.s32.totalorder %s43, %s45
    %p49 = scmp.eq.s32.totalorder %s9, 0
    %p50 = por %p48, %p49
    %p51 = scmp.ne.s32.totalorder %s43, %s45
    %p52 = scmp.eq.s32.totalorder %s14, 1
    %p53 = por %p51, %p52
    %p54 = scmp.ne.s32.totalorder %s45, %s46
    %p55 = scmp.eq.s32.totalorder %s14, 0
    %p56 = por %p54, %p55
    %p57 = scmp.ne.s32.totalorder %s45, %s46
    %p58 = scmp.eq.s32.totalorder %s15, 1
    %p59 = por %p57, %p58
    %p61 = scmp.ne.s32.totalorder %s46, %s60
    %p62 = scmp.eq.s32.totalorder %s15, 0
    %p63 = por %p61, %p62
    %s65 = sadd.s32 %s64, 1
    %p68 = scmp.eq.s32.totalorder %s9, 1
    %p69 = scmp.ne.s32.totalorder %s64, %s66
    %p70 = scmp.eq.s32.totalorder %s9, 0
    %p71 = por %p69, %p70
    %p72 = scmp.ne.s32.totalorder %s64, %s66
    %p73 = scmp.eq.s32.totalorder %s14, 1
    %p74 = por %p72, %p73
    %p75 = scmp.ne.s32.totalorder %s66, %s67
    %p76 = scmp.eq.s32.totalorder %s14, 0
    %p77 = por %p75, %p76
    %p78 = scmp.ne.s32.totalorder %s66, %s67
    %p79 = scmp.eq.s32.totalorder %s15, 1
    %p80 = por %p78, %p79
    %p82 = scmp.ne.s32.totalorder %s67, %s81
    %p83 = scmp.eq.s32.totalorder %s15, 0
    %p84 = por %p82, %p83
    %s85 = ssub.s32 %s9, %s16
    %p86 = scmp.eq.s32.totalorder %s85, 0
    %s88 = sadd.s32 %s87, 1
    %s89 = scalar_select %p86, %s87, %s88
    %p92 = pneg %p86
    %p93 = scmp.eq.s32.totalorder %s9, 1
    %p94 = por %p92, %p93
    %p95 = scmp.ne.s32.totalorder %s87, %s90
    %p96 = scmp.eq.s32.totalorder %s9, 0
    %p97 = por %p95, %p96
    %p98 = scmp.ne.s32.totalorder %s87, %s90
    %p99 = scmp.eq.s32.totalorder %s14, 1
    %p100 = por %p98, %p99
    %p101 = scmp.ne.s32.totalorder %s90, %s91
    %p102 = scmp.eq.s32.totalorder %s14, 0
    %p103 = por %p101, %p102
    %p104 = scmp.ne.s32.totalorder %s90, %s91
    %p105 = scmp.eq.s32.totalorder %s15, 1
    %p106 = por %p104, %p105
    %p108 = scmp.ne.s32.totalorder %s91, %s107
    %p109 = scmp.eq.s32.totalorder %s15, 0
    %p110 = por %p108, %p109
    %p111 = scmp.le.s32.totalorder 1, %s9
    %p112 = scmp.lt.s32.totalorder %s9, 3
    %p113 = pnand %p111, %p112
    %p114 = pneg %p113
    // Predicated region
    $region9: #{cyclegan_generator_forward.12} parent=5 // pred_check
      _
    $region10: #{cyclegan_generator_forward.12} parent=5 // pred_check_branch
      %116 = sbr.rel (%p113) target = $region12
    $region11: #{cyclegan_generator_forward.12} parent=5 // pred_region
      %s117 = ssub.s32 %s9, 1
      // Predicated region
      $region13: #{cyclegan_generator_forward.12} parent=11 // pred_check
        %p118 = pneg %p56
      $region14: #{cyclegan_generator_forward.12} parent=11 // pred_check_branch
        %120 = sbr.rel (%p118) target = $region16
      $region15: #{cyclegan_generator_forward.12} parent=11 // pred_region
        _
      $region16: #{cyclegan_generator_forward.12} parent=11 // pred_fallthru
        _
      // Predicated region
      $region17: #{cyclegan_generator_forward.12} parent=11 // pred_check
        %p121 = pneg %p77
      $region18: #{cyclegan_generator_forward.12} parent=11 // pred_check_branch
        %123 = sbr.rel (%p121) target = $region20
      $region19: #{cyclegan_generator_forward.12} parent=11 // pred_region
        _
      $region20: #{cyclegan_generator_forward.12} parent=11 // pred_fallthru
        _
    $region12: #{cyclegan_generator_forward.12} parent=5 // pred_fallthru
      _
    %p124 = scmp.lt.s32.totalorder %s9, 2
    // Predicated region
    $region21: #{cyclegan_generator_forward.12} parent=5 // pred_check
      %p125 = pneg %p124
    $region22: #{cyclegan_generator_forward.12} parent=5 // pred_check_branch
      %127 = sbr.rel (%p125) target = $region24
    $region23: #{cyclegan_generator_forward.12} parent=5 // pred_region
      // Predicated region
      $region25: #{cyclegan_generator_forward.12} parent=23 // pred_check
        %p128 = pneg %p29
      $region26: #{cyclegan_generator_forward.12} parent=23 // pred_check_branch
        %130 = sbr.rel (%p128) target = $region28
      $region27: #{cyclegan_generator_forward.12} parent=23 // pred_region
        %p131 = scmp.lt.s32.totalorder %s9, 1
        %s132 = scalar_select %p131, %s9, 1
        %s133 = smul.addr %s132, 16
        %s134 = smul.addr %s133, 4
        %s135 = scalar_lea.vmem %s0, %s134
      $region28: #{cyclegan_generator_forward.12} parent=23 // pred_fallthru
        _
    $region24: #{cyclegan_generator_forward.12} parent=5 // pred_fallthru
      _
    %p136 = scmp.le.s32.totalorder 1, %s9
    %p137 = scmp.lt.s32.totalorder %s9, 3
    %p138 = pnand %p136, %p137
    %p139 = pneg %p138
    // Predicated region
    $region29: #{cyclegan_generator_forward.12} parent=5 // pred_check
      _
    $region30: #{cyclegan_generator_forward.12} parent=5 // pred_check_branch
      %141 = sbr.rel (%p138) target = $region32
    $region31: #{cyclegan_generator_forward.12} parent=5 // pred_region
      %s142 = ssub.s32 %s9, 1
      %p143 = scmp.lt.s32.totalorder %s14, 1
      %s144 = scalar_select %p143, %s14, 1
      %s145 = smul.addr %s144, 16
      %s146 = smul.addr %s145, 4
      %s147 = scalar_lea.vmem %s0, %s146
      %p148 = pneg %p35
      %p149 = pneg %p32
      %p150 = pneg %p56
      %p151 = pneg %p53
      %p152 = pneg %p77
      %p153 = pneg %p74
      %p154 = pneg %p103
      %p155 = pneg %p100
      %p156 = scmp.lt.s32.totalorder %s14, 1
      %s157 = scalar_select %p156, %s14, 1
      %s158 = smul.addr %s157, 4
      %s159 = smul.addr %s158, 4
      %s160 = scalar_lea.vmem %s3, %s159
      %p161 = scmp.lt.s32.totalorder %s14, 1
      %s162 = scalar_select %p161, %s14, 1
      %s163 = smul.addr %s162, 16
      %s164 = smul.addr %s163, 4
      %s165 = scalar_lea.vmem %s0, %s164
      %p166 = scmp.lt.s32.totalorder %s14, 1
      %s167 = scalar_select %p166, %s14, 1
      %s168 = smul.addr %s167, 4
      %s169 = smul.addr %s168, 4
      %s170 = scalar_lea.vmem %s3, %s169
      %v172 = vld [vmem:[%s165] sm:$0xf]
      %v173 = vld [vmem:[%s165 + $0x8] sm:$0xf]
      %v174 = vld [vmem:[%s165 + $0x10] sm:$0xf]
      %v175 = vld [vmem:[%s165 + $0x18] sm:$0xf]
      %v176 = vld [vmem:[%s165 + $0x20] sm:$0xf]
      %v177 = vld [vmem:[%s165 + $0x28] sm:$0xf]
      %v178 = vld [vmem:[%s165 + $0x30] sm:$0xf]
      %v179 = vld [vmem:[%s165 + $0x38] sm:$0xf]
      %v188 = vunpack.c.l.b16 %v172
      %v189 = vunpack.c.l.b16 %v173
      %v190 = vunpack.c.l.b16 %v174
      %v191 = vunpack.c.l.b16 %v175
      %v192 = vunpack.c.l.b16 %v176
      %v193 = vunpack.c.l.b16 %v177
      %v194 = vunpack.c.l.b16 %v178
      %v195 = vunpack.c.l.b16 %v179
      %v196 = vpack.c.b16 %v189, %v188
      %v197 = vpack.c.b16 %v191, %v190
      %v198 = vpack.c.b16 %v193, %v192
      %v199 = vpack.c.b16 %v195, %v194
      %204 = vst [vmem:[#allocation2] sm:$0xff] %v196
      %205 = vst [vmem:[#allocation2 + $0x8] sm:$0xff] %v197
      %206 = vst [vmem:[#allocation2 + $0x10] sm:$0xff] %v198
      %207 = vst [vmem:[#allocation2 + $0x18] sm:$0xff] %v199
      %v208 = vld [vmem:[%s165] sm:$0xff]
      %v209 = vld [vmem:[%s165 + $0x8] sm:$0xff]
      %v210 = vld [vmem:[%s165 + $0x10] sm:$0xff]
      %v211 = vld [vmem:[%s165 + $0x18] sm:$0xff]
      %v212 = vld [vmem:[%s165 + $0x20] sm:$0xff]
      %v213 = vld [vmem:[%s165 + $0x28] sm:$0xff]
      %v214 = vld [vmem:[%s165 + $0x30] sm:$0xff]
      %v215 = vld [vmem:[%s165 + $0x38] sm:$0xff]
      %v224 = vunpack.c.l.b16 %v208
      %v225 = vunpack.c.h.b16 %v208
      %v226 = vunpack.c.l.b16 %v209
      %v227 = vunpack.c.h.b16 %v209
      %v228 = vunpack.c.l.b16 %v210
      %v229 = vunpack.c.h.b16 %v210
      %v230 = vunpack.c.l.b16 %v211
      %v231 = vunpack.c.h.b16 %v211
      %v232 = vunpack.c.l.b16 %v212
      %v233 = vunpack.c.h.b16 %v212
      %v234 = vunpack.c.l.b16 %v213
      %v235 = vunpack.c.h.b16 %v213
      %v236 = vunpack.c.l.b16 %v214
      %v237 = vunpack.c.h.b16 %v214
      %v238 = vunpack.c.l.b16 %v215
      %v239 = vunpack.c.h.b16 %v215
      %v240 = vpack.c.b16 %v226, %v224
      %v241 = vpack.c.b16 %v227, %v225
      %v242 = vpack.c.b16 %v230, %v228
      %v243 = vpack.c.b16 %v231, %v229
      %v244 = vpack.c.b16 %v234, %v232
      %v245 = vpack.c.b16 %v235, %v233
      %v246 = vpack.c.b16 %v238, %v236
      %v247 = vpack.c.b16 %v239, %v237
      %248 = vrot.lane.b32.xlu0 %v240, 127
      %v249 = vpop.permute.xlu0 %248
      %250 = vrot.lane.b32.xlu0 %v241, 127
      %v251 = vpop.permute.xlu0 %250
      %252 = vrot.lane.b32.xlu0 %v242, 127
      %v253 = vpop.permute.xlu0 %252
      %254 = vrot.lane.b32.xlu0 %v243, 127
      %v255 = vpop.permute.xlu0 %254
      %256 = vrot.lane.b32.xlu0 %v244, 127
      %v257 = vpop.permute.xlu0 %256
      %258 = vrot.lane.b32.xlu0 %v245, 127
      %v259 = vpop.permute.xlu0 %258
      %260 = vrot.lane.b32.xlu0 %v246, 127
      %v261 = vpop.permute.xlu0 %260
      %262 = vrot.lane.b32.xlu0 %v247, 127
      %v263 = vpop.permute.xlu0 %262
      %vm264 = vcmask 1039360
      %v265 = vsel %vm264, %v249, %v251
      %v266 = vsel %vm264, %v253, %v255
      %v267 = vsel %vm264, %v257, %v259
      %v268 = vsel %vm264, %v261, %v263
      %273 = vst [vmem:[#allocation2 + $0x20] sm:$0xff] %v265
      %274 = vst [vmem:[#allocation2 + $0x28] sm:$0xff] %v266
      %275 = vst [vmem:[#allocation2 + $0x30] sm:$0xff] %v267
      %276 = vst [vmem:[#allocation2 + $0x38] sm:$0xff] %v268
      %v277 = vld [vmem:[%s165] sm:$0xff]
      %v278 = vld [vmem:[%s165 + $0x8] sm:$0xff]
      %v279 = vld [vmem:[%s165 + $0x10] sm:$0xff]
      %v280 = vld [vmem:[%s165 + $0x18] sm:$0xff]
      %v281 = vld [vmem:[%s165 + $0x20] sm:$0xff]
      %v282 = vld [vmem:[%s165 + $0x28] sm:$0xff]
      %v283 = vld [vmem:[%s165 + $0x30] sm:$0xff]
      %v284 = vld [vmem:[%s165 + $0x38] sm:$0xff]
      %v293 = vunpack.c.l.b16 %v277
      %v294 = vunpack.c.h.b16 %v277
      %v295 = vunpack.c.l.b16 %v278
      %v296 = vunpack.c.h.b16 %v278
      %v297 = vunpack.c.l.b16 %v279
      %v298 = vunpack.c.h.b16 %v279
      %v299 = vunpack.c.l.b16 %v280
      %v300 = vunpack.c.h.b16 %v280
      %v301 = vunpack.c.l.b16 %v281
      %v302 = vunpack.c.h.b16 %v281
      %v303 = vunpack.c.l.b16 %v282
      %v304 = vunpack.c.h.b16 %v282
      %v305 = vunpack.c.l.b16 %v283
      %v306 = vunpack.c.h.b16 %v283
      %v307 = vunpack.c.l.b16 %v284
      %v308 = vunpack.c.h.b16 %v284
      %v309 = vpack.c.b16 %v295, %v293
      %v310 = vpack.c.b16 %v296, %v294
      %v311 = vpack.c.b16 %v299, %v297
      %v312 = vpack.c.b16 %v300, %v298
      %v313 = vpack.c.b16 %v303, %v301
      %v314 = vpack.c.b16 %v304, %v302
      %v315 = vpack.c.b16 %v307, %v305
      %v316 = vpack.c.b16 %v308, %v306
      %317 = vrot.lane.b32.xlu0 %v309, 123
      %v318 = vpop.permute.xlu0 %317
      %319 = vrot.lane.b32.xlu0 %v310, 123
      %v320 = vpop.permute.xlu0 %319
      %321 = vrot.lane.b32.xlu0 %v311, 123
      %v322 = vpop.permute.xlu0 %321
      %323 = vrot.lane.b32.xlu0 %v312, 123
      %v324 = vpop.permute.xlu0 %323
      %325 = vrot.lane.b32.xlu0 %v313, 123
      %v326 = vpop.permute.xlu0 %325
      %327 = vrot.lane.b32.xlu0 %v314, 123
      %v328 = vpop.permute.xlu0 %327
      %329 = vrot.lane.b32.xlu0 %v315, 123
      %v330 = vpop.permute.xlu0 %329
      %331 = vrot.lane.b32.xlu0 %v316, 123
      %v332 = vpop.permute.xlu0 %331
      %vm333 = vcmask 1006592
      %v334 = vsel %vm333, %v318, %v320
      %v335 = vsel %vm333, %v322, %v324
      %v336 = vsel %vm333, %v326, %v328
      %v337 = vsel %vm333, %v330, %v332
      %342 = vst [vmem:[#allocation2 + $0x40] sm:$0xff] %v334
      %343 = vst [vmem:[#allocation2 + $0x48] sm:$0xff] %v335
      %344 = vst [vmem:[#allocation2 + $0x50] sm:$0xff] %v336
      %345 = vst [vmem:[#allocation2 + $0x58] sm:$0xff] %v337
      %v346 = vld [vmem:[%s165] sm:$0xff]
      %v347 = vld [vmem:[%s165 + $0x8] sm:$0xff]
      %v348 = vld [vmem:[%s165 + $0x10] sm:$0xff]
      %v349 = vld [vmem:[%s165 + $0x18] sm:$0xff]
      %v350 = vld [vmem:[%s165 + $0x20] sm:$0xff]
      %v351 = vld [vmem:[%s165 + $0x28] sm:$0xff]
      %v352 = vld [vmem:[%s165 + $0x30] sm:$0xff]
      %v353 = vld [vmem:[%s165 + $0x38] sm:$0xff]
      %v362 = vunpack.c.l.b16 %v346
      %v363 = vunpack.c.h.b16 %v346
      %v364 = vunpack.c.l.b16 %v347
      %v365 = vunpack.c.h.b16 %v347
      %v366 = vunpack.c.l.b16 %v348
      %v367 = vunpack.c.h.b16 %v348
      %v368 = vunpack.c.l.b16 %v349
      %v369 = vunpack.c.h.b16 %v349
      %v370 = vunpack.c.l.b16 %v350
      %v371 = vunpack.c.h.b16 %v350
      %v372 = vunpack.c.l.b16 %v351
      %v373 = vunpack.c.h.b16 %v351
      %v374 = vunpack.c.l.b16 %v352
      %v375 = vunpack.c.h.b16 %v352
      %v376 = vunpack.c.l.b16 %v353
      %v377 = vunpack.c.h.b16 %v353
      %v378 = vpack.c.b16 %v364, %v362
      %v379 = vpack.c.b16 %v365, %v363
      %v380 = vpack.c.b16 %v368, %v366
      %v381 = vpack.c.b16 %v369, %v367
      %v382 = vpack.c.b16 %v372, %v370
      %v383 = vpack.c.b16 %v373, %v371
      %v384 = vpack.c.b16 %v376, %v374
      %v385 = vpack.c.b16 %v377, %v375
      %386 = vrot.lane.b32.xlu0 %v378, 122
      %v387 = vpop.permute.xlu0 %386
      %388 = vrot.lane.b32.xlu0 %v379, 122
      %v389 = vpop.permute.xlu0 %388
      %390 = vrot.lane.b32.xlu0 %v380, 122
      %v391 = vpop.permute.xlu0 %390
      %392 = vrot.lane.b32.xlu0 %v381, 122
      %v393 = vpop.permute.xlu0 %392
      %394 = vrot.lane.b32.xlu0 %v382, 122
      %v395 = vpop.permute.xlu0 %394
      %396 = vrot.lane.b32.xlu0 %v383, 122
      %v397 = vpop.permute.xlu0 %396
      %398 = vrot.lane.b32.xlu0 %v384, 122
      %v399 = vpop.permute.xlu0 %398
      %400 = vrot.lane.b32.xlu0 %v385, 122
      %v401 = vpop.permute.xlu0 %400
      %vm402 = vcmask 998400
      %v403 = vsel %vm402, %v387, %v389
      %v404 = vsel %vm402, %v391, %v393
      %v405 = vsel %vm402, %v395, %v397
      %v406 = vsel %vm402, %v399, %v401
      %411 = vst [vmem:[#allocation2 + $0x60] sm:$0xff] %v403
      %412 = vst [vmem:[#allocation2 + $0x68] sm:$0xff] %v404
      %413 = vst [vmem:[#allocation2 + $0x70] sm:$0xff] %v405
      %414 = vst [vmem:[#allocation2 + $0x78] sm:$0xff] %v406
      %v415 = vld [vmem:[%s1] sm:$0xff]
      %v416 = vld [vmem:[%s1 + $0x8] sm:$0xff]
      %v417 = vld [vmem:[%s1 + $0x10] sm:$0xff]
      %v418 = vld [vmem:[%s1 + $0x18] sm:$0xff]
      %v419 = vld [vmem:[#allocation2] sm:$0xff]
      %v420 = vld [vmem:[#allocation2 + $0x8] sm:$0xff]
      %v421 = vld [vmem:[#allocation2 + $0x10] sm:$0xff]
      %v422 = vld [vmem:[#allocation2 + $0x18] sm:$0xff]
      %v423 = vld [vmem:[#allocation2 + $0x20] sm:$0xff]
      %v424 = vld [vmem:[#allocation2 + $0x28] sm:$0xff]
      %v425 = vld [vmem:[#allocation2 + $0x30] sm:$0xff]
      %v426 = vld [vmem:[#allocation2 + $0x38] sm:$0xff]
      %v427 = vld [vmem:[#allocation2 + $0x40] sm:$0xff]
      %v428 = vld [vmem:[#allocation2 + $0x48] sm:$0xff]
      %v429 = vld [vmem:[#allocation2 + $0x50] sm:$0xff]
      %v430 = vld [vmem:[#allocation2 + $0x58] sm:$0xff]
      %v431 = vld [vmem:[#allocation2 + $0x60] sm:$0xff]
      %v432 = vld [vmem:[#allocation2 + $0x68] sm:$0xff]
      %v433 = vld [vmem:[#allocation2 + $0x70] sm:$0xff]
      %v434 = vld [vmem:[#allocation2 + $0x78] sm:$0xff]
      %v435 = vld [vmem:[%s2] sm:$0xff]
      %v436 = vld [vmem:[%s2 + $0x8] sm:$0xff]
      %v437 = vld [vmem:[%s2 + $0x10] sm:$0xff]
      %v438 = vld [vmem:[%s2 + $0x18] sm:$0xff]
      %440 = vset.pattern.permute.xlu0 0
      %441 = vperm.xlu0 %440, %v435
      %v442 = vpop.permute.xlu0 %441
      %445 = vset.pattern.permute.xlu0 0
      %446 = vperm.xlu0 %445, %v436
      %v447 = vpop.permute.xlu0 %446
      %450 = vset.pattern.permute.xlu0 0
      %451 = vperm.xlu0 %450, %v437
      %v452 = vpop.permute.xlu0 %451
      %455 = vset.pattern.permute.xlu0 0
      %456 = vperm.xlu0 %455, %v438
      %v457 = vpop.permute.xlu0 %456
      %v463 = vunpack.c.l.b16 %v415
      %v464 = vunpack.c.h.b16 %v415
      %v465 = vunpack.c.l.b16 %v416
      %v466 = vunpack.c.h.b16 %v416
      %v467 = vunpack.c.l.b16 %v417
      %v468 = vunpack.c.h.b16 %v417
      %v469 = vunpack.c.l.b16 %v418
      %v470 = vunpack.c.h.b16 %v418
      %v471 = vpack.c.b16 %v465, %v463
      %v472 = vpack.c.b16 %v466, %v464
      %v473 = vpack.c.b16 %v469, %v467
      %v474 = vpack.c.b16 %v470, %v468
      %479 = vmatprep.subr.bf16.mxu0 0
      %480 = vmatpush1.bf16.msra.mxu0 %v419
      %481 = vmatprep.subr.bf16.mxu0 0
      %482 = vmatpush1.bf16.msra.mxu0 %v420
      %483 = vmatprep.subr.bf16.mxu0 0
      %484 = vmatpush1.bf16.msra.mxu0 %v421
      %485 = vmatprep.subr.bf16.mxu0 0
      %486 = vmatpush1.bf16.msra.mxu0 %v422
      %487 = vmatprep.subr.bf16.mxu0 0
      %488 = vmatpush1.bf16.msra.mxu0 %v423
      %489 = vmatprep.subr.bf16.mxu0 0
      %490 = vmatpush1.bf16.msra.mxu0 %v424
      %491 = vmatprep.subr.bf16.mxu0 0
      %492 = vmatpush1.bf16.msra.mxu0 %v425
      %493 = vmatprep.subr.bf16.mxu0 0
      %494 = vmatpush1.bf16.msra.mxu0 %v426
      %495 = vmatprep.subr.bf16.mxu0 0
      %496 = vmatpush1.bf16.msra.mxu0 %v427
      %497 = vmatprep.subr.bf16.mxu0 0
      %498 = vmatpush1.bf16.msra.mxu0 %v428
      %499 = vmatprep.subr.bf16.mxu0 0
      %500 = vmatpush1.bf16.msra.mxu0 %v429
      %501 = vmatprep.subr.bf16.mxu0 0
      %502 = vmatpush1.bf16.msra.mxu0 %v430
      %503 = vmatprep.subr.bf16.mxu0 0
      %504 = vmatpush1.bf16.msra.mxu0 %v431
      %505 = vmatprep.subr.bf16.mxu0 0
      %506 = vmatpush1.bf16.msra.mxu0 %v432
      %507 = vmatprep.subr.bf16.mxu0 0
      %508 = vmatpush1.bf16.msra.mxu0 %v433
      %509 = vmatprep.subr.bf16.mxu0 0
      %510 = vmatpush1.bf16.msra.mxu0 %v434
      %511 = vmatprep.mubr.bf16.mxu0 %v472
      %512 = vmatmul.mubr.bf16.gmra.mrb[0].mxu0 %v471
      %v513 = vpop.f32.mrb[0].mxu0
      %v514 = vadd.f32 %v442, %v513
      %v515 = vpop.f32.mrb[0].mxu0
      %v516 = vpop.f32.mrb[0].mxu0
      %v517 = vadd.f32 %v447, %v516
      %v518 = vpop.f32.mrb[0].mxu0
      %519 = vmatprep.mubr.bf16.mxu0 %v474
      %520 = vmatmul.mubr.bf16.gmra.mrb[0].mxu0 %v473
      %v521 = vpop.f32.mrb[0].mxu0
      %v522 = vadd.f32 %v452, %v521
      %v523 = vpop.f32.mrb[0].mxu0
      %v524 = vpop.f32.mrb[0].mxu0
      %v525 = vadd.f32 %v457, %v524
      %v526 = vpop.f32.mrb[0].mxu0
      %527 = vdwg.mxu0
      %v528 = vlaneseq
      %v529 = vand.u32 %v528, 127
      %vm530 = vcmp.lt.s32.totalorder %v529, 0
      %v531 = vsub.s32 0, %v529
      %v532 = vsel %vm530, %v531, %v529
      %v533 = vmul.u32.u64.compose %v532, 3435973837
      %v534 = vextract.low.u32 %v533
      %v535 = vextract.high.u32 %v533
      %v536 = vshrl.u32 %v535, 2
      %v537 = vmul.u32 %v536, 5
      %v538 = vsub.s32 %v532, %v537
      %v539 = vsub.s32 0, %v538
      %v540 = vsel %vm530, %v539, %v538
      %vm541 = vcmp.ne.s32.totalorder %v540, 0
      %vm542 = vcmp.lt.s32.totalorder %v540, 0
      %vm543 = vmand %vm542, %vm541
      %v544 = vadd.s32 %v540, 5
      %v545 = vsel %vm543, %v544, %v540
      %vm546 = vcmp.lt.s32.totalorder %v545, 4
      %vm547 = vcmp.lt.s32.totalorder %v529, 19
      %vm548 = vmand %vm546, %vm547
      %v549 = vsel %vm548, 1, 0
      %v550 = vcvt.s32.f32 %v549
      %v551 = vmul.f32 %v514, %v550
      %v552 = vmul.f32 %v517, %v550
      %v553 = vmul.f32 %v522, %v550
      %v554 = vmul.f32 %v525, %v550
      %555 = vadd.xlane.f32.xlu0 %v551
      %v556 = vpop.xlane.xlu0 %555
      %557 = vadd.xlane.f32.xlu0 %v552
      %v558 = vpop.xlane.xlu0 %557
      %559 = vadd.xlane.f32.xlu0 %v553
      %v560 = vpop.xlane.xlu0 %559
      %561 = vadd.xlane.f32.xlu0 %v554
      %v562 = vpop.xlane.xlu0 %561
      %v563 = vmul.f32 %v514, %v551
      %v564 = vmul.f32 %v517, %v552
      %v565 = vmul.f32 %v522, %v553
      %v566 = vmul.f32 %v525, %v554
      %567 = vadd.xlane.f32.xlu0 %v563
      %v568 = vpop.xlane.xlu0 %567
      %569 = vadd.xlane.f32.xlu0 %v564
      %v570 = vpop.xlane.xlu0 %569
      %571 = vadd.xlane.f32.xlu0 %v565
      %v572 = vpop.xlane.xlu0 %571
      %573 = vadd.xlane.f32.xlu0 %v566
      %v574 = vpop.xlane.xlu0 %573
      %v575 = vmul.f32 %v556, 0.0625
      %v576 = vmul.f32 %v558, 0.0625
      %v577 = vmul.f32 %v560, 0.0625
      %v578 = vmul.f32 %v562, 0.0625
      %v579 = vmul.f32 %v568, 0.0625
      %v580 = vmul.f32 %v570, 0.0625
      %v581 = vmul.f32 %v572, 0.0625
      %v582 = vmul.f32 %v574, 0.0625
      %v583 = vmul.f32 %v575, %v575
      %v584 = vmul.f32 %v576, %v576
      %v585 = vmul.f32 %v577, %v577
      %v586 = vmul.f32 %v578, %v578
      %v587 = vsub.f32 %v579, %v583
      %v588 = vsub.f32 %v580, %v584
      %v589 = vsub.f32 %v581, %v585
      %v590 = vsub.f32 %v582, %v586
      %v591 = vmax.f32 %v587, 0.0
      %v592 = vmax.f32 %v588, 0.0
      %v593 = vmax.f32 %v589, 0.0
      %v594 = vmax.f32 %v590, 0.0
      %v595 = vadd.f32 %v591, 1e-05
      %v596 = vadd.f32 %v592, 1e-05
      %v597 = vadd.f32 %v593, 1e-05
      %v598 = vadd.f32 %v594, 1e-05
      %v599 = vrsqrt.pop %v595
      %v600 = vrsqrt.pop %v596
      %v601 = vrsqrt.pop %v597
      %v602 = vrsqrt.pop %v598
      %v603 = vsub.f32 %v514, %v575
      %v604 = vsub.f32 %v517, %v576
      %v605 = vsub.f32 %v522, %v577
      %v606 = vsub.f32 %v525, %v578
      %v607 = vmul.f32 %v603, %v599
      %v608 = vmul.f32 %v604, %v600
      %v609 = vmul.f32 %v605, %v601
      %v610 = vmul.f32 %v606, %v602
      %v611 = vmax.f32 %v607, 0.0
      %v612 = vmax.f32 %v608, 0.0
      %v613 = vmax.f32 %v609, 0.0
      %v614 = vmax.f32 %v610, 0.0
      %v615 = vpack.c.bf16 %v612, %v611
      %v616 = vpack.c.bf16 %v614, %v613
      %v619 = vunpack.c.l.b16 %v615
      %v620 = vunpack.c.h.b16 %v615
      %v621 = vunpack.c.l.b16 %v616
      %v622 = vunpack.c.h.b16 %v616
      %v623 = vpack.c.b16 %v619, %v619
      %v624 = vpack.c.b16 %v620, %v620
      %v625 = vpack.c.b16 %v621, %v621
      %v626 = vpack.c.b16 %v622, %v622
      %631 = vst [vmem:[%s170] sm:$0xf] %v623
      %632 = vst [vmem:[%s170 + $0x4] sm:$0xf] %v624
      %633 = vst [vmem:[%s170 + $0x8] sm:$0xf] %v625
      %634 = vst [vmem:[%s170 + $0xc] sm:$0xf] %v626
      %p635 = scmp.lt.s32.totalorder %s14, 1
      %s636 = scalar_select %p635, %s14, 1
      %s637 = smul.addr %s636, 4
      %s638 = smul.addr %s637, 4
      %s639 = scalar_lea.vmem %s3, %s638
      // Predicated region
      $region33: #{cyclegan_generator_forward.12} parent=31 // pred_check
        %p640 = pneg %p100
      $region34: #{cyclegan_generator_forward.12} parent=31 // pred_check_branch
        %642 = sbr.rel (%p640) target = $region36
      $region35: #{cyclegan_generator_forward.12} parent=31 // pred_region
        _
      $region36: #{cyclegan_generator_forward.12} parent=31 // pred_fallthru
        _
    $region32: #{cyclegan_generator_forward.12} parent=5 // pred_fallthru
      _
    %p643 = scmp.le.s32.totalorder 2, %s9
    // Predicated region
    $region37: #{cyclegan_generator_forward.12} parent=5 // pred_check
      %p644 = pneg %p643
    $region38: #{cyclegan_generator_forward.12} parent=5 // pred_check_branch
      %646 = sbr.rel (%p644) target = $region40
    $region39: #{cyclegan_generator_forward.12} parent=5 // pred_region
      %s647 = ssub.s32 %s9, 2
      // Predicated region
      $region41: #{cyclegan_generator_forward.12} parent=39 // pred_check
        %p648 = pneg %p106
      $region42: #{cyclegan_generator_forward.12} parent=39 // pred_check_branch
        %650 = sbr.rel (%p648) target = $region44
      $region43: #{cyclegan_generator_forward.12} parent=39 // pred_region
        %p651 = scmp.lt.s32.totalorder %s15, 1
        %s652 = scalar_select %p651, %s15, 1
        %s653 = smul.addr %s652, 4
        %s654 = smul.addr %s653, 4
        %s655 = scalar_lea.vmem %s3, %s654
      $region44: #{cyclegan_generator_forward.12} parent=39 // pred_fallthru
        _
    $region40: #{cyclegan_generator_forward.12} parent=5 // pred_fallthru
      _
  $region6: #{cyclegan_generator_forward.12} parent=0 // loop_footer
    %s13 = sadd.s32 1, %s9
  $region7: #{cyclegan_generator_forward.12} parent=0 // loop_footer_branch
    %8 = sbr.rel target = $region3
  $region8: #{cyclegan_generator_forward.12} parent=0 // loop_exit
    _

// kernel: cyclegan_generator_forward.13
$region0: #{cyclegan_generator_forward.13}
  #allocation0 [shape = 'u32[]', space=smem, size = 0x4, offset = 0x4, fixed_abs, tag = 'smem constant byte address 0x4 - core index']
  #allocation1 [shape = 'u32[144,128]{1,0:T(1,128)}', space=vmem, size = 0x12000, scoped, tag = 'internal scratch']
  #allocation2 [shape = 'bf16[288,128]{1,0:T(16,128)(2,1)}', space=vmem, size = 0x12000, scoped, tag = 'scratch operand']
  %s0 = inlined_call_operand.vmem [shape: bf16[2,32,142], index: 0, kind: input, shape index: {}]
  %s1 = inlined_call_operand.vmem [shape: bf16[32,288], index: 1, kind: input, shape index: {}]
  %s2 = inlined_call_operand.vmem [shape: f32[32,1], index: 2, kind: input, shape index: {}]
  %s3 = inlined_call_operand.vmem [shape: bf16[2,32,128], index: 3, kind: output, shape index: {}]
  %s4 = sld [smem:[#allocation0]]
  $region45: #{cyclegan_generator_forward.13} parent=0
    _
  %s6 = ssub.s32 1, %s4
  %s7 = scalar_select 0, %s6, %s4
  loop: start=0, step=1, limit=4
  $region2: #{cyclegan_generator_forward.13} parent=0 // loop_pre_header
    _
  $region3: #{cyclegan_generator_forward.13} parent=0 // loop_header
    %s9 = sphi 0, %s13
    %p10 = scmp.ge.s32.totalorder %s9, 4
    %s19 = sphi 0, %s21
    %s22 = sphi 0, %s19
    %s23 = sphi 0, %s22
    %s39 = sphi 0, %s23
    %s43 = sphi 0, %s43
    %s45 = sphi 0, %s43
    %s46 = sphi 0, %s45
    %s60 = sphi 0, %s46
    %s64 = sphi 0, %s64
    %s66 = sphi 0, %s64
    %s67 = sphi 0, %s66
    %s81 = sphi 0, %s67
    %s87 = sphi 0, %s89
    %s90 = sphi 0, %s87
    %s91 = sphi 0, %s90
    %s107 = sphi 0, %s91
  $region4: #{cyclegan_generator_forward.13} parent=0 // loop_header_branch
    %12 = sbr.rel (%p10) target = $region8
  $region5: #{cyclegan_generator_forward.13} parent=0 // loop_body
    %s14 = ssub.s32 %s9, 1
    %s15 = ssub.s32 %s9, 2
    %s16 = sadd.s32 %s9, 1
    %s17 = ssub.s32 %s9, %s16
    %p18 = scmp.eq.s32.totalorder %s17, 0
    %s20 = sadd.s32 %s19, 1
    %s21 = scalar_select %p18, %s19, %s20
    %p24 = pneg %p18
    %p25 = scmp.eq.s32.totalorder %s9, 1
    %p26 = por %p24, %p25
    %p27 = scmp.ne.s32.totalorder %s19, %s22
    %p28 = scmp.eq.s32.totalorder %s9, 0
    %p29 = por %p27, %p28
    %p30 = scmp.ne.s32.totalorder %s19, %s22
    %p31 = scmp.eq.s32.totalorder %s14, 1
    %p32 = por %p30, %p31
    %p33 = scmp.ne.s32.totalorder %s22, %s23
    %p34 = scmp.eq.s32.totalorder %s14, 0
    %p35 = por %p33, %p34
    %p36 = scmp.ne.s32.totalorder %s22, %s23
    %p37 = scmp.eq.s32.totalorder %s15, 1
    %p38 = por %p36, %p37
    %p40 = scmp.ne.s32.totalorder %s23, %s39
    %p41 = scmp.eq.s32.totalorder %s15, 0
    %p42 = por %p40, %p41
    %s44 = sadd.s32 %s43, 1
    %p47 = scmp.eq.s32.totalorder %s9, 1
    %p48 = scmp.ne.s32.totalorder %s43, %s45
    %p49 = scmp.eq.s32.totalorder %s9, 0
    %p50 = por %p48, %p49
    %p51 = scmp.ne.s32.totalorder %s43, %s45
    %p52 = scmp.eq.s32.totalorder %s14, 1
    %p53 = por %p51, %p52
    %p54 = scmp.ne.s32.totalorder %s45, %s46
    %p55 = scmp.eq.s32.totalorder %s14, 0
    %p56 = por %p54, %p55
    %p57 = scmp.ne.s32.totalorder %s45, %s46
    %p58 = scmp.eq.s32.totalorder %s15, 1
    %p59 = por %p57, %p58
    %p61 = scmp.ne.s32.totalorder %s46, %s60
    %p62 = scmp.eq.s32.totalorder %s15, 0
    %p63 = por %p61, %p62
    %s65 = sadd.s32 %s64, 1
    %p68 = scmp.eq.s32.totalorder %s9, 1
    %p69 = scmp.ne.s32.totalorder %s64, %s66
    %p70 = scmp.eq.s32.totalorder %s9, 0
    %p71 = por %p69, %p70
    %p72 = scmp.ne.s32.totalorder %s64, %s66
    %p73 = scmp.eq.s32.totalorder %s14, 1
    %p74 = por %p72, %p73
    %p75 = scmp.ne.s32.totalorder %s66, %s67
    %p76 = scmp.eq.s32.totalorder %s14, 0
    %p77 = por %p75, %p76
    %p78 = scmp.ne.s32.totalorder %s66, %s67
    %p79 = scmp.eq.s32.totalorder %s15, 1
    %p80 = por %p78, %p79
    %p82 = scmp.ne.s32.totalorder %s67, %s81
    %p83 = scmp.eq.s32.totalorder %s15, 0
    %p84 = por %p82, %p83
    %s85 = ssub.s32 %s9, %s16
    %p86 = scmp.eq.s32.totalorder %s85, 0
    %s88 = sadd.s32 %s87, 1
    %s89 = scalar_select %p86, %s87, %s88
    %p92 = pneg %p86
    %p93 = scmp.eq.s32.totalorder %s9, 1
    %p94 = por %p92, %p93
    %p95 = scmp.ne.s32.totalorder %s87, %s90
    %p96 = scmp.eq.s32.totalorder %s9, 0
    %p97 = por %p95, %p96
    %p98 = scmp.ne.s32.totalorder %s87, %s90
    %p99 = scmp.eq.s32.totalorder %s14, 1
    %p100 = por %p98, %p99
    %p101 = scmp.ne.s32.totalorder %s90, %s91
    %p102 = scmp.eq.s32.totalorder %s14, 0
    %p103 = por %p101, %p102
    %p104 = scmp.ne.s32.totalorder %s90, %s91
    %p105 = scmp.eq.s32.totalorder %s15, 1
    %p106 = por %p104, %p105
    %p108 = scmp.ne.s32.totalorder %s91, %s107
    %p109 = scmp.eq.s32.totalorder %s15, 0
    %p110 = por %p108, %p109
    %p111 = scmp.le.s32.totalorder 1, %s9
    %p112 = scmp.lt.s32.totalorder %s9, 3
    %p113 = pnand %p111, %p112
    %p114 = pneg %p113
    // Predicated region
    $region9: #{cyclegan_generator_forward.13} parent=5 // pred_check
      _
    $region10: #{cyclegan_generator_forward.13} parent=5 // pred_check_branch
      %116 = sbr.rel (%p113) target = $region12
    $region11: #{cyclegan_generator_forward.13} parent=5 // pred_region
      %s117 = ssub.s32 %s9, 1
      // Predicated region
      $region13: #{cyclegan_generator_forward.13} parent=11 // pred_check
        %p118 = pneg %p56
      $region14: #{cyclegan_generator_forward.13} parent=11 // pred_check_branch
        %120 = sbr.rel (%p118) target = $region16
      $region15: #{cyclegan_generator_forward.13} parent=11 // pred_region
        _
      $region16: #{cyclegan_generator_forward.13} parent=11 // pred_fallthru
        _
      // Predicated region
      $region17: #{cyclegan_generator_forward.13} parent=11 // pred_check
        %p121 = pneg %p77
      $region18: #{cyclegan_generator_forward.13} parent=11 // pred_check_branch
        %123 = sbr.rel (%p121) target = $region20
      $region19: #{cyclegan_generator_forward.13} parent=11 // pred_region
        _
      $region20: #{cyclegan_generator_forward.13} parent=11 // pred_fallthru
        _
    $region12: #{cyclegan_generator_forward.13} parent=5 // pred_fallthru
      _
    %p124 = scmp.lt.s32.totalorder %s9, 2
    // Predicated region
    $region21: #{cyclegan_generator_forward.13} parent=5 // pred_check
      %p125 = pneg %p124
    $region22: #{cyclegan_generator_forward.13} parent=5 // pred_check_branch
      %127 = sbr.rel (%p125) target = $region24
    $region23: #{cyclegan_generator_forward.13} parent=5 // pred_region
      // Predicated region
      $region25: #{cyclegan_generator_forward.13} parent=23 // pred_check
        %p128 = pneg %p29
      $region26: #{cyclegan_generator_forward.13} parent=23 // pred_check_branch
        %130 = sbr.rel (%p128) target = $region28
      $region27: #{cyclegan_generator_forward.13} parent=23 // pred_region
        %p131 = scmp.lt.s32.totalorder %s9, 1
        %s132 = scalar_select %p131, %s9, 1
        %s133 = smul.addr %s132, 8
        %s134 = smul.addr %s133, 4
        %s135 = scalar_lea.vmem %s0, %s134
      $region28: #{cyclegan_generator_forward.13} parent=23 // pred_fallthru
        _
    $region24: #{cyclegan_generator_forward.13} parent=5 // pred_fallthru
      _
    %p136 = scmp.le.s32.totalorder 1, %s9
    %p137 = scmp.lt.s32.totalorder %s9, 3
    %p138 = pnand %p136, %p137
    %p139 = pneg %p138
    // Predicated region
    $region29: #{cyclegan_generator_forward.13} parent=5 // pred_check
      _
    $region30: #{cyclegan_generator_forward.13} parent=5 // pred_check_branch
      %141 = sbr.rel (%p138) target = $region32
    $region31: #{cyclegan_generator_forward.13} parent=5 // pred_region
      %s142 = ssub.s32 %s9, 1
      %p143 = scmp.lt.s32.totalorder %s14, 1
      %s144 = scalar_select %p143, %s14, 1
      %s145 = smul.addr %s144, 8
      %s146 = smul.addr %s145, 4
      %s147 = scalar_lea.vmem %s0, %s146
      %p148 = pneg %p35
      %p149 = pneg %p32
      %p150 = pneg %p56
      %p151 = pneg %p53
      %p152 = pneg %p77
      %p153 = pneg %p74
      %p154 = pneg %p103
      %p155 = pneg %p100
      %p156 = scmp.lt.s32.totalorder %s14, 1
      %s157 = scalar_select %p156, %s14, 1
      %s158 = smul.addr %s157, 4
      %s159 = smul.addr %s158, 4
      %s160 = scalar_lea.vmem %s3, %s159
      %p161 = scmp.lt.s32.totalorder %s14, 1
      %s162 = scalar_select %p161, %s14, 1
      %s163 = smul.addr %s162, 8
      %s164 = smul.addr %s163, 4
      %s165 = scalar_lea.vmem %s0, %s164
      %p166 = scmp.lt.s32.totalorder %s14, 1
      %s167 = scalar_select %p166, %s14, 1
      %s168 = smul.addr %s167, 4
      %s169 = smul.addr %s168, 4
      %s170 = scalar_lea.vmem %s3, %s169
      %v172 = vld [vmem:[%s165] sm:$0xf]
      %v173 = vld [vmem:[%s165 + $0x8] sm:$0xf]
      %v174 = vld [vmem:[%s165 + $0x10] sm:$0xf]
      %v175 = vld [vmem:[%s165 + $0x18] sm:$0xf]
      %v180 = vunpack.c.l.b16 %v172
      %v181 = vunpack.c.l.b16 %v173
      %v182 = vunpack.c.l.b16 %v174
      %v183 = vunpack.c.l.b16 %v175
      %v184 = vpack.c.b16 %v181, %v180
      %v185 = vpack.c.b16 %v183, %v182
      %188 = vst [vmem:[#allocation2] sm:$0xff] %v184
      %189 = vst [vmem:[#allocation2 + $0x8] sm:$0xff] %v185
      %v190 = vld [vmem:[%s165] sm:$0xff]
      %v191 = vld [vmem:[%s165 + $0x8] sm:$0xff]
      %v192 = vld [vmem:[%s165 + $0x10] sm:$0xff]
      %v193 = vld [vmem:[%s165 + $0x18] sm:$0xff]
      %v198 = vunpack.c.l.b16 %v190
      %v199 = vunpack.c.h.b16 %v190
      %v200 = vunpack.c.l.b16 %v191
      %v201 = vunpack.c.h.b16 %v191
      %v202 = vunpack.c.l.b16 %v192
      %v203 = vunpack.c.h.b16 %v192
      %v204 = vunpack.c.l.b16 %v193
      %v205 = vunpack.c.h.b16 %v193
      %v206 = vpack.c.b16 %v200, %v198
      %v207 = vpack.c.b16 %v201, %v199
      %v208 = vpack.c.b16 %v204, %v202
      %v209 = vpack.c.b16 %v205, %v203
      %210 = vrot.lane.b32.xlu0 %v206, 127
      %v211 = vpop.permute.xlu0 %210
      %212 = vrot.lane.b32.xlu0 %v207, 127
      %v213 = vpop.permute.xlu0 %212
      %214 = vrot.lane.b32.xlu0 %v208, 127
      %v215 = vpop.permute.xlu0 %214
      %216 = vrot.lane.b32.xlu0 %v209, 127
      %v217 = vpop.permute.xlu0 %216
      %vm218 = vcmask 1039360
      %v219 = vsel %vm218, %v211, %v213
      %v220 = vsel %vm218, %v215, %v217
      %223 = vst [vmem:[#allocation2 + $0x10] sm:$0xff] %v219
      %224 = vst [vmem:[#allocation2 + $0x18] sm:$0xff] %v220
      %v225 = vld [vmem:[%s165] sm:$0xff]
      %v226 = vld [vmem:[%s165 + $0x8] sm:$0xff]
      %v227 = vld [vmem:[%s165 + $0x10] sm:$0xff]
      %v228 = vld [vmem:[%s165 + $0x18] sm:$0xff]
      %v233 = vunpack.c.l.b16 %v225
      %v234 = vunpack.c.h.b16 %v225
      %v235 = vunpack.c.l.b16 %v226
      %v236 = vunpack.c.h.b16 %v226
      %v237 = vunpack.c.l.b16 %v227
      %v238 = vunpack.c.h.b16 %v227
      %v239 = vunpack.c.l.b16 %v228
      %v240 = vunpack.c.h.b16 %v228
      %v241 = vpack.c.b16 %v235, %v233
      %v242 = vpack.c.b16 %v236, %v234
      %v243 = vpack.c.b16 %v239, %v237
      %v244 = vpack.c.b16 %v240, %v238
      %245 = vrot.lane.b32.xlu0 %v241, 126
      %v246 = vpop.permute.xlu0 %245
      %247 = vrot.lane.b32.xlu0 %v242, 126
      %v248 = vpop.permute.xlu0 %247
      %249 = vrot.lane.b32.xlu0 %v243, 126
      %v250 = vpop.permute.xlu0 %249
      %251 = vrot.lane.b32.xlu0 %v244, 126
      %v252 = vpop.permute.xlu0 %251
      %vm253 = vcmask 1031168
      %v254 = vsel %vm253, %v246, %v248
      %v255 = vsel %vm253, %v250, %v252
      %258 = vst [vmem:[#allocation2 + $0x20] sm:$0xff] %v254
      %259 = vst [vmem:[#allocation2 + $0x28] sm:$0xff] %v255
      %v260 = vld [vmem:[%s165] sm:$0xff]
      %v261 = vld [vmem:[%s165 + $0x8] sm:$0xff]
      %v262 = vld [vmem:[%s165 + $0x10] sm:$0xff]
      %v263 = vld [vmem:[%s165 + $0x18] sm:$0xff]
      %v268 = vunpack.c.l.b16 %v260
      %v269 = vunpack.c.h.b16 %v260
      %v270 = vunpack.c.l.b16 %v261
      %v271 = vunpack.c.h.b16 %v261
      %v272 = vunpack.c.l.b16 %v262
      %v273 = vunpack.c.h.b16 %v262
      %v274 = vunpack.c.l.b16 %v263
      %v275 = vunpack.c.h.b16 %v263
      %v276 = vpack.c.b16 %v270, %v268
      %v277 = vpack.c.b16 %v271, %v269
      %v278 = vpack.c.b16 %v274, %v272
      %v279 = vpack.c.b16 %v275, %v273
      %280 = vrot.lane.b32.xlu0 %v276, 122
      %v281 = vpop.permute.xlu0 %280
      %282 = vrot.lane.b32.xlu0 %v277, 122
      %v283 = vpop.permute.xlu0 %282
      %284 = vrot.lane.b32.xlu0 %v278, 122
      %v285 = vpop.permute.xlu0 %284
      %286 = vrot.lane.b32.xlu0 %v279, 122
      %v287 = vpop.permute.xlu0 %286
      %vm288 = vcmask 998400
      %v289 = vsel %vm288, %v281, %v283
      %v290 = vsel %vm288, %v285, %v287
      %293 = vst [vmem:[#allocation2 + $0x30] sm:$0xff] %v289
      %294 = vst [vmem:[#allocation2 + $0x38] sm:$0xff] %v290
      %v295 = vld [vmem:[%s165] sm:$0xff]
      %v296 = vld [vmem:[%s165 + $0x8] sm:$0xff]
      %v297 = vld [vmem:[%s165 + $0x10] sm:$0xff]
      %v298 = vld [vmem:[%s165 + $0x18] sm:$0xff]
      %v303 = vunpack.c.l.b16 %v295
      %v304 = vunpack.c.h.b16 %v295
      %v305 = vunpack.c.l.b16 %v296
      %v306 = vunpack.c.h.b16 %v296
      %v307 = vunpack.c.l.b16 %v297
      %v308 = vunpack.c.h.b16 %v297
      %v309 = vunpack.c.l.b16 %v298
      %v310 = vunpack.c.h.b16 %v298
      %v311 = vpack.c.b16 %v305, %v303
      %v312 = vpack.c.b16 %v306, %v304
      %v313 = vpack.c.b16 %v309, %v307
      %v314 = vpack.c.b16 %v310, %v308
      %315 = vrot.lane.b32.xlu0 %v311, 121
      %v316 = vpop.permute.xlu0 %315
      %317 = vrot.lane.b32.xlu0 %v312, 121
      %v318 = vpop.permute.xlu0 %317
      %319 = vrot.lane.b32.xlu0 %v313, 121
      %v320 = vpop.permute.xlu0 %319
      %321 = vrot.lane.b32.xlu0 %v314, 121
      %v322 = vpop.permute.xlu0 %321
      %vm323 = vcmask 990208
      %v324 = vsel %vm323, %v316, %v318
      %v325 = vsel %vm323, %v320, %v322
      %328 = vst [vmem:[#allocation2 + $0x40] sm:$0xff] %v324
      %329 = vst [vmem:[#allocation2 + $0x48] sm:$0xff] %v325
      %v330 = vld [vmem:[%s165] sm:$0xff]
      %v331 = vld [vmem:[%s165 + $0x8] sm:$0xff]
      %v332 = vld [vmem:[%s165 + $0x10] sm:$0xff]
      %v333 = vld [vmem:[%s165 + $0x18] sm:$0xff]
      %v338 = vunpack.c.l.b16 %v330
      %v339 = vunpack.c.h.b16 %v330
      %v340 = vunpack.c.l.b16 %v331
      %v341 = vunpack.c.h.b16 %v331
      %v342 = vunpack.c.l.b16 %v332
      %v343 = vunpack.c.h.b16 %v332
      %v344 = vunpack.c.l.b16 %v333
      %v345 = vunpack.c.h.b16 %v333
      %v346 = vpack.c.b16 %v340, %v338
      %v347 = vpack.c.b16 %v341, %v339
      %v348 = vpack.c.b16 %v344, %v342
      %v349 = vpack.c.b16 %v345, %v343
      %350 = vrot.lane.b32.xlu0 %v346, 120
      %v351 = vpop.permute.xlu0 %350
      %352 = vrot.lane.b32.xlu0 %v347, 120
      %v353 = vpop.permute.xlu0 %352
      %354 = vrot.lane.b32.xlu0 %v348, 120
      %v355 = vpop.permute.xlu0 %354
      %356 = vrot.lane.b32.xlu0 %v349, 120
      %v357 = vpop.permute.xlu0 %356
      %vm358 = vcmask 982016
      %v359 = vsel %vm358, %v351, %v353
      %v360 = vsel %vm358, %v355, %v357
      %363 = vst [vmem:[#allocation2 + $0x50] sm:$0xff] %v359
      %364 = vst [vmem:[#allocation2 + $0x58] sm:$0xff] %v360
      %v365 = vld [vmem:[%s165] sm:$0xff]
      %v366 = vld [vmem:[%s165 + $0x8] sm:$0xff]
      %v367 = vld [vmem:[%s165 + $0x10] sm:$0xff]
      %v368 = vld [vmem:[%s165 + $0x18] sm:$0xff]
      %v373 = vunpack.c.l.b16 %v365
      %v374 = vunpack.c.h.b16 %v365
      %v375 = vunpack.c.l.b16 %v366
      %v376 = vunpack.c.h.b16 %v366
      %v377 = vunpack.c.l.b16 %v367
      %v378 = vunpack.c.h.b16 %v367
      %v379 = vunpack.c.l.b16 %v368
      %v380 = vunpack.c.h.b16 %v368
      %v381 = vpack.c.b16 %v375, %v373
      %v382 = vpack.c.b16 %v376, %v374
      %v383 = vpack.c.b16 %v379, %v377
      %v384 = vpack.c.b16 %v380, %v378
      %385 = vrot.lane.b32.xlu0 %v381, 116
      %v386 = vpop.permute.xlu0 %385
      %387 = vrot.lane.b32.xlu0 %v382, 116
      %v388 = vpop.permute.xlu0 %387
      %389 = vrot.lane.b32.xlu0 %v383, 116
      %v390 = vpop.permute.xlu0 %389
      %391 = vrot.lane.b32.xlu0 %v384, 116
      %v392 = vpop.permute.xlu0 %391
      %vm393 = vcmask 949248
      %v394 = vsel %vm393, %v386, %v388
      %v395 = vsel %vm393, %v390, %v392
      %398 = vst [vmem:[#allocation2 + $0x60] sm:$0xff] %v394
      %399 = vst [vmem:[#allocation2 + $0x68] sm:$0xff] %v395
      %v400 = vld [vmem:[%s165] sm:$0xff]
      %v401 = vld [vmem:[%s165 + $0x8] sm:$0xff]
      %v402 = vld [vmem:[%s165 + $0x10] sm:$0xff]
      %v403 = vld [vmem:[%s165 + $0x18] sm:$0xff]
      %v408 = vunpack.c.l.b16 %v400
      %v409 = vunpack.c.h.b16 %v400
      %v410 = vunpack.c.l.b16 %v401
      %v411 = vunpack.c.h.b16 %v401
      %v412 = vunpack.c.l.b16 %v402
      %v413 = vunpack.c.h.b16 %v402
      %v414 = vunpack.c.l.b16 %v403
      %v415 = vunpack.c.h.b16 %v403
      %v416 = vpack.c.b16 %v410, %v408
      %v417 = vpack.c.b16 %v411, %v409
      %v418 = vpack.c.b16 %v414, %v412
      %v419 = vpack.c.b16 %v415, %v413
      %420 = vrot.lane.b32.xlu0 %v416, 115
      %v421 = vpop.permute.xlu0 %420
      %422 = vrot.lane.b32.xlu0 %v417, 115
      %v423 = vpop.permute.xlu0 %422
      %424 = vrot.lane.b32.xlu0 %v418, 115
      %v425 = vpop.permute.xlu0 %424
      %426 = vrot.lane.b32.xlu0 %v419, 115
      %v427 = vpop.permute.xlu0 %426
      %vm428 = vcmask 941056
      %v429 = vsel %vm428, %v421, %v423
      %v430 = vsel %vm428, %v425, %v427
      %433 = vst [vmem:[#allocation2 + $0x70] sm:$0xff] %v429
      %434 = vst [vmem:[#allocation2 + $0x78] sm:$0xff] %v430
      %v435 = vld [vmem:[%s165] sm:$0xff]
      %v436 = vld [vmem:[%s165 + $0x8] sm:$0xff]
      %v437 = vld [vmem:[%s165 + $0x10] sm:$0xff]
      %v438 = vld [vmem:[%s165 + $0x18] sm:$0xff]
      %v443 = vunpack.c.l.b16 %v435
      %v444 = vunpack.c.h.b16 %v435
      %v445 = vunpack.c.l.b16 %v436
      %v446 = vunpack.c.h.b16 %v436
      %v447 = vunpack.c.l.b16 %v437
      %v448 = vunpack.c.h.b16 %v437
      %v449 = vunpack.c.l.b16 %v438
      %v450 = vunpack.c.h.b16 %v438
      %v451 = vpack.c.b16 %v445, %v443
      %v452 = vpack.c.b16 %v446, %v444
      %v453 = vpack.c.b16 %v449, %v447
      %v454 = vpack.c.b16 %v450, %v448
      %455 = vrot.lane.b32.xlu0 %v451, 114
      %v456 = vpop.permute.xlu0 %455
      %457 = vrot.lane.b32.xlu0 %v452, 114
      %v458 = vpop.permute.xlu0 %457
      %459 = vrot.lane.b32.xlu0 %v453, 114
      %v460 = vpop.permute.xlu0 %459
      %461 = vrot.lane.b32.xlu0 %v454, 114
      %v462 = vpop.permute.xlu0 %461
      %vm463 = vcmask 932864
      %v464 = vsel %vm463, %v456, %v458
      %v465 = vsel %vm463, %v460, %v462
      %468 = vst [vmem:[#allocation2 + $0x80] sm:$0xff] %v464
      %469 = vst [vmem:[#allocation2 + $0x88] sm:$0xff] %v465
      %v470 = vld [vmem:[%s1] sm:$0xff]
      %v471 = vld [vmem:[%s1 + $0x8] sm:$0xf]
      %v472 = vld [vmem:[%s1 + $0xc] sm:$0xff]
      %v473 = vld [vmem:[%s1 + $0x14] sm:$0xf]
      %v474 = vld [vmem:[%s1 + $0x18] sm:$0xff]
      %v475 = vld [vmem:[%s1 + $0x20] sm:$0xf]
      %v476 = vld [vmem:[%s1 + $0x24] sm:$0xff]
      %v477 = vld [vmem:[%s1 + $0x2c] sm:$0xf]
      %v478 = vld [vmem:[#allocation2] sm:$0xff]
      %v479 = vld [vmem:[#allocation2 + $0x8] sm:$0xff]
      %v480 = vld [vmem:[#allocation2 + $0x10] sm:$0xff]
      %v481 = vld [vmem:[#allocation2 + $0x18] sm:$0xff]
      %v482 = vld [vmem:[#allocation2 + $0x20] sm:$0xff]
      %v483 = vld [vmem:[#allocation2 + $0x28] sm:$0xff]
      %v484 = vld [vmem:[#allocation2 + $0x30] sm:$0xff]
      %v485 = vld [vmem:[#allocation2 + $0x38] sm:$0xff]
      %v486 = vld [vmem:[#allocation2 + $0x40] sm:$0xff]
      %v487 = vld [vmem:[#allocation2 + $0x48] sm:$0xff]
      %v488 = vld [vmem:[#allocation2 + $0x50] sm:$0xff]
      %v489 = vld [vmem:[#allocation2 + $0x58] sm:$0xff]
      %v490 = vld [vmem:[#allocation2 + $0x60] sm:$0xff]
      %v491 = vld [vmem:[#allocation2 + $0x68] sm:$0xff]
      %v492 = vld [vmem:[#allocation2 + $0x70] sm:$0xff]
      %v493 = vld [vmem:[#allocation2 + $0x78] sm:$0xff]
      %v494 = vld [vmem:[#allocation2 + $0x80] sm:$0xff]
      %v495 = vld [vmem:[#allocation2 + $0x88] sm:$0xff]
      %v496 = vld [vmem:[%s2] sm:$0xff]
      %v497 = vld [vmem:[%s2 + $0x8] sm:$0xff]
      %v498 = vld [vmem:[%s2 + $0x10] sm:$0xff]
      %v499 = vld [vmem:[%s2 + $0x18] sm:$0xff]
      %501 = vset.pattern.permute.xlu0 0
      %502 = vperm.xlu0 %501, %v496
      %v503 = vpop.permute.xlu0 %502
      %506 = vset.pattern.permute.xlu0 0
      %507 = vperm.xlu0 %506, %v497
      %v508 = vpop.permute.xlu0 %507
      %511 = vset.pattern.permute.xlu0 0
      %512 = vperm.xlu0 %511, %v498
      %v513 = vpop.permute.xlu0 %512
      %516 = vset.pattern.permute.xlu0 0
      %517 = vperm.xlu0 %516, %v499
      %v518 = vpop.permute.xlu0 %517
      %v528 = vunpack.c.l.b16 %v470
      %v529 = vunpack.c.h.b16 %v470
      %v530 = vunpack.c.l.b16 %v471
      %v531 = vunpack.c.l.b16 %v472
      %v532 = vunpack.c.h.b16 %v472
      %v533 = vunpack.c.l.b16 %v473
      %v534 = vunpack.c.l.b16 %v474
      %v535 = vunpack.c.h.b16 %v474
      %v536 = vunpack.c.l.b16 %v475
      %v537 = vunpack.c.l.b16 %v476
      %v538 = vunpack.c.h.b16 %v476
      %v539 = vunpack.c.l.b16 %v477
      %v540 = vpack.c.b16 %v531, %v528
      %v541 = vpack.c.b16 %v532, %v529
      %v542 = vpack.c.b16 %v533, %v530
      %v543 = vpack.c.b16 %v537, %v534
      %v544 = vpack.c.b16 %v538, %v535
      %v545 = vpack.c.b16 %v539, %v536
      %vm550 = vcmask 261120
      %v552 = vsel %vm550, %v542, 0
      %v555 = vsel %vm550, %v545, 0
      %557 = vmatprep.subr.bf16.mxu0 0
      %558 = vmatpush1.bf16.msra.mxu0 %v478
      %559 = vmatprep.subr.bf16.mxu0 0
      %560 = vmatpush1.bf16.msra.mxu0 %v479
      %561 = vmatprep.subr.bf16.mxu0 0
      %562 = vmatpush1.bf16.msra.mxu0 %v480
      %563 = vmatprep.subr.bf16.mxu0 0
      %564 = vmatpush1.bf16.msra.mxu0 %v481
      %565 = vmatprep.subr.bf16.mxu0 0
      %566 = vmatpush1.bf16.msra.mxu0 %v482
      %567 = vmatprep.subr.bf16.mxu0 0
      %568 = vmatpush1.bf16.msra.mxu0 %v483
      %569 = vmatprep.subr.bf16.mxu0 0
      %570 = vmatpush1.bf16.msra.mxu0 %v484
      %571 = vmatprep.subr.bf16.mxu0 0
      %572 = vmatpush1.bf16.msra.mxu0 %v485
      %573 = vmatprep.subr.bf16.mxu0 0
      %574 = vmatpush1.bf16.msra.mxu0 %v486
      %575 = vmatprep.subr.bf16.mxu0 0
      %576 = vmatpush1.bf16.msra.mxu0 %v487
      %577 = vmatprep.subr.bf16.mxu0 0
      %578 = vmatpush1.bf16.msra.mxu0 %v488
      %579 = vmatprep.subr.bf16.mxu0 0
      %580 = vmatpush1.bf16.msra.mxu0 %v489
      %581 = vmatprep.subr.bf16.mxu0 0
      %582 = vmatpush1.bf16.msra.mxu0 %v490
      %583 = vmatprep.subr.bf16.mxu0 0
      %584 = vmatpush1.bf16.msra.mxu0 %v491
      %585 = vmatprep.subr.bf16.mxu0 0
      %586 = vmatpush1.bf16.msra.mxu0 %v492
      %587 = vmatprep.subr.bf16.mxu0 0
      %588 = vmatpush1.bf16.msra.mxu0 %v493
      %589 = vmatprep.mubr.bf16.mxu0 %v541
      %590 = vmatmul.mubr.bf16.gmra.mrb[0].mxu0 %v540
      %v591 = vpop.f32.mrb[0].mxu0
      %v592 = vadd.f32 %v503, %v591
      %v593 = vpop.f32.mrb[0].mxu0
      %v594 = vpop.f32.mrb[0].mxu0
      %v595 = vadd.f32 %v508, %v594
      %v596 = vpop.f32.mrb[0].mxu0
      %597 = vmatprep.mubr.bf16.mxu0 %v544
      %598 = vmatmul.mubr.bf16.gmra.mrb[0].mxu0 %v543
      %v599 = vpop.f32.mrb[0].mxu0
      %v600 = vadd.f32 %v513, %v599
      %v601 = vpop.f32.mrb[0].mxu0
      %v602 = vpop.f32.mrb[0].mxu0
      %v603 = vadd.f32 %v518, %v602
      %v604 = vpop.f32.mrb[0].mxu0
      %605 = vdwg.mxu0
      %606 = vmatprep.subr.bf16.mxu0 0
      %607 = vmatpush1.bf16.msra.mxu0 %v494
      %608 = vmatprep.subr.bf16.mxu0 0
      %609 = vmatpush1.bf16.msra.mxu0 %v495
      %610 = vmatprep.subr.bf16.mxu0 0
      %611 = vmatpush1.bf16.msra.mxu0 0
      %612 = vmatprep.subr.bf16.mxu0 0
      %613 = vmatpush1.bf16.msra.mxu0 0
      %614 = vmatprep.subr.bf16.mxu0 0
      %615 = vmatpush1.bf16.msra.mxu0 0
      %616 = vmatprep.subr.bf16.mxu0 0
      %617 = vmatpush1.bf16.msra.mxu0 0
      %618 = vmatprep.subr.bf16.mxu0 0
      %619 = vmatpush1.bf16.msra.mxu0 0
      %620 = vmatprep.subr.bf16.mxu0 0
      %621 = vmatpush1.bf16.msra.mxu0 0
      %622 = vmatprep.subr.bf16.mxu0 0
      %623 = vmatpush1.bf16.msra.mxu0 0
      %624 = vmatprep.subr.bf16.mxu0 0
      %625 = vmatpush1.bf16.msra.mxu0 0
      %626 = vmatprep.subr.bf16.mxu0 0
      %627 = vmatpush1.bf16.msra.mxu0 0
      %628 = vmatprep.subr.bf16.mxu0 0
      %629 = vmatpush1.bf16.msra.mxu0 0
      %630 = vmatprep.subr.bf16.mxu0 0
      %631 = vmatpush1.bf16.msra.mxu0 0
      %632 = vmatprep.subr.bf16.mxu0 0
      %633 = vmatpush1.bf16.msra.mxu0 0
      %634 = vmatprep.subr.bf16.mxu0 0
      %635 = vmatpush1.bf16.msra.mxu0 0
      %636 = vmatprep.subr.bf16.mxu0 0
      %637 = vmatpush1.bf16.msra.mxu0 0
      %638 = vmatprep.mubr.bf16.mxu0 0
      %639 = vmatmul.mubr.bf16.gmra.mrb[0].mxu0 %v552
      %v640 = vpop.f32.mrb[0].mxu0
      %v641 = vadd.f32 %v592, %v640
      %v642 = vpop.f32.mrb[0].mxu0
      %v643 = vpop.f32.mrb[0].mxu0
      %v644 = vadd.f32 %v595, %v643
      %v645 = vpop.f32.mrb[0].mxu0
      %646 = vmatprep.mubr.bf16.mxu0 0
      %647 = vmatmul.mubr.bf16.gmra.mrb[0].mxu0 %v555
      %v648 = vpop.f32.mrb[0].mxu0
      %v649 = vadd.f32 %v600, %v648
      %v650 = vpop.f32.mrb[0].mxu0
      %v651 = vpop.f32.mrb[0].mxu0
      %v652 = vadd.f32 %v603, %v651
      %v653 = vpop.f32.mrb[0].mxu0
      %654 = vdwg.mxu0
      %v655 = vlaneseq
      %v656 = vand.u32 %v655, 127
      %vm657 = vcmp.lt.s32.totalorder %v656, 0
      %v658 = vsub.s32 0, %v656
      %v659 = vsel %vm657, %v658, %v656
      %v660 = vmul.u32.u64.compose %v659, 2863311531
      %v661 = vextract.low.u32 %v660
      %v662 = vextract.high.u32 %v660
      %v663 = vshrl.u32 %v662, 2
      %v664 = vmul.u32 %v663, 6
      %v665 = vsub.s32 %v659, %v664
      %v666 = vsub.s32 0, %v665
      %v667 = vsel %vm657, %v666, %v665
      %vm668 = vcmp.ne.s32.totalorder %v667, 0
      %vm669 = vcmp.lt.s32.totalorder %v667, 0
      %vm670 = vmand %vm669, %vm668
      %v671 = vadd.s32 %v667, 6
      %v672 = vsel %vm670, %v671, %v667
      %vm673 = vcmp.lt.s32.totalorder %v672, 4
      %vm674 = vcmp.lt.s32.totalorder %v656, 22
      %vm675 = vmand %vm673, %vm674
      %v676 = vsel %vm675, 1, 0
      %v677 = vcvt.s32.f32 %v676
      %v678 = vmul.f32 %v641, %v677
      %v679 = vmul.f32 %v644, %v677
      %v680 = vmul.f32 %v649, %v677
      %v681 = vmul.f32 %v652, %v677
      %682 = vadd.xlane.f32.xlu0 %v678
      %v683 = vpop.xlane.xlu0 %682
      %684 = vadd.xlane.f32.xlu0 %v679
      %v685 = vpop.xlane.xlu0 %684
      %686 = vadd.xlane.f32.xlu0 %v680
      %v687 = vpop.xlane.xlu0 %686
      %688 = vadd.xlane.f32.xlu0 %v681
      %v689 = vpop.xlane.xlu0 %688
      %v690 = vmul.f32 %v641, %v678
      %v691 = vmul.f32 %v644, %v679
      %v692 = vmul.f32 %v649, %v680
      %v693 = vmul.f32 %v652, %v681
      %694 = vadd.xlane.f32.xlu0 %v690
      %v695 = vpop.xlane.xlu0 %694
      %696 = vadd.xlane.f32.xlu0 %v691
      %v697 = vpop.xlane.xlu0 %696
      %698 = vadd.xlane.f32.xlu0 %v692
      %v699 = vpop.xlane.xlu0 %698
      %700 = vadd.xlane.f32.xlu0 %v693
      %v701 = vpop.xlane.xlu0 %700
      %v702 = vmul.f32 %v683, 0.0625
      %v703 = vmul.f32 %v685, 0.0625
      %v704 = vmul.f32 %v687, 0.0625
      %v705 = vmul.f32 %v689, 0.0625
      %v706 = vmul.f32 %v695, 0.0625
      %v707 = vmul.f32 %v697, 0.0625
      %v708 = vmul.f32 %v699, 0.0625
      %v709 = vmul.f32 %v701, 0.0625
      %v710 = vmul.f32 %v702, %v702
      %v711 = vmul.f32 %v703, %v703
      %v712 = vmul.f32 %v704, %v704
      %v713 = vmul.f32 %v705, %v705
      %v714 = vsub.f32 %v706, %v710
      %v715 = vsub.f32 %v707, %v711
      %v716 = vsub.f32 %v708, %v712
      %v717 = vsub.f32 %v709, %v713
      %v718 = vmax.f32 %v714, 0.0
      %v719 = vmax.f32 %v715, 0.0
      %v720 = vmax.f32 %v716, 0.0
      %v721 = vmax.f32 %v717, 0.0
      %v722 = vadd.f32 %v718, 1e-05
      %v723 = vadd.f32 %v719, 1e-05
      %v724 = vadd.f32 %v720, 1e-05
      %v725 = vadd.f32 %v721, 1e-05
      %v726 = vrsqrt.pop %v722
      %v727 = vrsqrt.pop %v723
      %v728 = vrsqrt.pop %v724
      %v729 = vrsqrt.pop %v725
      %v730 = vsub.f32 %v641, %v702
      %v731 = vsub.f32 %v644, %v703
      %v732 = vsub.f32 %v649, %v704
      %v733 = vsub.f32 %v652, %v705
      %v734 = vmul.f32 %v730, %v726
      %v735 = vmul.f32 %v731, %v727
      %v736 = vmul.f32 %v732, %v728
      %v737 = vmul.f32 %v733, %v729
      %v738 = vmax.f32 %v734, 0.0
      %v739 = vmax.f32 %v735, 0.0
      %v740 = vmax.f32 %v736, 0.0
      %v741 = vmax.f32 %v737, 0.0
      %v742 = vpack.c.bf16 %v739, %v738
      %v743 = vpack.c.bf16 %v741, %v740
      %v746 = vunpack.c.l.b16 %v742
      %v747 = vunpack.c.h.b16 %v742
      %v748 = vunpack.c.l.b16 %v743
      %v749 = vunpack.c.h.b16 %v743
      %v750 = vpack.c.b16 %v746, %v746
      %v751 = vpack.c.b16 %v747, %v747
      %v752 = vpack.c.b16 %v748, %v748
      %v753 = vpack.c.b16 %v749, %v749
      %758 = vst [vmem:[%s170] sm:$0xf] %v750
      %759 = vst [vmem:[%s170 + $0x4] sm:$0xf] %v751
      %760 = vst [vmem:[%s170 + $0x8] sm:$0xf] %v752
      %761 = vst [vmem:[%s170 + $0xc] sm:$0xf] %v753
      %p762 = scmp.lt.s32.totalorder %s14, 1
      %s763 = scalar_select %p762, %s14, 1
      %s764 = smul.addr %s763, 4
      %s765 = smul.addr %s764, 4
      %s766 = scalar_lea.vmem %s3, %s765
      // Predicated region
      $region33: #{cyclegan_generator_forward.13} parent=31 // pred_check
        %p767 = pneg %p100
      $region34: #{cyclegan_generator_forward.13} parent=31 // pred_check_branch
        %769 = sbr.rel (%p767) target = $region36
      $region35: #{cyclegan_generator_forward.13} parent=31 // pred_region
        _
      $region36: #{cyclegan_generator_forward.13} parent=31 // pred_fallthru
        _
    $region32: #{cyclegan_generator_forward.13} parent=5 // pred_fallthru
      _
    %p770 = scmp.le.s32.totalorder 2, %s9
    // Predicated region
    $region37: #{cyclegan_generator_forward.13} parent=5 // pred_check
      %p771 = pneg %p770
    $region38: #{cyclegan_generator_forward.13} parent=5 // pred_check_branch
      %773 = sbr.rel (%p771) target = $region40
    $region39: #{cyclegan_generator_forward.13} parent=5 // pred_region
      %s774 = ssub.s32 %s9, 2
      // Predicated region
      $region41: #{cyclegan_generator_forward.13} parent=39 // pred_check
        %p775 = pneg %p106
      $region42: #{cyclegan_generator_forward.13} parent=39 // pred_check_branch
        %777 = sbr.rel (%p775) target = $region44
      $region43: #{cyclegan_generator_forward.13} parent=39 // pred_region
        %p778 = scmp.lt.s32.totalorder %s15, 1
        %s779 = scalar_select %p778, %s15, 1
        %s780 = smul.addr %s779, 4
        %s781 = smul.addr %s780, 4
        %s782 = scalar_lea.vmem %s3, %s781
      $region44: #{cyclegan_generator_forward.13} parent=39 // pred_fallthru
        _
    $region40: #{cyclegan_generator_forward.13} parent=5 // pred_fallthru
      _
  $region6: #{cyclegan_generator_forward.13} parent=0 // loop_footer
    %s13 = sadd.s32 1, %s9
  $region7: #{cyclegan_generator_forward.13} parent=0 // loop_footer_branch
    %8 = sbr.rel target = $region3
  $region8: #{cyclegan_generator_forward.13} parent=0 // loop_exit
    _

// kernel: tile.13
$region0: #{tile.13}
  #allocation0 [shape = 's32[1]{0}', space=sflag, size = 0x4, scoped, tag = 'scoped memory for tile.13']
  %s0 = inlined_call_operand.vmem [shape: f32[16], index: 0, kind: input, shape index: {}]
  %s1 = inlined_call_operand.vmem [shape: f32[4,16], index: 1, kind: output, shape index: {}]
  // Predicated region
  $region2: #{tile.13} parent=0 // pred_check
    _
  $region3: #{tile.13} parent=0 // pred_check_branch
    %3 = sbr.rel (0) target = $region5
  $region4: #{tile.13} parent=0 // pred_region
    _
  $region5: #{tile.13} parent=0 // pred_fallthru
    _
  %v4 = vld [vmem:[%s0] ss:$0 sm:$0xff]
  %5 = vst [vmem:[%s1] sm:$0xf] %v4

// kernel: tile.0
$region0: #{tile.0}
  %s0 = inlined_call_operand.vmem [shape: f32[4,16], index: 0, kind: input, shape index: {}]
  %s1 = inlined_call_operand.vmem [shape: f32[64,1], index: 1, kind: output, shape index: {}]
  $region1: #{tile.0} parent=0
    #allocation0 [shape = 'u8[4096]{0}', space=vmem, size = 0x1000, scoped, tag = 'scoped mem for input reshape']
    %s3 = sshllo.u32 0, 4
    %v4 = vld [vmem:[%s0] sm:%s3]
    %5 = vst [vmem:[#allocation0] sm:%s3] %v4
    %v6 = vld [vmem:[#allocation0] sm:$0xf]
    %vm7 = vcmask 7168
    %8 = vst.msk [vmem:[%s1] ss:$16 sm:$0x3] %vm7, %v6
    %9 = vst.msk [vmem:[%s1] ss:$16 sm:$0xc] %vm7, %v6
    %v10 = vld [vmem:[#allocation0] sm:$0xf]
    %11 = vrot.lane.b32.xlu0 %v10, 127
    %v12 = vpop.permute.xlu0 %11
    %vm13 = vcmask 7168
    %s14 = scalar_lea.vmem %s1, 1
    %15 = vst.msk [vmem:[%s14] ss:$16 sm:$0x3] %vm13, %v12
    %s16 = scalar_lea.vmem %s1, 1
    %17 = vst.msk [vmem:[%s16] ss:$16 sm:$0xc] %vm13, %v12
    %v18 = vld [vmem:[#allocation0] sm:$0xf]
    %19 = vrot.lane.b32.xlu0 %v18, 126
    %v20 = vpop.permute.xlu0 %19
    %vm21 = vcmask 7168
    %s22 = scalar_lea.vmem %s1, 2
    %23 = vst.msk [vmem:[%s22] ss:$16 sm:$0x3] %vm21, %v20
    %s24 = scalar_lea.vmem %s1, 2
    %25 = vst.msk [vmem:[%s24] ss:$16 sm:$0xc] %vm21, %v20
    %v26 = vld [vmem:[#allocation0] sm:$0xf]
    %27 = vrot.lane.b32.xlu0 %v26, 125
    %v28 = vpop.permute.xlu0 %27
    %vm29 = vcmask 7168
    %s30 = scalar_lea.vmem %s1, 3
    %31 = vst.msk [vmem:[%s30] ss:$16 sm:$0x3] %vm29, %v28
    %s32 = scalar_lea.vmem %s1, 3
    %33 = vst.msk [vmem:[%s32] ss:$16 sm:$0xc] %vm29, %v28
    %v34 = vld [vmem:[#allocation0] sm:$0xf]
    %35 = vrot.lane.b32.xlu0 %v34, 124
    %v36 = vpop.permute.xlu0 %35
    %vm37 = vcmask 7168
    %s38 = scalar_lea.vmem %s1, 4
    %39 = vst.msk [vmem:[%s38] ss:$16 sm:$0x3] %vm37, %v36
    %s40 = scalar_lea.vmem %s1, 4
    %41 = vst.msk [vmem:[%s40] ss:$16 sm:$0xc] %vm37, %v36
    %v42 = vld [vmem:[#allocation0] sm:$0xf]
    %43 = vrot.lane.b32.xlu0 %v42, 123
    %v44 = vpop.permute.xlu0 %43
    %vm45 = vcmask 7168
    %s46 = scalar_lea.vmem %s1, 5
    %47 = vst.msk [vmem:[%s46] ss:$16 sm:$0x3] %vm45, %v44
    %s48 = scalar_lea.vmem %s1, 5
    %49 = vst.msk [vmem:[%s48] ss:$16 sm:$0xc] %vm45, %v44
    %v50 = vld [vmem:[#allocation0] sm:$0xf]
    %51 = vrot.lane.b32.xlu0 %v50, 122
    %v52 = vpop.permute.xlu0 %51
    %vm53 = vcmask 7168
    %s54 = scalar_lea.vmem %s1, 6
    %55 = vst.msk [vmem:[%s54] ss:$16 sm:$0x3] %vm53, %v52
    %s56 = scalar_lea.vmem %s1, 6
    %57 = vst.msk [vmem:[%s56] ss:$16 sm:$0xc] %vm53, %v52
    %v58 = vld [vmem:[#allocation0] sm:$0xf]
    %59 = vrot.lane.b32.xlu0 %v58, 121
    %v60 = vpop.permute.xlu0 %59
    %vm61 = vcmask 7168
    %s62 = scalar_lea.vmem %s1, 7
    %63 = vst.msk [vmem:[%s62] ss:$16 sm:$0x3] %vm61, %v60
    %s64 = scalar_lea.vmem %s1, 7
    %65 = vst.msk [vmem:[%s64] ss:$16 sm:$0xc] %vm61, %v60
    %v66 = vld [vmem:[#allocation0] sm:$0xf]
    %67 = vrot.lane.b32.xlu0 %v66, 120
    %v68 = vpop.permute.xlu0 %67
    %vm69 = vcmask 7168
    %s70 = scalar_lea.vmem %s1, 8
    %71 = vst.msk [vmem:[%s70] ss:$16 sm:$0x3] %vm69, %v68
    %s72 = scalar_lea.vmem %s1, 8
    %73 = vst.msk [vmem:[%s72] ss:$16 sm:$0xc] %vm69, %v68
    %v74 = vld [vmem:[#allocation0] sm:$0xf]
    %75 = vrot.lane.b32.xlu0 %v74, 119
    %v76 = vpop.permute.xlu0 %75
    %vm77 = vcmask 7168
    %s78 = scalar_lea.vmem %s1, 9
    %79 = vst.msk [vmem:[%s78] ss:$16 sm:$0x3] %vm77, %v76
    %s80 = scalar_lea.vmem %s1, 9
    %81 = vst.msk [vmem:[%s80] ss:$16 sm:$0xc] %vm77, %v76
    %v82 = vld [vmem:[#allocation0] sm:$0xf]
    %83 = vrot.lane.b32.xlu0 %v82, 118
    %v84 = vpop.permute.xlu0 %83
    %vm85 = vcmask 7168
    %s86 = scalar_lea.vmem %s1, 10
    %87 = vst.msk [vmem:[%s86] ss:$16 sm:$0x3] %vm85, %v84
    %s88 = scalar_lea.vmem %s1, 10
    %89 = vst.msk [vmem:[%s88] ss:$16 sm:$0xc] %vm85, %v84
    %v90 = vld [vmem:[#allocation0] sm:$0xf]
    %91 = vrot.lane.b32.xlu0 %v90, 117
    %v92 = vpop.permute.xlu0 %91
    %vm93 = vcmask 7168
    %s94 = scalar_lea.vmem %s1, 11
    %95 = vst.msk [vmem:[%s94] ss:$16 sm:$0x3] %vm93, %v92
    %s96 = scalar_lea.vmem %s1, 11
    %97 = vst.msk [vmem:[%s96] ss:$16 sm:$0xc] %vm93, %v92
    %v98 = vld [vmem:[#allocation0] sm:$0xf]
    %99 = vrot.lane.b32.xlu0 %v98, 116
    %v100 = vpop.permute.xlu0 %99
    %vm101 = vcmask 7168
    %s102 = scalar_lea.vmem %s1, 12
    %103 = vst.msk [vmem:[%s102] ss:$16 sm:$0x3] %vm101, %v100
    %s104 = scalar_lea.vmem %s1, 12
    %105 = vst.msk [vmem:[%s104] ss:$16 sm:$0xc] %vm101, %v100
    %v106 = vld [vmem:[#allocation0] sm:$0xf]
    %107 = vrot.lane.b32.xlu0 %v106, 115
    %v108 = vpop.permute.xlu0 %107
    %vm109 = vcmask 7168
    %s110 = scalar_lea.vmem %s1, 13
    %111 = vst.msk [vmem:[%s110] ss:$16 sm:$0x3] %vm109, %v108
    %s112 = scalar_lea.vmem %s1, 13
    %113 = vst.msk [vmem:[%s112] ss:$16 sm:$0xc] %vm109, %v108
    %v114 = vld [vmem:[#allocation0] sm:$0xf]
    %115 = vrot.lane.b32.xlu0 %v114, 114
    %v116 = vpop.permute.xlu0 %115
    %vm117 = vcmask 7168
    %s118 = scalar_lea.vmem %s1, 14
    %119 = vst.msk [vmem:[%s118] ss:$16 sm:$0x3] %vm117, %v116
    %s120 = scalar_lea.vmem %s1, 14
    %121 = vst.msk [vmem:[%s120] ss:$16 sm:$0xc] %vm117, %v116
    %v122 = vld [vmem:[#allocation0] sm:$0xf]
    %123 = vrot.lane.b32.xlu0 %v122, 113
    %v124 = vpop.permute.xlu0 %123
    %vm125 = vcmask 7168
    %s126 = scalar_lea.vmem %s1, 15
    %127 = vst.msk [vmem:[%s126] ss:$16 sm:$0x3] %vm125, %v124
    %s128 = scalar_lea.vmem %s1, 15
    %129 = vst.msk [vmem:[%s128] ss:$16 sm:$0xc] %vm125, %v124

// kernel: cyclegan_generator_forward.14
$region0: #{cyclegan_generator_forward.14}
  #allocation0 [shape = 'u32[]', space=smem, size = 0x4, offset = 0x4, fixed_abs, tag = 'smem constant byte address 0x4 - core index']
  #allocation1 [shape = 'u32[144,128]{1,0:T(1,128)}', space=vmem, size = 0x12000, scoped, tag = 'internal scratch']
  #allocation2 [shape = 'bf16[288,128]{1,0:T(16,128)(2,1)}', space=vmem, size = 0x12000, scoped, tag = 'scratch operand']
  %s0 = inlined_call_operand.vmem [shape: bf16[2,32,142], index: 0, kind: input, shape index: {}]
  %s1 = inlined_call_operand.vmem [shape: bf16[32,288], index: 1, kind: input, shape index: {}]
  %s2 = inlined_call_operand.vmem [shape: f32[32,1], index: 2, kind: input, shape index: {}]
  %s3 = inlined_call_operand.vmem [shape: bf16[2,32,128], index: 3, kind: input, shape index: {}]
  %s4 = inlined_call_operand.vmem [shape: bf16[2,32,128], index: 4, kind: output, shape index: {}]
  %s5 = sld [smem:[#allocation0]]
  $region49: #{cyclegan_generator_forward.14} parent=0
    _
  %s7 = ssub.s32 1, %s5
  %s8 = scalar_select 0, %s7, %s5
  loop: start=0, step=1, limit=4
  $region2: #{cyclegan_generator_forward.14} parent=0 // loop_pre_header
    _
  $region3: #{cyclegan_generator_forward.14} parent=0 // loop_header
    %s10 = sphi 0, %s14
    %p11 = scmp.ge.s32.totalorder %s10, 4
    %s20 = sphi 0, %s22
    %s23 = sphi 0, %s20
    %s24 = sphi 0, %s23
    %s40 = sphi 0, %s24
    %s44 = sphi 0, %s44
    %s46 = sphi 0, %s44
    %s47 = sphi 0, %s46
    %s61 = sphi 0, %s47
    %s65 = sphi 0, %s65
    %s67 = sphi 0, %s65
    %s68 = sphi 0, %s67
    %s82 = sphi 0, %s68
    %s88 = sphi 0, %s90
    %s91 = sphi 0, %s88
    %s92 = sphi 0, %s91
    %s108 = sphi 0, %s92
    %s114 = sphi 0, %s116
    %s117 = sphi 0, %s114
    %s118 = sphi 0, %s117
    %s134 = sphi 0, %s118
  $region4: #{cyclegan_generator_forward.14} parent=0 // loop_header_branch
    %13 = sbr.rel (%p11) target = $region8
  $region5: #{cyclegan_generator_forward.14} parent=0 // loop_body
    %s15 = ssub.s32 %s10, 1
    %s16 = ssub.s32 %s10, 2
    %s17 = sadd.s32 %s10, 1
    %s18 = ssub.s32 %s10, %s17
    %p19 = scmp.eq.s32.totalorder %s18, 0
    %s21 = sadd.s32 %s20, 1
    %s22 = scalar_select %p19, %s20, %s21
    %p25 = pneg %p19
    %p26 = scmp.eq.s32.totalorder %s10, 1
    %p27 = por %p25, %p26
    %p28 = scmp.ne.s32.totalorder %s20, %s23
    %p29 = scmp.eq.s32.totalorder %s10, 0
    %p30 = por %p28, %p29
    %p31 = scmp.ne.s32.totalorder %s20, %s23
    %p32 = scmp.eq.s32.totalorder %s15, 1
    %p33 = por %p31, %p32
    %p34 = scmp.ne.s32.totalorder %s23, %s24
    %p35 = scmp.eq.s32.totalorder %s15, 0
    %p36 = por %p34, %p35
    %p37 = scmp.ne.s32.totalorder %s23, %s24
    %p38 = scmp.eq.s32.totalorder %s16, 1
    %p39 = por %p37, %p38
    %p41 = scmp.ne.s32.totalorder %s24, %s40
    %p42 = scmp.eq.s32.totalorder %s16, 0
    %p43 = por %p41, %p42
    %s45 = sadd.s32 %s44, 1
    %p48 = scmp.eq.s32.totalorder %s10, 1
    %p49 = scmp.ne.s32.totalorder %s44, %s46
    %p50 = scmp.eq.s32.totalorder %s10, 0
    %p51 = por %p49, %p50
    %p52 = scmp.ne.s32.totalorder %s44, %s46
    %p53 = scmp.eq.s32.totalorder %s15, 1
    %p54 = por %p52, %p53
    %p55 = scmp.ne.s32.totalorder %s46, %s47
    %p56 = scmp.eq.s32.totalorder %s15, 0
    %p57 = por %p55, %p56
    %p58 = scmp.ne.s32.totalorder %s46, %s47
    %p59 = scmp.eq.s32.totalorder %s16, 1
    %p60 = por %p58, %p59
    %p62 = scmp.ne.s32.totalorder %s47, %s61
    %p63 = scmp.eq.s32.totalorder %s16, 0
    %p64 = por %p62, %p63
    %s66 = sadd.s32 %s65, 1
    %p69 = scmp.eq.s32.totalorder %s10, 1
    %p70 = scmp.ne.s32.totalorder %s65, %s67
    %p71 = scmp.eq.s32.totalorder %s10, 0
    %p72 = por %p70, %p71
    %p73 = scmp.ne.s32.totalorder %s65, %s67
    %p74 = scmp.eq.s32.totalorder %s15, 1
    %p75 = por %p73, %p74
    %p76 = scmp.ne.s32.totalorder %s67, %s68
    %p77 = scmp.eq.s32.totalorder %s15, 0
    %p78 = por %p76, %p77
    %p79 = scmp.ne.s32.totalorder %s67, %s68
    %p80 = scmp.eq.s32.totalorder %s16, 1
    %p81 = por %p79, %p80
    %p83 = scmp.ne.s32.totalorder %s68, %s82
    %p84 = scmp.eq.s32.totalorder %s16, 0
    %p85 = por %p83, %p84
    %s86 = ssub.s32 %s10, %s17
    %p87 = scmp.eq.s32.totalorder %s86, 0
    %s89 = sadd.s32 %s88, 1
    %s90 = scalar_select %p87, %s88, %s89
    %p93 = pneg %p87
    %p94 = scmp.eq.s32.totalorder %s10, 1
    %p95 = por %p93, %p94
    %p96 = scmp.ne.s32.totalorder %s88, %s91
    %p97 = scmp.eq.s32.totalorder %s10, 0
    %p98 = por %p96, %p97
    %p99 = scmp.ne.s32.totalorder %s88, %s91
    %p100 = scmp.eq.s32.totalorder %s15, 1
    %p101 = por %p99, %p100
    %p102 = scmp.ne.s32.totalorder %s91, %s92
    %p103 = scmp.eq.s32.totalorder %s15, 0
    %p104 = por %p102, %p103
    %p105 = scmp.ne.s32.totalorder %s91, %s92
    %p106 = scmp.eq.s32.totalorder %s16, 1
    %p107 = por %p105, %p106
    %p109 = scmp.ne.s32.totalorder %s92, %s108
    %p110 = scmp.eq.s32.totalorder %s16, 0
    %p111 = por %p109, %p110
    %s112 = ssub.s32 %s10, %s17
    %p113 = scmp.eq.s32.totalorder %s112, 0
    %s115 = sadd.s32 %s114, 1
    %s116 = scalar_select %p113, %s114, %s115
    %p119 = pneg %p113
    %p120 = scmp.eq.s32.totalorder %s10, 1
    %p121 = por %p119, %p120
    %p122 = scmp.ne.s32.totalorder %s114, %s117
    %p123 = scmp.eq.s32.totalorder %s10, 0
    %p124 = por %p122, %p123
    %p125 = scmp.ne.s32.totalorder %s114, %s117
    %p126 = scmp.eq.s32.totalorder %s15, 1
    %p127 = por %p125, %p126
    %p128 = scmp.ne.s32.totalorder %s117, %s118
    %p129 = scmp.eq.s32.totalorder %s15, 0
    %p130 = por %p128, %p129
    %p131 = scmp.ne.s32.totalorder %s117, %s118
    %p132 = scmp.eq.s32.totalorder %s16, 1
    %p133 = por %p131, %p132
    %p135 = scmp.ne.s32.totalorder %s118, %s134
    %p136 = scmp.eq.s32.totalorder %s16, 0
    %p137 = por %p135, %p136
    %p138 = scmp.le.s32.totalorder 1, %s10
    %p139 = scmp.lt.s32.totalorder %s10, 3
    %p140 = pnand %p138, %p139
    %p141 = pneg %p140
    // Predicated region
    $region9: #{cyclegan_generator_forward.14} parent=5 // pred_check
      _
    $region10: #{cyclegan_generator_forward.14} parent=5 // pred_check_branch
      %143 = sbr.rel (%p140) target = $region12
    $region11: #{cyclegan_generator_forward.14} parent=5 // pred_region
      %s144 = ssub.s32 %s10, 1
      // Predicated region
      $region13: #{cyclegan_generator_forward.14} parent=11 // pred_check
        %p145 = pneg %p57
      $region14: #{cyclegan_generator_forward.14} parent=11 // pred_check_branch
        %147 = sbr.rel (%p145) target = $region16
      $region15: #{cyclegan_generator_forward.14} parent=11 // pred_region
        _
      $region16: #{cyclegan_generator_forward.14} parent=11 // pred_fallthru
        _
      // Predicated region
      $region17: #{cyclegan_generator_forward.14} parent=11 // pred_check
        %p148 = pneg %p78
      $region18: #{cyclegan_generator_forward.14} parent=11 // pred_check_branch
        %150 = sbr.rel (%p148) target = $region20
      $region19: #{cyclegan_generator_forward.14} parent=11 // pred_region
        _
      $region20: #{cyclegan_generator_forward.14} parent=11 // pred_fallthru
        _
    $region12: #{cyclegan_generator_forward.14} parent=5 // pred_fallthru
      _
    %p151 = scmp.lt.s32.totalorder %s10, 2
    // Predicated region
    $region21: #{cyclegan_generator_forward.14} parent=5 // pred_check
      %p152 = pneg %p151
    $region22: #{cyclegan_generator_forward.14} parent=5 // pred_check_branch
      %154 = sbr.rel (%p152) target = $region24
    $region23: #{cyclegan_generator_forward.14} parent=5 // pred_region
      // Predicated region
      $region25: #{cyclegan_generator_forward.14} parent=23 // pred_check
        %p155 = pneg %p30
      $region26: #{cyclegan_generator_forward.14} parent=23 // pred_check_branch
        %157 = sbr.rel (%p155) target = $region28
      $region27: #{cyclegan_generator_forward.14} parent=23 // pred_region
        %p158 = scmp.lt.s32.totalorder %s10, 1
        %s159 = scalar_select %p158, %s10, 1
        %s160 = smul.addr %s159, 8
        %s161 = smul.addr %s160, 4
        %s162 = scalar_lea.vmem %s0, %s161
      $region28: #{cyclegan_generator_forward.14} parent=23 // pred_fallthru
        _
      // Predicated region
      $region29: #{cyclegan_generator_forward.14} parent=23 // pred_check
        %p163 = pneg %p98
      $region30: #{cyclegan_generator_forward.14} parent=23 // pred_check_branch
        %165 = sbr.rel (%p163) target = $region32
      $region31: #{cyclegan_generator_forward.14} parent=23 // pred_region
        %p166 = scmp.lt.s32.totalorder %s10, 1
        %s167 = scalar_select %p166, %s10, 1
        %s168 = smul.addr %s167, 4
        %s169 = smul.addr %s168, 4
        %s170 = scalar_lea.vmem %s3, %s169
      $region32: #{cyclegan_generator_forward.14} parent=23 // pred_fallthru
        _
    $region24: #{cyclegan_generator_forward.14} parent=5 // pred_fallthru
      _
    %p171 = scmp.le.s32.totalorder 1, %s10
    %p172 = scmp.lt.s32.totalorder %s10, 3
    %p173 = pnand %p171, %p172
    %p174 = pneg %p173
    // Predicated region
    $region33: #{cyclegan_generator_forward.14} parent=5 // pred_check
      _
    $region34: #{cyclegan_generator_forward.14} parent=5 // pred_check_branch
      %176 = sbr.rel (%p173) target = $region36
    $region35: #{cyclegan_generator_forward.14} parent=5 // pred_region
      %s177 = ssub.s32 %s10, 1
      %p178 = scmp.lt.s32.totalorder %s15, 1
      %s179 = scalar_select %p178, %s15, 1
      %s180 = smul.addr %s179, 8
      %s181 = smul.addr %s180, 4
      %s182 = scalar_lea.vmem %s0, %s181
      %p183 = pneg %p36
      %p184 = pneg %p33
      %p185 = pneg %p57
      %p186 = pneg %p54
      %p187 = pneg %p78
      %p188 = pneg %p75
      %p189 = scmp.lt.s32.totalorder %s15, 1
      %s190 = scalar_select %p189, %s15, 1
      %s191 = smul.addr %s190, 4
      %s192 = smul.addr %s191, 4
      %s193 = scalar_lea.vmem %s3, %s192
      %p194 = pneg %p104
      %p195 = pneg %p101
      %p196 = pneg %p130
      %p197 = pneg %p127
      %p198 = scmp.lt.s32.totalorder %s15, 1
      %s199 = scalar_select %p198, %s15, 1
      %s200 = smul.addr %s199, 4
      %s201 = smul.addr %s200, 4
      %s202 = scalar_lea.vmem %s4, %s201
      %p203 = scmp.lt.s32.totalorder %s15, 1
      %s204 = scalar_select %p203, %s15, 1
      %s205 = smul.addr %s204, 8
      %s206 = smul.addr %s205, 4
      %s207 = scalar_lea.vmem %s0, %s206
      %p208 = scmp.lt.s32.totalorder %s15, 1
      %s209 = scalar_select %p208, %s15, 1
      %s210 = smul.addr %s209, 4
      %s211 = smul.addr %s210, 4
      %s212 = scalar_lea.vmem %s3, %s211
      %p213 = scmp.lt.s32.totalorder %s15, 1
      %s214 = scalar_select %p213, %s15, 1
      %s215 = smul.addr %s214, 4
      %s216 = smul.addr %s215, 4
      %s217 = scalar_lea.vmem %s4, %s216
      %v219 = vld [vmem:[%s207] sm:$0xf]
      %v220 = vld [vmem:[%s207 + $0x8] sm:$0xf]
      %v221 = vld [vmem:[%s207 + $0x10] sm:$0xf]
      %v222 = vld [vmem:[%s207 + $0x18] sm:$0xf]
      %v227 = vunpack.c.l.b16 %v219
      %v228 = vunpack.c.l.b16 %v220
      %v229 = vunpack.c.l.b16 %v221
      %v230 = vunpack.c.l.b16 %v222
      %v231 = vpack.c.b16 %v228, %v227
      %v232 = vpack.c.b16 %v230, %v229
      %235 = vst [vmem:[#allocation2] sm:$0xff] %v231
      %236 = vst [vmem:[#allocation2 + $0x8] sm:$0xff] %v232
      %v237 = vld [vmem:[%s207] sm:$0xff]
      %v238 = vld [vmem:[%s207 + $0x8] sm:$0xff]
      %v239 = vld [vmem:[%s207 + $0x10] sm:$0xff]
      %v240 = vld [vmem:[%s207 + $0x18] sm:$0xff]
      %v245 = vunpack.c.l.b16 %v237
      %v246 = vunpack.c.h.b16 %v237
      %v247 = vunpack.c.l.b16 %v238
      %v248 = vunpack.c.h.b16 %v238
      %v249 = vunpack.c.l.b16 %v239
      %v250 = vunpack.c.h.b16 %v239
      %v251 = vunpack.c.l.b16 %v240
      %v252 = vunpack.c.h.b16 %v240
      %v253 = vpack.c.b16 %v247, %v245
      %v254 = vpack.c.b16 %v248, %v246
      %v255 = vpack.c.b16 %v251, %v249
      %v256 = vpack.c.b16 %v252, %v250
      %257 = vrot.lane.b32.xlu0 %v253, 127
      %v258 = vpop.permute.xlu0 %257
      %259 = vrot.lane.b32.xlu0 %v254, 127
      %v260 = vpop.permute.xlu0 %259
      %261 = vrot.lane.b32.xlu0 %v255, 127
      %v262 = vpop.permute.xlu0 %261
      %263 = vrot.lane.b32.xlu0 %v256, 127
      %v264 = vpop.permute.xlu0 %263
      %vm265 = vcmask 1039360
      %v266 = vsel %vm265, %v258, %v260
      %v267 = vsel %vm265, %v262, %v264
      %270 = vst [vmem:[#allocation2 + $0x10] sm:$0xff] %v266
      %271 = vst [vmem:[#allocation2 + $0x18] sm:$0xff] %v267
      %v272 = vld [vmem:[%s207] sm:$0xff]
      %v273 = vld [vmem:[%s207 + $0x8] sm:$0xff]
      %v274 = vld [vmem:[%s207 + $0x10] sm:$0xff]
      %v275 = vld [vmem:[%s207 + $0x18] sm:$0xff]
      %v280 = vunpack.c.l.b16 %v272
      %v281 = vunpack.c.h.b16 %v272
      %v282 = vunpack.c.l.b16 %v273
      %v283 = vunpack.c.h.b16 %v273
      %v284 = vunpack.c.l.b16 %v274
      %v285 = vunpack.c.h.b16 %v274
      %v286 = vunpack.c.l.b16 %v275
      %v287 = vunpack.c.h.b16 %v275
      %v288 = vpack.c.b16 %v282, %v280
      %v289 = vpack.c.b16 %v283, %v281
      %v290 = vpack.c.b16 %v286, %v284
      %v291 = vpack.c.b16 %v287, %v285
      %292 = vrot.lane.b32.xlu0 %v288, 126
      %v293 = vpop.permute.xlu0 %292
      %294 = vrot.lane.b32.xlu0 %v289, 126
      %v295 = vpop.permute.xlu0 %294
      %296 = vrot.lane.b32.xlu0 %v290, 126
      %v297 = vpop.permute.xlu0 %296
      %298 = vrot.lane.b32.xlu0 %v291, 126
      %v299 = vpop.permute.xlu0 %298
      %vm300 = vcmask 1031168
      %v301 = vsel %vm300, %v293, %v295
      %v302 = vsel %vm300, %v297, %v299
      %305 = vst [vmem:[#allocation2 + $0x20] sm:$0xff] %v301
      %306 = vst [vmem:[#allocation2 + $0x28] sm:$0xff] %v302
      %v307 = vld [vmem:[%s207] sm:$0xff]
      %v308 = vld [vmem:[%s207 + $0x8] sm:$0xff]
      %v309 = vld [vmem:[%s207 + $0x10] sm:$0xff]
      %v310 = vld [vmem:[%s207 + $0x18] sm:$0xff]
      %v315 = vunpack.c.l.b16 %v307
      %v316 = vunpack.c.h.b16 %v307
      %v317 = vunpack.c.l.b16 %v308
      %v318 = vunpack.c.h.b16 %v308
      %v319 = vunpack.c.l.b16 %v309
      %v320 = vunpack.c.h.b16 %v309
      %v321 = vunpack.c.l.b16 %v310
      %v322 = vunpack.c.h.b16 %v310
      %v323 = vpack.c.b16 %v317, %v315
      %v324 = vpack.c.b16 %v318, %v316
      %v325 = vpack.c.b16 %v321, %v319
      %v326 = vpack.c.b16 %v322, %v320
      %327 = vrot.lane.b32.xlu0 %v323, 122
      %v328 = vpop.permute.xlu0 %327
      %329 = vrot.lane.b32.xlu0 %v324, 122
      %v330 = vpop.permute.xlu0 %329
      %331 = vrot.lane.b32.xlu0 %v325, 122
      %v332 = vpop.permute.xlu0 %331
      %333 = vrot.lane.b32.xlu0 %v326, 122
      %v334 = vpop.permute.xlu0 %333
      %vm335 = vcmask 998400
      %v336 = vsel %vm335, %v328, %v330
      %v337 = vsel %vm335, %v332, %v334
      %340 = vst [vmem:[#allocation2 + $0x30] sm:$0xff] %v336
      %341 = vst [vmem:[#allocation2 + $0x38] sm:$0xff] %v337
      %v342 = vld [vmem:[%s207] sm:$0xff]
      %v343 = vld [vmem:[%s207 + $0x8] sm:$0xff]
      %v344 = vld [vmem:[%s207 + $0x10] sm:$0xff]
      %v345 = vld [vmem:[%s207 + $0x18] sm:$0xff]
      %v350 = vunpack.c.l.b16 %v342
      %v351 = vunpack.c.h.b16 %v342
      %v352 = vunpack.c.l.b16 %v343
      %v353 = vunpack.c.h.b16 %v343
      %v354 = vunpack.c.l.b16 %v344
      %v355 = vunpack.c.h.b16 %v344
      %v356 = vunpack.c.l.b16 %v345
      %v357 = vunpack.c.h.b16 %v345
      %v358 = vpack.c.b16 %v352, %v350
      %v359 = vpack.c.b16 %v353, %v351
      %v360 = vpack.c.b16 %v356, %v354
      %v361 = vpack.c.b16 %v357, %v355
      %362 = vrot.lane.b32.xlu0 %v358, 121
      %v363 = vpop.permute.xlu0 %362
      %364 = vrot.lane.b32.xlu0 %v359, 121
      %v365 = vpop.permute.xlu0 %364
      %366 = vrot.lane.b32.xlu0 %v360, 121
      %v367 = vpop.permute.xlu0 %366
      %368 = vrot.lane.b32.xlu0 %v361, 121
      %v369 = vpop.permute.xlu0 %368
      %vm370 = vcmask 990208
      %v371 = vsel %vm370, %v363, %v365
      %v372 = vsel %vm370, %v367, %v369
      %375 = vst [vmem:[#allocation2 + $0x40] sm:$0xff] %v371
      %376 = vst [vmem:[#allocation2 + $0x48] sm:$0xff] %v372
      %v377 = vld [vmem:[%s207] sm:$0xff]
      %v378 = vld [vmem:[%s207 + $0x8] sm:$0xff]
      %v379 = vld [vmem:[%s207 + $0x10] sm:$0xff]
      %v380 = vld [vmem:[%s207 + $0x18] sm:$0xff]
      %v385 = vunpack.c.l.b16 %v377
      %v386 = vunpack.c.h.b16 %v377
      %v387 = vunpack.c.l.b16 %v378
      %v388 = vunpack.c.h.b16 %v378
      %v389 = vunpack.c.l.b16 %v379
      %v390 = vunpack.c.h.b16 %v379
      %v391 = vunpack.c.l.b16 %v380
      %v392 = vunpack.c.h.b16 %v380
      %v393 = vpack.c.b16 %v387, %v385
      %v394 = vpack.c.b16 %v388, %v386
      %v395 = vpack.c.b16 %v391, %v389
      %v396 = vpack.c.b16 %v392, %v390
      %397 = vrot.lane.b32.xlu0 %v393, 120
      %v398 = vpop.permute.xlu0 %397
      %399 = vrot.lane.b32.xlu0 %v394, 120
      %v400 = vpop.permute.xlu0 %399
      %401 = vrot.lane.b32.xlu0 %v395, 120
      %v402 = vpop.permute.xlu0 %401
      %403 = vrot.lane.b32.xlu0 %v396, 120
      %v404 = vpop.permute.xlu0 %403
      %vm405 = vcmask 982016
      %v406 = vsel %vm405, %v398, %v400
      %v407 = vsel %vm405, %v402, %v404
      %410 = vst [vmem:[#allocation2 + $0x50] sm:$0xff] %v406
      %411 = vst [vmem:[#allocation2 + $0x58] sm:$0xff] %v407
      %v412 = vld [vmem:[%s207] sm:$0xff]
      %v413 = vld [vmem:[%s207 + $0x8] sm:$0xff]
      %v414 = vld [vmem:[%s207 + $0x10] sm:$0xff]
      %v415 = vld [vmem:[%s207 + $0x18] sm:$0xff]
      %v420 = vunpack.c.l.b16 %v412
      %v421 = vunpack.c.h.b16 %v412
      %v422 = vunpack.c.l.b16 %v413
      %v423 = vunpack.c.h.b16 %v413
      %v424 = vunpack.c.l.b16 %v414
      %v425 = vunpack.c.h.b16 %v414
      %v426 = vunpack.c.l.b16 %v415
      %v427 = vunpack.c.h.b16 %v415
      %v428 = vpack.c.b16 %v422, %v420
      %v429 = vpack.c.b16 %v423, %v421
      %v430 = vpack.c.b16 %v426, %v424
      %v431 = vpack.c.b16 %v427, %v425
      %432 = vrot.lane.b32.xlu0 %v428, 116
      %v433 = vpop.permute.xlu0 %432
      %434 = vrot.lane.b32.xlu0 %v429, 116
      %v435 = vpop.permute.xlu0 %434
      %436 = vrot.lane.b32.xlu0 %v430, 116
      %v437 = vpop.permute.xlu0 %436
      %438 = vrot.lane.b32.xlu0 %v431, 116
      %v439 = vpop.permute.xlu0 %438
      %vm440 = vcmask 949248
      %v441 = vsel %vm440, %v433, %v435
      %v442 = vsel %vm440, %v437, %v439
      %445 = vst [vmem:[#allocation2 + $0x60] sm:$0xff] %v441
      %446 = vst [vmem:[#allocation2 + $0x68] sm:$0xff] %v442
      %v447 = vld [vmem:[%s207] sm:$0xff]
      %v448 = vld [vmem:[%s207 + $0x8] sm:$0xff]
      %v449 = vld [vmem:[%s207 + $0x10] sm:$0xff]
      %v450 = vld [vmem:[%s207 + $0x18] sm:$0xff]
      %v455 = vunpack.c.l.b16 %v447
      %v456 = vunpack.c.h.b16 %v447
      %v457 = vunpack.c.l.b16 %v448
      %v458 = vunpack.c.h.b16 %v448
      %v459 = vunpack.c.l.b16 %v449
      %v460 = vunpack.c.h.b16 %v449
      %v461 = vunpack.c.l.b16 %v450
      %v462 = vunpack.c.h.b16 %v450
      %v463 = vpack.c.b16 %v457, %v455
      %v464 = vpack.c.b16 %v458, %v456
      %v465 = vpack.c.b16 %v461, %v459
      %v466 = vpack.c.b16 %v462, %v460
      %467 = vrot.lane.b32.xlu0 %v463, 115
      %v468 = vpop.permute.xlu0 %467
      %469 = vrot.lane.b32.xlu0 %v464, 115
      %v470 = vpop.permute.xlu0 %469
      %471 = vrot.lane.b32.xlu0 %v465, 115
      %v472 = vpop.permute.xlu0 %471
      %473 = vrot.lane.b32.xlu0 %v466, 115
      %v474 = vpop.permute.xlu0 %473
      %vm475 = vcmask 941056
      %v476 = vsel %vm475, %v468, %v470
      %v477 = vsel %vm475, %v472, %v474
      %480 = vst [vmem:[#allocation2 + $0x70] sm:$0xff] %v476
      %481 = vst [vmem:[#allocation2 + $0x78] sm:$0xff] %v477
      %v482 = vld [vmem:[%s207] sm:$0xff]
      %v483 = vld [vmem:[%s207 + $0x8] sm:$0xff]
      %v484 = vld [vmem:[%s207 + $0x10] sm:$0xff]
      %v485 = vld [vmem:[%s207 + $0x18] sm:$0xff]
      %v490 = vunpack.c.l.b16 %v482
      %v491 = vunpack.c.h.b16 %v482
      %v492 = vunpack.c.l.b16 %v483
      %v493 = vunpack.c.h.b16 %v483
      %v494 = vunpack.c.l.b16 %v484
      %v495 = vunpack.c.h.b16 %v484
      %v496 = vunpack.c.l.b16 %v485
      %v497 = vunpack.c.h.b16 %v485
      %v498 = vpack.c.b16 %v492, %v490
      %v499 = vpack.c.b16 %v493, %v491
      %v500 = vpack.c.b16 %v496, %v494
      %v501 = vpack.c.b16 %v497, %v495
      %502 = vrot.lane.b32.xlu0 %v498, 114
      %v503 = vpop.permute.xlu0 %502
      %504 = vrot.lane.b32.xlu0 %v499, 114
      %v505 = vpop.permute.xlu0 %504
      %506 = vrot.lane.b32.xlu0 %v500, 114
      %v507 = vpop.permute.xlu0 %506
      %508 = vrot.lane.b32.xlu0 %v501, 114
      %v509 = vpop.permute.xlu0 %508
      %vm510 = vcmask 932864
      %v511 = vsel %vm510, %v503, %v505
      %v512 = vsel %vm510, %v507, %v509
      %515 = vst [vmem:[#allocation2 + $0x80] sm:$0xff] %v511
      %516 = vst [vmem:[#allocation2 + $0x88] sm:$0xff] %v512
      %v517 = vld [vmem:[%s1] sm:$0xff]
      %v518 = vld [vmem:[%s1 + $0x8] sm:$0xf]
      %v519 = vld [vmem:[%s1 + $0xc] sm:$0xff]
      %v520 = vld [vmem:[%s1 + $0x14] sm:$0xf]
      %v521 = vld [vmem:[%s1 + $0x18] sm:$0xff]
      %v522 = vld [vmem:[%s1 + $0x20] sm:$0xf]
      %v523 = vld [vmem:[%s1 + $0x24] sm:$0xff]
      %v524 = vld [vmem:[%s1 + $0x2c] sm:$0xf]
      %v525 = vld [vmem:[#allocation2] sm:$0xff]
      %v526 = vld [vmem:[#allocation2 + $0x8] sm:$0xff]
      %v527 = vld [vmem:[#allocation2 + $0x10] sm:$0xff]
      %v528 = vld [vmem:[#allocation2 + $0x18] sm:$0xff]
      %v529 = vld [vmem:[#allocation2 + $0x20] sm:$0xff]
      %v530 = vld [vmem:[#allocation2 + $0x28] sm:$0xff]
      %v531 = vld [vmem:[#allocation2 + $0x30] sm:$0xff]
      %v532 = vld [vmem:[#allocation2 + $0x38] sm:$0xff]
      %v533 = vld [vmem:[#allocation2 + $0x40] sm:$0xff]
      %v534 = vld [vmem:[#allocation2 + $0x48] sm:$0xff]
      %v535 = vld [vmem:[#allocation2 + $0x50] sm:$0xff]
      %v536 = vld [vmem:[#allocation2 + $0x58] sm:$0xff]
      %v537 = vld [vmem:[#allocation2 + $0x60] sm:$0xff]
      %v538 = vld [vmem:[#allocation2 + $0x68] sm:$0xff]
      %v539 = vld [vmem:[#allocation2 + $0x70] sm:$0xff]
      %v540 = vld [vmem:[#allocation2 + $0x78] sm:$0xff]
      %v541 = vld [vmem:[#allocation2 + $0x80] sm:$0xff]
      %v542 = vld [vmem:[#allocation2 + $0x88] sm:$0xff]
      %v543 = vld [vmem:[%s2] sm:$0xff]
      %v544 = vld [vmem:[%s2 + $0x8] sm:$0xff]
      %v545 = vld [vmem:[%s2 + $0x10] sm:$0xff]
      %v546 = vld [vmem:[%s2 + $0x18] sm:$0xff]
      %548 = vset.pattern.permute.xlu0 0
      %549 = vperm.xlu0 %548, %v543
      %v550 = vpop.permute.xlu0 %549
      %553 = vset.pattern.permute.xlu0 0
      %554 = vperm.xlu0 %553, %v544
      %v555 = vpop.permute.xlu0 %554
      %558 = vset.pattern.permute.xlu0 0
      %559 = vperm.xlu0 %558, %v545
      %v560 = vpop.permute.xlu0 %559
      %563 = vset.pattern.permute.xlu0 0
      %564 = vperm.xlu0 %563, %v546
      %v565 = vpop.permute.xlu0 %564
      %v575 = vunpack.c.l.b16 %v517
      %v576 = vunpack.c.h.b16 %v517
      %v577 = vunpack.c.l.b16 %v518
      %v578 = vunpack.c.l.b16 %v519
      %v579 = vunpack.c.h.b16 %v519
      %v580 = vunpack.c.l.b16 %v520
      %v581 = vunpack.c.l.b16 %v521
      %v582 = vunpack.c.h.b16 %v521
      %v583 = vunpack.c.l.b16 %v522
      %v584 = vunpack.c.l.b16 %v523
      %v585 = vunpack.c.h.b16 %v523
      %v586 = vunpack.c.l.b16 %v524
      %v587 = vpack.c.b16 %v578, %v575
      %v588 = vpack.c.b16 %v579, %v576
      %v589 = vpack.c.b16 %v580, %v577
      %v590 = vpack.c.b16 %v584, %v581
      %v591 = vpack.c.b16 %v585, %v582
      %v592 = vpack.c.b16 %v586, %v583
      %vm597 = vcmask 261120
      %v599 = vsel %vm597, %v589, 0
      %v602 = vsel %vm597, %v592, 0
      %604 = vmatprep.subr.bf16.mxu0 0
      %605 = vmatpush1.bf16.msra.mxu0 %v525
      %606 = vmatprep.subr.bf16.mxu0 0
      %607 = vmatpush1.bf16.msra.mxu0 %v526
      %608 = vmatprep.subr.bf16.mxu0 0
      %609 = vmatpush1.bf16.msra.mxu0 %v527
      %610 = vmatprep.subr.bf16.mxu0 0
      %611 = vmatpush1.bf16.msra.mxu0 %v528
      %612 = vmatprep.subr.bf16.mxu0 0
      %613 = vmatpush1.bf16.msra.mxu0 %v529
      %614 = vmatprep.subr.bf16.mxu0 0
      %615 = vmatpush1.bf16.msra.mxu0 %v530
      %616 = vmatprep.subr.bf16.mxu0 0
      %617 = vmatpush1.bf16.msra.mxu0 %v531
      %618 = vmatprep.subr.bf16.mxu0 0
      %619 = vmatpush1.bf16.msra.mxu0 %v532
      %620 = vmatprep.subr.bf16.mxu0 0
      %621 = vmatpush1.bf16.msra.mxu0 %v533
      %622 = vmatprep.subr.bf16.mxu0 0
      %623 = vmatpush1.bf16.msra.mxu0 %v534
      %624 = vmatprep.subr.bf16.mxu0 0
      %625 = vmatpush1.bf16.msra.mxu0 %v535
      %626 = vmatprep.subr.bf16.mxu0 0
      %627 = vmatpush1.bf16.msra.mxu0 %v536
      %628 = vmatprep.subr.bf16.mxu0 0
      %629 = vmatpush1.bf16.msra.mxu0 %v537
      %630 = vmatprep.subr.bf16.mxu0 0
      %631 = vmatpush1.bf16.msra.mxu0 %v538
      %632 = vmatprep.subr.bf16.mxu0 0
      %633 = vmatpush1.bf16.msra.mxu0 %v539
      %634 = vmatprep.subr.bf16.mxu0 0
      %635 = vmatpush1.bf16.msra.mxu0 %v540
      %636 = vmatprep.mubr.bf16.mxu0 %v588
      %637 = vmatmul.mubr.bf16.gmra.mrb[0].mxu0 %v587
      %v638 = vpop.f32.mrb[0].mxu0
      %v639 = vadd.f32 %v550, %v638
      %v640 = vpop.f32.mrb[0].mxu0
      %v641 = vpop.f32.mrb[0].mxu0
      %v642 = vadd.f32 %v555, %v641
      %v643 = vpop.f32.mrb[0].mxu0
      %644 = vmatprep.mubr.bf16.mxu0 %v591
      %645 = vmatmul.mubr.bf16.gmra.mrb[0].mxu0 %v590
      %v646 = vpop.f32.mrb[0].mxu0
      %v647 = vadd.f32 %v560, %v646
      %v648 = vpop.f32.mrb[0].mxu0
      %v649 = vpop.f32.mrb[0].mxu0
      %v650 = vadd.f32 %v565, %v649
      %v651 = vpop.f32.mrb[0].mxu0
      %652 = vdwg.mxu0
      %653 = vmatprep.subr.bf16.mxu0 0
      %654 = vmatpush1.bf16.msra.mxu0 %v541
      %655 = vmatprep.subr.bf16.mxu0 0
      %656 = vmatpush1.bf16.msra.mxu0 %v542
      %657 = vmatprep.subr.bf16.mxu0 0
      %658 = vmatpush1.bf16.msra.mxu0 0
      %659 = vmatprep.subr.bf16.mxu0 0
      %660 = vmatpush1.bf16.msra.mxu0 0
      %661 = vmatprep.subr.bf16.mxu0 0
      %662 = vmatpush1.bf16.msra.mxu0 0
      %663 = vmatprep.subr.bf16.mxu0 0
      %664 = vmatpush1.bf16.msra.mxu0 0
      %665 = vmatprep.subr.bf16.mxu0 0
      %666 = vmatpush1.bf16.msra.mxu0 0
      %667 = vmatprep.subr.bf16.mxu0 0
      %668 = vmatpush1.bf16.msra.mxu0 0
      %669 = vmatprep.subr.bf16.mxu0 0
      %670 = vmatpush1.bf16.msra.mxu0 0
      %671 = vmatprep.subr.bf16.mxu0 0
      %672 = vmatpush1.bf16.msra.mxu0 0
      %673 = vmatprep.subr.bf16.mxu0 0
      %674 = vmatpush1.bf16.msra.mxu0 0
      %675 = vmatprep.subr.bf16.mxu0 0
      %676 = vmatpush1.bf16.msra.mxu0 0
      %677 = vmatprep.subr.bf16.mxu0 0
      %678 = vmatpush1.bf16.msra.mxu0 0
      %679 = vmatprep.subr.bf16.mxu0 0
      %680 = vmatpush1.bf16.msra.mxu0 0
      %681 = vmatprep.subr.bf16.mxu0 0
      %682 = vmatpush1.bf16.msra.mxu0 0
      %683 = vmatprep.subr.bf16.mxu0 0
      %684 = vmatpush1.bf16.msra.mxu0 0
      %685 = vmatprep.mubr.bf16.mxu0 0
      %686 = vmatmul.mubr.bf16.gmra.mrb[0].mxu0 %v599
      %v687 = vpop.f32.mrb[0].mxu0
      %v688 = vadd.f32 %v639, %v687
      %v689 = vpop.f32.mrb[0].mxu0
      %v690 = vpop.f32.mrb[0].mxu0
      %v691 = vadd.f32 %v642, %v690
      %v692 = vpop.f32.mrb[0].mxu0
      %693 = vmatprep.mubr.bf16.mxu0 0
      %694 = vmatmul.mubr.bf16.gmra.mrb[0].mxu0 %v602
      %v695 = vpop.f32.mrb[0].mxu0
      %v696 = vadd.f32 %v647, %v695
      %v697 = vpop.f32.mrb[0].mxu0
      %v698 = vpop.f32.mrb[0].mxu0
      %v699 = vadd.f32 %v650, %v698
      %v700 = vpop.f32.mrb[0].mxu0
      %701 = vdwg.mxu0
      %v702 = vlaneseq
      %v703 = vand.u32 %v702, 127
      %vm704 = vcmp.lt.s32.totalorder %v703, 0
      %v705 = vsub.s32 0, %v703
      %v706 = vsel %vm704, %v705, %v703
      %v707 = vmul.u32.u64.compose %v706, 2863311531
      %v708 = vextract.low.u32 %v707
      %v709 = vextract.high.u32 %v707
      %v710 = vshrl.u32 %v709, 2
      %v711 = vmul.u32 %v710, 6
      %v712 = vsub.s32 %v706, %v711
      %v713 = vsub.s32 0, %v712
      %v714 = vsel %vm704, %v713, %v712
      %vm715 = vcmp.ne.s32.totalorder %v714, 0
      %vm716 = vcmp.lt.s32.totalorder %v714, 0
      %vm717 = vmand %vm716, %vm715
      %v718 = vadd.s32 %v714, 6
      %v719 = vsel %vm717, %v718, %v714
      %vm720 = vcmp.lt.s32.totalorder %v719, 4
      %vm721 = vcmp.lt.s32.totalorder %v703, 22
      %vm722 = vmand %vm720, %vm721
      %v723 = vsel %vm722, 1, 0
      %v724 = vcvt.s32.f32 %v723
      %v725 = vmul.f32 %v688, %v724
      %v726 = vmul.f32 %v691, %v724
      %v727 = vmul.f32 %v696, %v724
      %v728 = vmul.f32 %v699, %v724
      %729 = vadd.xlane.f32.xlu0 %v725
      %v730 = vpop.xlane.xlu0 %729
      %731 = vadd.xlane.f32.xlu0 %v726
      %v732 = vpop.xlane.xlu0 %731
      %733 = vadd.xlane.f32.xlu0 %v727
      %v734 = vpop.xlane.xlu0 %733
      %735 = vadd.xlane.f32.xlu0 %v728
      %v736 = vpop.xlane.xlu0 %735
      %v737 = vmul.f32 %v688, %v725
      %v738 = vmul.f32 %v691, %v726
      %v739 = vmul.f32 %v696, %v727
      %v740 = vmul.f32 %v699, %v728
      %741 = vadd.xlane.f32.xlu0 %v737
      %v742 = vpop.xlane.xlu0 %741
      %743 = vadd.xlane.f32.xlu0 %v738
      %v744 = vpop.xlane.xlu0 %743
      %745 = vadd.xlane.f32.xlu0 %v739
      %v746 = vpop.xlane.xlu0 %745
      %747 = vadd.xlane.f32.xlu0 %v740
      %v748 = vpop.xlane.xlu0 %747
      %v749 = vmul.f32 %v730, 0.0625
      %v750 = vmul.f32 %v732, 0.0625
      %v751 = vmul.f32 %v734, 0.0625
      %v752 = vmul.f32 %v736, 0.0625
      %v753 = vmul.f32 %v742, 0.0625
      %v754 = vmul.f32 %v744, 0.0625
      %v755 = vmul.f32 %v746, 0.0625
      %v756 = vmul.f32 %v748, 0.0625
      %v757 = vmul.f32 %v749, %v749
      %v758 = vmul.f32 %v750, %v750
      %v759 = vmul.f32 %v751, %v751
      %v760 = vmul.f32 %v752, %v752
      %v761 = vsub.f32 %v753, %v757
      %v762 = vsub.f32 %v754, %v758
      %v763 = vsub.f32 %v755, %v759
      %v764 = vsub.f32 %v756, %v760
      %v765 = vmax.f32 %v761, 0.0
      %v766 = vmax.f32 %v762, 0.0
      %v767 = vmax.f32 %v763, 0.0
      %v768 = vmax.f32 %v764, 0.0
      %v769 = vadd.f32 %v765, 1e-05
      %v770 = vadd.f32 %v766, 1e-05
      %v771 = vadd.f32 %v767, 1e-05
      %v772 = vadd.f32 %v768, 1e-05
      %v773 = vrsqrt.pop %v769
      %v774 = vrsqrt.pop %v770
      %v775 = vrsqrt.pop %v771
      %v776 = vrsqrt.pop %v772
      %v777 = vld [vmem:[%s212] sm:$0xf]
      %v778 = vld [vmem:[%s212 + $0x4] sm:$0xf]
      %v779 = vld [vmem:[%s212 + $0x8] sm:$0xf]
      %v780 = vld [vmem:[%s212 + $0xc] sm:$0xf]
      %v781 = vunpack.c.l.bf16 %v777
      %v782 = vunpack.c.l.bf16 %v778
      %v783 = vunpack.c.l.bf16 %v779
      %v784 = vunpack.c.l.bf16 %v780
      %v785 = vsub.f32 %v688, %v749
      %v786 = vsub.f32 %v691, %v750
      %v787 = vsub.f32 %v696, %v751
      %v788 = vsub.f32 %v699, %v752
      %v789 = vmul.f32 %v785, %v773
      %v790 = vmul.f32 %v786, %v774
      %v791 = vmul.f32 %v787, %v775
      %v792 = vmul.f32 %v788, %v776
      %v793 = vadd.f32 %v789, %v781
      %v794 = vadd.f32 %v790, %v782
      %v795 = vadd.f32 %v791, %v783
      %v796 = vadd.f32 %v792, %v784
      %v797 = vpack.c.bf16 %v794, %v793
      %v798 = vpack.c.bf16 %v796, %v795
      %v801 = vunpack.c.l.b16 %v797
      %v802 = vunpack.c.h.b16 %v797
      %v803 = vunpack.c.l.b16 %v798
      %v804 = vunpack.c.h.b16 %v798
      %v805 = vpack.c.b16 %v801, %v801
      %v806 = vpack.c.b16 %v802, %v802
      %v807 = vpack.c.b16 %v803, %v803
      %v808 = vpack.c.b16 %v804, %v804
      %813 = vst [vmem:[%s217] sm:$0xf] %v805
      %814 = vst [vmem:[%s217 + $0x4] sm:$0xf] %v806
      %815 = vst [vmem:[%s217 + $0x8] sm:$0xf] %v807
      %816 = vst [vmem:[%s217 + $0xc] sm:$0xf] %v808
      %p817 = scmp.lt.s32.totalorder %s15, 1
      %s818 = scalar_select %p817, %s15, 1
      %s819 = smul.addr %s818, 4
      %s820 = smul.addr %s819, 4
      %s821 = scalar_lea.vmem %s4, %s820
      // Predicated region
      $region37: #{cyclegan_generator_forward.14} parent=35 // pred_check
        %p822 = pneg %p127
      $region38: #{cyclegan_generator_forward.14} parent=35 // pred_check_branch
        %824 = sbr.rel (%p822) target = $region40
      $region39: #{cyclegan_generator_forward.14} parent=35 // pred_region
        _
      $region40: #{cyclegan_generator_forward.14} parent=35 // pred_fallthru
        _
    $region36: #{cyclegan_generator_forward.14} parent=5 // pred_fallthru
      _
    %p825 = scmp.le.s32.totalorder 2, %s10
    // Predicated region
    $region41: #{cyclegan_generator_forward.14} parent=5 // pred_check
      %p826 = pneg %p825
    $region42: #{cyclegan_generator_forward.14} parent=5 // pred_check_branch
      %828 = sbr.rel (%p826) target = $region44
    $region43: #{cyclegan_generator_forward.14} parent=5 // pred_region
      %s829 = ssub.s32 %s10, 2
      // Predicated region
      $region45: #{cyclegan_generator_forward.14} parent=43 // pred_check
        %p830 = pneg %p133
      $region46: #{cyclegan_generator_forward.14} parent=43 // pred_check_branch
        %832 = sbr.rel (%p830) target = $region48
      $region47: #{cyclegan_generator_forward.14} parent=43 // pred_region
        %p833 = scmp.lt.s32.totalorder %s16, 1
        %s834 = scalar_select %p833, %s16, 1
        %s835 = smul.addr %s834, 4
        %s836 = smul.addr %s835, 4
        %s837 = scalar_lea.vmem %s4, %s836
      $region48: #{cyclegan_generator_forward.14} parent=43 // pred_fallthru
        _
    $region44: #{cyclegan_generator_forward.14} parent=5 // pred_fallthru
      _
  $region6: #{cyclegan_generator_forward.14} parent=0 // loop_footer
    %s14 = sadd.s32 1, %s10
  $region7: #{cyclegan_generator_forward.14} parent=0 // loop_footer_branch
    %9 = sbr.rel target = $region3
  $region8: #{cyclegan_generator_forward.14} parent=0 // loop_exit
    _

// kernel: tile.18
$region0: #{tile.18}
  #allocation0 [shape = 's32[1]{0}', space=sflag, size = 0x4, scoped, tag = 'scoped memory for tile.18']
  %s0 = inlined_call_operand.vmem [shape: f32[8], index: 0, kind: input, shape index: {}]
  %s1 = inlined_call_operand.vmem [shape: f32[4,8], index: 1, kind: output, shape index: {}]
  // Predicated region
  $region2: #{tile.18} parent=0 // pred_check
    _
  $region3: #{tile.18} parent=0 // pred_check_branch
    %3 = sbr.rel (0) target = $region5
  $region4: #{tile.18} parent=0 // pred_region
    _
  $region5: #{tile.18} parent=0 // pred_fallthru
    _
  %v4 = vld [vmem:[%s0] ss:$0 sm:$0xff]
  %5 = vst [vmem:[%s1] sm:$0xf] %v4

// kernel: tile.1
$region0: #{tile.1}
  %s0 = inlined_call_operand.vmem [shape: f32[4,8], index: 0, kind: input, shape index: {}]
  %s1 = inlined_call_operand.vmem [shape: f32[32,1], index: 1, kind: output, shape index: {}]
  $region1: #{tile.1} parent=0
    #allocation0 [shape = 'u8[4096]{0}', space=vmem, size = 0x1000, scoped, tag = 'scoped mem for input reshape']
    %s3 = sshllo.u32 0, 4
    %v4 = vld [vmem:[%s0] sm:%s3]
    %5 = vst [vmem:[#allocation0] sm:%s3] %v4
    %v6 = vld [vmem:[#allocation0] sm:$0xf]
    %vm7 = vcmask 7168
    %8 = vst.msk [vmem:[%s1] ss:$8 sm:$0xf] %vm7, %v6
    %v9 = vld [vmem:[#allocation0] sm:$0xf]
    %10 = vrot.lane.b32.xlu0 %v9, 127
    %v11 = vpop.permute.xlu0 %10
    %vm12 = vcmask 7168
    %s13 = scalar_lea.vmem %s1, 1
    %14 = vst.msk [vmem:[%s13] ss:$8 sm:$0xf] %vm12, %v11
    %v15 = vld [vmem:[#allocation0] sm:$0xf]
    %16 = vrot.lane.b32.xlu0 %v15, 126
    %v17 = vpop.permute.xlu0 %16
    %vm18 = vcmask 7168
    %s19 = scalar_lea.vmem %s1, 2
    %20 = vst.msk [vmem:[%s19] ss:$8 sm:$0xf] %vm18, %v17
    %v21 = vld [vmem:[#allocation0] sm:$0xf]
    %22 = vrot.lane.b32.xlu0 %v21, 125
    %v23 = vpop.permute.xlu0 %22
    %vm24 = vcmask 7168
    %s25 = scalar_lea.vmem %s1, 3
    %26 = vst.msk [vmem:[%s25] ss:$8 sm:$0xf] %vm24, %v23
    %v27 = vld [vmem:[#allocation0] sm:$0xf]
    %28 = vrot.lane.b32.xlu0 %v27, 124
    %v29 = vpop.permute.xlu0 %28
    %vm30 = vcmask 7168
    %s31 = scalar_lea.vmem %s1, 4
    %32 = vst.msk [vmem:[%s31] ss:$8 sm:$0xf] %vm30, %v29
    %v33 = vld [vmem:[#allocation0] sm:$0xf]
    %34 = vrot.lane.b32.xlu0 %v33, 123
    %v35 = vpop.permute.xlu0 %34
    %vm36 = vcmask 7168
    %s37 = scalar_lea.vmem %s1, 5
    %38 = vst.msk [vmem:[%s37] ss:$8 sm:$0xf] %vm36, %v35
    %v39 = vld [vmem:[#allocation0] sm:$0xf]
    %40 = vrot.lane.b32.xlu0 %v39, 122
    %v41 = vpop.permute.xlu0 %40
    %vm42 = vcmask 7168
    %s43 = scalar_lea.vmem %s1, 6
    %44 = vst.msk [vmem:[%s43] ss:$8 sm:$0xf] %vm42, %v41
    %v45 = vld [vmem:[#allocation0] sm:$0xf]
    %46 = vrot.lane.b32.xlu0 %v45, 121
    %v47 = vpop.permute.xlu0 %46
    %vm48 = vcmask 7168
    %s49 = scalar_lea.vmem %s1, 7
    %50 = vst.msk [vmem:[%s49] ss:$8 sm:$0xf] %vm48, %v47

// kernel: cyclegan_generator_forward.17
$region0: #{cyclegan_generator_forward.17}
  #allocation0 [shape = 'u32[]', space=smem, size = 0x4, offset = 0x4, fixed_abs, tag = 'smem constant byte address 0x4 - core index']
  #allocation1 [shape = 'u32[144,128]{1,0:T(1,128)}', space=vmem, size = 0x12000, scoped, tag = 'internal scratch']
  #allocation2 [shape = 'bf16[128,128]{1,0:T(16,128)(2,1)}', space=vmem, size = 0x8000, scoped, tag = 'scratch operand']
  %s0 = inlined_call_operand.vmem [shape: bf16[2,32,134], index: 0, kind: input, shape index: {}]
  %s1 = inlined_call_operand.vmem [shape: bf16[64,128], index: 1, kind: input, shape index: {}]
  %s2 = inlined_call_operand.vmem [shape: f32[64,1], index: 2, kind: input, shape index: {}]
  %s3 = inlined_call_operand.vmem [shape: bf16[2,64,128], index: 3, kind: output, shape index: {}]
  %s4 = sld [smem:[#allocation0]]
  $region45: #{cyclegan_generator_forward.17} parent=0
    _
  %s6 = ssub.s32 1, %s4
  %s7 = scalar_select 0, %s6, %s4
  loop: start=0, step=1, limit=4
  $region2: #{cyclegan_generator_forward.17} parent=0 // loop_pre_header
    _
  $region3: #{cyclegan_generator_forward.17} parent=0 // loop_header
    %s9 = sphi 0, %s13
    %p10 = scmp.ge.s32.totalorder %s9, 4
    %s19 = sphi 0, %s21
    %s22 = sphi 0, %s19
    %s23 = sphi 0, %s22
    %s39 = sphi 0, %s23
    %s43 = sphi 0, %s43
    %s45 = sphi 0, %s43
    %s46 = sphi 0, %s45
    %s60 = sphi 0, %s46
    %s64 = sphi 0, %s64
    %s66 = sphi 0, %s64
    %s67 = sphi 0, %s66
    %s81 = sphi 0, %s67
    %s87 = sphi 0, %s89
    %s90 = sphi 0, %s87
    %s91 = sphi 0, %s90
    %s107 = sphi 0, %s91
  $region4: #{cyclegan_generator_forward.17} parent=0 // loop_header_branch
    %12 = sbr.rel (%p10) target = $region8
  $region5: #{cyclegan_generator_forward.17} parent=0 // loop_body
    %s14 = ssub.s32 %s9, 1
    %s15 = ssub.s32 %s9, 2
    %s16 = sadd.s32 %s9, 1
    %s17 = ssub.s32 %s9, %s16
    %p18 = scmp.eq.s32.totalorder %s17, 0
    %s20 = sadd.s32 %s19, 1
    %s21 = scalar_select %p18, %s19, %s20
    %p24 = pneg %p18
    %p25 = scmp.eq.s32.totalorder %s9, 1
    %p26 = por %p24, %p25
    %p27 = scmp.ne.s32.totalorder %s19, %s22
    %p28 = scmp.eq.s32.totalorder %s9, 0
    %p29 = por %p27, %p28
    %p30 = scmp.ne.s32.totalorder %s19, %s22
    %p31 = scmp.eq.s32.totalorder %s14, 1
    %p32 = por %p30, %p31
    %p33 = scmp.ne.s32.totalorder %s22, %s23
    %p34 = scmp.eq.s32.totalorder %s14, 0
    %p35 = por %p33, %p34
    %p36 = scmp.ne.s32.totalorder %s22, %s23
    %p37 = scmp.eq.s32.totalorder %s15, 1
    %p38 = por %p36, %p37
    %p40 = scmp.ne.s32.totalorder %s23, %s39
    %p41 = scmp.eq.s32.totalorder %s15, 0
    %p42 = por %p40, %p41
    %s44 = sadd.s32 %s43, 1
    %p47 = scmp.eq.s32.totalorder %s9, 1
    %p48 = scmp.ne.s32.totalorder %s43, %s45
    %p49 = scmp.eq.s32.totalorder %s9, 0
    %p50 = por %p48, %p49
    %p51 = scmp.ne.s32.totalorder %s43, %s45
    %p52 = scmp.eq.s32.totalorder %s14, 1
    %p53 = por %p51, %p52
    %p54 = scmp.ne.s32.totalorder %s45, %s46
    %p55 = scmp.eq.s32.totalorder %s14, 0
    %p56 = por %p54, %p55
    %p57 = scmp.ne.s32.totalorder %s45, %s46
    %p58 = scmp.eq.s32.totalorder %s15, 1
    %p59 = por %p57, %p58
    %p61 = scmp.ne.s32.totalorder %s46, %s60
    %p62 = scmp.eq.s32.totalorder %s15, 0
    %p63 = por %p61, %p62
    %s65 = sadd.s32 %s64, 1
    %p68 = scmp.eq.s32.totalorder %s9, 1
    %p69 = scmp.ne.s32.totalorder %s64, %s66
    %p70 = scmp.eq.s32.totalorder %s9, 0
    %p71 = por %p69, %p70
    %p72 = scmp.ne.s32.totalorder %s64, %s66
    %p73 = scmp.eq.s32.totalorder %s14, 1
    %p74 = por %p72, %p73
    %p75 = scmp.ne.s32.totalorder %s66, %s67
    %p76 = scmp.eq.s32.totalorder %s14, 0
    %p77 = por %p75, %p76
    %p78 = scmp.ne.s32.totalorder %s66, %s67
    %p79 = scmp.eq.s32.totalorder %s15, 1
    %p80 = por %p78, %p79
    %p82 = scmp.ne.s32.totalorder %s67, %s81
    %p83 = scmp.eq.s32.totalorder %s15, 0
    %p84 = por %p82, %p83
    %s85 = ssub.s32 %s9, %s16
    %p86 = scmp.eq.s32.totalorder %s85, 0
    %s88 = sadd.s32 %s87, 1
    %s89 = scalar_select %p86, %s87, %s88
    %p92 = pneg %p86
    %p93 = scmp.eq.s32.totalorder %s9, 1
    %p94 = por %p92, %p93
    %p95 = scmp.ne.s32.totalorder %s87, %s90
    %p96 = scmp.eq.s32.totalorder %s9, 0
    %p97 = por %p95, %p96
    %p98 = scmp.ne.s32.totalorder %s87, %s90
    %p99 = scmp.eq.s32.totalorder %s14, 1
    %p100 = por %p98, %p99
    %p101 = scmp.ne.s32.totalorder %s90, %s91
    %p102 = scmp.eq.s32.totalorder %s14, 0
    %p103 = por %p101, %p102
    %p104 = scmp.ne.s32.totalorder %s90, %s91
    %p105 = scmp.eq.s32.totalorder %s15, 1
    %p106 = por %p104, %p105
    %p108 = scmp.ne.s32.totalorder %s91, %s107
    %p109 = scmp.eq.s32.totalorder %s15, 0
    %p110 = por %p108, %p109
    %p111 = scmp.le.s32.totalorder 1, %s9
    %p112 = scmp.lt.s32.totalorder %s9, 3
    %p113 = pnand %p111, %p112
    %p114 = pneg %p113
    // Predicated region
    $region9: #{cyclegan_generator_forward.17} parent=5 // pred_check
      _
    $region10: #{cyclegan_generator_forward.17} parent=5 // pred_check_branch
      %116 = sbr.rel (%p113) target = $region12
    $region11: #{cyclegan_generator_forward.17} parent=5 // pred_region
      %s117 = ssub.s32 %s9, 1
      // Predicated region
      $region13: #{cyclegan_generator_forward.17} parent=11 // pred_check
        %p118 = pneg %p56
      $region14: #{cyclegan_generator_forward.17} parent=11 // pred_check_branch
        %120 = sbr.rel (%p118) target = $region16
      $region15: #{cyclegan_generator_forward.17} parent=11 // pred_region
        _
      $region16: #{cyclegan_generator_forward.17} parent=11 // pred_fallthru
        _
      // Predicated region
      $region17: #{cyclegan_generator_forward.17} parent=11 // pred_check
        %p121 = pneg %p77
      $region18: #{cyclegan_generator_forward.17} parent=11 // pred_check_branch
        %123 = sbr.rel (%p121) target = $region20
      $region19: #{cyclegan_generator_forward.17} parent=11 // pred_region
        _
      $region20: #{cyclegan_generator_forward.17} parent=11 // pred_fallthru
        _
    $region12: #{cyclegan_generator_forward.17} parent=5 // pred_fallthru
      _
    %p124 = scmp.lt.s32.totalorder %s9, 2
    // Predicated region
    $region21: #{cyclegan_generator_forward.17} parent=5 // pred_check
      %p125 = pneg %p124
    $region22: #{cyclegan_generator_forward.17} parent=5 // pred_check_branch
      %127 = sbr.rel (%p125) target = $region24
    $region23: #{cyclegan_generator_forward.17} parent=5 // pred_region
      // Predicated region
      $region25: #{cyclegan_generator_forward.17} parent=23 // pred_check
        %p128 = pneg %p29
      $region26: #{cyclegan_generator_forward.17} parent=23 // pred_check_branch
        %130 = sbr.rel (%p128) target = $region28
      $region27: #{cyclegan_generator_forward.17} parent=23 // pred_region
        %p131 = scmp.lt.s32.totalorder %s9, 1
        %s132 = scalar_select %p131, %s9, 1
        %s133 = smul.addr %s132, 8
        %s134 = smul.addr %s133, 4
        %s135 = scalar_lea.vmem %s0, %s134
      $region28: #{cyclegan_generator_forward.17} parent=23 // pred_fallthru
        _
    $region24: #{cyclegan_generator_forward.17} parent=5 // pred_fallthru
      _
    %p136 = scmp.le.s32.totalorder 1, %s9
    %p137 = scmp.lt.s32.totalorder %s9, 3
    %p138 = pnand %p136, %p137
    %p139 = pneg %p138
    // Predicated region
    $region29: #{cyclegan_generator_forward.17} parent=5 // pred_check
      _
    $region30: #{cyclegan_generator_forward.17} parent=5 // pred_check_branch
      %141 = sbr.rel (%p138) target = $region32
    $region31: #{cyclegan_generator_forward.17} parent=5 // pred_region
      %s142 = ssub.s32 %s9, 1
      %p143 = scmp.lt.s32.totalorder %s14, 1
      %s144 = scalar_select %p143, %s14, 1
      %s145 = smul.addr %s144, 8
      %s146 = smul.addr %s145, 4
      %s147 = scalar_lea.vmem %s0, %s146
      %p148 = pneg %p35
      %p149 = pneg %p32
      %p150 = pneg %p56
      %p151 = pneg %p53
      %p152 = pneg %p77
      %p153 = pneg %p74
      %p154 = pneg %p103
      %p155 = pneg %p100
      %p156 = scmp.lt.s32.totalorder %s14, 1
      %s157 = scalar_select %p156, %s14, 1
      %s158 = smul.addr %s157, 8
      %s159 = smul.addr %s158, 4
      %s160 = scalar_lea.vmem %s3, %s159
      %p161 = scmp.lt.s32.totalorder %s14, 1
      %s162 = scalar_select %p161, %s14, 1
      %s163 = smul.addr %s162, 8
      %s164 = smul.addr %s163, 4
      %s165 = scalar_lea.vmem %s0, %s164
      %p166 = scmp.lt.s32.totalorder %s14, 1
      %s167 = scalar_select %p166, %s14, 1
      %s168 = smul.addr %s167, 8
      %s169 = smul.addr %s168, 4
      %s170 = scalar_lea.vmem %s3, %s169
      %v172 = vld [vmem:[%s165] sm:$0xf]
      %v173 = vld [vmem:[%s165 + $0x8] sm:$0xf]
      %v174 = vld [vmem:[%s165 + $0x10] sm:$0xf]
      %v175 = vld [vmem:[%s165 + $0x18] sm:$0xf]
      %v180 = vunpack.c.l.b16 %v172
      %v181 = vunpack.c.l.b16 %v173
      %v182 = vunpack.c.l.b16 %v174
      %v183 = vunpack.c.l.b16 %v175
      %v184 = vpack.c.b16 %v181, %v180
      %v185 = vpack.c.b16 %v183, %v182
      %188 = vst [vmem:[#allocation2] sm:$0xff] %v184
      %189 = vst [vmem:[#allocation2 + $0x8] sm:$0xff] %v185
      %v190 = vld [vmem:[%s165] sm:$0xff]
      %v191 = vld [vmem:[%s165 + $0x8] sm:$0xff]
      %v192 = vld [vmem:[%s165 + $0x10] sm:$0xff]
      %v193 = vld [vmem:[%s165 + $0x18] sm:$0xff]
      %v198 = vunpack.c.l.b16 %v190
      %v199 = vunpack.c.h.b16 %v190
      %v200 = vunpack.c.l.b16 %v191
      %v201 = vunpack.c.h.b16 %v191
      %v202 = vunpack.c.l.b16 %v192
      %v203 = vunpack.c.h.b16 %v192
      %v204 = vunpack.c.l.b16 %v193
      %v205 = vunpack.c.h.b16 %v193
      %v206 = vpack.c.b16 %v200, %v198
      %v207 = vpack.c.b16 %v201, %v199
      %v208 = vpack.c.b16 %v204, %v202
      %v209 = vpack.c.b16 %v205, %v203
      %210 = vrot.lane.b32.xlu0 %v206, 127
      %v211 = vpop.permute.xlu0 %210
      %212 = vrot.lane.b32.xlu0 %v207, 127
      %v213 = vpop.permute.xlu0 %212
      %214 = vrot.lane.b32.xlu0 %v208, 127
      %v215 = vpop.permute.xlu0 %214
      %216 = vrot.lane.b32.xlu0 %v209, 127
      %v217 = vpop.permute.xlu0 %216
      %vm218 = vcmask 1039360
      %v219 = vsel %vm218, %v211, %v213
      %v220 = vsel %vm218, %v215, %v217
      %223 = vst [vmem:[#allocation2 + $0x10] sm:$0xff] %v219
      %224 = vst [vmem:[#allocation2 + $0x18] sm:$0xff] %v220
      %v225 = vld [vmem:[%s165] sm:$0xff]
      %v226 = vld [vmem:[%s165 + $0x8] sm:$0xff]
      %v227 = vld [vmem:[%s165 + $0x10] sm:$0xff]
      %v228 = vld [vmem:[%s165 + $0x18] sm:$0xff]
      %v233 = vunpack.c.l.b16 %v225
      %v234 = vunpack.c.h.b16 %v225
      %v235 = vunpack.c.l.b16 %v226
      %v236 = vunpack.c.h.b16 %v226
      %v237 = vunpack.c.l.b16 %v227
      %v238 = vunpack.c.h.b16 %v227
      %v239 = vunpack.c.l.b16 %v228
      %v240 = vunpack.c.h.b16 %v228
      %v241 = vpack.c.b16 %v235, %v233
      %v242 = vpack.c.b16 %v236, %v234
      %v243 = vpack.c.b16 %v239, %v237
      %v244 = vpack.c.b16 %v240, %v238
      %245 = vrot.lane.b32.xlu0 %v241, 123
      %v246 = vpop.permute.xlu0 %245
      %247 = vrot.lane.b32.xlu0 %v242, 123
      %v248 = vpop.permute.xlu0 %247
      %249 = vrot.lane.b32.xlu0 %v243, 123
      %v250 = vpop.permute.xlu0 %249
      %251 = vrot.lane.b32.xlu0 %v244, 123
      %v252 = vpop.permute.xlu0 %251
      %vm253 = vcmask 1006592
      %v254 = vsel %vm253, %v246, %v248
      %v255 = vsel %vm253, %v250, %v252
      %258 = vst [vmem:[#allocation2 + $0x20] sm:$0xff] %v254
      %259 = vst [vmem:[#allocation2 + $0x28] sm:$0xff] %v255
      %v260 = vld [vmem:[%s165] sm:$0xff]
      %v261 = vld [vmem:[%s165 + $0x8] sm:$0xff]
      %v262 = vld [vmem:[%s165 + $0x10] sm:$0xff]
      %v263 = vld [vmem:[%s165 + $0x18] sm:$0xff]
      %v268 = vunpack.c.l.b16 %v260
      %v269 = vunpack.c.h.b16 %v260
      %v270 = vunpack.c.l.b16 %v261
      %v271 = vunpack.c.h.b16 %v261
      %v272 = vunpack.c.l.b16 %v262
      %v273 = vunpack.c.h.b16 %v262
      %v274 = vunpack.c.l.b16 %v263
      %v275 = vunpack.c.h.b16 %v263
      %v276 = vpack.c.b16 %v270, %v268
      %v277 = vpack.c.b16 %v271, %v269
      %v278 = vpack.c.b16 %v274, %v272
      %v279 = vpack.c.b16 %v275, %v273
      %280 = vrot.lane.b32.xlu0 %v276, 122
      %v281 = vpop.permute.xlu0 %280
      %282 = vrot.lane.b32.xlu0 %v277, 122
      %v283 = vpop.permute.xlu0 %282
      %284 = vrot.lane.b32.xlu0 %v278, 122
      %v285 = vpop.permute.xlu0 %284
      %286 = vrot.lane.b32.xlu0 %v279, 122
      %v287 = vpop.permute.xlu0 %286
      %vm288 = vcmask 998400
      %v289 = vsel %vm288, %v281, %v283
      %v290 = vsel %vm288, %v285, %v287
      %293 = vst [vmem:[#allocation2 + $0x30] sm:$0xff] %v289
      %294 = vst [vmem:[#allocation2 + $0x38] sm:$0xff] %v290
      %v295 = vld [vmem:[%s1] sm:$0xf]
      %v296 = vld [vmem:[%s1 + $0x4] sm:$0xf]
      %v297 = vld [vmem:[%s1 + $0x8] sm:$0xf]
      %v298 = vld [vmem:[%s1 + $0xc] sm:$0xf]
      %v299 = vld [vmem:[%s1 + $0x10] sm:$0xf]
      %v300 = vld [vmem:[%s1 + $0x14] sm:$0xf]
      %v301 = vld [vmem:[%s1 + $0x18] sm:$0xf]
      %v302 = vld [vmem:[%s1 + $0x1c] sm:$0xf]
      %v303 = vld [vmem:[#allocation2] sm:$0xff]
      %v304 = vld [vmem:[#allocation2 + $0x8] sm:$0xff]
      %v305 = vld [vmem:[#allocation2 + $0x10] sm:$0xff]
      %v306 = vld [vmem:[#allocation2 + $0x18] sm:$0xff]
      %v307 = vld [vmem:[#allocation2 + $0x20] sm:$0xff]
      %v308 = vld [vmem:[#allocation2 + $0x28] sm:$0xff]
      %v309 = vld [vmem:[#allocation2 + $0x30] sm:$0xff]
      %v310 = vld [vmem:[#allocation2 + $0x38] sm:$0xff]
      %v311 = vld [vmem:[%s2] sm:$0xff]
      %v312 = vld [vmem:[%s2 + $0x8] sm:$0xff]
      %v313 = vld [vmem:[%s2 + $0x10] sm:$0xff]
      %v314 = vld [vmem:[%s2 + $0x18] sm:$0xff]
      %v315 = vld [vmem:[%s2 + $0x20] sm:$0xff]
      %v316 = vld [vmem:[%s2 + $0x28] sm:$0xff]
      %v317 = vld [vmem:[%s2 + $0x30] sm:$0xff]
      %v318 = vld [vmem:[%s2 + $0x38] sm:$0xff]
      %320 = vset.pattern.permute.xlu0 0
      %321 = vperm.xlu0 %320, %v311
      %v322 = vpop.permute.xlu0 %321
      %325 = vset.pattern.permute.xlu0 0
      %326 = vperm.xlu0 %325, %v312
      %v327 = vpop.permute.xlu0 %326
      %330 = vset.pattern.permute.xlu0 0
      %331 = vperm.xlu0 %330, %v313
      %v332 = vpop.permute.xlu0 %331
      %335 = vset.pattern.permute.xlu0 0
      %336 = vperm.xlu0 %335, %v314
      %v337 = vpop.permute.xlu0 %336
      %340 = vset.pattern.permute.xlu0 0
      %341 = vperm.xlu0 %340, %v315
      %v342 = vpop.permute.xlu0 %341
      %345 = vset.pattern.permute.xlu0 0
      %346 = vperm.xlu0 %345, %v316
      %v347 = vpop.permute.xlu0 %346
      %350 = vset.pattern.permute.xlu0 0
      %351 = vperm.xlu0 %350, %v317
      %v352 = vpop.permute.xlu0 %351
      %355 = vset.pattern.permute.xlu0 0
      %356 = vperm.xlu0 %355, %v318
      %v357 = vpop.permute.xlu0 %356
      %v367 = vunpack.c.l.b16 %v295
      %v368 = vunpack.c.l.b16 %v296
      %v369 = vunpack.c.l.b16 %v297
      %v370 = vunpack.c.l.b16 %v298
      %v371 = vunpack.c.l.b16 %v299
      %v372 = vunpack.c.l.b16 %v300
      %v373 = vunpack.c.l.b16 %v301
      %v374 = vunpack.c.l.b16 %v302
      %v375 = vpack.c.b16 %v368, %v367
      %v376 = vpack.c.b16 %v370, %v369
      %v377 = vpack.c.b16 %v372, %v371
      %v378 = vpack.c.b16 %v374, %v373
      %383 = vmatprep.subr.bf16.mxu0 0
      %384 = vmatpush1.bf16.msra.mxu0 %v303
      %385 = vmatprep.subr.bf16.mxu0 0
      %386 = vmatpush1.bf16.msra.mxu0 %v304
      %387 = vmatprep.subr.bf16.mxu0 0
      %388 = vmatpush1.bf16.msra.mxu0 %v305
      %389 = vmatprep.subr.bf16.mxu0 0
      %390 = vmatpush1.bf16.msra.mxu0 %v306
      %391 = vmatprep.subr.bf16.mxu0 0
      %392 = vmatpush1.bf16.msra.mxu0 %v307
      %393 = vmatprep.subr.bf16.mxu0 0
      %394 = vmatpush1.bf16.msra.mxu0 %v308
      %395 = vmatprep.subr.bf16.mxu0 0
      %396 = vmatpush1.bf16.msra.mxu0 %v309
      %397 = vmatprep.subr.bf16.mxu0 0
      %398 = vmatpush1.bf16.msra.mxu0 %v310
      %399 = vmatprep.subr.bf16.mxu0 0
      %400 = vmatpush1.bf16.msra.mxu0 0
      %401 = vmatprep.subr.bf16.mxu0 0
      %402 = vmatpush1.bf16.msra.mxu0 0
      %403 = vmatprep.subr.bf16.mxu0 0
      %404 = vmatpush1.bf16.msra.mxu0 0
      %405 = vmatprep.subr.bf16.mxu0 0
      %406 = vmatpush1.bf16.msra.mxu0 0
      %407 = vmatprep.subr.bf16.mxu0 0
      %408 = vmatpush1.bf16.msra.mxu0 0
      %409 = vmatprep.subr.bf16.mxu0 0
      %410 = vmatpush1.bf16.msra.mxu0 0
      %411 = vmatprep.subr.bf16.mxu0 0
      %412 = vmatpush1.bf16.msra.mxu0 0
      %413 = vmatprep.subr.bf16.mxu0 0
      %414 = vmatpush1.bf16.msra.mxu0 0
      %415 = vmatprep.mubr.bf16.mxu0 0
      %416 = vmatmul.mubr.bf16.gmra.mrb[0].mxu0 %v375
      %v417 = vpop.f32.mrb[0].mxu0
      %v418 = vadd.f32 %v322, %v417
      %v419 = vpop.f32.mrb[0].mxu0
      %v420 = vpop.f32.mrb[0].mxu0
      %v421 = vadd.f32 %v327, %v420
      %v422 = vpop.f32.mrb[0].mxu0
      %423 = vmatprep.mubr.bf16.mxu0 0
      %424 = vmatmul.mubr.bf16.gmra.mrb[0].mxu0 %v376
      %v425 = vpop.f32.mrb[0].mxu0
      %v426 = vadd.f32 %v332, %v425
      %v427 = vpop.f32.mrb[0].mxu0
      %v428 = vpop.f32.mrb[0].mxu0
      %v429 = vadd.f32 %v337, %v428
      %v430 = vpop.f32.mrb[0].mxu0
      %431 = vmatprep.mubr.bf16.mxu0 0
      %432 = vmatmul.mubr.bf16.gmra.mrb[0].mxu0 %v377
      %v433 = vpop.f32.mrb[0].mxu0
      %v434 = vadd.f32 %v342, %v433
      %v435 = vpop.f32.mrb[0].mxu0
      %v436 = vpop.f32.mrb[0].mxu0
      %v437 = vadd.f32 %v347, %v436
      %v438 = vpop.f32.mrb[0].mxu0
      %439 = vmatprep.mubr.bf16.mxu0 0
      %440 = vmatmul.mubr.bf16.gmra.mrb[0].mxu0 %v378
      %v441 = vpop.f32.mrb[0].mxu0
      %v442 = vadd.f32 %v352, %v441
      %v443 = vpop.f32.mrb[0].mxu0
      %v444 = vpop.f32.mrb[0].mxu0
      %v445 = vadd.f32 %v357, %v444
      %v446 = vpop.f32.mrb[0].mxu0
      %447 = vdwg.mxu0
      %v448 = vlaneseq
      %v449 = vand.u32 %v448, 127
      %vm450 = vcmp.lt.s32.totalorder %v449, 0
      %v451 = vsub.s32 0, %v449
      %v452 = vsel %vm450, %v451, %v449
      %v453 = vmul.u32.u64.compose %v452, 3435973837
      %v454 = vextract.low.u32 %v453
      %v455 = vextract.high.u32 %v453
      %v456 = vshrl.u32 %v455, 2
      %v457 = vmul.u32 %v456, 5
      %v458 = vsub.s32 %v452, %v457
      %v459 = vsub.s32 0, %v458
      %v460 = vsel %vm450, %v459, %v458
      %vm461 = vcmp.ne.s32.totalorder %v460, 0
      %vm462 = vcmp.lt.s32.totalorder %v460, 0
      %vm463 = vmand %vm462, %vm461
      %v464 = vadd.s32 %v460, 5
      %v465 = vsel %vm463, %v464, %v460
      %vm466 = vcmp.lt.s32.totalorder %v465, 4
      %vm467 = vcmp.lt.s32.totalorder %v449, 19
      %vm468 = vmand %vm466, %vm467
      %v469 = vsel %vm468, 1, 0
      %v470 = vcvt.s32.f32 %v469
      %v471 = vmul.f32 %v418, %v470
      %v472 = vmul.f32 %v421, %v470
      %473 = vadd.xlane.f32.xlu0 %v471
      %v474 = vpop.xlane.xlu0 %473
      %475 = vadd.xlane.f32.xlu0 %v472
      %v476 = vpop.xlane.xlu0 %475
      %v477 = vmul.f32 %v418, %v471
      %v478 = vmul.f32 %v421, %v472
      %479 = vadd.xlane.f32.xlu0 %v477
      %v480 = vpop.xlane.xlu0 %479
      %481 = vadd.xlane.f32.xlu0 %v478
      %v482 = vpop.xlane.xlu0 %481
      %v483 = vmul.f32 %v426, %v470
      %v484 = vmul.f32 %v429, %v470
      %485 = vadd.xlane.f32.xlu0 %v483
      %v486 = vpop.xlane.xlu0 %485
      %487 = vadd.xlane.f32.xlu0 %v484
      %v488 = vpop.xlane.xlu0 %487
      %v489 = vmul.f32 %v426, %v483
      %v490 = vmul.f32 %v429, %v484
      %491 = vadd.xlane.f32.xlu0 %v489
      %v492 = vpop.xlane.xlu0 %491
      %493 = vadd.xlane.f32.xlu0 %v490
      %v494 = vpop.xlane.xlu0 %493
      %v495 = vadd.f32 %v474, %v486
      %v496 = vadd.f32 %v476, %v488
      %v497 = vadd.f32 %v480, %v492
      %v498 = vadd.f32 %v482, %v494
      %v499 = vmul.f32 %v434, %v470
      %v500 = vmul.f32 %v437, %v470
      %501 = vadd.xlane.f32.xlu0 %v499
      %v502 = vpop.xlane.xlu0 %501
      %503 = vadd.xlane.f32.xlu0 %v500
      %v504 = vpop.xlane.xlu0 %503
      %v505 = vmul.f32 %v434, %v499
      %v506 = vmul.f32 %v437, %v500
      %507 = vadd.xlane.f32.xlu0 %v505
      %v508 = vpop.xlane.xlu0 %507
      %509 = vadd.xlane.f32.xlu0 %v506
      %v510 = vpop.xlane.xlu0 %509
      %v511 = vadd.f32 %v495, %v502
      %v512 = vadd.f32 %v496, %v504
      %v513 = vadd.f32 %v497, %v508
      %v514 = vadd.f32 %v498, %v510
      %v515 = vmul.f32 %v442, %v470
      %v516 = vmul.f32 %v445, %v470
      %517 = vadd.xlane.f32.xlu0 %v515
      %v518 = vpop.xlane.xlu0 %517
      %519 = vadd.xlane.f32.xlu0 %v516
      %v520 = vpop.xlane.xlu0 %519
      %v521 = vmul.f32 %v442, %v515
      %v522 = vmul.f32 %v445, %v516
      %523 = vadd.xlane.f32.xlu0 %v521
      %v524 = vpop.xlane.xlu0 %523
      %525 = vadd.xlane.f32.xlu0 %v522
      %v526 = vpop.xlane.xlu0 %525
      %v527 = vadd.f32 %v511, %v518
      %v528 = vadd.f32 %v512, %v520
      %v529 = vadd.f32 %v513, %v524
      %v530 = vadd.f32 %v514, %v526
      %v531 = vmul.f32 %v527, 0.015625
      %v532 = vmul.f32 %v528, 0.015625
      %v533 = vmul.f32 %v529, 0.015625
      %v534 = vmul.f32 %v530, 0.015625
      %v535 = vmul.f32 %v531, %v531
      %v536 = vmul.f32 %v532, %v532
      %v537 = vsub.f32 %v533, %v535
      %v538 = vsub.f32 %v534, %v536
      %v539 = vmax.f32 %v537, 0.0
      %v540 = vmax.f32 %v538, 0.0
      %v541 = vadd.f32 %v539, 1e-05
      %v542 = vadd.f32 %v540, 1e-05
      %v543 = vrsqrt.pop %v541
      %v544 = vrsqrt.pop %v542
      %v545 = vsub.f32 %v418, %v531
      %v546 = vsub.f32 %v421, %v532
      %v547 = vmul.f32 %v545, %v543
      %v548 = vmul.f32 %v546, %v544
      %v549 = vmax.f32 %v547, 0.0
      %v550 = vmax.f32 %v548, 0.0
      %v551 = vpack.c.bf16 %v550, %v549
      %v553 = vunpack.c.l.b16 %v551
      %v554 = vunpack.c.h.b16 %v551
      %v555 = vpack.c.b16 %v553, %v553
      %v556 = vpack.c.b16 %v554, %v554
      %559 = vst [vmem:[%s170] sm:$0xf] %v555
      %560 = vst [vmem:[%s170 + $0x4] sm:$0xf] %v556
      %v561 = vsub.f32 %v426, %v531
      %v562 = vsub.f32 %v429, %v532
      %v563 = vmul.f32 %v561, %v543
      %v564 = vmul.f32 %v562, %v544
      %v565 = vmax.f32 %v563, 0.0
      %v566 = vmax.f32 %v564, 0.0
      %v567 = vpack.c.bf16 %v566, %v565
      %v569 = vunpack.c.l.b16 %v567
      %v570 = vunpack.c.h.b16 %v567
      %v571 = vpack.c.b16 %v569, %v569
      %v572 = vpack.c.b16 %v570, %v570
      %575 = vst [vmem:[%s170 + $0x8] sm:$0xf] %v571
      %576 = vst [vmem:[%s170 + $0xc] sm:$0xf] %v572
      %v577 = vsub.f32 %v434, %v531
      %v578 = vsub.f32 %v437, %v532
      %v579 = vmul.f32 %v577, %v543
      %v580 = vmul.f32 %v578, %v544
      %v581 = vmax.f32 %v579, 0.0
      %v582 = vmax.f32 %v580, 0.0
      %v583 = vpack.c.bf16 %v582, %v581
      %v585 = vunpack.c.l.b16 %v583
      %v586 = vunpack.c.h.b16 %v583
      %v587 = vpack.c.b16 %v585, %v585
      %v588 = vpack.c.b16 %v586, %v586
      %591 = vst [vmem:[%s170 + $0x10] sm:$0xf] %v587
      %592 = vst [vmem:[%s170 + $0x14] sm:$0xf] %v588
      %v593 = vsub.f32 %v442, %v531
      %v594 = vsub.f32 %v445, %v532
      %v595 = vmul.f32 %v593, %v543
      %v596 = vmul.f32 %v594, %v544
      %v597 = vmax.f32 %v595, 0.0
      %v598 = vmax.f32 %v596, 0.0
      %v599 = vpack.c.bf16 %v598, %v597
      %v601 = vunpack.c.l.b16 %v599
      %v602 = vunpack.c.h.b16 %v599
      %v603 = vpack.c.b16 %v601, %v601
      %v604 = vpack.c.b16 %v602, %v602
      %607 = vst [vmem:[%s170 + $0x18] sm:$0xf] %v603
      %608 = vst [vmem:[%s170 + $0x1c] sm:$0xf] %v604
      %p609 = scmp.lt.s32.totalorder %s14, 1
      %s610 = scalar_select %p609, %s14, 1
      %s611 = smul.addr %s610, 8
      %s612 = smul.addr %s611, 4
      %s613 = scalar_lea.vmem %s3, %s612
      // Predicated region
      $region33: #{cyclegan_generator_forward.17} parent=31 // pred_check
        %p614 = pneg %p100
      $region34: #{cyclegan_generator_forward.17} parent=31 // pred_check_branch
        %616 = sbr.rel (%p614) target = $region36
      $region35: #{cyclegan_generator_forward.17} parent=31 // pred_region
        _
      $region36: #{cyclegan_generator_forward.17} parent=31 // pred_fallthru
        _
    $region32: #{cyclegan_generator_forward.17} parent=5 // pred_fallthru
      _
    %p617 = scmp.le.s32.totalorder 2, %s9
    // Predicated region
    $region37: #{cyclegan_generator_forward.17} parent=5 // pred_check
      %p618 = pneg %p617
    $region38: #{cyclegan_generator_forward.17} parent=5 // pred_check_branch
      %620 = sbr.rel (%p618) target = $region40
    $region39: #{cyclegan_generator_forward.17} parent=5 // pred_region
      %s621 = ssub.s32 %s9, 2
      // Predicated region
      $region41: #{cyclegan_generator_forward.17} parent=39 // pred_check
        %p622 = pneg %p106
      $region42: #{cyclegan_generator_forward.17} parent=39 // pred_check_branch
        %624 = sbr.rel (%p622) target = $region44
      $region43: #{cyclegan_generator_forward.17} parent=39 // pred_region
        %p625 = scmp.lt.s32.totalorder %s15, 1
        %s626 = scalar_select %p625, %s15, 1
        %s627 = smul.addr %s626, 8
        %s628 = smul.addr %s627, 4
        %s629 = scalar_lea.vmem %s3, %s628
      $region44: #{cyclegan_generator_forward.17} parent=39 // pred_fallthru
        _
    $region40: #{cyclegan_generator_forward.17} parent=5 // pred_fallthru
      _
  $region6: #{cyclegan_generator_forward.17} parent=0 // loop_footer
    %s13 = sadd.s32 1, %s9
  $region7: #{cyclegan_generator_forward.17} parent=0 // loop_footer_branch
    %8 = sbr.rel target = $region3
  $region8: #{cyclegan_generator_forward.17} parent=0 // loop_exit
    _

// kernel: cyclegan_generator_forward.18
$region0: #{cyclegan_generator_forward.18}
  #allocation0 [shape = 'u32[]', space=smem, size = 0x4, offset = 0x4, fixed_abs, tag = 'smem constant byte address 0x4 - core index']
  #allocation1 [shape = 'u32[144,128]{1,0:T(1,128)}', space=vmem, size = 0x12000, scoped, tag = 'internal scratch']
  #allocation2 [shape = 'bf16[64,128]{1,0:T(16,128)(2,1)}', space=vmem, size = 0x4000, scoped, tag = 'scratch operand']
  %s0 = inlined_call_operand.vmem [shape: bf16[2,16,138], index: 0, kind: input, shape index: {}]
  %s1 = inlined_call_operand.vmem [shape: bf16[32,64], index: 1, kind: input, shape index: {}]
  %s2 = inlined_call_operand.vmem [shape: f32[32,1], index: 2, kind: input, shape index: {}]
  %s3 = inlined_call_operand.vmem [shape: bf16[2,32,128], index: 3, kind: output, shape index: {}]
  %s4 = sld [smem:[#allocation0]]
  $region45: #{cyclegan_generator_forward.18} parent=0
    _
  %s6 = ssub.s32 1, %s4
  %s7 = scalar_select 0, %s6, %s4
  loop: start=0, step=1, limit=4
  $region2: #{cyclegan_generator_forward.18} parent=0 // loop_pre_header
    _
  $region3: #{cyclegan_generator_forward.18} parent=0 // loop_header
    %s9 = sphi 0, %s13
    %p10 = scmp.ge.s32.totalorder %s9, 4
    %s19 = sphi 0, %s21
    %s22 = sphi 0, %s19
    %s23 = sphi 0, %s22
    %s39 = sphi 0, %s23
    %s43 = sphi 0, %s43
    %s45 = sphi 0, %s43
    %s46 = sphi 0, %s45
    %s60 = sphi 0, %s46
    %s64 = sphi 0, %s64
    %s66 = sphi 0, %s64
    %s67 = sphi 0, %s66
    %s81 = sphi 0, %s67
    %s87 = sphi 0, %s89
    %s90 = sphi 0, %s87
    %s91 = sphi 0, %s90
    %s107 = sphi 0, %s91
  $region4: #{cyclegan_generator_forward.18} parent=0 // loop_header_branch
    %12 = sbr.rel (%p10) target = $region8
  $region5: #{cyclegan_generator_forward.18} parent=0 // loop_body
    %s14 = ssub.s32 %s9, 1
    %s15 = ssub.s32 %s9, 2
    %s16 = sadd.s32 %s9, 1
    %s17 = ssub.s32 %s9, %s16
    %p18 = scmp.eq.s32.totalorder %s17, 0
    %s20 = sadd.s32 %s19, 1
    %s21 = scalar_select %p18, %s19, %s20
    %p24 = pneg %p18
    %p25 = scmp.eq.s32.totalorder %s9, 1
    %p26 = por %p24, %p25
    %p27 = scmp.ne.s32.totalorder %s19, %s22
    %p28 = scmp.eq.s32.totalorder %s9, 0
    %p29 = por %p27, %p28
    %p30 = scmp.ne.s32.totalorder %s19, %s22
    %p31 = scmp.eq.s32.totalorder %s14, 1
    %p32 = por %p30, %p31
    %p33 = scmp.ne.s32.totalorder %s22, %s23
    %p34 = scmp.eq.s32.totalorder %s14, 0
    %p35 = por %p33, %p34
    %p36 = scmp.ne.s32.totalorder %s22, %s23
    %p37 = scmp.eq.s32.totalorder %s15, 1
    %p38 = por %p36, %p37
    %p40 = scmp.ne.s32.totalorder %s23, %s39
    %p41 = scmp.eq.s32.totalorder %s15, 0
    %p42 = por %p40, %p41
    %s44 = sadd.s32 %s43, 1
    %p47 = scmp.eq.s32.totalorder %s9, 1
    %p48 = scmp.ne.s32.totalorder %s43, %s45
    %p49 = scmp.eq.s32.totalorder %s9, 0
    %p50 = por %p48, %p49
    %p51 = scmp.ne.s32.totalorder %s43, %s45
    %p52 = scmp.eq.s32.totalorder %s14, 1
    %p53 = por %p51, %p52
    %p54 = scmp.ne.s32.totalorder %s45, %s46
    %p55 = scmp.eq.s32.totalorder %s14, 0
    %p56 = por %p54, %p55
    %p57 = scmp.ne.s32.totalorder %s45, %s46
    %p58 = scmp.eq.s32.totalorder %s15, 1
    %p59 = por %p57, %p58
    %p61 = scmp.ne.s32.totalorder %s46, %s60
    %p62 = scmp.eq.s32.totalorder %s15, 0
    %p63 = por %p61, %p62
    %s65 = sadd.s32 %s64, 1
    %p68 = scmp.eq.s32.totalorder %s9, 1
    %p69 = scmp.ne.s32.totalorder %s64, %s66
    %p70 = scmp.eq.s32.totalorder %s9, 0
    %p71 = por %p69, %p70
    %p72 = scmp.ne.s32.totalorder %s64, %s66
    %p73 = scmp.eq.s32.totalorder %s14, 1
    %p74 = por %p72, %p73
    %p75 = scmp.ne.s32.totalorder %s66, %s67
    %p76 = scmp.eq.s32.totalorder %s14, 0
    %p77 = por %p75, %p76
    %p78 = scmp.ne.s32.totalorder %s66, %s67
    %p79 = scmp.eq.s32.totalorder %s15, 1
    %p80 = por %p78, %p79
    %p82 = scmp.ne.s32.totalorder %s67, %s81
    %p83 = scmp.eq.s32.totalorder %s15, 0
    %p84 = por %p82, %p83
    %s85 = ssub.s32 %s9, %s16
    %p86 = scmp.eq.s32.totalorder %s85, 0
    %s88 = sadd.s32 %s87, 1
    %s89 = scalar_select %p86, %s87, %s88
    %p92 = pneg %p86
    %p93 = scmp.eq.s32.totalorder %s9, 1
    %p94 = por %p92, %p93
    %p95 = scmp.ne.s32.totalorder %s87, %s90
    %p96 = scmp.eq.s32.totalorder %s9, 0
    %p97 = por %p95, %p96
    %p98 = scmp.ne.s32.totalorder %s87, %s90
    %p99 = scmp.eq.s32.totalorder %s14, 1
    %p100 = por %p98, %p99
    %p101 = scmp.ne.s32.totalorder %s90, %s91
    %p102 = scmp.eq.s32.totalorder %s14, 0
    %p103 = por %p101, %p102
    %p104 = scmp.ne.s32.totalorder %s90, %s91
    %p105 = scmp.eq.s32.totalorder %s15, 1
    %p106 = por %p104, %p105
    %p108 = scmp.ne.s32.totalorder %s91, %s107
    %p109 = scmp.eq.s32.totalorder %s15, 0
    %p110 = por %p108, %p109
    %p111 = scmp.le.s32.totalorder 1, %s9
    %p112 = scmp.lt.s32.totalorder %s9, 3
    %p113 = pnand %p111, %p112
    %p114 = pneg %p113
    // Predicated region
    $region9: #{cyclegan_generator_forward.18} parent=5 // pred_check
      _
    $region10: #{cyclegan_generator_forward.18} parent=5 // pred_check_branch
      %116 = sbr.rel (%p113) target = $region12
    $region11: #{cyclegan_generator_forward.18} parent=5 // pred_region
      %s117 = ssub.s32 %s9, 1
      // Predicated region
      $region13: #{cyclegan_generator_forward.18} parent=11 // pred_check
        %p118 = pneg %p56
      $region14: #{cyclegan_generator_forward.18} parent=11 // pred_check_branch
        %120 = sbr.rel (%p118) target = $region16
      $region15: #{cyclegan_generator_forward.18} parent=11 // pred_region
        _
      $region16: #{cyclegan_generator_forward.18} parent=11 // pred_fallthru
        _
      // Predicated region
      $region17: #{cyclegan_generator_forward.18} parent=11 // pred_check
        %p121 = pneg %p77
      $region18: #{cyclegan_generator_forward.18} parent=11 // pred_check_branch
        %123 = sbr.rel (%p121) target = $region20
      $region19: #{cyclegan_generator_forward.18} parent=11 // pred_region
        _
      $region20: #{cyclegan_generator_forward.18} parent=11 // pred_fallthru
        _
    $region12: #{cyclegan_generator_forward.18} parent=5 // pred_fallthru
      _
    %p124 = scmp.lt.s32.totalorder %s9, 2
    // Predicated region
    $region21: #{cyclegan_generator_forward.18} parent=5 // pred_check
      %p125 = pneg %p124
    $region22: #{cyclegan_generator_forward.18} parent=5 // pred_check_branch
      %127 = sbr.rel (%p125) target = $region24
    $region23: #{cyclegan_generator_forward.18} parent=5 // pred_region
      // Predicated region
      $region25: #{cyclegan_generator_forward.18} parent=23 // pred_check
        %p128 = pneg %p29
      $region26: #{cyclegan_generator_forward.18} parent=23 // pred_check_branch
        %130 = sbr.rel (%p128) target = $region28
      $region27: #{cyclegan_generator_forward.18} parent=23 // pred_region
        %p131 = scmp.lt.s32.totalorder %s9, 1
        %s132 = scalar_select %p131, %s9, 1
        %s133 = smul.addr %s132, 4
        %s134 = smul.addr %s133, 4
        %s135 = scalar_lea.vmem %s0, %s134
      $region28: #{cyclegan_generator_forward.18} parent=23 // pred_fallthru
        _
    $region24: #{cyclegan_generator_forward.18} parent=5 // pred_fallthru
      _
    %p136 = scmp.le.s32.totalorder 1, %s9
    %p137 = scmp.lt.s32.totalorder %s9, 3
    %p138 = pnand %p136, %p137
    %p139 = pneg %p138
    // Predicated region
    $region29: #{cyclegan_generator_forward.18} parent=5 // pred_check
      _
    $region30: #{cyclegan_generator_forward.18} parent=5 // pred_check_branch
      %141 = sbr.rel (%p138) target = $region32
    $region31: #{cyclegan_generator_forward.18} parent=5 // pred_region
      %s142 = ssub.s32 %s9, 1
      %p143 = scmp.lt.s32.totalorder %s14, 1
      %s144 = scalar_select %p143, %s14, 1
      %s145 = smul.addr %s144, 4
      %s146 = smul.addr %s145, 4
      %s147 = scalar_lea.vmem %s0, %s146
      %p148 = pneg %p35
      %p149 = pneg %p32
      %p150 = pneg %p56
      %p151 = pneg %p53
      %p152 = pneg %p77
      %p153 = pneg %p74
      %p154 = pneg %p103
      %p155 = pneg %p100
      %p156 = scmp.lt.s32.totalorder %s14, 1
      %s157 = scalar_select %p156, %s14, 1
      %s158 = smul.addr %s157, 4
      %s159 = smul.addr %s158, 4
      %s160 = scalar_lea.vmem %s3, %s159
      %p161 = scmp.lt.s32.totalorder %s14, 1
      %s162 = scalar_select %p161, %s14, 1
      %s163 = smul.addr %s162, 4
      %s164 = smul.addr %s163, 4
      %s165 = scalar_lea.vmem %s0, %s164
      %p166 = scmp.lt.s32.totalorder %s14, 1
      %s167 = scalar_select %p166, %s14, 1
      %s168 = smul.addr %s167, 4
      %s169 = smul.addr %s168, 4
      %s170 = scalar_lea.vmem %s3, %s169
      %v172 = vld [vmem:[%s165] sm:$0xf]
      %v173 = vld [vmem:[%s165 + $0x8] sm:$0xf]
      %v176 = vunpack.c.l.b16 %v172
      %v177 = vunpack.c.l.b16 %v173
      %v178 = vpack.c.b16 %v177, %v176
      %180 = vst [vmem:[#allocation2] sm:$0xff] %v178
      %v181 = vld [vmem:[%s165] sm:$0xff]
      %v182 = vld [vmem:[%s165 + $0x8] sm:$0xff]
      %v185 = vunpack.c.l.b16 %v181
      %v186 = vunpack.c.h.b16 %v181
      %v187 = vunpack.c.l.b16 %v182
      %v188 = vunpack.c.h.b16 %v182
      %v189 = vpack.c.b16 %v187, %v185
      %v190 = vpack.c.b16 %v188, %v186
      %191 = vrot.lane.b32.xlu0 %v189, 127
      %v192 = vpop.permute.xlu0 %191
      %193 = vrot.lane.b32.xlu0 %v190, 127
      %v194 = vpop.permute.xlu0 %193
      %vm195 = vcmask 1039360
      %v196 = vsel %vm195, %v192, %v194
      %198 = vst [vmem:[#allocation2 + $0x8] sm:$0xff] %v196
      %v199 = vld [vmem:[%s165] sm:$0xff]
      %v200 = vld [vmem:[%s165 + $0x8] sm:$0xff]
      %v203 = vunpack.c.l.b16 %v199
      %v204 = vunpack.c.h.b16 %v199
      %v205 = vunpack.c.l.b16 %v200
      %v206 = vunpack.c.h.b16 %v200
      %v207 = vpack.c.b16 %v205, %v203
      %v208 = vpack.c.b16 %v206, %v204
      %209 = vrot.lane.b32.xlu0 %v207, 119
      %v210 = vpop.permute.xlu0 %209
      %211 = vrot.lane.b32.xlu0 %v208, 119
      %v212 = vpop.permute.xlu0 %211
      %vm213 = vcmask 973824
      %v214 = vsel %vm213, %v210, %v212
      %216 = vst [vmem:[#allocation2 + $0x10] sm:$0xff] %v214
      %v217 = vld [vmem:[%s165] sm:$0xff]
      %v218 = vld [vmem:[%s165 + $0x8] sm:$0xff]
      %v221 = vunpack.c.l.b16 %v217
      %v222 = vunpack.c.h.b16 %v217
      %v223 = vunpack.c.l.b16 %v218
      %v224 = vunpack.c.h.b16 %v218
      %v225 = vpack.c.b16 %v223, %v221
      %v226 = vpack.c.b16 %v224, %v222
      %227 = vrot.lane.b32.xlu0 %v225, 118
      %v228 = vpop.permute.xlu0 %227
      %229 = vrot.lane.b32.xlu0 %v226, 118
      %v230 = vpop.permute.xlu0 %229
      %vm231 = vcmask 965632
      %v232 = vsel %vm231, %v228, %v230
      %234 = vst [vmem:[#allocation2 + $0x18] sm:$0xff] %v232
      %v235 = vld [vmem:[%s1] sm:$0xf]
      %v236 = vld [vmem:[%s1 + $0x4] sm:$0xf]
      %v237 = vld [vmem:[%s1 + $0x8] sm:$0xf]
      %v238 = vld [vmem:[%s1 + $0xc] sm:$0xf]
      %v239 = vld [vmem:[#allocation2] sm:$0xff]
      %v240 = vld [vmem:[#allocation2 + $0x8] sm:$0xff]
      %v241 = vld [vmem:[#allocation2 + $0x10] sm:$0xff]
      %v242 = vld [vmem:[#allocation2 + $0x18] sm:$0xff]
      %v243 = vld [vmem:[%s2] sm:$0xff]
      %v244 = vld [vmem:[%s2 + $0x8] sm:$0xff]
      %v245 = vld [vmem:[%s2 + $0x10] sm:$0xff]
      %v246 = vld [vmem:[%s2 + $0x18] sm:$0xff]
      %248 = vset.pattern.permute.xlu0 0
      %249 = vperm.xlu0 %248, %v243
      %v250 = vpop.permute.xlu0 %249
      %253 = vset.pattern.permute.xlu0 0
      %254 = vperm.xlu0 %253, %v244
      %v255 = vpop.permute.xlu0 %254
      %258 = vset.pattern.permute.xlu0 0
      %259 = vperm.xlu0 %258, %v245
      %v260 = vpop.permute.xlu0 %259
      %263 = vset.pattern.permute.xlu0 0
      %264 = vperm.xlu0 %263, %v246
      %v265 = vpop.permute.xlu0 %264
      %v271 = vunpack.c.l.b16 %v235
      %v272 = vunpack.c.l.b16 %v236
      %v273 = vunpack.c.l.b16 %v237
      %v274 = vunpack.c.l.b16 %v238
      %v275 = vpack.c.b16 %v272, %v271
      %v276 = vpack.c.b16 %v274, %v273
      %vm277 = vcmask 523264
      %v279 = vsel %vm277, %v275, 0
      %v282 = vsel %vm277, %v276, 0
      %284 = vmatprep.subr.bf16.mxu0 0
      %285 = vmatpush1.bf16.msra.mxu0 %v239
      %286 = vmatprep.subr.bf16.mxu0 0
      %287 = vmatpush1.bf16.msra.mxu0 %v240
      %288 = vmatprep.subr.bf16.mxu0 0
      %289 = vmatpush1.bf16.msra.mxu0 %v241
      %290 = vmatprep.subr.bf16.mxu0 0
      %291 = vmatpush1.bf16.msra.mxu0 %v242
      %292 = vmatprep.subr.bf16.mxu0 0
      %293 = vmatpush1.bf16.msra.mxu0 0
      %294 = vmatprep.subr.bf16.mxu0 0
      %295 = vmatpush1.bf16.msra.mxu0 0
      %296 = vmatprep.subr.bf16.mxu0 0
      %297 = vmatpush1.bf16.msra.mxu0 0
      %298 = vmatprep.subr.bf16.mxu0 0
      %299 = vmatpush1.bf16.msra.mxu0 0
      %300 = vmatprep.subr.bf16.mxu0 0
      %301 = vmatpush1.bf16.msra.mxu0 0
      %302 = vmatprep.subr.bf16.mxu0 0
      %303 = vmatpush1.bf16.msra.mxu0 0
      %304 = vmatprep.subr.bf16.mxu0 0
      %305 = vmatpush1.bf16.msra.mxu0 0
      %306 = vmatprep.subr.bf16.mxu0 0
      %307 = vmatpush1.bf16.msra.mxu0 0
      %308 = vmatprep.subr.bf16.mxu0 0
      %309 = vmatpush1.bf16.msra.mxu0 0
      %310 = vmatprep.subr.bf16.mxu0 0
      %311 = vmatpush1.bf16.msra.mxu0 0
      %312 = vmatprep.subr.bf16.mxu0 0
      %313 = vmatpush1.bf16.msra.mxu0 0
      %314 = vmatprep.subr.bf16.mxu0 0
      %315 = vmatpush1.bf16.msra.mxu0 0
      %316 = vmatprep.mubr.bf16.mxu0 0
      %317 = vmatmul.mubr.bf16.gmra.mrb[0].mxu0 %v279
      %v318 = vpop.f32.mrb[0].mxu0
      %v319 = vadd.f32 %v250, %v318
      %v320 = vpop.f32.mrb[0].mxu0
      %v321 = vpop.f32.mrb[0].mxu0
      %v322 = vadd.f32 %v255, %v321
      %v323 = vpop.f32.mrb[0].mxu0
      %324 = vmatprep.mubr.bf16.mxu0 0
      %325 = vmatmul.mubr.bf16.gmra.mrb[0].mxu0 %v282
      %v326 = vpop.f32.mrb[0].mxu0
      %v327 = vadd.f32 %v260, %v326
      %v328 = vpop.f32.mrb[0].mxu0
      %v329 = vpop.f32.mrb[0].mxu0
      %v330 = vadd.f32 %v265, %v329
      %v331 = vpop.f32.mrb[0].mxu0
      %332 = vdwg.mxu0
      %v333 = vlaneseq
      %v334 = vand.u32 %v333, 127
      %vm335 = vcmp.lt.s32.totalorder %v334, 0
      %v336 = vsub.s32 0, %v334
      %v337 = vsel %vm335, %v336, %v334
      %v338 = vmul.u32.u64.compose %v337, 3817748708
      %v339 = vextract.low.u32 %v338
      %v340 = vextract.high.u32 %v338
      %v341 = vshrl.u32 %v340, 3
      %v342 = vmul.u32 %v341, 9
      %v343 = vsub.s32 %v337, %v342
      %v344 = vsub.s32 0, %v343
      %v345 = vsel %vm335, %v344, %v343
      %vm346 = vcmp.ne.s32.totalorder %v345, 0
      %vm347 = vcmp.lt.s32.totalorder %v345, 0
      %vm348 = vmand %vm347, %vm346
      %v349 = vadd.s32 %v345, 9
      %v350 = vsel %vm348, %v349, %v345
      %vm351 = vcmp.lt.s32.totalorder %v350, 8
      %vm352 = vcmp.lt.s32.totalorder %v334, 71
      %vm353 = vmand %vm351, %vm352
      %v354 = vsel %vm353, 1, 0
      %v355 = vcvt.s32.f32 %v354
      %v356 = vmul.f32 %v319, %v355
      %357 = vadd.xlane.f32.xlu0 %v356
      %v358 = vpop.xlane.xlu0 %357
      %v359 = vmul.f32 %v319, %v356
      %360 = vadd.xlane.f32.xlu0 %v359
      %v361 = vpop.xlane.xlu0 %360
      %v362 = vmul.f32 %v322, %v355
      %363 = vadd.xlane.f32.xlu0 %v362
      %v364 = vpop.xlane.xlu0 %363
      %v365 = vmul.f32 %v322, %v362
      %366 = vadd.xlane.f32.xlu0 %v365
      %v367 = vpop.xlane.xlu0 %366
      %v368 = vadd.f32 %v358, %v364
      %v369 = vadd.f32 %v361, %v367
      %v370 = vmul.f32 %v327, %v355
      %371 = vadd.xlane.f32.xlu0 %v370
      %v372 = vpop.xlane.xlu0 %371
      %v373 = vmul.f32 %v327, %v370
      %374 = vadd.xlane.f32.xlu0 %v373
      %v375 = vpop.xlane.xlu0 %374
      %v376 = vadd.f32 %v368, %v372
      %v377 = vadd.f32 %v369, %v375
      %v378 = vmul.f32 %v330, %v355
      %379 = vadd.xlane.f32.xlu0 %v378
      %v380 = vpop.xlane.xlu0 %379
      %v381 = vmul.f32 %v330, %v378
      %382 = vadd.xlane.f32.xlu0 %v381
      %v383 = vpop.xlane.xlu0 %382
      %v384 = vadd.f32 %v376, %v380
      %v385 = vadd.f32 %v377, %v383
      %v386 = vmul.f32 %v384, 0.00390625
      %v387 = vmul.f32 %v385, 0.00390625
      %v388 = vmul.f32 %v386, %v386
      %v389 = vsub.f32 %v387, %v388
      %v390 = vmax.f32 %v389, 0.0
      %v391 = vadd.f32 %v390, 1e-05
      %v392 = vrsqrt.pop %v391
      %v393 = vsub.f32 %v319, %v386
      %v394 = vmul.f32 %v393, %v392
      %v395 = vmax.f32 %v394, 0.0
      %v396 = vpack.c.bf16 %v395, %v395
      %397 = vst [vmem:[%s170] sm:$0xf] %v396
      %v398 = vsub.f32 %v322, %v386
      %v399 = vmul.f32 %v398, %v392
      %v400 = vmax.f32 %v399, 0.0
      %v401 = vpack.c.bf16 %v400, %v400
      %402 = vst [vmem:[%s170 + $0x4] sm:$0xf] %v401
      %v403 = vsub.f32 %v327, %v386
      %v404 = vmul.f32 %v403, %v392
      %v405 = vmax.f32 %v404, 0.0
      %v406 = vpack.c.bf16 %v405, %v405
      %407 = vst [vmem:[%s170 + $0x8] sm:$0xf] %v406
      %v408 = vsub.f32 %v330, %v386
      %v409 = vmul.f32 %v408, %v392
      %v410 = vmax.f32 %v409, 0.0
      %v411 = vpack.c.bf16 %v410, %v410
      %412 = vst [vmem:[%s170 + $0xc] sm:$0xf] %v411
      %p413 = scmp.lt.s32.totalorder %s14, 1
      %s414 = scalar_select %p413, %s14, 1
      %s415 = smul.addr %s414, 4
      %s416 = smul.addr %s415, 4
      %s417 = scalar_lea.vmem %s3, %s416
      // Predicated region
      $region33: #{cyclegan_generator_forward.18} parent=31 // pred_check
        %p418 = pneg %p100
      $region34: #{cyclegan_generator_forward.18} parent=31 // pred_check_branch
        %420 = sbr.rel (%p418) target = $region36
      $region35: #{cyclegan_generator_forward.18} parent=31 // pred_region
        _
      $region36: #{cyclegan_generator_forward.18} parent=31 // pred_fallthru
        _
    $region32: #{cyclegan_generator_forward.18} parent=5 // pred_fallthru
      _
    %p421 = scmp.le.s32.totalorder 2, %s9
    // Predicated region
    $region37: #{cyclegan_generator_forward.18} parent=5 // pred_check
      %p422 = pneg %p421
    $region38: #{cyclegan_generator_forward.18} parent=5 // pred_check_branch
      %424 = sbr.rel (%p422) target = $region40
    $region39: #{cyclegan_generator_forward.18} parent=5 // pred_region
      %s425 = ssub.s32 %s9, 2
      // Predicated region
      $region41: #{cyclegan_generator_forward.18} parent=39 // pred_check
        %p426 = pneg %p106
      $region42: #{cyclegan_generator_forward.18} parent=39 // pred_check_branch
        %428 = sbr.rel (%p426) target = $region44
      $region43: #{cyclegan_generator_forward.18} parent=39 // pred_region
        %p429 = scmp.lt.s32.totalorder %s15, 1
        %s430 = scalar_select %p429, %s15, 1
        %s431 = smul.addr %s430, 4
        %s432 = smul.addr %s431, 4
        %s433 = scalar_lea.vmem %s3, %s432
      $region44: #{cyclegan_generator_forward.18} parent=39 // pred_fallthru
        _
    $region40: #{cyclegan_generator_forward.18} parent=5 // pred_fallthru
      _
  $region6: #{cyclegan_generator_forward.18} parent=0 // loop_footer
    %s13 = sadd.s32 1, %s9
  $region7: #{cyclegan_generator_forward.18} parent=0 // loop_footer_branch
    %8 = sbr.rel target = $region3
  $region8: #{cyclegan_generator_forward.18} parent=0 // loop_exit
    _

// kernel: cyclegan_generator_forward.19
$region0: #{cyclegan_generator_forward.19}
  #allocation0 [shape = 'u32[]', space=smem, size = 0x4, offset = 0x4, fixed_abs, tag = 'smem constant byte address 0x4 - core index']
  #allocation1 [shape = 'u32[144,128]{1,0:T(1,128)}', space=vmem, size = 0x12000, scoped, tag = 'internal scratch']
  #allocation2 [shape = 'bf16[392,384]{1,0:T(8,128)(2,1)}', space=vmem, size = 0x49800, scoped, tag = 'scratch operand']
  %s0 = inlined_call_operand.vmem [shape: bf16[2,8,522], index: 0, kind: input, shape index: {}]
  %s1 = inlined_call_operand.vmem [shape: bf16[3,392], index: 1, kind: input, shape index: {}]
  %s2 = inlined_call_operand.vmem [shape: f32[3,1], index: 2, kind: input, shape index: {}]
  %s3 = inlined_call_operand.vmem [shape: f32[2,3,384], index: 3, kind: output, shape index: {}]
  %s4 = sld [smem:[#allocation0]]
  $region45: #{cyclegan_generator_forward.19} parent=0
    _
  %s6 = ssub.s32 1, %s4
  %s7 = scalar_select 0, %s6, %s4
  loop: start=0, step=1, limit=4
  $region2: #{cyclegan_generator_forward.19} parent=0 // loop_pre_header
    _
  $region3: #{cyclegan_generator_forward.19} parent=0 // loop_header
    %s9 = sphi 0, %s13
    %p10 = scmp.ge.s32.totalorder %s9, 4
    %s19 = sphi 0, %s21
    %s22 = sphi 0, %s19
    %s23 = sphi 0, %s22
    %s39 = sphi 0, %s23
    %s43 = sphi 0, %s43
    %s45 = sphi 0, %s43
    %s46 = sphi 0, %s45
    %s60 = sphi 0, %s46
    %s64 = sphi 0, %s64
    %s66 = sphi 0, %s64
    %s67 = sphi 0, %s66
    %s81 = sphi 0, %s67
    %s87 = sphi 0, %s89
    %s90 = sphi 0, %s87
    %s91 = sphi 0, %s90
    %s107 = sphi 0, %s91
  $region4: #{cyclegan_generator_forward.19} parent=0 // loop_header_branch
    %12 = sbr.rel (%p10) target = $region8
  $region5: #{cyclegan_generator_forward.19} parent=0 // loop_body
    %s14 = ssub.s32 %s9, 1
    %s15 = ssub.s32 %s9, 2
    %s16 = sadd.s32 %s9, 1
    %s17 = ssub.s32 %s9, %s16
    %p18 = scmp.eq.s32.totalorder %s17, 0
    %s20 = sadd.s32 %s19, 1
    %s21 = scalar_select %p18, %s19, %s20
    %p24 = pneg %p18
    %p25 = scmp.eq.s32.totalorder %s9, 1
    %p26 = por %p24, %p25
    %p27 = scmp.ne.s32.totalorder %s19, %s22
    %p28 = scmp.eq.s32.totalorder %s9, 0
    %p29 = por %p27, %p28
    %p30 = scmp.ne.s32.totalorder %s19, %s22
    %p31 = scmp.eq.s32.totalorder %s14, 1
    %p32 = por %p30, %p31
    %p33 = scmp.ne.s32.totalorder %s22, %s23
    %p34 = scmp.eq.s32.totalorder %s14, 0
    %p35 = por %p33, %p34
    %p36 = scmp.ne.s32.totalorder %s22, %s23
    %p37 = scmp.eq.s32.totalorder %s15, 1
    %p38 = por %p36, %p37
    %p40 = scmp.ne.s32.totalorder %s23, %s39
    %p41 = scmp.eq.s32.totalorder %s15, 0
    %p42 = por %p40, %p41
    %s44 = sadd.s32 %s43, 1
    %p47 = scmp.eq.s32.totalorder %s9, 1
    %p48 = scmp.ne.s32.totalorder %s43, %s45
    %p49 = scmp.eq.s32.totalorder %s9, 0
    %p50 = por %p48, %p49
    %p51 = scmp.ne.s32.totalorder %s43, %s45
    %p52 = scmp.eq.s32.totalorder %s14, 1
    %p53 = por %p51, %p52
    %p54 = scmp.ne.s32.totalorder %s45, %s46
    %p55 = scmp.eq.s32.totalorder %s14, 0
    %p56 = por %p54, %p55
    %p57 = scmp.ne.s32.totalorder %s45, %s46
    %p58 = scmp.eq.s32.totalorder %s15, 1
    %p59 = por %p57, %p58
    %p61 = scmp.ne.s32.totalorder %s46, %s60
    %p62 = scmp.eq.s32.totalorder %s15, 0
    %p63 = por %p61, %p62
    %s65 = sadd.s32 %s64, 1
    %p68 = scmp.eq.s32.totalorder %s9, 1
    %p69 = scmp.ne.s32.totalorder %s64, %s66
    %p70 = scmp.eq.s32.totalorder %s9, 0
    %p71 = por %p69, %p70
    %p72 = scmp.ne.s32.totalorder %s64, %s66
    %p73 = scmp.eq.s32.totalorder %s14, 1
    %p74 = por %p72, %p73
    %p75 = scmp.ne.s32.totalorder %s66, %s67
    %p76 = scmp.eq.s32.totalorder %s14, 0
    %p77 = por %p75, %p76
    %p78 = scmp.ne.s32.totalorder %s66, %s67
    %p79 = scmp.eq.s32.totalorder %s15, 1
    %p80 = por %p78, %p79
    %p82 = scmp.ne.s32.totalorder %s67, %s81
    %p83 = scmp.eq.s32.totalorder %s15, 0
    %p84 = por %p82, %p83
    %s85 = ssub.s32 %s9, %s16
    %p86 = scmp.eq.s32.totalorder %s85, 0
    %s88 = sadd.s32 %s87, 1
    %s89 = scalar_select %p86, %s87, %s88
    %p92 = pneg %p86
    %p93 = scmp.eq.s32.totalorder %s9, 1
    %p94 = por %p92, %p93
    %p95 = scmp.ne.s32.totalorder %s87, %s90
    %p96 = scmp.eq.s32.totalorder %s9, 0
    %p97 = por %p95, %p96
    %p98 = scmp.ne.s32.totalorder %s87, %s90
    %p99 = scmp.eq.s32.totalorder %s14, 1
    %p100 = por %p98, %p99
    %p101 = scmp.ne.s32.totalorder %s90, %s91
    %p102 = scmp.eq.s32.totalorder %s14, 0
    %p103 = por %p101, %p102
    %p104 = scmp.ne.s32.totalorder %s90, %s91
    %p105 = scmp.eq.s32.totalorder %s15, 1
    %p106 = por %p104, %p105
    %p108 = scmp.ne.s32.totalorder %s91, %s107
    %p109 = scmp.eq.s32.totalorder %s15, 0
    %p110 = por %p108, %p109
    %p111 = scmp.le.s32.totalorder 1, %s9
    %p112 = scmp.lt.s32.totalorder %s9, 3
    %p113 = pnand %p111, %p112
    %p114 = pneg %p113
    // Predicated region
    $region9: #{cyclegan_generator_forward.19} parent=5 // pred_check
      _
    $region10: #{cyclegan_generator_forward.19} parent=5 // pred_check_branch
      %116 = sbr.rel (%p113) target = $region12
    $region11: #{cyclegan_generator_forward.19} parent=5 // pred_region
      %s117 = ssub.s32 %s9, 1
      // Predicated region
      $region13: #{cyclegan_generator_forward.19} parent=11 // pred_check
        %p118 = pneg %p56
      $region14: #{cyclegan_generator_forward.19} parent=11 // pred_check_branch
        %120 = sbr.rel (%p118) target = $region16
      $region15: #{cyclegan_generator_forward.19} parent=11 // pred_region
        _
      $region16: #{cyclegan_generator_forward.19} parent=11 // pred_fallthru
        _
      // Predicated region
      $region17: #{cyclegan_generator_forward.19} parent=11 // pred_check
        %p121 = pneg %p77
      $region18: #{cyclegan_generator_forward.19} parent=11 // pred_check_branch
        %123 = sbr.rel (%p121) target = $region20
      $region19: #{cyclegan_generator_forward.19} parent=11 // pred_region
        _
      $region20: #{cyclegan_generator_forward.19} parent=11 // pred_fallthru
        _
    $region12: #{cyclegan_generator_forward.19} parent=5 // pred_fallthru
      _
    %p124 = scmp.lt.s32.totalorder %s9, 2
    // Predicated region
    $region21: #{cyclegan_generator_forward.19} parent=5 // pred_check
      %p125 = pneg %p124
    $region22: #{cyclegan_generator_forward.19} parent=5 // pred_check_branch
      %127 = sbr.rel (%p125) target = $region24
    $region23: #{cyclegan_generator_forward.19} parent=5 // pred_region
      // Predicated region
      $region25: #{cyclegan_generator_forward.19} parent=23 // pred_check
        %p128 = pneg %p29
      $region26: #{cyclegan_generator_forward.19} parent=23 // pred_check_branch
        %130 = sbr.rel (%p128) target = $region28
      $region27: #{cyclegan_generator_forward.19} parent=23 // pred_region
        %p131 = scmp.lt.s32.totalorder %s9, 1
        %s132 = scalar_select %p131, %s9, 1
        %s133 = smul.addr %s132, 5
        %s134 = smul.addr %s133, 4
        %s135 = scalar_lea.vmem %s0, %s134
      $region28: #{cyclegan_generator_forward.19} parent=23 // pred_fallthru
        _
    $region24: #{cyclegan_generator_forward.19} parent=5 // pred_fallthru
      _
    %p136 = scmp.le.s32.totalorder 1, %s9
    %p137 = scmp.lt.s32.totalorder %s9, 3
    %p138 = pnand %p136, %p137
    %p139 = pneg %p138
    // Predicated region
    $region29: #{cyclegan_generator_forward.19} parent=5 // pred_check
      _
    $region30: #{cyclegan_generator_forward.19} parent=5 // pred_check_branch
      %141 = sbr.rel (%p138) target = $region32
    $region31: #{cyclegan_generator_forward.19} parent=5 // pred_region
      %s142 = ssub.s32 %s9, 1
      %p143 = scmp.lt.s32.totalorder %s14, 1
      %s144 = scalar_select %p143, %s14, 1
      %s145 = smul.addr %s144, 5
      %s146 = smul.addr %s145, 4
      %s147 = scalar_lea.vmem %s0, %s146
      %p148 = pneg %p35
      %p149 = pneg %p32
      %p150 = pneg %p56
      %p151 = pneg %p53
      %p152 = pneg %p77
      %p153 = pneg %p74
      %p154 = pneg %p103
      %p155 = pneg %p100
      %p156 = scmp.lt.s32.totalorder %s14, 1
      %s157 = scalar_select %p156, %s14, 1
      %s158 = smul.addr %s157, 3
      %s159 = smul.addr %s158, 4
      %s160 = scalar_lea.vmem %s3, %s159
      %p161 = scmp.lt.s32.totalorder %s14, 1
      %s162 = scalar_select %p161, %s14, 1
      %s163 = smul.addr %s162, 5
      %s164 = smul.addr %s163, 4
      %s165 = scalar_lea.vmem %s0, %s164
      %p166 = scmp.lt.s32.totalorder %s14, 1
      %s167 = scalar_select %p166, %s14, 1
      %s168 = smul.addr %s167, 3
      %s169 = smul.addr %s168, 4
      %s170 = scalar_lea.vmem %s3, %s169
      %v172 = vld [vmem:[%s165] sm:$0xff]
      %v173 = vld [vmem:[%s165 + $0x8] sm:$0xf]
      %174 = vst [vmem:[#allocation2] sm:$0xff] %v172
      %175 = vst [vmem:[#allocation2 + $0x8] sm:$0xf] %v173
      %v176 = vld [vmem:[%s165] sm:$0xff]
      %v177 = vld [vmem:[%s165 + $0x8] sm:$0xff]
      %180 = vrot.lane.b32.xlu0 %v176, 127
      %v181 = vpop.permute.xlu0 %180
      %182 = vrot.lane.b32.xlu0 %v177, 127
      %v183 = vpop.permute.xlu0 %182
      %v184 = vrot.slane %v181, 4
      %v185 = vrot.slane %v183, 4
      %vm186 = vcmask 1043456
      %v187 = vsel %vm186, %v184, %v185
      %vm188 = vcmask 1039360
      %v189 = vsel %vm188, %v181, %v187
      %v190 = vsel %vm188, %v183, %v185
      %193 = vst [vmem:[#allocation2 + $0xc] sm:$0xff] %v189
      %194 = vst [vmem:[#allocation2 + $0x14] sm:$0xf] %v190
      %v195 = vld [vmem:[%s165] sm:$0xff]
      %v196 = vld [vmem:[%s165 + $0x8] sm:$0xff]
      %199 = vrot.lane.b32.xlu0 %v195, 126
      %v200 = vpop.permute.xlu0 %199
      %201 = vrot.lane.b32.xlu0 %v196, 126
      %v202 = vpop.permute.xlu0 %201
      %v203 = vrot.slane %v200, 4
      %v204 = vrot.slane %v202, 4
      %v205 = vsel %vm186, %v203, %v204
      %vm206 = vcmask 1031168
      %v207 = vsel %vm206, %v200, %v205
      %v208 = vsel %vm206, %v202, %v204
      %211 = vst [vmem:[#allocation2 + $0x18] sm:$0xff] %v207
      %212 = vst [vmem:[#allocation2 + $0x20] sm:$0xf] %v208
      %v213 = vld [vmem:[%s165] sm:$0xff]
      %v214 = vld [vmem:[%s165 + $0x8] sm:$0xff]
      %217 = vrot.lane.b32.xlu0 %v213, 125
      %v218 = vpop.permute.xlu0 %217
      %219 = vrot.lane.b32.xlu0 %v214, 125
      %v220 = vpop.permute.xlu0 %219
      %v221 = vrot.slane %v218, 4
      %v222 = vrot.slane %v220, 4
      %v223 = vsel %vm186, %v221, %v222
      %vm224 = vcmask 1022976
      %v225 = vsel %vm224, %v218, %v223
      %v226 = vsel %vm224, %v220, %v222
      %229 = vst [vmem:[#allocation2 + $0x24] sm:$0xff] %v225
      %230 = vst [vmem:[#allocation2 + $0x2c] sm:$0xf] %v226
      %v231 = vld [vmem:[%s165] sm:$0xff]
      %v232 = vld [vmem:[%s165 + $0x8] sm:$0xff]
      %235 = vrot.lane.b32.xlu0 %v231, 124
      %v236 = vpop.permute.xlu0 %235
      %237 = vrot.lane.b32.xlu0 %v232, 124
      %v238 = vpop.permute.xlu0 %237
      %v239 = vrot.slane %v236, 4
      %v240 = vrot.slane %v238, 4
      %v241 = vsel %vm186, %v239, %v240
      %vm242 = vcmask 1014784
      %v243 = vsel %vm242, %v236, %v241
      %v244 = vsel %vm242, %v238, %v240
      %247 = vst [vmem:[#allocation2 + $0x30] sm:$0xff] %v243
      %248 = vst [vmem:[#allocation2 + $0x38] sm:$0xf] %v244
      %v249 = vld [vmem:[%s165] sm:$0xff]
      %v250 = vld [vmem:[%s165 + $0x8] sm:$0xff]
      %253 = vrot.lane.b32.xlu0 %v249, 123
      %v254 = vpop.permute.xlu0 %253
      %255 = vrot.lane.b32.xlu0 %v250, 123
      %v256 = vpop.permute.xlu0 %255
      %v257 = vrot.slane %v254, 4
      %v258 = vrot.slane %v256, 4
      %v259 = vsel %vm186, %v257, %v258
      %vm260 = vcmask 1006592
      %v261 = vsel %vm260, %v254, %v259
      %v262 = vsel %vm260, %v256, %v258
      %265 = vst [vmem:[#allocation2 + $0x3c] sm:$0xff] %v261
      %266 = vst [vmem:[#allocation2 + $0x44] sm:$0xf] %v262
      %v267 = vld [vmem:[%s165] sm:$0xff]
      %v268 = vld [vmem:[%s165 + $0x8] sm:$0xff]
      %271 = vrot.lane.b32.xlu0 %v267, 122
      %v272 = vpop.permute.xlu0 %271
      %273 = vrot.lane.b32.xlu0 %v268, 122
      %v274 = vpop.permute.xlu0 %273
      %v275 = vrot.slane %v272, 4
      %v276 = vrot.slane %v274, 4
      %v277 = vsel %vm186, %v275, %v276
      %vm278 = vcmask 998400
      %v279 = vsel %vm278, %v272, %v277
      %v280 = vsel %vm278, %v274, %v276
      %283 = vst [vmem:[#allocation2 + $0x48] sm:$0xff] %v279
      %284 = vst [vmem:[#allocation2 + $0x50] sm:$0xf] %v280
      %v285 = vld [vmem:[%s165] sm:$0xff]
      %v286 = vld [vmem:[%s165 + $0x8] sm:$0xff]
      %289 = vrot.lane.b32.xlu0 %v285, 106
      %v290 = vpop.permute.xlu0 %289
      %291 = vrot.lane.b32.xlu0 %v286, 106
      %v292 = vpop.permute.xlu0 %291
      %v293 = vrot.slane %v290, 4
      %v294 = vrot.slane %v292, 4
      %v295 = vsel %vm186, %v293, %v294
      %vm296 = vcmask 867328
      %v297 = vsel %vm296, %v290, %v295
      %v298 = vsel %vm296, %v292, %v294
      %301 = vst [vmem:[#allocation2 + $0x54] sm:$0xff] %v297
      %302 = vst [vmem:[#allocation2 + $0x5c] sm:$0xf] %v298
      %v303 = vld [vmem:[%s165] sm:$0xff]
      %v304 = vld [vmem:[%s165 + $0x8] sm:$0xff]
      %307 = vrot.lane.b32.xlu0 %v303, 105
      %v308 = vpop.permute.xlu0 %307
      %309 = vrot.lane.b32.xlu0 %v304, 105
      %v310 = vpop.permute.xlu0 %309
      %v311 = vrot.slane %v308, 4
      %v312 = vrot.slane %v310, 4
      %v313 = vsel %vm186, %v311, %v312
      %vm314 = vcmask 859136
      %v315 = vsel %vm314, %v308, %v313
      %v316 = vsel %vm314, %v310, %v312
      %319 = vst [vmem:[#allocation2 + $0x60] sm:$0xff] %v315
      %320 = vst [vmem:[#allocation2 + $0x68] sm:$0xf] %v316
      %v321 = vld [vmem:[%s165] sm:$0xff]
      %v322 = vld [vmem:[%s165 + $0x8] sm:$0xff]
      %325 = vrot.lane.b32.xlu0 %v321, 104
      %v326 = vpop.permute.xlu0 %325
      %327 = vrot.lane.b32.xlu0 %v322, 104
      %v328 = vpop.permute.xlu0 %327
      %v329 = vrot.slane %v326, 4
      %v330 = vrot.slane %v328, 4
      %v331 = vsel %vm186, %v329, %v330
      %vm332 = vcmask 850944
      %v333 = vsel %vm332, %v326, %v331
      %v334 = vsel %vm332, %v328, %v330
      %337 = vst [vmem:[#allocation2 + $0x6c] sm:$0xff] %v333
      %338 = vst [vmem:[#allocation2 + $0x74] sm:$0xf] %v334
      %v339 = vld [vmem:[%s165] sm:$0xff]
      %v340 = vld [vmem:[%s165 + $0x8] sm:$0xff]
      %343 = vrot.lane.b32.xlu0 %v339, 103
      %v344 = vpop.permute.xlu0 %343
      %345 = vrot.lane.b32.xlu0 %v340, 103
      %v346 = vpop.permute.xlu0 %345
      %v347 = vrot.slane %v344, 4
      %v348 = vrot.slane %v346, 4
      %v349 = vsel %vm186, %v347, %v348
      %vm350 = vcmask 842752
      %v351 = vsel %vm350, %v344, %v349
      %v352 = vsel %vm350, %v346, %v348
      %355 = vst [vmem:[#allocation2 + $0x78] sm:$0xff] %v351
      %356 = vst [vmem:[#allocation2 + $0x80] sm:$0xf] %v352
      %v357 = vld [vmem:[%s165] sm:$0xff]
      %v358 = vld [vmem:[%s165 + $0x8] sm:$0xff]
      %361 = vrot.lane.b32.xlu0 %v357, 102
      %v362 = vpop.permute.xlu0 %361
      %363 = vrot.lane.b32.xlu0 %v358, 102
      %v364 = vpop.permute.xlu0 %363
      %v365 = vrot.slane %v362, 4
      %v366 = vrot.slane %v364, 4
      %v367 = vsel %vm186, %v365, %v366
      %vm368 = vcmask 834560
      %v369 = vsel %vm368, %v362, %v367
      %v370 = vsel %vm368, %v364, %v366
      %373 = vst [vmem:[#allocation2 + $0x84] sm:$0xff] %v369
      %374 = vst [vmem:[#allocation2 + $0x8c] sm:$0xf] %v370
      %v375 = vld [vmem:[%s165] sm:$0xff]
      %v376 = vld [vmem:[%s165 + $0x8] sm:$0xff]
      %379 = vrot.lane.b32.xlu0 %v375, 101
      %v380 = vpop.permute.xlu0 %379
      %381 = vrot.lane.b32.xlu0 %v376, 101
      %v382 = vpop.permute.xlu0 %381
      %v383 = vrot.slane %v380, 4
      %v384 = vrot.slane %v382, 4
      %v385 = vsel %vm186, %v383, %v384
      %vm386 = vcmask 826368
      %v387 = vsel %vm386, %v380, %v385
      %v388 = vsel %vm386, %v382, %v384
      %391 = vst [vmem:[#allocation2 + $0x90] sm:$0xff] %v387
      %392 = vst [vmem:[#allocation2 + $0x98] sm:$0xf] %v388
      %v393 = vld [vmem:[%s165] sm:$0xff]
      %v394 = vld [vmem:[%s165 + $0x8] sm:$0xff]
      %397 = vrot.lane.b32.xlu0 %v393, 100
      %v398 = vpop.permute.xlu0 %397
      %399 = vrot.lane.b32.xlu0 %v394, 100
      %v400 = vpop.permute.xlu0 %399
      %v401 = vrot.slane %v398, 4
      %v402 = vrot.slane %v400, 4
      %v403 = vsel %vm186, %v401, %v402
      %vm404 = vcmask 818176
      %v405 = vsel %vm404, %v398, %v403
      %v406 = vsel %vm404, %v400, %v402
      %409 = vst [vmem:[#allocation2 + $0x9c] sm:$0xff] %v405
      %410 = vst [vmem:[#allocation2 + $0xa4] sm:$0xf] %v406
      %v411 = vld [vmem:[%s165] sm:$0xff]
      %v412 = vld [vmem:[%s165 + $0x8] sm:$0xff]
      %415 = vrot.lane.b32.xlu0 %v411, 84
      %v416 = vpop.permute.xlu0 %415
      %417 = vrot.lane.b32.xlu0 %v412, 84
      %v418 = vpop.permute.xlu0 %417
      %v419 = vrot.slane %v416, 4
      %v420 = vrot.slane %v418, 4
      %v421 = vsel %vm186, %v419, %v420
      %vm422 = vcmask 687104
      %v423 = vsel %vm422, %v416, %v421
      %v424 = vsel %vm422, %v418, %v420
      %427 = vst [vmem:[#allocation2 + $0xa8] sm:$0xff] %v423
      %428 = vst [vmem:[#allocation2 + $0xb0] sm:$0xf] %v424
      %v429 = vld [vmem:[%s165] sm:$0xff]
      %v430 = vld [vmem:[%s165 + $0x8] sm:$0xff]
      %433 = vrot.lane.b32.xlu0 %v429, 83
      %v434 = vpop.permute.xlu0 %433
      %435 = vrot.lane.b32.xlu0 %v430, 83
      %v436 = vpop.permute.xlu0 %435
      %v437 = vrot.slane %v434, 4
      %v438 = vrot.slane %v436, 4
      %v439 = vsel %vm186, %v437, %v438
      %vm440 = vcmask 678912
      %v441 = vsel %vm440, %v434, %v439
      %v442 = vsel %vm440, %v436, %v438
      %445 = vst [vmem:[#allocation2 + $0xb4] sm:$0xff] %v441
      %446 = vst [vmem:[#allocation2 + $0xbc] sm:$0xf] %v442
      %v447 = vld [vmem:[%s165] sm:$0xff]
      %v448 = vld [vmem:[%s165 + $0x8] sm:$0xff]
      %451 = vrot.lane.b32.xlu0 %v447, 82
      %v452 = vpop.permute.xlu0 %451
      %453 = vrot.lane.b32.xlu0 %v448, 82
      %v454 = vpop.permute.xlu0 %453
      %v455 = vrot.slane %v452, 4
      %v456 = vrot.slane %v454, 4
      %v457 = vsel %vm186, %v455, %v456
      %vm458 = vcmask 670720
      %v459 = vsel %vm458, %v452, %v457
      %v460 = vsel %vm458, %v454, %v456
      %463 = vst [vmem:[#allocation2 + $0xc0] sm:$0xff] %v459
      %464 = vst [vmem:[#allocation2 + $0xc8] sm:$0xf] %v460
      %v465 = vld [vmem:[%s165] sm:$0xff]
      %v466 = vld [vmem:[%s165 + $0x8] sm:$0xff]
      %469 = vrot.lane.b32.xlu0 %v465, 81
      %v470 = vpop.permute.xlu0 %469
      %471 = vrot.lane.b32.xlu0 %v466, 81
      %v472 = vpop.permute.xlu0 %471
      %v473 = vrot.slane %v470, 4
      %v474 = vrot.slane %v472, 4
      %v475 = vsel %vm186, %v473, %v474
      %vm476 = vcmask 662528
      %v477 = vsel %vm476, %v470, %v475
      %v478 = vsel %vm476, %v472, %v474
      %481 = vst [vmem:[#allocation2 + $0xcc] sm:$0xff] %v477
      %482 = vst [vmem:[#allocation2 + $0xd4] sm:$0xf] %v478
      %v483 = vld [vmem:[%s165] sm:$0xff]
      %v484 = vld [vmem:[%s165 + $0x8] sm:$0xff]
      %487 = vrot.lane.b32.xlu0 %v483, 80
      %v488 = vpop.permute.xlu0 %487
      %489 = vrot.lane.b32.xlu0 %v484, 80
      %v490 = vpop.permute.xlu0 %489
      %v491 = vrot.slane %v488, 4
      %v492 = vrot.slane %v490, 4
      %v493 = vsel %vm186, %v491, %v492
      %vm494 = vcmask 654336
      %v495 = vsel %vm494, %v488, %v493
      %v496 = vsel %vm494, %v490, %v492
      %499 = vst [vmem:[#allocation2 + $0xd8] sm:$0xff] %v495
      %500 = vst [vmem:[#allocation2 + $0xe0] sm:$0xf] %v496
      %v501 = vld [vmem:[%s165] sm:$0xff]
      %v502 = vld [vmem:[%s165 + $0x8] sm:$0xff]
      %505 = vrot.lane.b32.xlu0 %v501, 79
      %v506 = vpop.permute.xlu0 %505
      %507 = vrot.lane.b32.xlu0 %v502, 79
      %v508 = vpop.permute.xlu0 %507
      %v509 = vrot.slane %v506, 4
      %v510 = vrot.slane %v508, 4
      %v511 = vsel %vm186, %v509, %v510
      %vm512 = vcmask 646144
      %v513 = vsel %vm512, %v506, %v511
      %v514 = vsel %vm512, %v508, %v510
      %517 = vst [vmem:[#allocation2 + $0xe4] sm:$0xff] %v513
      %518 = vst [vmem:[#allocation2 + $0xec] sm:$0xf] %v514
      %v519 = vld [vmem:[%s165] sm:$0xff]
      %v520 = vld [vmem:[%s165 + $0x8] sm:$0xff]
      %523 = vrot.lane.b32.xlu0 %v519, 78
      %v524 = vpop.permute.xlu0 %523
      %525 = vrot.lane.b32.xlu0 %v520, 78
      %v526 = vpop.permute.xlu0 %525
      %v527 = vrot.slane %v524, 4
      %v528 = vrot.slane %v526, 4
      %v529 = vsel %vm186, %v527, %v528
      %vm530 = vcmask 637952
      %v531 = vsel %vm530, %v524, %v529
      %v532 = vsel %vm530, %v526, %v528
      %535 = vst [vmem:[#allocation2 + $0xf0] sm:$0xff] %v531
      %536 = vst [vmem:[#allocation2 + $0xf8] sm:$0xf] %v532
      %v537 = vld [vmem:[%s165] sm:$0xff]
      %v538 = vld [vmem:[%s165 + $0x8] sm:$0xff]
      %541 = vrot.lane.b32.xlu0 %v537, 62
      %v542 = vpop.permute.xlu0 %541
      %543 = vrot.lane.b32.xlu0 %v538, 62
      %v544 = vpop.permute.xlu0 %543
      %v545 = vrot.slane %v542, 4
      %v546 = vrot.slane %v544, 4
      %v547 = vsel %vm186, %v545, %v546
      %vm548 = vcmask 506880
      %v549 = vsel %vm548, %v542, %v547
      %v550 = vsel %vm548, %v544, %v546
      %553 = vst [vmem:[#allocation2 + $0xfc] sm:$0xff] %v549
      %554 = vst [vmem:[#allocation2 + $0x104] sm:$0xf] %v550
      %v555 = vld [vmem:[%s165] sm:$0xff]
      %v556 = vld [vmem:[%s165 + $0x8] sm:$0xff]
      %559 = vrot.lane.b32.xlu0 %v555, 61
      %v560 = vpop.permute.xlu0 %559
      %561 = vrot.lane.b32.xlu0 %v556, 61
      %v562 = vpop.permute.xlu0 %561
      %v563 = vrot.slane %v560, 4
      %v564 = vrot.slane %v562, 4
      %v565 = vsel %vm186, %v563, %v564
      %vm566 = vcmask 498688
      %v567 = vsel %vm566, %v560, %v565
      %v568 = vsel %vm566, %v562, %v564
      %571 = vst [vmem:[#allocation2 + $0x108] sm:$0xff] %v567
      %572 = vst [vmem:[#allocation2 + $0x110] sm:$0xf] %v568
      %v573 = vld [vmem:[%s165] sm:$0xff]
      %v574 = vld [vmem:[%s165 + $0x8] sm:$0xff]
      %577 = vrot.lane.b32.xlu0 %v573, 60
      %v578 = vpop.permute.xlu0 %577
      %579 = vrot.lane.b32.xlu0 %v574, 60
      %v580 = vpop.permute.xlu0 %579
      %v581 = vrot.slane %v578, 4
      %v582 = vrot.slane %v580, 4
      %v583 = vsel %vm186, %v581, %v582
      %vm584 = vcmask 490496
      %v585 = vsel %vm584, %v578, %v583
      %v586 = vsel %vm584, %v580, %v582
      %589 = vst [vmem:[#allocation2 + $0x114] sm:$0xff] %v585
      %590 = vst [vmem:[#allocation2 + $0x11c] sm:$0xf] %v586
      %v591 = vld [vmem:[%s165] sm:$0xff]
      %v592 = vld [vmem:[%s165 + $0x8] sm:$0xff]
      %595 = vrot.lane.b32.xlu0 %v591, 59
      %v596 = vpop.permute.xlu0 %595
      %597 = vrot.lane.b32.xlu0 %v592, 59
      %v598 = vpop.permute.xlu0 %597
      %v599 = vrot.slane %v596, 4
      %v600 = vrot.slane %v598, 4
      %v601 = vsel %vm186, %v599, %v600
      %vm602 = vcmask 482304
      %v603 = vsel %vm602, %v596, %v601
      %v604 = vsel %vm602, %v598, %v600
      %607 = vst [vmem:[#allocation2 + $0x120] sm:$0xff] %v603
      %608 = vst [vmem:[#allocation2 + $0x128] sm:$0xf] %v604
      %v609 = vld [vmem:[%s165] sm:$0xff]
      %v610 = vld [vmem:[%s165 + $0x8] sm:$0xff]
      %613 = vrot.lane.b32.xlu0 %v609, 58
      %v614 = vpop.permute.xlu0 %613
      %615 = vrot.lane.b32.xlu0 %v610, 58
      %v616 = vpop.permute.xlu0 %615
      %v617 = vrot.slane %v614, 4
      %v618 = vrot.slane %v616, 4
      %v619 = vsel %vm186, %v617, %v618
      %vm620 = vcmask 474112
      %v621 = vsel %vm620, %v614, %v619
      %v622 = vsel %vm620, %v616, %v618
      %625 = vst [vmem:[#allocation2 + $0x12c] sm:$0xff] %v621
      %626 = vst [vmem:[#allocation2 + $0x134] sm:$0xf] %v622
      %v627 = vld [vmem:[%s165] sm:$0xff]
      %v628 = vld [vmem:[%s165 + $0x8] sm:$0xff]
      %631 = vrot.lane.b32.xlu0 %v627, 57
      %v632 = vpop.permute.xlu0 %631
      %633 = vrot.lane.b32.xlu0 %v628, 57
      %v634 = vpop.permute.xlu0 %633
      %v635 = vrot.slane %v632, 4
      %v636 = vrot.slane %v634, 4
      %v637 = vsel %vm186, %v635, %v636
      %vm638 = vcmask 465920
      %v639 = vsel %vm638, %v632, %v637
      %v640 = vsel %vm638, %v634, %v636
      %643 = vst [vmem:[#allocation2 + $0x138] sm:$0xff] %v639
      %644 = vst [vmem:[#allocation2 + $0x140] sm:$0xf] %v640
      %v645 = vld [vmem:[%s165] sm:$0xff]
      %v646 = vld [vmem:[%s165 + $0x8] sm:$0xff]
      %649 = vrot.lane.b32.xlu0 %v645, 56
      %v650 = vpop.permute.xlu0 %649
      %651 = vrot.lane.b32.xlu0 %v646, 56
      %v652 = vpop.permute.xlu0 %651
      %v653 = vrot.slane %v650, 4
      %v654 = vrot.slane %v652, 4
      %v655 = vsel %vm186, %v653, %v654
      %vm656 = vcmask 457728
      %v657 = vsel %vm656, %v650, %v655
      %v658 = vsel %vm656, %v652, %v654
      %661 = vst [vmem:[#allocation2 + $0x144] sm:$0xff] %v657
      %662 = vst [vmem:[#allocation2 + $0x14c] sm:$0xf] %v658
      %v663 = vld [vmem:[%s165] sm:$0xff]
      %v664 = vld [vmem:[%s165 + $0x8] sm:$0xff]
      %667 = vrot.lane.b32.xlu0 %v663, 40
      %v668 = vpop.permute.xlu0 %667
      %669 = vrot.lane.b32.xlu0 %v664, 40
      %v670 = vpop.permute.xlu0 %669
      %v671 = vrot.slane %v668, 4
      %v672 = vrot.slane %v670, 4
      %v673 = vsel %vm186, %v671, %v672
      %vm674 = vcmask 326656
      %v675 = vsel %vm674, %v668, %v673
      %v676 = vsel %vm674, %v670, %v672
      %679 = vst [vmem:[#allocation2 + $0x150] sm:$0xff] %v675
      %680 = vst [vmem:[#allocation2 + $0x158] sm:$0xf] %v676
      %v681 = vld [vmem:[%s165] sm:$0xff]
      %v682 = vld [vmem:[%s165 + $0x8] sm:$0xff]
      %685 = vrot.lane.b32.xlu0 %v681, 39
      %v686 = vpop.permute.xlu0 %685
      %687 = vrot.lane.b32.xlu0 %v682, 39
      %v688 = vpop.permute.xlu0 %687
      %v689 = vrot.slane %v686, 4
      %v690 = vrot.slane %v688, 4
      %v691 = vsel %vm186, %v689, %v690
      %vm692 = vcmask 318464
      %v693 = vsel %vm692, %v686, %v691
      %v694 = vsel %vm692, %v688, %v690
      %697 = vst [vmem:[#allocation2 + $0x15c] sm:$0xff] %v693
      %698 = vst [vmem:[#allocation2 + $0x164] sm:$0xf] %v694
      %v699 = vld [vmem:[%s165] sm:$0xff]
      %v700 = vld [vmem:[%s165 + $0x8] sm:$0xff]
      %703 = vrot.lane.b32.xlu0 %v699, 38
      %v704 = vpop.permute.xlu0 %703
      %705 = vrot.lane.b32.xlu0 %v700, 38
      %v706 = vpop.permute.xlu0 %705
      %v707 = vrot.slane %v704, 4
      %v708 = vrot.slane %v706, 4
      %v709 = vsel %vm186, %v707, %v708
      %vm710 = vcmask 310272
      %v711 = vsel %vm710, %v704, %v709
      %v712 = vsel %vm710, %v706, %v708
      %715 = vst [vmem:[#allocation2 + $0x168] sm:$0xff] %v711
      %716 = vst [vmem:[#allocation2 + $0x170] sm:$0xf] %v712
      %v717 = vld [vmem:[%s165] sm:$0xff]
      %v718 = vld [vmem:[%s165 + $0x8] sm:$0xff]
      %721 = vrot.lane.b32.xlu0 %v717, 37
      %v722 = vpop.permute.xlu0 %721
      %723 = vrot.lane.b32.xlu0 %v718, 37
      %v724 = vpop.permute.xlu0 %723
      %v725 = vrot.slane %v722, 4
      %v726 = vrot.slane %v724, 4
      %v727 = vsel %vm186, %v725, %v726
      %vm728 = vcmask 302080
      %v729 = vsel %vm728, %v722, %v727
      %v730 = vsel %vm728, %v724, %v726
      %733 = vst [vmem:[#allocation2 + $0x174] sm:$0xff] %v729
      %734 = vst [vmem:[#allocation2 + $0x17c] sm:$0xf] %v730
      %v735 = vld [vmem:[%s165] sm:$0xff]
      %v736 = vld [vmem:[%s165 + $0x8] sm:$0xff]
      %739 = vrot.lane.b32.xlu0 %v735, 36
      %v740 = vpop.permute.xlu0 %739
      %741 = vrot.lane.b32.xlu0 %v736, 36
      %v742 = vpop.permute.xlu0 %741
      %v743 = vrot.slane %v740, 4
      %v744 = vrot.slane %v742, 4
      %v745 = vsel %vm186, %v743, %v744
      %vm746 = vcmask 293888
      %v747 = vsel %vm746, %v740, %v745
      %v748 = vsel %vm746, %v742, %v744
      %751 = vst [vmem:[#allocation2 + $0x180] sm:$0xff] %v747
      %752 = vst [vmem:[#allocation2 + $0x188] sm:$0xf] %v748
      %v753 = vld [vmem:[%s165] sm:$0xff]
      %v754 = vld [vmem:[%s165 + $0x8] sm:$0xff]
      %757 = vrot.lane.b32.xlu0 %v753, 35
      %v758 = vpop.permute.xlu0 %757
      %759 = vrot.lane.b32.xlu0 %v754, 35
      %v760 = vpop.permute.xlu0 %759
      %v761 = vrot.slane %v758, 4
      %v762 = vrot.slane %v760, 4
      %v763 = vsel %vm186, %v761, %v762
      %vm764 = vcmask 285696
      %v765 = vsel %vm764, %v758, %v763
      %v766 = vsel %vm764, %v760, %v762
      %769 = vst [vmem:[#allocation2 + $0x18c] sm:$0xff] %v765
      %770 = vst [vmem:[#allocation2 + $0x194] sm:$0xf] %v766
      %v771 = vld [vmem:[%s165] sm:$0xff]
      %v772 = vld [vmem:[%s165 + $0x8] sm:$0xff]
      %775 = vrot.lane.b32.xlu0 %v771, 34
      %v776 = vpop.permute.xlu0 %775
      %777 = vrot.lane.b32.xlu0 %v772, 34
      %v778 = vpop.permute.xlu0 %777
      %v779 = vrot.slane %v776, 4
      %v780 = vrot.slane %v778, 4
      %v781 = vsel %vm186, %v779, %v780
      %vm782 = vcmask 277504
      %v783 = vsel %vm782, %v776, %v781
      %v784 = vsel %vm782, %v778, %v780
      %787 = vst [vmem:[#allocation2 + $0x198] sm:$0xff] %v783
      %788 = vst [vmem:[#allocation2 + $0x1a0] sm:$0xf] %v784
      %v789 = vld [vmem:[%s165] sm:$0xff]
      %v790 = vld [vmem:[%s165 + $0x8] sm:$0xff]
      %793 = vrot.lane.b32.xlu0 %v789, 18
      %v794 = vpop.permute.xlu0 %793
      %795 = vrot.lane.b32.xlu0 %v790, 18
      %v796 = vpop.permute.xlu0 %795
      %v797 = vrot.slane %v794, 4
      %v798 = vrot.slane %v796, 4
      %v799 = vsel %vm186, %v797, %v798
      %vm800 = vcmask 146432
      %v801 = vsel %vm800, %v794, %v799
      %v802 = vsel %vm800, %v796, %v798
      %805 = vst [vmem:[#allocation2 + $0x1a4] sm:$0xff] %v801
      %806 = vst [vmem:[#allocation2 + $0x1ac] sm:$0xf] %v802
      %v807 = vld [vmem:[%s165] sm:$0xff]
      %v808 = vld [vmem:[%s165 + $0x8] sm:$0xff]
      %811 = vrot.lane.b32.xlu0 %v807, 17
      %v812 = vpop.permute.xlu0 %811
      %813 = vrot.lane.b32.xlu0 %v808, 17
      %v814 = vpop.permute.xlu0 %813
      %v815 = vrot.slane %v812, 4
      %v816 = vrot.slane %v814, 4
      %v817 = vsel %vm186, %v815, %v816
      %vm818 = vcmask 138240
      %v819 = vsel %vm818, %v812, %v817
      %v820 = vsel %vm818, %v814, %v816
      %823 = vst [vmem:[#allocation2 + $0x1b0] sm:$0xff] %v819
      %824 = vst [vmem:[#allocation2 + $0x1b8] sm:$0xf] %v820
      %v825 = vld [vmem:[%s165] sm:$0xff]
      %v826 = vld [vmem:[%s165 + $0x8] sm:$0xff]
      %829 = vrot.lane.b32.xlu0 %v825, 16
      %v830 = vpop.permute.xlu0 %829
      %831 = vrot.lane.b32.xlu0 %v826, 16
      %v832 = vpop.permute.xlu0 %831
      %v833 = vrot.slane %v830, 4
      %v834 = vrot.slane %v832, 4
      %v835 = vsel %vm186, %v833, %v834
      %vm836 = vcmask 130048
      %v837 = vsel %vm836, %v830, %v835
      %v838 = vsel %vm836, %v832, %v834
      %841 = vst [vmem:[#allocation2 + $0x1bc] sm:$0xff] %v837
      %842 = vst [vmem:[#allocation2 + $0x1c4] sm:$0xf] %v838
      %v843 = vld [vmem:[%s165] sm:$0xff]
      %v844 = vld [vmem:[%s165 + $0x8] sm:$0xff]
      %847 = vrot.lane.b32.xlu0 %v843, 15
      %v848 = vpop.permute.xlu0 %847
      %849 = vrot.lane.b32.xlu0 %v844, 15
      %v850 = vpop.permute.xlu0 %849
      %v851 = vrot.slane %v848, 4
      %v852 = vrot.slane %v850, 4
      %v853 = vsel %vm186, %v851, %v852
      %vm854 = vcmask 121856
      %v855 = vsel %vm854, %v848, %v853
      %v856 = vsel %vm854, %v850, %v852
      %859 = vst [vmem:[#allocation2 + $0x1c8] sm:$0xff] %v855
      %860 = vst [vmem:[#allocation2 + $0x1d0] sm:$0xf] %v856
      %v861 = vld [vmem:[%s165] sm:$0xff]
      %v862 = vld [vmem:[%s165 + $0x8] sm:$0xff]
      %865 = vrot.lane.b32.xlu0 %v861, 14
      %v866 = vpop.permute.xlu0 %865
      %867 = vrot.lane.b32.xlu0 %v862, 14
      %v868 = vpop.permute.xlu0 %867
      %v869 = vrot.slane %v866, 4
      %v870 = vrot.slane %v868, 4
      %v871 = vsel %vm186, %v869, %v870
      %vm872 = vcmask 113664
      %v873 = vsel %vm872, %v866, %v871
      %v874 = vsel %vm872, %v868, %v870
      %877 = vst [vmem:[#allocation2 + $0x1d4] sm:$0xff] %v873
      %878 = vst [vmem:[#allocation2 + $0x1dc] sm:$0xf] %v874
      %v879 = vld [vmem:[%s165] sm:$0xff]
      %v880 = vld [vmem:[%s165 + $0x8] sm:$0xff]
      %883 = vrot.lane.b32.xlu0 %v879, 13
      %v884 = vpop.permute.xlu0 %883
      %885 = vrot.lane.b32.xlu0 %v880, 13
      %v886 = vpop.permute.xlu0 %885
      %v887 = vrot.slane %v884, 4
      %v888 = vrot.slane %v886, 4
      %v889 = vsel %vm186, %v887, %v888
      %vm890 = vcmask 105472
      %v891 = vsel %vm890, %v884, %v889
      %v892 = vsel %vm890, %v886, %v888
      %895 = vst [vmem:[#allocation2 + $0x1e0] sm:$0xff] %v891
      %896 = vst [vmem:[#allocation2 + $0x1e8] sm:$0xf] %v892
      %v897 = vld [vmem:[%s165] sm:$0xff]
      %v898 = vld [vmem:[%s165 + $0x8] sm:$0xff]
      %901 = vrot.lane.b32.xlu0 %v897, 12
      %v902 = vpop.permute.xlu0 %901
      %903 = vrot.lane.b32.xlu0 %v898, 12
      %v904 = vpop.permute.xlu0 %903
      %v905 = vrot.slane %v902, 4
      %v906 = vrot.slane %v904, 4
      %v907 = vsel %vm186, %v905, %v906
      %vm908 = vcmask 97280
      %v909 = vsel %vm908, %v902, %v907
      %v910 = vsel %vm908, %v904, %v906
      %913 = vst [vmem:[#allocation2 + $0x1ec] sm:$0xff] %v909
      %914 = vst [vmem:[#allocation2 + $0x1f4] sm:$0xf] %v910
      %v915 = vld [vmem:[%s165 + $0x4] sm:$0xff]
      %v916 = vld [vmem:[%s165 + $0xc] sm:$0xff]
      %919 = vrot.lane.b32.xlu0 %v915, 124
      %v920 = vpop.permute.xlu0 %919
      %921 = vrot.lane.b32.xlu0 %v916, 124
      %v922 = vpop.permute.xlu0 %921
      %v923 = vrot.slane %v920, 4
      %v924 = vrot.slane %v922, 4
      %v925 = vsel %vm186, %v923, %v924
      %v926 = vsel %vm242, %v920, %v925
      %v927 = vsel %vm242, %v922, %v924
      %930 = vst [vmem:[#allocation2 + $0x1f8] sm:$0xff] %v926
      %931 = vst [vmem:[#allocation2 + $0x200] sm:$0xf] %v927
      %v932 = vld [vmem:[%s165 + $0x4] sm:$0xff]
      %v933 = vld [vmem:[%s165 + $0xc] sm:$0xff]
      %936 = vrot.lane.b32.xlu0 %v932, 123
      %v937 = vpop.permute.xlu0 %936
      %938 = vrot.lane.b32.xlu0 %v933, 123
      %v939 = vpop.permute.xlu0 %938
      %v940 = vrot.slane %v937, 4
      %v941 = vrot.slane %v939, 4
      %v942 = vsel %vm186, %v940, %v941
      %v943 = vsel %vm260, %v937, %v942
      %v944 = vsel %vm260, %v939, %v941
      %947 = vst [vmem:[#allocation2 + $0x204] sm:$0xff] %v943
      %948 = vst [vmem:[#allocation2 + $0x20c] sm:$0xf] %v944
      %v949 = vld [vmem:[%s165 + $0x4] sm:$0xff]
      %v950 = vld [vmem:[%s165 + $0xc] sm:$0xff]
      %953 = vrot.lane.b32.xlu0 %v949, 122
      %v954 = vpop.permute.xlu0 %953
      %955 = vrot.lane.b32.xlu0 %v950, 122
      %v956 = vpop.permute.xlu0 %955
      %v957 = vrot.slane %v954, 4
      %v958 = vrot.slane %v956, 4
      %v959 = vsel %vm186, %v957, %v958
      %v960 = vsel %vm278, %v954, %v959
      %v961 = vsel %vm278, %v956, %v958
      %964 = vst [vmem:[#allocation2 + $0x210] sm:$0xff] %v960
      %965 = vst [vmem:[#allocation2 + $0x218] sm:$0xf] %v961
      %v966 = vld [vmem:[%s165 + $0x4] sm:$0xff]
      %v967 = vld [vmem:[%s165 + $0xc] sm:$0xff]
      %970 = vrot.lane.b32.xlu0 %v966, 121
      %v971 = vpop.permute.xlu0 %970
      %972 = vrot.lane.b32.xlu0 %v967, 121
      %v973 = vpop.permute.xlu0 %972
      %v974 = vrot.slane %v971, 4
      %v975 = vrot.slane %v973, 4
      %v976 = vsel %vm186, %v974, %v975
      %vm977 = vcmask 990208
      %v978 = vsel %vm977, %v971, %v976
      %v979 = vsel %vm977, %v973, %v975
      %982 = vst [vmem:[#allocation2 + $0x21c] sm:$0xff] %v978
      %983 = vst [vmem:[#allocation2 + $0x224] sm:$0xf] %v979
      %v984 = vld [vmem:[%s165 + $0x4] sm:$0xff]
      %v985 = vld [vmem:[%s165 + $0xc] sm:$0xff]
      %988 = vrot.lane.b32.xlu0 %v984, 120
      %v989 = vpop.permute.xlu0 %988
      %990 = vrot.lane.b32.xlu0 %v985, 120
      %v991 = vpop.permute.xlu0 %990
      %v992 = vrot.slane %v989, 4
      %v993 = vrot.slane %v991, 4
      %v994 = vsel %vm186, %v992, %v993
      %vm995 = vcmask 982016
      %v996 = vsel %vm995, %v989, %v994
      %v997 = vsel %vm995, %v991, %v993
      %1000 = vst [vmem:[#allocation2 + $0x228] sm:$0xff] %v996
      %1001 = vst [vmem:[#allocation2 + $0x230] sm:$0xf] %v997
      %v1002 = vld [vmem:[%s165 + $0x4] sm:$0xff]
      %v1003 = vld [vmem:[%s165 + $0xc] sm:$0xff]
      %1006 = vrot.lane.b32.xlu0 %v1002, 119
      %v1007 = vpop.permute.xlu0 %1006
      %1008 = vrot.lane.b32.xlu0 %v1003, 119
      %v1009 = vpop.permute.xlu0 %1008
      %v1010 = vrot.slane %v1007, 4
      %v1011 = vrot.slane %v1009, 4
      %v1012 = vsel %vm186, %v1010, %v1011
      %vm1013 = vcmask 973824
      %v1014 = vsel %vm1013, %v1007, %v1012
      %v1015 = vsel %vm1013, %v1009, %v1011
      %1018 = vst [vmem:[#allocation2 + $0x234] sm:$0xff] %v1014
      %1019 = vst [vmem:[#allocation2 + $0x23c] sm:$0xf] %v1015
      %v1020 = vld [vmem:[%s165 + $0x4] sm:$0xff]
      %v1021 = vld [vmem:[%s165 + $0xc] sm:$0xff]
      %1024 = vrot.lane.b32.xlu0 %v1020, 118
      %v1025 = vpop.permute.xlu0 %1024
      %1026 = vrot.lane.b32.xlu0 %v1021, 118
      %v1027 = vpop.permute.xlu0 %1026
      %v1028 = vrot.slane %v1025, 4
      %v1029 = vrot.slane %v1027, 4
      %v1030 = vsel %vm186, %v1028, %v1029
      %vm1031 = vcmask 965632
      %v1032 = vsel %vm1031, %v1025, %v1030
      %v1033 = vsel %vm1031, %v1027, %v1029
      %1036 = vst [vmem:[#allocation2 + $0x240] sm:$0xff] %v1032
      %1037 = vst [vmem:[#allocation2 + $0x248] sm:$0xf] %v1033
      %v1038 = vld [vmem:[%s1] sm:$0xff]
      %v1039 = vld [vmem:[#allocation2] sm:$0xff]
      %v1040 = vld [vmem:[#allocation2 + $0x8] sm:$0xf]
      %v1041 = vld [vmem:[#allocation2 + $0xc] sm:$0xff]
      %v1042 = vld [vmem:[#allocation2 + $0x14] sm:$0xf]
      %v1043 = vld [vmem:[#allocation2 + $0x18] sm:$0xff]
      %v1044 = vld [vmem:[#allocation2 + $0x20] sm:$0xf]
      %v1045 = vld [vmem:[#allocation2 + $0x24] sm:$0xff]
      %v1046 = vld [vmem:[#allocation2 + $0x2c] sm:$0xf]
      %v1047 = vld [vmem:[#allocation2 + $0x30] sm:$0xff]
      %v1048 = vld [vmem:[#allocation2 + $0x38] sm:$0xf]
      %v1049 = vld [vmem:[#allocation2 + $0x3c] sm:$0xff]
      %v1050 = vld [vmem:[#allocation2 + $0x44] sm:$0xf]
      %v1051 = vld [vmem:[#allocation2 + $0x48] sm:$0xff]
      %v1052 = vld [vmem:[#allocation2 + $0x50] sm:$0xf]
      %v1053 = vld [vmem:[#allocation2 + $0x54] sm:$0xff]
      %v1054 = vld [vmem:[#allocation2 + $0x5c] sm:$0xf]
      %v1055 = vld [vmem:[#allocation2 + $0x60] sm:$0xff]
      %v1056 = vld [vmem:[#allocation2 + $0x68] sm:$0xf]
      %v1057 = vld [vmem:[#allocation2 + $0x6c] sm:$0xff]
      %v1058 = vld [vmem:[#allocation2 + $0x74] sm:$0xf]
      %v1059 = vld [vmem:[#allocation2 + $0x78] sm:$0xff]
      %v1060 = vld [vmem:[#allocation2 + $0x80] sm:$0xf]
      %v1061 = vld [vmem:[#allocation2 + $0x84] sm:$0xff]
      %v1062 = vld [vmem:[#allocation2 + $0x8c] sm:$0xf]
      %v1063 = vld [vmem:[#allocation2 + $0x90] sm:$0xff]
      %v1064 = vld [vmem:[#allocation2 + $0x98] sm:$0xf]
      %v1065 = vld [vmem:[#allocation2 + $0x9c] sm:$0xff]
      %v1066 = vld [vmem:[#allocation2 + $0xa4] sm:$0xf]
      %v1067 = vld [vmem:[#allocation2 + $0xa8] sm:$0xff]
      %v1068 = vld [vmem:[#allocation2 + $0xb0] sm:$0xf]
      %v1069 = vld [vmem:[#allocation2 + $0xb4] sm:$0xff]
      %v1070 = vld [vmem:[#allocation2 + $0xbc] sm:$0xf]
      %v1071 = vld [vmem:[#allocation2 + $0xc0] sm:$0xff]
      %v1072 = vld [vmem:[#allocation2 + $0xc8] sm:$0xf]
      %v1073 = vld [vmem:[#allocation2 + $0xcc] sm:$0xff]
      %v1074 = vld [vmem:[#allocation2 + $0xd4] sm:$0xf]
      %v1075 = vld [vmem:[#allocation2 + $0xd8] sm:$0xff]
      %v1076 = vld [vmem:[#allocation2 + $0xe0] sm:$0xf]
      %v1077 = vld [vmem:[#allocation2 + $0xe4] sm:$0xff]
      %v1078 = vld [vmem:[#allocation2 + $0xec] sm:$0xf]
      %v1079 = vld [vmem:[#allocation2 + $0xf0] sm:$0xff]
      %v1080 = vld [vmem:[#allocation2 + $0xf8] sm:$0xf]
      %v1081 = vld [vmem:[#allocation2 + $0xfc] sm:$0xff]
      %v1082 = vld [vmem:[#allocation2 + $0x104] sm:$0xf]
      %v1083 = vld [vmem:[#allocation2 + $0x108] sm:$0xff]
      %v1084 = vld [vmem:[#allocation2 + $0x110] sm:$0xf]
      %v1085 = vld [vmem:[#allocation2 + $0x114] sm:$0xff]
      %v1086 = vld [vmem:[#allocation2 + $0x11c] sm:$0xf]
      %v1087 = vld [vmem:[#allocation2 + $0x120] sm:$0xff]
      %v1088 = vld [vmem:[#allocation2 + $0x128] sm:$0xf]
      %v1089 = vld [vmem:[#allocation2 + $0x12c] sm:$0xff]
      %v1090 = vld [vmem:[#allocation2 + $0x134] sm:$0xf]
      %v1091 = vld [vmem:[#allocation2 + $0x138] sm:$0xff]
      %v1092 = vld [vmem:[#allocation2 + $0x140] sm:$0xf]
      %v1093 = vld [vmem:[#allocation2 + $0x144] sm:$0xff]
      %v1094 = vld [vmem:[#allocation2 + $0x14c] sm:$0xf]
      %v1095 = vld [vmem:[#allocation2 + $0x150] sm:$0xff]
      %v1096 = vld [vmem:[#allocation2 + $0x158] sm:$0xf]
      %v1097 = vld [vmem:[#allocation2 + $0x15c] sm:$0xff]
      %v1098 = vld [vmem:[#allocation2 + $0x164] sm:$0xf]
      %v1099 = vld [vmem:[#allocation2 + $0x168] sm:$0xff]
      %v1100 = vld [vmem:[#allocation2 + $0x170] sm:$0xf]
      %v1101 = vld [vmem:[#allocation2 + $0x174] sm:$0xff]
      %v1102 = vld [vmem:[#allocation2 + $0x17c] sm:$0xf]
      %v1103 = vld [vmem:[#allocation2 + $0x180] sm:$0xff]
      %v1104 = vld [vmem:[#allocation2 + $0x188] sm:$0xf]
      %v1105 = vld [vmem:[#allocation2 + $0x18c] sm:$0xff]
      %v1106 = vld [vmem:[#allocation2 + $0x194] sm:$0xf]
      %v1107 = vld [vmem:[#allocation2 + $0x198] sm:$0xff]
      %v1108 = vld [vmem:[#allocation2 + $0x1a0] sm:$0xf]
      %v1109 = vld [vmem:[#allocation2 + $0x1a4] sm:$0xff]
      %v1110 = vld [vmem:[#allocation2 + $0x1ac] sm:$0xf]
      %v1111 = vld [vmem:[#allocation2 + $0x1b0] sm:$0xff]
      %v1112 = vld [vmem:[#allocation2 + $0x1b8] sm:$0xf]
      %v1113 = vld [vmem:[#allocation2 + $0x1bc] sm:$0xff]
      %v1114 = vld [vmem:[#allocation2 + $0x1c4] sm:$0xf]
      %v1115 = vld [vmem:[#allocation2 + $0x1c8] sm:$0xff]
      %v1116 = vld [vmem:[#allocation2 + $0x1d0] sm:$0xf]
      %v1117 = vld [vmem:[#allocation2 + $0x1d4] sm:$0xff]
      %v1118 = vld [vmem:[#allocation2 + $0x1dc] sm:$0xf]
      %v1119 = vld [vmem:[#allocation2 + $0x1e0] sm:$0xff]
      %v1120 = vld [vmem:[#allocation2 + $0x1e8] sm:$0xf]
      %v1121 = vld [vmem:[#allocation2 + $0x1ec] sm:$0xff]
      %v1122 = vld [vmem:[#allocation2 + $0x1f4] sm:$0xf]
      %v1123 = vld [vmem:[#allocation2 + $0x1f8] sm:$0xff]
      %v1124 = vld [vmem:[#allocation2 + $0x200] sm:$0xf]
      %v1125 = vld [vmem:[#allocation2 + $0x204] sm:$0xff]
      %v1126 = vld [vmem:[#allocation2 + $0x20c] sm:$0xf]
      %v1127 = vld [vmem:[#allocation2 + $0x210] sm:$0xff]
      %v1128 = vld [vmem:[#allocation2 + $0x218] sm:$0xf]
      %v1129 = vld [vmem:[#allocation2 + $0x21c] sm:$0xff]
      %v1130 = vld [vmem:[#allocation2 + $0x224] sm:$0xf]
      %v1131 = vld [vmem:[#allocation2 + $0x228] sm:$0xff]
      %v1132 = vld [vmem:[#allocation2 + $0x230] sm:$0xf]
      %v1133 = vld [vmem:[#allocation2 + $0x234] sm:$0xff]
      %v1134 = vld [vmem:[#allocation2 + $0x23c] sm:$0xf]
      %v1135 = vld [vmem:[#allocation2 + $0x240] sm:$0xff]
      %v1136 = vld [vmem:[#allocation2 + $0x248] sm:$0xf]
      %v1137 = vld [vmem:[%s2] sm:$0x7]
      %1139 = vset.pattern.permute.xlu0 0
      %1140 = vperm.xlu0 %1139, %v1137
      %v1141 = vpop.permute.xlu0 %1140
      %v1144 = vcombine.high %v1038, %v1038
      %v1146 = vunpack.c.l.s4 1983009808
      %v1147 = vunpack.c.0.s8 %v1146
      %v1148 = vlaneseq
      %v1149 = vshrl.u32 %v1148, 7
      %v1150 = vsub.s32 %v1147, %v1149
      %v1151 = vrot.slane %v1038, %v1150
      %v1153 = vunpack.c.l.s4 1983009808
      %v1154 = vunpack.c.0.s8 %v1153
      %v1155 = vlaneseq
      %v1156 = vshrl.u32 %v1155, 7
      %v1157 = vsub.s32 %v1154, %v1156
      %v1158 = vrot.slane %v1144, %v1157
      %v1159 = vcombine.high %v1151, %v1151
      %v1160 = vcombine.high %v1158, %v1158
      %v1262 = vunpack.c.l.b16 %v1039
      %v1263 = vunpack.c.h.b16 %v1039
      %v1264 = vunpack.c.l.b16 %v1040
      %v1265 = vunpack.c.l.b16 %v1041
      %v1266 = vunpack.c.h.b16 %v1041
      %v1267 = vunpack.c.l.b16 %v1042
      %v1268 = vunpack.c.l.b16 %v1043
      %v1269 = vunpack.c.h.b16 %v1043
      %v1270 = vunpack.c.l.b16 %v1044
      %v1271 = vunpack.c.l.b16 %v1045
      %v1272 = vunpack.c.h.b16 %v1045
      %v1273 = vunpack.c.l.b16 %v1046
      %v1274 = vunpack.c.l.b16 %v1047
      %v1275 = vunpack.c.h.b16 %v1047
      %v1276 = vunpack.c.l.b16 %v1048
      %v1277 = vunpack.c.l.b16 %v1049
      %v1278 = vunpack.c.h.b16 %v1049
      %v1279 = vunpack.c.l.b16 %v1050
      %v1280 = vunpack.c.l.b16 %v1051
      %v1281 = vunpack.c.h.b16 %v1051
      %v1282 = vunpack.c.l.b16 %v1052
      %v1283 = vunpack.c.l.b16 %v1053
      %v1284 = vunpack.c.h.b16 %v1053
      %v1285 = vunpack.c.l.b16 %v1054
      %v1286 = vunpack.c.l.b16 %v1055
      %v1287 = vunpack.c.h.b16 %v1055
      %v1288 = vunpack.c.l.b16 %v1056
      %v1289 = vunpack.c.l.b16 %v1057
      %v1290 = vunpack.c.h.b16 %v1057
      %v1291 = vunpack.c.l.b16 %v1058
      %v1292 = vunpack.c.l.b16 %v1059
      %v1293 = vunpack.c.h.b16 %v1059
      %v1294 = vunpack.c.l.b16 %v1060
      %v1295 = vunpack.c.l.b16 %v1061
      %v1296 = vunpack.c.h.b16 %v1061
      %v1297 = vunpack.c.l.b16 %v1062
      %v1298 = vunpack.c.l.b16 %v1063
      %v1299 = vunpack.c.h.b16 %v1063
      %v1300 = vunpack.c.l.b16 %v1064
      %v1301 = vunpack.c.l.b16 %v1065
      %v1302 = vunpack.c.h.b16 %v1065
      %v1303 = vunpack.c.l.b16 %v1066
      %v1304 = vunpack.c.l.b16 %v1067
      %v1305 = vunpack.c.h.b16 %v1067
      %v1306 = vunpack.c.l.b16 %v1068
      %v1307 = vunpack.c.l.b16 %v1069
      %v1308 = vunpack.c.h.b16 %v1069
      %v1309 = vunpack.c.l.b16 %v1070
      %v1310 = vunpack.c.l.b16 %v1071
      %v1311 = vunpack.c.h.b16 %v1071
      %v1312 = vunpack.c.l.b16 %v1072
      %v1313 = vunpack.c.l.b16 %v1073
      %v1314 = vunpack.c.h.b16 %v1073
      %v1315 = vunpack.c.l.b16 %v1074
      %v1316 = vunpack.c.l.b16 %v1075
      %v1317 = vunpack.c.h.b16 %v1075
      %v1318 = vunpack.c.l.b16 %v1076
      %v1319 = vunpack.c.l.b16 %v1077
      %v1320 = vunpack.c.h.b16 %v1077
      %v1321 = vunpack.c.l.b16 %v1078
      %v1322 = vunpack.c.l.b16 %v1079
      %v1323 = vunpack.c.h.b16 %v1079
      %v1324 = vunpack.c.l.b16 %v1080
      %v1325 = vunpack.c.l.b16 %v1081
      %v1326 = vunpack.c.h.b16 %v1081
      %v1327 = vunpack.c.l.b16 %v1082
      %v1328 = vunpack.c.l.b16 %v1083
      %v1329 = vunpack.c.h.b16 %v1083
      %v1330 = vunpack.c.l.b16 %v1084
      %v1331 = vunpack.c.l.b16 %v1085
      %v1332 = vunpack.c.h.b16 %v1085
      %v1333 = vunpack.c.l.b16 %v1086
      %v1334 = vunpack.c.l.b16 %v1087
      %v1335 = vunpack.c.h.b16 %v1087
      %v1336 = vunpack.c.l.b16 %v1088
      %v1337 = vunpack.c.l.b16 %v1089
      %v1338 = vunpack.c.h.b16 %v1089
      %v1339 = vunpack.c.l.b16 %v1090
      %v1340 = vunpack.c.l.b16 %v1091
      %v1341 = vunpack.c.h.b16 %v1091
      %v1342 = vunpack.c.l.b16 %v1092
      %v1343 = vunpack.c.l.b16 %v1093
      %v1344 = vunpack.c.h.b16 %v1093
      %v1345 = vunpack.c.l.b16 %v1094
      %v1346 = vunpack.c.l.b16 %v1095
      %v1347 = vunpack.c.h.b16 %v1095
      %v1348 = vunpack.c.l.b16 %v1096
      %v1349 = vunpack.c.l.b16 %v1097
      %v1350 = vunpack.c.h.b16 %v1097
      %v1351 = vunpack.c.l.b16 %v1098
      %v1352 = vunpack.c.l.b16 %v1099
      %v1353 = vunpack.c.h.b16 %v1099
      %v1354 = vunpack.c.l.b16 %v1100
      %v1355 = vunpack.c.l.b16 %v1101
      %v1356 = vunpack.c.h.b16 %v1101
      %v1357 = vunpack.c.l.b16 %v1102
      %v1358 = vunpack.c.l.b16 %v1103
      %v1359 = vunpack.c.h.b16 %v1103
      %v1360 = vunpack.c.l.b16 %v1104
      %v1361 = vunpack.c.l.b16 %v1105
      %v1362 = vunpack.c.h.b16 %v1105
      %v1363 = vunpack.c.l.b16 %v1106
      %v1364 = vunpack.c.l.b16 %v1107
      %v1365 = vunpack.c.h.b16 %v1107
      %v1366 = vunpack.c.l.b16 %v1108
      %v1367 = vunpack.c.l.b16 %v1109
      %v1368 = vunpack.c.h.b16 %v1109
      %v1369 = vunpack.c.l.b16 %v1110
      %v1370 = vunpack.c.l.b16 %v1111
      %v1371 = vunpack.c.h.b16 %v1111
      %v1372 = vunpack.c.l.b16 %v1112
      %v1373 = vunpack.c.l.b16 %v1113
      %v1374 = vunpack.c.h.b16 %v1113
      %v1375 = vunpack.c.l.b16 %v1114
      %v1376 = vunpack.c.l.b16 %v1115
      %v1377 = vunpack.c.h.b16 %v1115
      %v1378 = vunpack.c.l.b16 %v1116
      %v1379 = vunpack.c.l.b16 %v1117
      %v1380 = vunpack.c.h.b16 %v1117
      %v1381 = vunpack.c.l.b16 %v1118
      %v1382 = vunpack.c.l.b16 %v1119
      %v1383 = vunpack.c.h.b16 %v1119
      %v1384 = vunpack.c.l.b16 %v1120
      %v1385 = vunpack.c.l.b16 %v1121
      %v1386 = vunpack.c.h.b16 %v1121
      %v1387 = vunpack.c.l.b16 %v1122
      %v1388 = vunpack.c.l.b16 %v1123
      %v1389 = vunpack.c.h.b16 %v1123
      %v1390 = vunpack.c.l.b16 %v1124
      %v1391 = vunpack.c.l.b16 %v1125
      %v1392 = vunpack.c.h.b16 %v1125
      %v1393 = vunpack.c.l.b16 %v1126
      %v1394 = vunpack.c.l.b16 %v1127
      %v1395 = vunpack.c.h.b16 %v1127
      %v1396 = vunpack.c.l.b16 %v1128
      %v1397 = vunpack.c.l.b16 %v1129
      %v1398 = vunpack.c.h.b16 %v1129
      %v1399 = vunpack.c.l.b16 %v1130
      %v1400 = vunpack.c.l.b16 %v1131
      %v1401 = vunpack.c.h.b16 %v1131
      %v1402 = vunpack.c.l.b16 %v1132
      %v1403 = vunpack.c.l.b16 %v1133
      %v1404 = vunpack.c.h.b16 %v1133
      %v1405 = vunpack.c.l.b16 %v1134
      %v1406 = vunpack.c.l.b16 %v1135
      %v1407 = vunpack.c.h.b16 %v1135
      %v1408 = vunpack.c.l.b16 %v1136
      %v1409 = vpack.c.b16 %v1265, %v1262
      %v1410 = vpack.c.b16 %v1266, %v1263
      %v1411 = vpack.c.b16 %v1267, %v1264
      %v1412 = vpack.c.b16 %v1271, %v1268
      %v1413 = vpack.c.b16 %v1272, %v1269
      %v1414 = vpack.c.b16 %v1273, %v1270
      %v1415 = vpack.c.b16 %v1277, %v1274
      %v1416 = vpack.c.b16 %v1278, %v1275
      %v1417 = vpack.c.b16 %v1279, %v1276
      %v1418 = vpack.c.b16 %v1283, %v1280
      %v1419 = vpack.c.b16 %v1284, %v1281
      %v1420 = vpack.c.b16 %v1285, %v1282
      %v1421 = vpack.c.b16 %v1289, %v1286
      %v1422 = vpack.c.b16 %v1290, %v1287
      %v1423 = vpack.c.b16 %v1291, %v1288
      %v1424 = vpack.c.b16 %v1295, %v1292
      %v1425 = vpack.c.b16 %v1296, %v1293
      %v1426 = vpack.c.b16 %v1297, %v1294
      %v1427 = vpack.c.b16 %v1301, %v1298
      %v1428 = vpack.c.b16 %v1302, %v1299
      %v1429 = vpack.c.b16 %v1303, %v1300
      %v1430 = vpack.c.b16 %v1307, %v1304
      %v1431 = vpack.c.b16 %v1308, %v1305
      %v1432 = vpack.c.b16 %v1309, %v1306
      %v1433 = vpack.c.b16 %v1313, %v1310
      %v1434 = vpack.c.b16 %v1314, %v1311
      %v1435 = vpack.c.b16 %v1315, %v1312
      %v1436 = vpack.c.b16 %v1319, %v1316
      %v1437 = vpack.c.b16 %v1320, %v1317
      %v1438 = vpack.c.b16 %v1321, %v1318
      %v1439 = vpack.c.b16 %v1325, %v1322
      %v1440 = vpack.c.b16 %v1326, %v1323
      %v1441 = vpack.c.b16 %v1327, %v1324
      %v1442 = vpack.c.b16 %v1331, %v1328
      %v1443 = vpack.c.b16 %v1332, %v1329
      %v1444 = vpack.c.b16 %v1333, %v1330
      %v1445 = vpack.c.b16 %v1337, %v1334
      %v1446 = vpack.c.b16 %v1338, %v1335
      %v1447 = vpack.c.b16 %v1339, %v1336
      %v1448 = vpack.c.b16 %v1343, %v1340
      %v1449 = vpack.c.b16 %v1344, %v1341
      %v1450 = vpack.c.b16 %v1345, %v1342
      %v1451 = vpack.c.b16 %v1349, %v1346
      %v1452 = vpack.c.b16 %v1350, %v1347
      %v1453 = vpack.c.b16 %v1351, %v1348
      %v1454 = vpack.c.b16 %v1355, %v1352
      %v1455 = vpack.c.b16 %v1356, %v1353
      %v1456 = vpack.c.b16 %v1357, %v1354
      %v1457 = vpack.c.b16 %v1361, %v1358
      %v1458 = vpack.c.b16 %v1362, %v1359
      %v1459 = vpack.c.b16 %v1363, %v1360
      %v1460 = vpack.c.b16 %v1367, %v1364
      %v1461 = vpack.c.b16 %v1368, %v1365
      %v1462 = vpack.c.b16 %v1369, %v1366
      %v1463 = vpack.c.b16 %v1373, %v1370
      %v1464 = vpack.c.b16 %v1374, %v1371
      %v1465 = vpack.c.b16 %v1375, %v1372
      %v1466 = vpack.c.b16 %v1379, %v1376
      %v1467 = vpack.c.b16 %v1380, %v1377
      %v1468 = vpack.c.b16 %v1381, %v1378
      %v1469 = vpack.c.b16 %v1385, %v1382
      %v1470 = vpack.c.b16 %v1386, %v1383
      %v1471 = vpack.c.b16 %v1387, %v1384
      %v1472 = vpack.c.b16 %v1391, %v1388
      %v1473 = vpack.c.b16 %v1392, %v1389
      %v1474 = vpack.c.b16 %v1393, %v1390
      %v1475 = vpack.c.b16 %v1397, %v1394
      %v1476 = vpack.c.b16 %v1398, %v1395
      %v1477 = vpack.c.b16 %v1399, %v1396
      %v1478 = vpack.c.b16 %v1403, %v1400
      %v1479 = vpack.c.b16 %v1404, %v1401
      %v1480 = vpack.c.b16 %v1405, %v1402
      %v1481 = vpack.c.b16 %v1406, %v1406
      %v1482 = vpack.c.b16 %v1407, %v1407
      %v1483 = vpack.c.b16 %v1408, %v1408
      %vm1556 = vcmask 64512
      %v1558 = vsel %vm1556, %v1160, 0
      %vm1560 = vcmask 1043456
      %v1562 = vsel %vm1560, %v1481, 0
      %v1565 = vsel %vm1560, %v1482, 0
      %v1568 = vsel %vm1560, %v1483, 0
      %1570 = vmatprep.subr.bf16.mxu0 %v1410
      %1571 = vmatpush1.bf16.msra.mxu0 %v1409
      %1572 = vmatprep.subr.bf16.mxu0 %v1413
      %1573 = vmatpush1.bf16.msra.mxu0 %v1412
      %1574 = vmatprep.subr.bf16.mxu0 %v1416
      %1575 = vmatpush1.bf16.msra.mxu0 %v1415
      %1576 = vmatprep.subr.bf16.mxu0 %v1419
      %1577 = vmatpush1.bf16.msra.mxu0 %v1418
      %1578 = vmatprep.subr.bf16.mxu0 %v1422
      %1579 = vmatpush1.bf16.msra.mxu0 %v1421
      %1580 = vmatprep.subr.bf16.mxu0 %v1425
      %1581 = vmatpush1.bf16.msra.mxu0 %v1424
      %1582 = vmatprep.subr.bf16.mxu0 %v1428
      %1583 = vmatpush1.bf16.msra.mxu0 %v1427
      %1584 = vmatprep.subr.bf16.mxu0 %v1431
      %1585 = vmatpush1.bf16.msra.mxu0 %v1430
      %1586 = vmatprep.subr.bf16.mxu0 %v1434
      %1587 = vmatpush1.bf16.msra.mxu0 %v1433
      %1588 = vmatprep.subr.bf16.mxu0 %v1437
      %1589 = vmatpush1.bf16.msra.mxu0 %v1436
      %1590 = vmatprep.subr.bf16.mxu0 %v1440
      %1591 = vmatpush1.bf16.msra.mxu0 %v1439
      %1592 = vmatprep.subr.bf16.mxu0 %v1443
      %1593 = vmatpush1.bf16.msra.mxu0 %v1442
      %1594 = vmatprep.subr.bf16.mxu0 %v1446
      %1595 = vmatpush1.bf16.msra.mxu0 %v1445
      %1596 = vmatprep.subr.bf16.mxu0 %v1449
      %1597 = vmatpush1.bf16.msra.mxu0 %v1448
      %1598 = vmatprep.subr.bf16.mxu0 %v1452
      %1599 = vmatpush1.bf16.msra.mxu0 %v1451
      %1600 = vmatprep.subr.bf16.mxu0 %v1455
      %1601 = vmatpush1.bf16.msra.mxu0 %v1454
      %1602 = vmatprep.mubr.bf16.mxu0 %v1159
      %1603 = vmatmul.mubr.bf16.gmra.mrb[0].mxu0 %v1151
      %v1604 = vpop.f32.mrb[0].mxu0
      %v1605 = vadd.f32 %v1141, %v1604
      %v1606 = vpop.f32.mrb[0].mxu0
      %v1607 = vadd.f32 %v1141, %v1606
      %v1608 = vpop.f32.mrb[0].mxu0
      %v1609 = vpop.f32.mrb[0].mxu0
      %1610 = vdwg.mxu0
      %1611 = vmatprep.subr.bf16.mxu0 %v1458
      %1612 = vmatpush1.bf16.msra.mxu0 %v1457
      %1613 = vmatprep.subr.bf16.mxu0 %v1461
      %1614 = vmatpush1.bf16.msra.mxu0 %v1460
      %1615 = vmatprep.subr.bf16.mxu0 %v1464
      %1616 = vmatpush1.bf16.msra.mxu0 %v1463
      %1617 = vmatprep.subr.bf16.mxu0 %v1467
      %1618 = vmatpush1.bf16.msra.mxu0 %v1466
      %1619 = vmatprep.subr.bf16.mxu0 %v1470
      %1620 = vmatpush1.bf16.msra.mxu0 %v1469
      %1621 = vmatprep.subr.bf16.mxu0 %v1473
      %1622 = vmatpush1.bf16.msra.mxu0 %v1472
      %1623 = vmatprep.subr.bf16.mxu0 %v1476
      %1624 = vmatpush1.bf16.msra.mxu0 %v1475
      %1625 = vmatprep.subr.bf16.mxu0 %v1479
      %1626 = vmatpush1.bf16.msra.mxu0 %v1478
      %1627 = vmatprep.subr.bf16.mxu0 %v1565
      %1628 = vmatpush1.bf16.msra.mxu0 %v1562
      %1629 = vmatprep.subr.bf16.mxu0 0
      %1630 = vmatpush1.bf16.msra.mxu0 0
      %1631 = vmatprep.subr.bf16.mxu0 0
      %1632 = vmatpush1.bf16.msra.mxu0 0
      %1633 = vmatprep.subr.bf16.mxu0 0
      %1634 = vmatpush1.bf16.msra.mxu0 0
      %1635 = vmatprep.subr.bf16.mxu0 0
      %1636 = vmatpush1.bf16.msra.mxu0 0
      %1637 = vmatprep.subr.bf16.mxu0 0
      %1638 = vmatpush1.bf16.msra.mxu0 0
      %1639 = vmatprep.subr.bf16.mxu0 0
      %1640 = vmatpush1.bf16.msra.mxu0 0
      %1641 = vmatprep.subr.bf16.mxu0 0
      %1642 = vmatpush1.bf16.msra.mxu0 0
      %1643 = vmatprep.mubr.bf16.mxu0 %v1558
      %1644 = vmatmul.mubr.bf16.gmra.mrb[0].mxu0 %v1158
      %v1645 = vpop.f32.mrb[0].mxu0
      %v1646 = vadd.f32 %v1605, %v1645
      %v1647 = vpop.f32.mrb[0].mxu0
      %v1648 = vadd.f32 %v1607, %v1647
      %v1649 = vpop.f32.mrb[0].mxu0
      %v1650 = vpop.f32.mrb[0].mxu0
      %1651 = vdwg.mxu0
      %1652 = vmatprep.subr.bf16.mxu0 0
      %1653 = vmatpush1.bf16.msra.mxu0 %v1411
      %1654 = vmatprep.subr.bf16.mxu0 0
      %1655 = vmatpush1.bf16.msra.mxu0 %v1414
      %1656 = vmatprep.subr.bf16.mxu0 0
      %1657 = vmatpush1.bf16.msra.mxu0 %v1417
      %1658 = vmatprep.subr.bf16.mxu0 0
      %1659 = vmatpush1.bf16.msra.mxu0 %v1420
      %1660 = vmatprep.subr.bf16.mxu0 0
      %1661 = vmatpush1.bf16.msra.mxu0 %v1423
      %1662 = vmatprep.subr.bf16.mxu0 0
      %1663 = vmatpush1.bf16.msra.mxu0 %v1426
      %1664 = vmatprep.subr.bf16.mxu0 0
      %1665 = vmatpush1.bf16.msra.mxu0 %v1429
      %1666 = vmatprep.subr.bf16.mxu0 0
      %1667 = vmatpush1.bf16.msra.mxu0 %v1432
      %1668 = vmatprep.subr.bf16.mxu0 0
      %1669 = vmatpush1.bf16.msra.mxu0 %v1435
      %1670 = vmatprep.subr.bf16.mxu0 0
      %1671 = vmatpush1.bf16.msra.mxu0 %v1438
      %1672 = vmatprep.subr.bf16.mxu0 0
      %1673 = vmatpush1.bf16.msra.mxu0 %v1441
      %1674 = vmatprep.subr.bf16.mxu0 0
      %1675 = vmatpush1.bf16.msra.mxu0 %v1444
      %1676 = vmatprep.subr.bf16.mxu0 0
      %1677 = vmatpush1.bf16.msra.mxu0 %v1447
      %1678 = vmatprep.subr.bf16.mxu0 0
      %1679 = vmatpush1.bf16.msra.mxu0 %v1450
      %1680 = vmatprep.subr.bf16.mxu0 0
      %1681 = vmatpush1.bf16.msra.mxu0 %v1453
      %1682 = vmatprep.subr.bf16.mxu0 0
      %1683 = vmatpush1.bf16.msra.mxu0 %v1456
      %1684 = vmatprep.mubr.bf16.mxu0 %v1159
      %1685 = vmatmul.mubr.bf16.gmra.mrb[0].mxu0 %v1151
      %v1686 = vpop.f32.mrb[0].mxu0
      %v1687 = vadd.f32 %v1141, %v1686
      %v1688 = vpop.f32.mrb[0].mxu0
      %v1689 = vpop.f32.mrb[0].mxu0
      %v1690 = vpop.f32.mrb[0].mxu0
      %1691 = vdwg.mxu0
      %1692 = vmatprep.subr.bf16.mxu0 0
      %1693 = vmatpush1.bf16.msra.mxu0 %v1459
      %1694 = vmatprep.subr.bf16.mxu0 0
      %1695 = vmatpush1.bf16.msra.mxu0 %v1462
      %1696 = vmatprep.subr.bf16.mxu0 0
      %1697 = vmatpush1.bf16.msra.mxu0 %v1465
      %1698 = vmatprep.subr.bf16.mxu0 0
      %1699 = vmatpush1.bf16.msra.mxu0 %v1468
      %1700 = vmatprep.subr.bf16.mxu0 0
      %1701 = vmatpush1.bf16.msra.mxu0 %v1471
      %1702 = vmatprep.subr.bf16.mxu0 0
      %1703 = vmatpush1.bf16.msra.mxu0 %v1474
      %1704 = vmatprep.subr.bf16.mxu0 0
      %1705 = vmatpush1.bf16.msra.mxu0 %v1477
      %1706 = vmatprep.subr.bf16.mxu0 0
      %1707 = vmatpush1.bf16.msra.mxu0 %v1480
      %1708 = vmatprep.subr.bf16.mxu0 0
      %1709 = vmatpush1.bf16.msra.mxu0 %v1568
      %1710 = vmatprep.subr.bf16.mxu0 0
      %1711 = vmatpush1.bf16.msra.mxu0 0
      %1712 = vmatprep.subr.bf16.mxu0 0
      %1713 = vmatpush1.bf16.msra.mxu0 0
      %1714 = vmatprep.subr.bf16.mxu0 0
      %1715 = vmatpush1.bf16.msra.mxu0 0
      %1716 = vmatprep.subr.bf16.mxu0 0
      %1717 = vmatpush1.bf16.msra.mxu0 0
      %1718 = vmatprep.subr.bf16.mxu0 0
      %1719 = vmatpush1.bf16.msra.mxu0 0
      %1720 = vmatprep.subr.bf16.mxu0 0
      %1721 = vmatpush1.bf16.msra.mxu0 0
      %1722 = vmatprep.subr.bf16.mxu0 0
      %1723 = vmatpush1.bf16.msra.mxu0 0
      %1724 = vmatprep.mubr.bf16.mxu0 %v1558
      %1725 = vmatmul.mubr.bf16.gmra.mrb[0].mxu0 %v1158
      %v1726 = vpop.f32.mrb[0].mxu0
      %v1727 = vadd.f32 %v1687, %v1726
      %v1728 = vpop.f32.mrb[0].mxu0
      %v1729 = vpop.f32.mrb[0].mxu0
      %v1730 = vpop.f32.mrb[0].mxu0
      %1731 = vdwg.mxu0
      %v1732 = vtanh.pop %v1646
      %v1733 = vtanh.pop %v1648
      %v1734 = vtanh.pop %v1727
      %v1737 = vcombine.low %v1732, %v1733
      %1739 = vst [vmem:[%s170] sm:$0x77] %v1737
      %1740 = vst [vmem:[%s170 + $0x8] sm:$0x7] %v1734
      %p1741 = scmp.lt.s32.totalorder %s14, 1
      %s1742 = scalar_select %p1741, %s14, 1
      %s1743 = smul.addr %s1742, 3
      %s1744 = smul.addr %s1743, 4
      %s1745 = scalar_lea.vmem %s3, %s1744
      // Predicated region
      $region33: #{cyclegan_generator_forward.19} parent=31 // pred_check
        %p1746 = pneg %p100
      $region34: #{cyclegan_generator_forward.19} parent=31 // pred_check_branch
        %1748 = sbr.rel (%p1746) target = $region36
      $region35: #{cyclegan_generator_forward.19} parent=31 // pred_region
        _
      $region36: #{cyclegan_generator_forward.19} parent=31 // pred_fallthru
        _
    $region32: #{cyclegan_generator_forward.19} parent=5 // pred_fallthru
      _
    %p1749 = scmp.le.s32.totalorder 2, %s9
    // Predicated region
    $region37: #{cyclegan_generator_forward.19} parent=5 // pred_check
      %p1750 = pneg %p1749
    $region38: #{cyclegan_generator_forward.19} parent=5 // pred_check_branch
      %1752 = sbr.rel (%p1750) target = $region40
    $region39: #{cyclegan_generator_forward.19} parent=5 // pred_region
      %s1753 = ssub.s32 %s9, 2
      // Predicated region
      $region41: #{cyclegan_generator_forward.19} parent=39 // pred_check
        %p1754 = pneg %p106
      $region42: #{cyclegan_generator_forward.19} parent=39 // pred_check_branch
        %1756 = sbr.rel (%p1754) target = $region44
      $region43: #{cyclegan_generator_forward.19} parent=39 // pred_region
        %p1757 = scmp.lt.s32.totalorder %s15, 1
        %s1758 = scalar_select %p1757, %s15, 1
        %s1759 = smul.addr %s1758, 3
        %s1760 = smul.addr %s1759, 4
        %s1761 = scalar_lea.vmem %s3, %s1760
      $region44: #{cyclegan_generator_forward.19} parent=39 // pred_fallthru
        _
    $region40: #{cyclegan_generator_forward.19} parent=5 // pred_fallthru
      _
  $region6: #{cyclegan_generator_forward.19} parent=0 // loop_footer
    %s13 = sadd.s32 1, %s9
  $region7: #{cyclegan_generator_forward.19} parent=0 // loop_footer_branch
    %8 = sbr.rel target = $region3
  $region8: #{cyclegan_generator_forward.19} parent=0 // loop_exit
    _

</llo_original>
